<compile_context>
chip_gen: v7x
topology: tpu7x:2x2x1
jax: 0.10.0
libtpu: 0.0.40
codegen_flags: <defaults>
</compile_context>

<pallas_src>
import functools
import math

import jax
import jax.numpy as jnp
from jax.experimental import pallas as pl
from jax.experimental.pallas import tpu as pltpu


_VMEM_SPEC = pl.BlockSpec(memory_space=pltpu.MemorySpace.VMEM)
_COMPILER_PARAMS = pltpu.CompilerParams(vmem_limit_bytes=32 * 1024 * 1024)
_EPS = 1e-5


# ----------------------------------------------------------------------------
# Pallas kernels
# ----------------------------------------------------------------------------
def _bn_affine(y, gb, relu):
    """Training-mode BatchNorm1d over rows (batch*length), f32 math."""
    mean = jnp.mean(y, axis=0, keepdims=True)
    var = jnp.mean(jnp.square(y - mean), axis=0, keepdims=True)  # biased, like torch
    y = (y - mean) * jax.lax.rsqrt(var + _EPS)
    y = y * gb[0:1, :] + gb[1:2, :]
    return jnp.maximum(y, 0.0) if relu else y


def _mm(a, w):
    """bf16 MXU matmul with f32 accumulation."""
    return jnp.dot(a.astype(jnp.bfloat16), w, preferred_element_type=jnp.float32)


def _stem_kernel(p_ref, w_ref, bn_ref, o_ref, shift_ref, *, B, L2, C1):
    """conv1(k7,s2,p3) + BN + ReLU + maxpool(k3,s2,p1), fused.

    p_ref : (B*2*L2, 7) f32 im2col patches, rows ordered (batch, phase, m)
            phase 0 -> conv output position 2m, phase 1 -> 2m+1.
    w_ref : (7, C1) bf16 ; bn_ref: (2, C1) f32 (gamma, beta)
    o_ref : (B*L2, C1) f32 pooled output, rows ordered (batch, m).
    """
    y = jnp.dot(p_ref[...].astype(jnp.bfloat16), w_ref[...],
                preferred_element_type=jnp.float32)          # (B*2*L2, C1)
    y = _bn_affine(y, bn_ref[...], relu=True)

    # maxpool(3,2,1): out[m] = max(conv[2m-1], conv[2m], conv[2m+1])
    for b in range(B):                                       # static, B is tiny
        base = b * 2 * L2
        even = y[base: base + L2, :]                         # conv[2m]
        odd = y[base + L2: base + 2 * L2, :]                 # conv[2m+1]
        shift_ref[...] = jnp.zeros(shift_ref.shape, shift_ref.dtype)
        shift_ref[1:L2 + 1, :] = odd
        odd_prev = shift_ref[0:L2, :]                        # conv[2m-1]; 0-pad OK (post-ReLU >= 0)
        o_ref[b * L2:(b + 1) * L2, :] = jnp.maximum(jnp.maximum(even, odd), odd_prev)


def _block_kernel(x_ref, w1_ref, bn1_ref, w2_ref, bn2_ref, *rest,
                  B, L, C_in, C_out, stride, has_ds):
    """Fused BasicBlock: conv3+BN+ReLU -> conv3+BN (+1x1 ds conv+BN) + add + ReLU.

    stride == 1: x_ref is (B*L, C_in).
    stride == 2: x_ref is (B*L/2, 2*C_in)  (lane-paired [x[2l] | x[2l+1]]).
    Conv padding is realised with zero-filled VMEM scratch + batch-boundary masks,
    so im2col never leaves VMEM.
    """
    if has_ds:
        wd_ref, bnd_ref, o_ref, pad1_ref, hpad_ref = rest
    else:
        o_ref, pad1_ref, hpad_ref = rest

    L1 = L // stride
    M1 = B * L1

    row = jax.lax.broadcasted_iota(jnp.int32, (M1, 1), 0)
    first = (row % L1) == 0            # l == 0      (per batch)
    last = (row % L1) == (L1 - 1)      # l == L1 - 1 (per batch)

    # ------- conv1 (3-tap, stride s, pad 1) + BN1 + ReLU ---------------------
    if stride == 1:
        x = x_ref[...]                                       # (M1, C_in)
        pad1_ref[...] = jnp.zeros(pad1_ref.shape, pad1_ref.dtype)
        pad1_ref[1:M1 + 1, :] = x
        xm1 = jnp.where(first, 0.0, pad1_ref[0:M1, :])       # x[l-1]
        xp1 = jnp.where(last, 0.0, pad1_ref[2:M1 + 2, :])    # x[l+1]
        acc1 = _mm(xm1, w1_ref[0]) + _mm(x, w1_ref[1]) + _mm(xp1, w1_ref[2])
        ds_src = x
        identity = x                                         # C_in == C_out when no downsample
    else:
        x2 = x_ref[...]                                      # (M1, 2*C_in)
        even = x2[:, :C_in]                                  # x[2l]
        odd = x2[:, C_in:]                                   # x[2l+1]
        pad1_ref[...] = jnp.zeros(pad1_ref.shape, pad1_ref.dtype)
        pad1_ref[1:M1 + 1, :] = odd
        odd_prev = jnp.where(first, 0.0, pad1_ref[0:M1, :])  # x[2l-1]
        acc1 = _mm(odd_prev, w1_ref[0]) + _mm(even, w1_ref[1]) + _mm(odd, w1_ref[2])
        ds_src = even
        identity = None                                      # stride 2 always has downsample

    h = _bn_affine(acc1, bn1_ref[...], relu=True)            # (M1, C_out) f32

    # ------- conv2 (3-tap, stride 1, pad 1) + BN2 ----------------------------
    hpad_ref[...] = jnp.zeros(hpad_ref.shape, hpad_ref.dtype)
    hpad_ref[1:M1 + 1, :] = h
    hm1 = jnp.where(first, 0.0, hpad_ref[0:M1, :])
    hp1 = jnp.where(last, 0.0, hpad_ref[2:M1 + 2, :])
    acc2 = _mm(hm1, w2_ref[0]) + _mm(h, w2_ref[1]) + _mm(hp1, w2_ref[2])
    y = _bn_affine(acc2, bn2_ref[...], relu=False)

    # ------- identity / downsample + add + ReLU ------------------------------
    if has_ds:
        identity = _bn_affine(_mm(ds_src, wd_ref[...]), bnd_ref[...], relu=False)
    o_ref[...] = jnp.maximum(y + identity, 0.0)


def _head_kernel(x_ref, pool_ref, w_ref, b_ref, o_ref):
    """Global average pool (via a tiny pooling matrix) + fc, fused."""
    pooled = jnp.dot(pool_ref[...], x_ref[...], preferred_element_type=jnp.float32)
    o_ref[...] = jnp.dot(pooled, w_ref[...], preferred_element_type=jnp.float32) + b_ref[...]


# ----------------------------------------------------------------------------
# Wrappers (thin JAX glue, channels-last everywhere)
# ----------------------------------------------------------------------------
def _stem_patches(x, K=7, stride=2, padding=3):
    """x: (B, L) -> phase-major im2col patches (B*2*L2, K) for the C_in=1 stem."""
    B, L = x.shape
    xp = jnp.pad(x, ((0, 0), (padding, padding)))
    L_conv = (L + 2 * padding - K) // stride + 1
    assert L_conv % 2 == 0
    idx = jnp.arange(L_conv)[:, None] * stride + jnp.arange(K)[None, :]
    pat = xp[:, idx]                                         # (B, L_conv, K) -- tiny (C_in == 1)
    L2 = L_conv // 2
    pat = pat.reshape(B, L2, 2, K).transpose(0, 2, 1, 3).reshape(B * 2 * L2, K)
    return pat, L2


def stem_forward(x, params, B):
    patches, L2 = _stem_patches(x)
    K = 7
    C1 = params["conv1_w"].shape[0]
    w = jnp.transpose(params["conv1_w"], (2, 1, 0)).reshape(K, C1).astype(jnp.bfloat16)
    bn = jnp.stack([params["bn1_g"], params["bn1_b"]]).astype(jnp.float32)
    kernel = functools.partial(_stem_kernel, B=B, L2=L2, C1=C1)
    out = pl.pallas_call(
        kernel,
        out_shape=jax.ShapeDtypeStruct((B * L2, C1), jnp.float32),
        in_specs=[_VMEM_SPEC] * 3,
        out_specs=_VMEM_SPEC,
        scratch_shapes=[pltpu.VMEM((L2 + 1, C1), jnp.float32)],
        compiler_params=_COMPILER_PARAMS,
        cost_estimate=pl.CostEstimate(
            flops=2 * B * 2 * L2 * K * C1,
            transcendentals=2 * C1,
            bytes_accessed=int(patches.size) * 4 + K * C1 * 2 + B * L2 * C1 * 4),
    )(patches, w, bn)
    return out, L2


def basic_block(x2d, B, L, blk, stride):
    """x2d: (B*L, C_in) channels-last -> (B*L1, C_out), one fused pallas_call."""
    C_in = x2d.shape[1]
    C_out = blk["conv1_w"].shape[0]
    L1 = L // stride
    M1 = B * L1
    has_ds = "down_w" in blk
    assert has_ds or stride == 1

    w1 = jnp.transpose(blk["conv1_w"], (2, 1, 0)).astype(jnp.bfloat16)   # (3, C_in, C_out)
    bn1 = jnp.stack([blk["bn1_g"], blk["bn1_b"]]).astype(jnp.float32)
    w2 = jnp.transpose(blk["conv2_w"], (2, 1, 0)).astype(jnp.bfloat16)   # (3, C_out, C_out)
    bn2 = jnp.stack([blk["bn2_g"], blk["bn2_b"]]).astype(jnp.float32)

    if stride == 1:
        x_in = x2d
        pad1_shape = (B * L + 2, C_in)
    else:
        # pair consecutive positions along lanes: row l1 = [x[2*l1] | x[2*l1+1]]
        x_in = x2d.reshape(M1, 2 * C_in)                      # free, row-major reshape
        pad1_shape = (M1 + 1, C_in)

    inputs = [x_in, w1, bn1, w2, bn2]
    if has_ds:
        inputs.append(jnp.transpose(blk["down_w"][:, :, 0]).astype(jnp.bfloat16))  # (C_in, C_out)
        inputs.append(jnp.stack([blk["down_g"], blk["down_b"]]).astype(jnp.float32))

    flops = 2 * M1 * C_in * C_out * 3 + 2 * M1 * C_out * C_out * 3
    if has_ds:
        flops += 2 * M1 * C_in * C_out
    bytes_accessed = sum(int(a.size) * a.dtype.itemsize for a in inputs) + M1 * C_out * 4

    kernel = functools.partial(_block_kernel, B=B, L=L, C_in=C_in, C_out=C_out,
                               stride=stride, has_ds=has_ds)
    out = pl.pallas_call(
        kernel,
        out_shape=jax.ShapeDtypeStruct((M1, C_out), jnp.float32),
        in_specs=[_VMEM_SPEC] * len(inputs),
        out_specs=_VMEM_SPEC,
        scratch_shapes=[pltpu.VMEM(pad1_shape, jnp.float32),
                        pltpu.VMEM((M1 + 2, C_out), jnp.float32)],
        compiler_params=_COMPILER_PARAMS,
        cost_estimate=pl.CostEstimate(flops=flops, transcendentals=4 * C_out,
                                      bytes_accessed=bytes_accessed),
    )(*inputs)
    return out, L1


def head_forward(x2d, fc_w, fc_b, B, Lf):
    """Fused AdaptiveAvgPool1d(1) + Linear.  x2d: (B*Lf, C) -> (B, num_classes)."""
    N = fc_w.shape[1]
    pool = jnp.kron(jnp.eye(B, dtype=jnp.float32),
                    jnp.full((1, Lf), 1.0 / Lf, jnp.float32))             # (B, B*Lf)
    return pl.pallas_call(
        _head_kernel,
        out_shape=jax.ShapeDtypeStruct((B, N), jnp.float32),
        in_specs=[_VMEM_SPEC] * 4,
        out_specs=_VMEM_SPEC,
        compiler_params=_COMPILER_PARAMS,
    )(x2d, pool, fc_w.astype(jnp.float32), fc_b.reshape(1, N).astype(jnp.float32))


def resnet1d_forward(x, params):
    """x: (B, L) float32 -> logits (B, num_classes).  Activations kept (B*L, C)."""
    B, L = x.shape
    h, Lc = stem_forward(x, params, B)                    # (B*L/4, 64)
    for blocks in params["layers"]:
        for blk, stride in blocks:
            h, Lc = basic_block(h, B, Lc, blk, stride)
    return head_forward(h, params["fc_w"], params["fc_b"], B, Lc)


# ----------------------------------------------------------------------------
# Deterministic parameter construction (BasicBlock, layers=[1,1,1,1])
# ----------------------------------------------------------------------------
def make_params(key, in_channels=1, num_classes=4, layers=(1, 1, 1, 1)):
    keys = iter(jax.random.split(key, 256))
    nk = lambda: next(keys)

    def conv_w(cout, cin, k):
        fan = cin * k
        return jax.random.normal(nk(), (cout, cin, k), jnp.float32) / math.sqrt(fan)

    def bn(c):
        g = jax.random.uniform(nk(), (c,), jnp.float32, minval=0.5, maxval=1.5)
        b = jax.random.normal(nk(), (c,), jnp.float32) * 0.1
        return g, b

    params = {"conv1_w": conv_w(64, in_channels, 7)}
    params["bn1_g"], params["bn1_b"] = bn(64)

    in_planes = 64
    layer_params = []
    for planes, nblocks, first_stride in zip((64, 128, 256, 512), layers, (1, 2, 2, 2)):
        blocks = []
        for bi in range(nblocks):
            s = first_stride if bi == 0 else 1
            blk = {"conv1_w": conv_w(planes, in_planes, 3)}
            blk["bn1_g"], blk["bn1_b"] = bn(planes)
            blk["conv2_w"] = conv_w(planes, planes, 3)
            blk["bn2_g"], blk["bn2_b"] = bn(planes)
            if s != 1 or in_planes != planes:              # expansion = 1
                blk["down_w"] = conv_w(planes, in_planes, 1)
                blk["down_g"], blk["down_b"] = bn(planes)
            blocks.append((blk, s))
            in_planes = planes
        layer_params.append(blocks)
    params["layers"] = layer_params

    params["fc_w"] = jax.random.normal(nk(), (512, num_classes), jnp.float32) / math.sqrt(512)
    params["fc_b"] = jax.random.normal(nk(), (num_classes,), jnp.float32) * 0.1
    return params


# ----------------------------------------------------------------------------
if __name__ == "__main__":
    key = jax.random.PRNGKey(0)
    pkey, xkey = jax.random.split(key)

    B, L = 2, 128                                           # small 1-D signal batch
    params = make_params(pkey, in_channels=1, num_classes=4, layers=(1, 1, 1, 1))
    x = jax.random.normal(xkey, (B, L), jnp.float32)

    forward = jax.jit(lambda inp: resnet1d_forward(inp, params))
    logits = jax.block_until_ready(forward(x))

    assert logits.shape == (B, 4) and bool(jnp.all(jnp.isfinite(logits)))
    print("KERNEL_OK")
</pallas_src>

<mosaic_0001>
module attributes {stable_mosaic.version = 11 : i64} {
  func.func @_stem_kernel(%arg0: memref<128x7xf32, #tpu.memory_space<vmem>>, %arg1: memref<7x64xbf16, #tpu.memory_space<vmem>>, %arg2: memref<2x64xf32, #tpu.memory_space<vmem>>, %arg3: memref<64x64xf32, #tpu.memory_space<vmem>>, %arg4: memref<33x64xf32, #tpu.memory_space<vmem>>) attributes {dimension_semantics = [], scalar_prefetch = 0 : i64, scratch_operands = 1 : i64, tpu.core_type = #tpu.core_type<tc>} {
    %c0 = arith.constant 0 : index
    %c0_0 = arith.constant 0 : index
    %0 = vector.load %arg0[%c0, %c0_0] : memref<128x7xf32, #tpu.memory_space<vmem>>, vector<128x7xf32>
    %1 = arith.truncf %0 : vector<128x7xf32> to vector<128x7xbf16>
    %c0_1 = arith.constant 0 : index
    %c0_2 = arith.constant 0 : index
    %2 = vector.load %arg1[%c0_1, %c0_2] : memref<7x64xbf16, #tpu.memory_space<vmem>>, vector<7x64xbf16>
    %cst = arith.constant dense<0.000000e+00> : vector<128x64xf32>
    %3 = tpu.matmul %1, %2, %cst {dimension_numbers = #tpu.dot_dimension_numbers<[1], [0], [0], [1], [0, 0, 1, 1], [], []>} : vector<128x7xbf16>, vector<7x64xbf16>, vector<128x64xf32> -> vector<128x64xf32>
    %c0_3 = arith.constant 0 : index
    %c0_4 = arith.constant 0 : index
    %4 = vector.load %arg2[%c0_3, %c0_4] : memref<2x64xf32, #tpu.memory_space<vmem>>, vector<2x64xf32>
    %cst_5 = arith.constant dense<0.000000e+00> : vector<64xf32>
    %5 = vector.multi_reduction <add>, %3, %cst_5 [0] : vector<128x64xf32> to vector<64xf32>
    %6 = vector.shape_cast %5 : vector<64xf32> to vector<1x64xf32>
    %cst_6 = arith.constant 1.280000e+02 : f32
    %7 = vector.broadcast %cst_6 : f32 to vector<1x64xf32>
    %8 = arith.divf %6, %7 : vector<1x64xf32>
    %9 = vector.broadcast %8 : vector<1x64xf32> to vector<128x64xf32>
    %10 = arith.subf %3, %9 : vector<128x64xf32>
    %11 = arith.mulf %10, %10 : vector<128x64xf32>
    %cst_7 = arith.constant dense<0.000000e+00> : vector<64xf32>
    %12 = vector.multi_reduction <add>, %11, %cst_7 [0] : vector<128x64xf32> to vector<64xf32>
    %13 = vector.shape_cast %12 : vector<64xf32> to vector<1x64xf32>
    %cst_8 = arith.constant 1.280000e+02 : f32
    %14 = vector.broadcast %cst_8 : f32 to vector<1x64xf32>
    %15 = arith.divf %13, %14 : vector<1x64xf32>
    %16 = vector.broadcast %8 : vector<1x64xf32> to vector<128x64xf32>
    %17 = arith.subf %3, %16 : vector<128x64xf32>
    %cst_9 = arith.constant 9.99999974E-6 : f32
    %18 = vector.broadcast %cst_9 : f32 to vector<1x64xf32>
    %19 = arith.addf %15, %18 : vector<1x64xf32>
    %20 = math.rsqrt %19 : vector<1x64xf32>
    %21 = vector.broadcast %20 : vector<1x64xf32> to vector<128x64xf32>
    %22 = arith.mulf %17, %21 : vector<128x64xf32>
    %23 = vector.extract_strided_slice %4 {offsets = [0, 0], sizes = [1, 64], strides = [1, 1]} : vector<2x64xf32> to vector<1x64xf32>
    %24 = vector.broadcast %23 : vector<1x64xf32> to vector<128x64xf32>
    %25 = arith.mulf %22, %24 : vector<128x64xf32>
    %26 = vector.extract_strided_slice %4 {offsets = [1, 0], sizes = [1, 64], strides = [1, 1]} : vector<2x64xf32> to vector<1x64xf32>
    %27 = vector.broadcast %26 : vector<1x64xf32> to vector<128x64xf32>
    %28 = arith.addf %25, %27 : vector<128x64xf32>
    %cst_10 = arith.constant 0.000000e+00 : f32
    %29 = vector.broadcast %cst_10 : f32 to vector<128x64xf32>
    %30 = arith.maximumf %28, %29 : vector<128x64xf32>
    %31 = vector.extract_strided_slice %30 {offsets = [0, 0], sizes = [32, 64], strides = [1, 1]} : vector<128x64xf32> to vector<32x64xf32>
    %32 = vector.extract_strided_slice %30 {offsets = [32, 0], sizes = [32, 64], strides = [1, 1]} : vector<128x64xf32> to vector<32x64xf32>
    %cst_11 = arith.constant 0.000000e+00 : f32
    %33 = vector.broadcast %cst_11 : f32 to vector<33x64xf32>
    %c0_12 = arith.constant 0 : index
    %c0_13 = arith.constant 0 : index
    %34 = vector.load %arg4[%c0_12, %c0_13] : memref<33x64xf32, #tpu.memory_space<vmem>>, vector<33x64xf32>
    tpu.vector_store %arg4[%c0_12, %c0_13], %33 {strides = array<i32>} : memref<33x64xf32, #tpu.memory_space<vmem>>, vector<33x64xf32>,
    %c1 = arith.constant 1 : index
    %c0_14 = arith.constant 0 : index
    %35 = vector.load %arg4[%c1, %c0_14] : memref<33x64xf32, #tpu.memory_space<vmem>>, vector<32x64xf32>
    tpu.vector_store %arg4[%c1, %c0_14], %32 {strides = array<i32>} : memref<33x64xf32, #tpu.memory_space<vmem>>, vector<32x64xf32>,
    %c0_15 = arith.constant 0 : index
    %c0_16 = arith.constant 0 : index
    %36 = vector.load %arg4[%c0_15, %c0_16] : memref<33x64xf32, #tpu.memory_space<vmem>>, vector<32x64xf32>
    %37 = arith.maximumf %31, %32 : vector<32x64xf32>
    %38 = arith.maximumf %37, %36 : vector<32x64xf32>
    %c0_17 = arith.constant 0 : index
    %c0_18 = arith.constant 0 : index
    %39 = vector.load %arg3[%c0_17, %c0_18] : memref<64x64xf32, #tpu.memory_space<vmem>>, vector<32x64xf32>
    tpu.vector_store %arg3[%c0_17, %c0_18], %38 {strides = array<i32>} : memref<64x64xf32, #tpu.memory_space<vmem>>, vector<32x64xf32>,
    %40 = vector.extract_strided_slice %30 {offsets = [64, 0], sizes = [32, 64], strides = [1, 1]} : vector<128x64xf32> to vector<32x64xf32>
    %41 = vector.extract_strided_slice %30 {offsets = [96, 0], sizes = [32, 64], strides = [1, 1]} : vector<128x64xf32> to vector<32x64xf32>
    %cst_19 = arith.constant 0.000000e+00 : f32
    %42 = vector.broadcast %cst_19 : f32 to vector<33x64xf32>
    %c0_20 = arith.constant 0 : index
    %c0_21 = arith.constant 0 : index
    %43 = vector.load %arg4[%c0_20, %c0_21] : memref<33x64xf32, #tpu.memory_space<vmem>>, vector<33x64xf32>
    tpu.vector_store %arg4[%c0_20, %c0_21], %42 {strides = array<i32>} : memref<33x64xf32, #tpu.memory_space<vmem>>, vector<33x64xf32>,
    %c1_22 = arith.constant 1 : index
    %c0_23 = arith.constant 0 : index
    %44 = vector.load %arg4[%c1_22, %c0_23] : memref<33x64xf32, #tpu.memory_space<vmem>>, vector<32x64xf32>
    tpu.vector_store %arg4[%c1_22, %c0_23], %41 {strides = array<i32>} : memref<33x64xf32, #tpu.memory_space<vmem>>, vector<32x64xf32>,
    %c0_24 = arith.constant 0 : index
    %c0_25 = arith.constant 0 : index
    %45 = vector.load %arg4[%c0_24, %c0_25] : memref<33x64xf32, #tpu.memory_space<vmem>>, vector<32x64xf32>
    %46 = arith.maximumf %40, %41 : vector<32x64xf32>
    %47 = arith.maximumf %46, %45 : vector<32x64xf32>
    %c32 = arith.constant 32 : index
    %c0_26 = arith.constant 0 : index
    %48 = vector.load %arg3[%c32, %c0_26] : memref<64x64xf32, #tpu.memory_space<vmem>>, vector<32x64xf32>
    tpu.vector_store %arg3[%c32, %c0_26], %47 {strides = array<i32>} : memref<64x64xf32, #tpu.memory_space<vmem>>, vector<32x64xf32>,
    return
  }
}

module attributes {stable_mosaic.version = 11 : i64} {
  func.func @_block_kernel(%arg0: memref<64x64xf32, #tpu.memory_space<vmem>>, %arg1: memref<3x64x64xbf16, #tpu.memory_space<vmem>>, %arg2: memref<2x64xf32, #tpu.memory_space<vmem>>, %arg3: memref<3x64x64xbf16, #tpu.memory_space<vmem>>, %arg4: memref<2x64xf32, #tpu.memory_space<vmem>>, %arg5: memref<64x64xf32, #tpu.memory_space<vmem>>, %arg6: memref<66x64xf32, #tpu.memory_space<vmem>>, %arg7: memref<66x64xf32, #tpu.memory_space<vmem>>) attributes {dimension_semantics = [], scalar_prefetch = 0 : i64, scratch_operands = 2 : i64, tpu.core_type = #tpu.core_type<tc>} {
    %0 = tpu.iota {dimensions = array<i32: 0>} : vector<64x1xi32>
    %c32_i32 = arith.constant 32 : i32
    %c0_i32 = arith.constant 0 : i32
    %1 = arith.cmpi eq, %c32_i32, %c0_i32 : i32
    %c1_i32 = arith.constant 1 : i32
    %2 = arith.select %1, %c1_i32, %c32_i32 : i32
    %3 = vector.broadcast %2 : i32 to vector<64x1xi32>
    %4 = arith.remsi %0, %3 : vector<64x1xi32>
    %c0_i32_0 = arith.constant 0 : i32
    %5 = vector.broadcast %c0_i32_0 : i32 to vector<64x1xi32>
    %6 = arith.cmpi ne, %4, %5 : vector<64x1xi32>
    %c0_i32_1 = arith.constant 0 : i32
    %7 = vector.broadcast %c0_i32_1 : i32 to vector<64x1xi32>
    %8 = arith.cmpi slt, %4, %7 : vector<64x1xi32>
    %c0_i32_2 = arith.constant 0 : i32
    %9 = arith.cmpi slt, %2, %c0_i32_2 : i32
    %10 = vector.broadcast %9 : i1 to vector<64x1xi1>
    %11 = vector.broadcast %10 : vector<64x1xi1> to vector<64x1xi1>
    %12 = arith.xori %8, %11 : vector<64x1xi1>
    %13 = arith.andi %12, %6 : vector<64x1xi1>
    %14 = vector.broadcast %2 : i32 to vector<64x1xi32>
    %15 = arith.addi %4, %14 : vector<64x1xi32>
    %16 = arith.select %13, %15, %4 : vector<64x1xi1>, vector<64x1xi32>
    %c0_i32_3 = arith.constant 0 : i32
    %17 = vector.broadcast %c0_i32_3 : i32 to vector<64x1xi32>
    %18 = arith.cmpi eq, %16, %17 : vector<64x1xi32>
    %c32_i32_4 = arith.constant 32 : i32
    %c0_i32_5 = arith.constant 0 : i32
    %19 = arith.cmpi eq, %c32_i32_4, %c0_i32_5 : i32
    %c1_i32_6 = arith.constant 1 : i32
    %20 = arith.select %19, %c1_i32_6, %c32_i32_4 : i32
    %21 = vector.broadcast %20 : i32 to vector<64x1xi32>
    %22 = arith.remsi %0, %21 : vector<64x1xi32>
    %c0_i32_7 = arith.constant 0 : i32
    %23 = vector.broadcast %c0_i32_7 : i32 to vector<64x1xi32>
    %24 = arith.cmpi ne, %22, %23 : vector<64x1xi32>
    %c0_i32_8 = arith.constant 0 : i32
    %25 = vector.broadcast %c0_i32_8 : i32 to vector<64x1xi32>
    %26 = arith.cmpi slt, %22, %25 : vector<64x1xi32>
    %c0_i32_9 = arith.constant 0 : i32
    %27 = arith.cmpi slt, %20, %c0_i32_9 : i32
    %28 = vector.broadcast %27 : i1 to vector<64x1xi1>
    %29 = vector.broadcast %28 : vector<64x1xi1> to vector<64x1xi1>
    %30 = arith.xori %26, %29 : vector<64x1xi1>
    %31 = arith.andi %30, %24 : vector<64x1xi1>
    %32 = vector.broadcast %20 : i32 to vector<64x1xi32>
    %33 = arith.addi %22, %32 : vector<64x1xi32>
    %34 = arith.select %31, %33, %22 : vector<64x1xi1>, vector<64x1xi32>
    %c31_i32 = arith.constant 31 : i32
    %35 = vector.broadcast %c31_i32 : i32 to vector<64x1xi32>
    %36 = arith.cmpi eq, %34, %35 : vector<64x1xi32>
    %c0 = arith.constant 0 : index
    %c0_10 = arith.constant 0 : index
    %37 = vector.load %arg0[%c0, %c0_10] : memref<64x64xf32, #tpu.memory_space<vmem>>, vector<64x64xf32>
    %cst = arith.constant 0.000000e+00 : f32
    %38 = vector.broadcast %cst : f32 to vector<66x64xf32>
    %c0_11 = arith.constant 0 : index
    %c0_12 = arith.constant 0 : index
    %39 = vector.load %arg6[%c0_11, %c0_12] : memref<66x64xf32, #tpu.memory_space<vmem>>, vector<66x64xf32>
    tpu.vector_store %arg6[%c0_11, %c0_12], %38 {strides = array<i32>} : memref<66x64xf32, #tpu.memory_space<vmem>>, vector<66x64xf32>,
    %c1 = arith.constant 1 : index
    %c0_13 = arith.constant 0 : index
    %40 = vector.load %arg6[%c1, %c0_13] : memref<66x64xf32, #tpu.memory_space<vmem>>, vector<64x64xf32>
    tpu.vector_store %arg6[%c1, %c0_13], %37 {strides = array<i32>} : memref<66x64xf32, #tpu.memory_space<vmem>>, vector<64x64xf32>,
    %c0_14 = arith.constant 0 : index
    %c0_15 = arith.constant 0 : index
    %41 = vector.load %arg6[%c0_14, %c0_15] : memref<66x64xf32, #tpu.memory_space<vmem>>, vector<64x64xf32>
    %cst_16 = arith.constant 0.000000e+00 : f32
    %42 = vector.shape_cast %18 : vector<64x1xi1> to vector<64x1xi1>
    %43 = vector.broadcast %42 : vector<64x1xi1> to vector<64x64xi1>
    %44 = vector.broadcast %cst_16 : f32 to vector<64x64xf32>
    %45 = arith.select %43, %44, %41 : vector<64x64xi1>, vector<64x64xf32>
    %c2 = arith.constant 2 : index
    %c0_17 = arith.constant 0 : index
    %46 = vector.load %arg6[%c2, %c0_17] : memref<66x64xf32, #tpu.memory_space<vmem>>, vector<64x64xf32>
    %cst_18 = arith.constant 0.000000e+00 : f32
    %47 = vector.shape_cast %36 : vector<64x1xi1> to vector<64x1xi1>
    %48 = vector.broadcast %47 : vector<64x1xi1> to vector<64x64xi1>
    %49 = vector.broadcast %cst_18 : f32 to vector<64x64xf32>
    %50 = arith.select %48, %49, %46 : vector<64x64xi1>, vector<64x64xf32>
    %c0_19 = arith.constant 0 : index
    %c0_20 = arith.constant 0 : index
    %c0_21 = arith.constant 0 : index
    %51 = vector.load %arg1[%c0_19, %c0_20, %c0_21] : memref<3x64x64xbf16, #tpu.memory_space<vmem>>, vector<1x64x64xbf16>
    %52 = vector.shape_cast %51 : vector<1x64x64xbf16> to vector<64x64xbf16>
    %53 = arith.truncf %45 : vector<64x64xf32> to vector<64x64xbf16>
    %cst_22 = arith.constant dense<0.000000e+00> : vector<64x64xf32>
    %54 = tpu.matmul %53, %52, %cst_22 {dimension_numbers = #tpu.dot_dimension_numbers<[1], [0], [0], [1], [0, 0, 1, 1], [], []>} : vector<64x64xbf16>, vector<64x64xbf16>, vector<64x64xf32> -> vector<64x64xf32>
    %c1_23 = arith.constant 1 : index
    %c0_24 = arith.constant 0 : index
    %c0_25 = arith.constant 0 : index
    %55 = vector.load %arg1[%c1_23, %c0_24, %c0_25] : memref<3x64x64xbf16, #tpu.memory_space<vmem>>, vector<1x64x64xbf16>
    %56 = vector.shape_cast %55 : vector<1x64x64xbf16> to vector<64x64xbf16>
    %57 = arith.truncf %37 : vector<64x64xf32> to vector<64x64xbf16>
    %cst_26 = arith.constant dense<0.000000e+00> : vector<64x64xf32>
    %58 = tpu.matmul %57, %56, %cst_26 {dimension_numbers = #tpu.dot_dimension_numbers<[1], [0], [0], [1], [0, 0, 1, 1], [], []>} : vector<64x64xbf16>, vector<64x64xbf16>, vector<64x64xf32> -> vector<64x64xf32>
    %59 = arith.addf %54, %58 : vector<64x64xf32>
    %c2_27 = arith.constant 2 : index
    %c0_28 = arith.constant 0 : index
    %c0_29 = arith.constant 0 : index
    %60 = vector.load %arg1[%c2_27, %c0_28, %c0_29] : memref<3x64x64xbf16, #tpu.memory_space<vmem>>, vector<1x64x64xbf16>
    %61 = vector.shape_cast %60 : vector<1x64x64xbf16> to vector<64x64xbf16>
    %62 = arith.truncf %50 : vector<64x64xf32> to vector<64x64xbf16>
    %cst_30 = arith.constant dense<0.000000e+00> : vector<64x64xf32>
    %63 = tpu.matmul %62, %61, %cst_30 {dimension_numbers = #tpu.dot_dimension_numbers<[1], [0], [0], [1], [0, 0, 1, 1], [], []>} : vector<64x64xbf16>, vector<64x64xbf16>, vector<64x64xf32> -> vector<64x64xf32>
    %64 = arith.addf %59, %63 : vector<64x64xf32>
    %c0_31 = arith.constant 0 : index
    %c0_32 = arith.constant 0 : index
    %65 = vector.load %arg2[%c0_31, %c0_32] : memref<2x64xf32, #tpu.memory_space<vmem>>, vector<2x64xf32>
    %cst_33 = arith.constant dense<0.000000e+00> : vector<64xf32>
    %66 = vector.multi_reduction <add>, %64, %cst_33 [0] : vector<64x64xf32> to vector<64xf32>
    %67 = vector.shape_cast %66 : vector<64xf32> to vector<1x64xf32>
    %cst_34 = arith.constant 6.400000e+01 : f32
    %68 = vector.broadcast %cst_34 : f32 to vector<1x64xf32>
    %69 = arith.divf %67, %68 : vector<1x64xf32>
    %70 = vector.broadcast %69 : vector<1x64xf32> to vector<64x64xf32>
    %71 = arith.subf %64, %70 : vector<64x64xf32>
    %72 = arith.mulf %71, %71 : vector<64x64xf32>
    %cst_35 = arith.constant dense<0.000000e+00> : vector<64xf32>
    %73 = vector.multi_reduction <add>, %72, %cst_35 [0] : vector<64x64xf32> to vector<64xf32>
    %74 = vector.shape_cast %73 : vector<64xf32> to vector<1x64xf32>
    %cst_36 = arith.constant 6.400000e+01 : f32
    %75 = vector.broadcast %cst_36 : f32 to vector<1x64xf32>
    %76 = arith.divf %74, %75 : vector<1x64xf32>
    %77 = vector.broadcast %69 : vector<1x64xf32> to vector<64x64xf32>
    %78 = arith.subf %64, %77 : vector<64x64xf32>
    %cst_37 = arith.constant 9.99999974E-6 : f32
    %79 = vector.broadcast %cst_37 : f32 to vector<1x64xf32>
    %80 = arith.addf %76, %79 : vector<1x64xf32>
    %81 = math.rsqrt %80 : vector<1x64xf32>
    %82 = vector.broadcast %81 : vector<1x64xf32> to vector<64x64xf32>
    %83 = arith.mulf %78, %82 : vector<64x64xf32>
    %84 = vector.extract_strided_slice %65 {offsets = [0, 0], sizes = [1, 64], strides = [1, 1]} : vector<2x64xf32> to vector<1x64xf32>
    %85 = vector.broadcast %84 : vector<1x64xf32> to vector<64x64xf32>
    %86 = arith.mulf %83, %85 : vector<64x64xf32>
    %87 = vector.extract_strided_slice %65 {offsets = [1, 0], sizes = [1, 64], strides = [1, 1]} : vector<2x64xf32> to vector<1x64xf32>
    %88 = vector.broadcast %87 : vector<1x64xf32> to vector<64x64xf32>
    %89 = arith.addf %86, %88 : vector<64x64xf32>
    %cst_38 = arith.constant 0.000000e+00 : f32
    %90 = vector.broadcast %cst_38 : f32 to vector<64x64xf32>
    %91 = arith.maximumf %89, %90 : vector<64x64xf32>
    %cst_39 = arith.constant 0.000000e+00 : f32
    %92 = vector.broadcast %cst_39 : f32 to vector<66x64xf32>
    %c0_40 = arith.constant 0 : index
    %c0_41 = arith.constant 0 : index
    %93 = vector.load %arg7[%c0_40, %c0_41] : memref<66x64xf32, #tpu.memory_space<vmem>>, vector<66x64xf32>
    tpu.vector_store %arg7[%c0_40, %c0_41], %92 {strides = array<i32>} : memref<66x64xf32, #tpu.memory_space<vmem>>, vector<66x64xf32>,
    %c1_42 = arith.constant 1 : index
    %c0_43 = arith.constant 0 : index
    %94 = vector.load %arg7[%c1_42, %c0_43] : memref<66x64xf32, #tpu.memory_space<vmem>>, vector<64x64xf32>
    tpu.vector_store %arg7[%c1_42, %c0_43], %91 {strides = array<i32>} : memref<66x64xf32, #tpu.memory_space<vmem>>, vector<64x64xf32>,
    %c0_44 = arith.constant 0 : index
    %c0_45 = arith.constant 0 : index
    %95 = vector.load %arg7[%c0_44, %c0_45] : memref<66x64xf32, #tpu.memory_space<vmem>>, vector<64x64xf32>
    %cst_46 = arith.constant 0.000000e+00 : f32
    %96 = vector.shape_cast %18 : vector<64x1xi1> to vector<64x1xi1>
    %97 = vector.broadcast %96 : vector<64x1xi1> to vector<64x64xi1>
    %98 = vector.broadcast %cst_46 : f32 to vector<64x64xf32>
    %99 = arith.select %97, %98, %95 : vector<64x64xi1>, vector<64x64xf32>
    %c2_47 = arith.constant 2 : index
    %c0_48 = arith.constant 0 : index
    %100 = vector.load %arg7[%c2_47, %c0_48] : memref<66x64xf32, #tpu.memory_space<vmem>>, vector<64x64xf32>
    %cst_49 = arith.constant 0.000000e+00 : f32
    %101 = vector.shape_cast %36 : vector<64x1xi1> to vector<64x1xi1>
    %102 = vector.broadcast %101 : vector<64x1xi1> to vector<64x64xi1>
    %103 = vector.broadcast %cst_49 : f32 to vector<64x64xf32>
    %104 = arith.select %102, %103, %100 : vector<64x64xi1>, vector<64x64xf32>
    %c0_50 = arith.constant 0 : index
    %c0_51 = arith.constant 0 : index
    %c0_52 = arith.constant 0 : index
    %105 = vector.load %arg3[%c0_50, %c0_51, %c0_52] : memref<3x64x64xbf16, #tpu.memory_space<vmem>>, vector<1x64x64xbf16>
    %106 = vector.shape_cast %105 : vector<1x64x64xbf16> to vector<64x64xbf16>
    %107 = arith.truncf %99 : vector<64x64xf32> to vector<64x64xbf16>
    %cst_53 = arith.constant dense<0.000000e+00> : vector<64x64xf32>
    %108 = tpu.matmul %107, %106, %cst_53 {dimension_numbers = #tpu.dot_dimension_numbers<[1], [0], [0], [1], [0, 0, 1, 1], [], []>} : vector<64x64xbf16>, vector<64x64xbf16>, vector<64x64xf32> -> vector<64x64xf32>
    %c1_54 = arith.constant 1 : index
    %c0_55 = arith.constant 0 : index
    %c0_56 = arith.constant 0 : index
    %109 = vector.load %arg3[%c1_54, %c0_55, %c0_56] : memref<3x64x64xbf16, #tpu.memory_space<vmem>>, vector<1x64x64xbf16>
    %110 = vector.shape_cast %109 : vector<1x64x64xbf16> to vector<64x64xbf16>
    %111 = arith.truncf %91 : vector<64x64xf32> to vector<64x64xbf16>
    %cst_57 = arith.constant dense<0.000000e+00> : vector<64x64xf32>
    %112 = tpu.matmul %111, %110, %cst_57 {dimension_numbers = #tpu.dot_dimension_numbers<[1], [0], [0], [1], [0, 0, 1, 1], [], []>} : vector<64x64xbf16>, vector<64x64xbf16>, vector<64x64xf32> -> vector<64x64xf32>
    %113 = arith.addf %108, %112 : vector<64x64xf32>
    %c2_58 = arith.constant 2 : index
    %c0_59 = arith.constant 0 : index
    %c0_60 = arith.constant 0 : index
    %114 = vector.load %arg3[%c2_58, %c0_59, %c0_60] : memref<3x64x64xbf16, #tpu.memory_space<vmem>>, vector<1x64x64xbf16>
    %115 = vector.shape_cast %114 : vector<1x64x64xbf16> to vector<64x64xbf16>
    %116 = arith.truncf %104 : vector<64x64xf32> to vector<64x64xbf16>
    %cst_61 = arith.constant dense<0.000000e+00> : vector<64x64xf32>
    %117 = tpu.matmul %116, %115, %cst_61 {dimension_numbers = #tpu.dot_dimension_numbers<[1], [0], [0], [1], [0, 0, 1, 1], [], []>} : vector<64x64xbf16>, vector<64x64xbf16>, vector<64x64xf32> -> vector<64x64xf32>
    %118 = arith.addf %113, %117 : vector<64x64xf32>
    %c0_62 = arith.constant 0 : index
    %c0_63 = arith.constant 0 : index
    %119 = vector.load %arg4[%c0_62, %c0_63] : memref<2x64xf32, #tpu.memory_space<vmem>>, vector<2x64xf32>
    %cst_64 = arith.constant dense<0.000000e+00> : vector<64xf32>
    %120 = vector.multi_reduction <add>, %118, %cst_64 [0] : vector<64x64xf32> to vector<64xf32>
    %121 = vector.shape_cast %120 : vector<64xf32> to vector<1x64xf32>
    %cst_65 = arith.constant 6.400000e+01 : f32
    %122 = vector.broadcast %cst_65 : f32 to vector<1x64xf32>
    %123 = arith.divf %121, %122 : vector<1x64xf32>
    %124 = vector.broadcast %123 : vector<1x64xf32> to vector<64x64xf32>
    %125 = arith.subf %118, %124 : vector<64x64xf32>
    %126 = arith.mulf %125, %125 : vector<64x64xf32>
    %cst_66 = arith.constant dense<0.000000e+00> : vector<64xf32>
    %127 = vector.multi_reduction <add>, %126, %cst_66 [0] : vector<64x64xf32> to vector<64xf32>
    %128 = vector.shape_cast %127 : vector<64xf32> to vector<1x64xf32>
    %cst_67 = arith.constant 6.400000e+01 : f32
    %129 = vector.broadcast %cst_67 : f32 to vector<1x64xf32>
    %130 = arith.divf %128, %129 : vector<1x64xf32>
    %131 = vector.broadcast %123 : vector<1x64xf32> to vector<64x64xf32>
    %132 = arith.subf %118, %131 : vector<64x64xf32>
    %cst_68 = arith.constant 9.99999974E-6 : f32
    %133 = vector.broadcast %cst_68 : f32 to vector<1x64xf32>
    %134 = arith.addf %130, %133 : vector<1x64xf32>
    %135 = math.rsqrt %134 : vector<1x64xf32>
    %136 = vector.broadcast %135 : vector<1x64xf32> to vector<64x64xf32>
    %137 = arith.mulf %132, %136 : vector<64x64xf32>
    %138 = vector.extract_strided_slice %119 {offsets = [0, 0], sizes = [1, 64], strides = [1, 1]} : vector<2x64xf32> to vector<1x64xf32>
    %139 = vector.broadcast %138 : vector<1x64xf32> to vector<64x64xf32>
    %140 = arith.mulf %137, %139 : vector<64x64xf32>
    %141 = vector.extract_strided_slice %119 {offsets = [1, 0], sizes = [1, 64], strides = [1, 1]} : vector<2x64xf32> to vector<1x64xf32>
    %142 = vector.broadcast %141 : vector<1x64xf32> to vector<64x64xf32>
    %143 = arith.addf %140, %142 : vector<64x64xf32>
    %144 = arith.addf %143, %37 : vector<64x64xf32>
    %cst_69 = arith.constant 0.000000e+00 : f32
    %145 = vector.broadcast %cst_69 : f32 to vector<64x64xf32>
    %146 = arith.maximumf %144, %145 : vector<64x64xf32>
    %c0_70 = arith.constant 0 : index
    %c0_71 = arith.constant 0 : index
    %147 = vector.load %arg5[%c0_70, %c0_71] : memref<64x64xf32, #tpu.memory_space<vmem>>, vector<64x64xf32>
    tpu.vector_store %arg5[%c0_70, %c0_71], %146 {strides = array<i32>} : memref<64x64xf32, #tpu.memory_space<vmem>>, vector<64x64xf32>,
    return
  }
}

module attributes {stable_mosaic.version = 11 : i64} {
  func.func @_block_kernel(%arg0: memref<32x128xf32, #tpu.memory_space<vmem>>, %arg1: memref<3x64x128xbf16, #tpu.memory_space<vmem>>, %arg2: memref<2x128xf32, #tpu.memory_space<vmem>>, %arg3: memref<3x128x128xbf16, #tpu.memory_space<vmem>>, %arg4: memref<2x128xf32, #tpu.memory_space<vmem>>, %arg5: memref<64x128xbf16, #tpu.memory_space<vmem>>, %arg6: memref<2x128xf32, #tpu.memory_space<vmem>>, %arg7: memref<32x128xf32, #tpu.memory_space<vmem>>, %arg8: memref<33x64xf32, #tpu.memory_space<vmem>>, %arg9: memref<34x128xf32, #tpu.memory_space<vmem>>) attributes {dimension_semantics = [], scalar_prefetch = 0 : i64, scratch_operands = 2 : i64, tpu.core_type = #tpu.core_type<tc>} {
    %0 = tpu.iota {dimensions = array<i32: 0>} : vector<32x1xi32>
    %c16_i32 = arith.constant 16 : i32
    %c0_i32 = arith.constant 0 : i32
    %1 = arith.cmpi eq, %c16_i32, %c0_i32 : i32
    %c1_i32 = arith.constant 1 : i32
    %2 = arith.select %1, %c1_i32, %c16_i32 : i32
    %3 = vector.broadcast %2 : i32 to vector<32x1xi32>
    %4 = arith.remsi %0, %3 : vector<32x1xi32>
    %c0_i32_0 = arith.constant 0 : i32
    %5 = vector.broadcast %c0_i32_0 : i32 to vector<32x1xi32>
    %6 = arith.cmpi ne, %4, %5 : vector<32x1xi32>
    %c0_i32_1 = arith.constant 0 : i32
    %7 = vector.broadcast %c0_i32_1 : i32 to vector<32x1xi32>
    %8 = arith.cmpi slt, %4, %7 : vector<32x1xi32>
    %c0_i32_2 = arith.constant 0 : i32
    %9 = arith.cmpi slt, %2, %c0_i32_2 : i32
    %10 = vector.broadcast %9 : i1 to vector<32x1xi1>
    %11 = vector.broadcast %10 : vector<32x1xi1> to vector<32x1xi1>
    %12 = arith.xori %8, %11 : vector<32x1xi1>
    %13 = arith.andi %12, %6 : vector<32x1xi1>
    %14 = vector.broadcast %2 : i32 to vector<32x1xi32>
    %15 = arith.addi %4, %14 : vector<32x1xi32>
    %16 = arith.select %13, %15, %4 : vector<32x1xi1>, vector<32x1xi32>
    %c0_i32_3 = arith.constant 0 : i32
    %17 = vector.broadcast %c0_i32_3 : i32 to vector<32x1xi32>
    %18 = arith.cmpi eq, %16, %17 : vector<32x1xi32>
    %c16_i32_4 = arith.constant 16 : i32
    %c0_i32_5 = arith.constant 0 : i32
    %19 = arith.cmpi eq, %c16_i32_4, %c0_i32_5 : i32
    %c1_i32_6 = arith.constant 1 : i32
    %20 = arith.select %19, %c1_i32_6, %c16_i32_4 : i32
    %21 = vector.broadcast %20 : i32 to vector<32x1xi32>
    %22 = arith.remsi %0, %21 : vector<32x1xi32>
    %c0_i32_7 = arith.constant 0 : i32
    %23 = vector.broadcast %c0_i32_7 : i32 to vector<32x1xi32>
    %24 = arith.cmpi ne, %22, %23 : vector<32x1xi32>
    %c0_i32_8 = arith.constant 0 : i32
    %25 = vector.broadcast %c0_i32_8 : i32 to vector<32x1xi32>
    %26 = arith.cmpi slt, %22, %25 : vector<32x1xi32>
    %c0_i32_9 = arith.constant 0 : i32
    %27 = arith.cmpi slt, %20, %c0_i32_9 : i32
    %28 = vector.broadcast %27 : i1 to vector<32x1xi1>
    %29 = vector.broadcast %28 : vector<32x1xi1> to vector<32x1xi1>
    %30 = arith.xori %26, %29 : vector<32x1xi1>
    %31 = arith.andi %30, %24 : vector<32x1xi1>
    %32 = vector.broadcast %20 : i32 to vector<32x1xi32>
    %33 = arith.addi %22, %32 : vector<32x1xi32>
    %34 = arith.select %31, %33, %22 : vector<32x1xi1>, vector<32x1xi32>
    %c15_i32 = arith.constant 15 : i32
    %35 = vector.broadcast %c15_i32 : i32 to vector<32x1xi32>
    %36 = arith.cmpi eq, %34, %35 : vector<32x1xi32>
    %c0 = arith.constant 0 : index
    %c0_10 = arith.constant 0 : index
    %37 = vector.load %arg0[%c0, %c0_10] : memref<32x128xf32, #tpu.memory_space<vmem>>, vector<32x128xf32>
    %38 = vector.extract_strided_slice %37 {offsets = [0, 0], sizes = [32, 64], strides = [1, 1]} : vector<32x128xf32> to vector<32x64xf32>
    %39 = vector.extract_strided_slice %37 {offsets = [0, 64], sizes = [32, 64], strides = [1, 1]} : vector<32x128xf32> to vector<32x64xf32>
    %cst = arith.constant 0.000000e+00 : f32
    %40 = vector.broadcast %cst : f32 to vector<33x64xf32>
    %c0_11 = arith.constant 0 : index
    %c0_12 = arith.constant 0 : index
    %41 = vector.load %arg8[%c0_11, %c0_12] : memref<33x64xf32, #tpu.memory_space<vmem>>, vector<33x64xf32>
    tpu.vector_store %arg8[%c0_11, %c0_12], %40 {strides = array<i32>} : memref<33x64xf32, #tpu.memory_space<vmem>>, vector<33x64xf32>,
    %c1 = arith.constant 1 : index
    %c0_13 = arith.constant 0 : index
    %42 = vector.load %arg8[%c1, %c0_13] : memref<33x64xf32, #tpu.memory_space<vmem>>, vector<32x64xf32>
    tpu.vector_store %arg8[%c1, %c0_13], %39 {strides = array<i32>} : memref<33x64xf32, #tpu.memory_space<vmem>>, vector<32x64xf32>,
    %c0_14 = arith.constant 0 : index
    %c0_15 = arith.constant 0 : index
    %43 = vector.load %arg8[%c0_14, %c0_15] : memref<33x64xf32, #tpu.memory_space<vmem>>, vector<32x64xf32>
    %cst_16 = arith.constant 0.000000e+00 : f32
    %44 = vector.shape_cast %18 : vector<32x1xi1> to vector<32x1xi1>
    %45 = vector.broadcast %44 : vector<32x1xi1> to vector<32x64xi1>
    %46 = vector.broadcast %cst_16 : f32 to vector<32x64xf32>
    %47 = arith.select %45, %46, %43 : vector<32x64xi1>, vector<32x64xf32>
    %c0_17 = arith.constant 0 : index
    %c0_18 = arith.constant 0 : index
    %c0_19 = arith.constant 0 : index
    %48 = vector.load %arg1[%c0_17, %c0_18, %c0_19] : memref<3x64x128xbf16, #tpu.memory_space<vmem>>, vector<1x64x128xbf16>
    %49 = vector.shape_cast %48 : vector<1x64x128xbf16> to vector<64x128xbf16>
    %50 = arith.truncf %47 : vector<32x64xf32> to vector<32x64xbf16>
    %cst_20 = arith.constant dense<0.000000e+00> : vector<32x128xf32>
    %51 = tpu.matmul %50, %49, %cst_20 {dimension_numbers = #tpu.dot_dimension_numbers<[1], [0], [0], [1], [0, 0, 1, 1], [], []>} : vector<32x64xbf16>, vector<64x128xbf16>, vector<32x128xf32> -> vector<32x128xf32>
    %c1_21 = arith.constant 1 : index
    %c0_22 = arith.constant 0 : index
    %c0_23 = arith.constant 0 : index
    %52 = vector.load %arg1[%c1_21, %c0_22, %c0_23] : memref<3x64x128xbf16, #tpu.memory_space<vmem>>, vector<1x64x128xbf16>
    %53 = vector.shape_cast %52 : vector<1x64x128xbf16> to vector<64x128xbf16>
    %54 = arith.truncf %38 : vector<32x64xf32> to vector<32x64xbf16>
    %cst_24 = arith.constant dense<0.000000e+00> : vector<32x128xf32>
    %55 = tpu.matmul %54, %53, %cst_24 {dimension_numbers = #tpu.dot_dimension_numbers<[1], [0], [0], [1], [0, 0, 1, 1], [], []>} : vector<32x64xbf16>, vector<64x128xbf16>, vector<32x128xf32> -> vector<32x128xf32>
    %56 = arith.addf %51, %55 : vector<32x128xf32>
    %c2 = arith.constant 2 : index
    %c0_25 = arith.constant 0 : index
    %c0_26 = arith.constant 0 : index
    %57 = vector.load %arg1[%c2, %c0_25, %c0_26] : memref<3x64x128xbf16, #tpu.memory_space<vmem>>, vector<1x64x128xbf16>
    %58 = vector.shape_cast %57 : vector<1x64x128xbf16> to vector<64x128xbf16>
    %59 = arith.truncf %39 : vector<32x64xf32> to vector<32x64xbf16>
    %cst_27 = arith.constant dense<0.000000e+00> : vector<32x128xf32>
    %60 = tpu.matmul %59, %58, %cst_27 {dimension_numbers = #tpu.dot_dimension_numbers<[1], [0], [0], [1], [0, 0, 1, 1], [], []>} : vector<32x64xbf16>, vector<64x128xbf16>, vector<32x128xf32> -> vector<32x128xf32>
    %61 = arith.addf %56, %60 : vector<32x128xf32>
    %c0_28 = arith.constant 0 : index
    %c0_29 = arith.constant 0 : index
    %62 = vector.load %arg2[%c0_28, %c0_29] : memref<2x128xf32, #tpu.memory_space<vmem>>, vector<2x128xf32>
    %cst_30 = arith.constant dense<0.000000e+00> : vector<128xf32>
    %63 = vector.multi_reduction <add>, %61, %cst_30 [0] : vector<32x128xf32> to vector<128xf32>
    %64 = vector.shape_cast %63 : vector<128xf32> to vector<1x128xf32>
    %cst_31 = arith.constant 3.200000e+01 : f32
    %65 = vector.broadcast %cst_31 : f32 to vector<1x128xf32>
    %66 = arith.divf %64, %65 : vector<1x128xf32>
    %67 = vector.broadcast %66 : vector<1x128xf32> to vector<32x128xf32>
    %68 = arith.subf %61, %67 : vector<32x128xf32>
    %69 = arith.mulf %68, %68 : vector<32x128xf32>
    %cst_32 = arith.constant dense<0.000000e+00> : vector<128xf32>
    %70 = vector.multi_reduction <add>, %69, %cst_32 [0] : vector<32x128xf32> to vector<128xf32>
    %71 = vector.shape_cast %70 : vector<128xf32> to vector<1x128xf32>
    %cst_33 = arith.constant 3.200000e+01 : f32
    %72 = vector.broadcast %cst_33 : f32 to vector<1x128xf32>
    %73 = arith.divf %71, %72 : vector<1x128xf32>
    %74 = vector.broadcast %66 : vector<1x128xf32> to vector<32x128xf32>
    %75 = arith.subf %61, %74 : vector<32x128xf32>
    %cst_34 = arith.constant 9.99999974E-6 : f32
    %76 = vector.broadcast %cst_34 : f32 to vector<1x128xf32>
    %77 = arith.addf %73, %76 : vector<1x128xf32>
    %78 = math.rsqrt %77 : vector<1x128xf32>
    %79 = vector.broadcast %78 : vector<1x128xf32> to vector<32x128xf32>
    %80 = arith.mulf %75, %79 : vector<32x128xf32>
    %81 = vector.extract_strided_slice %62 {offsets = [0, 0], sizes = [1, 128], strides = [1, 1]} : vector<2x128xf32> to vector<1x128xf32>
    %82 = vector.broadcast %81 : vector<1x128xf32> to vector<32x128xf32>
    %83 = arith.mulf %80, %82 : vector<32x128xf32>
    %84 = vector.extract_strided_slice %62 {offsets = [1, 0], sizes = [1, 128], strides = [1, 1]} : vector<2x128xf32> to vector<1x128xf32>
    %85 = vector.broadcast %84 : vector<1x128xf32> to vector<32x128xf32>
    %86 = arith.addf %83, %85 : vector<32x128xf32>
    %cst_35 = arith.constant 0.000000e+00 : f32
    %87 = vector.broadcast %cst_35 : f32 to vector<32x128xf32>
    %88 = arith.maximumf %86, %87 : vector<32x128xf32>
    %cst_36 = arith.constant 0.000000e+00 : f32
    %89 = vector.broadcast %cst_36 : f32 to vector<34x128xf32>
    %c0_37 = arith.constant 0 : index
    %c0_38 = arith.constant 0 : index
    %90 = vector.load %arg9[%c0_37, %c0_38] : memref<34x128xf32, #tpu.memory_space<vmem>>, vector<34x128xf32>
    tpu.vector_store %arg9[%c0_37, %c0_38], %89 {strides = array<i32>} : memref<34x128xf32, #tpu.memory_space<vmem>>, vector<34x128xf32>,
    %c1_39 = arith.constant 1 : index
    %c0_40 = arith.constant 0 : index
    %91 = vector.load %arg9[%c1_39, %c0_40] : memref<34x128xf32, #tpu.memory_space<vmem>>, vector<32x128xf32>
    tpu.vector_store %arg9[%c1_39, %c0_40], %88 {strides = array<i32>} : memref<34x128xf32, #tpu.memory_space<vmem>>, vector<32x128xf32>,
    %c0_41 = arith.constant 0 : index
    %c0_42 = arith.constant 0 : index
    %92 = vector.load %arg9[%c0_41, %c0_42] : memref<34x128xf32, #tpu.memory_space<vmem>>, vector<32x128xf32>
    %cst_43 = arith.constant 0.000000e+00 : f32
    %93 = vector.shape_cast %18 : vector<32x1xi1> to vector<32x1xi1>
    %94 = vector.broadcast %93 : vector<32x1xi1> to vector<32x128xi1>
    %95 = vector.broadcast %cst_43 : f32 to vector<32x128xf32>
    %96 = arith.select %94, %95, %92 : vector<32x128xi1>, vector<32x128xf32>
    %c2_44 = arith.constant 2 : index
    %c0_45 = arith.constant 0 : index
    %97 = vector.load %arg9[%c2_44, %c0_45] : memref<34x128xf32, #tpu.memory_space<vmem>>, vector<32x128xf32>
    %cst_46 = arith.constant 0.000000e+00 : f32
    %98 = vector.shape_cast %36 : vector<32x1xi1> to vector<32x1xi1>
    %99 = vector.broadcast %98 : vector<32x1xi1> to vector<32x128xi1>
    %100 = vector.broadcast %cst_46 : f32 to vector<32x128xf32>
    %101 = arith.select %99, %100, %97 : vector<32x128xi1>, vector<32x128xf32>
    %c0_47 = arith.constant 0 : index
    %c0_48 = arith.constant 0 : index
    %c0_49 = arith.constant 0 : index
    %102 = vector.load %arg3[%c0_47, %c0_48, %c0_49] : memref<3x128x128xbf16, #tpu.memory_space<vmem>>, vector<1x128x128xbf16>
    %103 = vector.shape_cast %102 : vector<1x128x128xbf16> to vector<128x128xbf16>
    %104 = arith.truncf %96 : vector<32x128xf32> to vector<32x128xbf16>
    %cst_50 = arith.constant dense<0.000000e+00> : vector<32x128xf32>
    %105 = tpu.matmul %104, %103, %cst_50 {dimension_numbers = #tpu.dot_dimension_numbers<[1], [0], [0], [1], [0, 0, 1, 1], [], []>} : vector<32x128xbf16>, vector<128x128xbf16>, vector<32x128xf32> -> vector<32x128xf32>
    %c1_51 = arith.constant 1 : index
    %c0_52 = arith.constant 0 : index
    %c0_53 = arith.constant 0 : index
    %106 = vector.load %arg3[%c1_51, %c0_52, %c0_53] : memref<3x128x128xbf16, #tpu.memory_space<vmem>>, vector<1x128x128xbf16>
    %107 = vector.shape_cast %106 : vector<1x128x128xbf16> to vector<128x128xbf16>
    %108 = arith.truncf %88 : vector<32x128xf32> to vector<32x128xbf16>
    %cst_54 = arith.constant dense<0.000000e+00> : vector<32x128xf32>
    %109 = tpu.matmul %108, %107, %cst_54 {dimension_numbers = #tpu.dot_dimension_numbers<[1], [0], [0], [1], [0, 0, 1, 1], [], []>} : vector<32x128xbf16>, vector<128x128xbf16>, vector<32x128xf32> -> vector<32x128xf32>
    %110 = arith.addf %105, %109 : vector<32x128xf32>
    %c2_55 = arith.constant 2 : index
    %c0_56 = arith.constant 0 : index
    %c0_57 = arith.constant 0 : index
    %111 = vector.load %arg3[%c2_55, %c0_56, %c0_57] : memref<3x128x128xbf16, #tpu.memory_space<vmem>>, vector<1x128x128xbf16>
    %112 = vector.shape_cast %111 : vector<1x128x128xbf16> to vector<128x128xbf16>
    %113 = arith.truncf %101 : vector<32x128xf32> to vector<32x128xbf16>
    %cst_58 = arith.constant dense<0.000000e+00> : vector<32x128xf32>
    %114 = tpu.matmul %113, %112, %cst_58 {dimension_numbers = #tpu.dot_dimension_numbers<[1], [0], [0], [1], [0, 0, 1, 1], [], []>} : vector<32x128xbf16>, vector<128x128xbf16>, vector<32x128xf32> -> vector<32x128xf32>
    %115 = arith.addf %110, %114 : vector<32x128xf32>
    %c0_59 = arith.constant 0 : index
    %c0_60 = arith.constant 0 : index
    %116 = vector.load %arg4[%c0_59, %c0_60] : memref<2x128xf32, #tpu.memory_space<vmem>>, vector<2x128xf32>
    %cst_61 = arith.constant dense<0.000000e+00> : vector<128xf32>
    %117 = vector.multi_reduction <add>, %115, %cst_61 [0] : vector<32x128xf32> to vector<128xf32>
    %118 = vector.shape_cast %117 : vector<128xf32> to vector<1x128xf32>
    %cst_62 = arith.constant 3.200000e+01 : f32
    %119 = vector.broadcast %cst_62 : f32 to vector<1x128xf32>
    %120 = arith.divf %118, %119 : vector<1x128xf32>
    %121 = vector.broadcast %120 : vector<1x128xf32> to vector<32x128xf32>
    %122 = arith.subf %115, %121 : vector<32x128xf32>
    %123 = arith.mulf %122, %122 : vector<32x128xf32>
    %cst_63 = arith.constant dense<0.000000e+00> : vector<128xf32>
    %124 = vector.multi_reduction <add>, %123, %cst_63 [0] : vector<32x128xf32> to vector<128xf32>
    %125 = vector.shape_cast %124 : vector<128xf32> to vector<1x128xf32>
    %cst_64 = arith.constant 3.200000e+01 : f32
    %126 = vector.broadcast %cst_64 : f32 to vector<1x128xf32>
    %127 = arith.divf %125, %126 : vector<1x128xf32>
    %128 = vector.broadcast %120 : vector<1x128xf32> to vector<32x128xf32>
    %129 = arith.subf %115, %128 : vector<32x128xf32>
    %cst_65 = arith.constant 9.99999974E-6 : f32
    %130 = vector.broadcast %cst_65 : f32 to vector<1x128xf32>
    %131 = arith.addf %127, %130 : vector<1x128xf32>
    %132 = math.rsqrt %131 : vector<1x128xf32>
    %133 = vector.broadcast %132 : vector<1x128xf32> to vector<32x128xf32>
    %134 = arith.mulf %129, %133 : vector<32x128xf32>
    %135 = vector.extract_strided_slice %116 {offsets = [0, 0], sizes = [1, 128], strides = [1, 1]} : vector<2x128xf32> to vector<1x128xf32>
    %136 = vector.broadcast %135 : vector<1x128xf32> to vector<32x128xf32>
    %137 = arith.mulf %134, %136 : vector<32x128xf32>
    %138 = vector.extract_strided_slice %116 {offsets = [1, 0], sizes = [1, 128], strides = [1, 1]} : vector<2x128xf32> to vector<1x128xf32>
    %139 = vector.broadcast %138 : vector<1x128xf32> to vector<32x128xf32>
    %140 = arith.addf %137, %139 : vector<32x128xf32>
    %c0_66 = arith.constant 0 : index
    %c0_67 = arith.constant 0 : index
    %141 = vector.load %arg5[%c0_66, %c0_67] : memref<64x128xbf16, #tpu.memory_space<vmem>>, vector<64x128xbf16>
    %142 = arith.truncf %38 : vector<32x64xf32> to vector<32x64xbf16>
    %cst_68 = arith.constant dense<0.000000e+00> : vector<32x128xf32>
    %143 = tpu.matmul %142, %141, %cst_68 {dimension_numbers = #tpu.dot_dimension_numbers<[1], [0], [0], [1], [0, 0, 1, 1], [], []>} : vector<32x64xbf16>, vector<64x128xbf16>, vector<32x128xf32> -> vector<32x128xf32>
    %c0_69 = arith.constant 0 : index
    %c0_70 = arith.constant 0 : index
    %144 = vector.load %arg6[%c0_69, %c0_70] : memref<2x128xf32, #tpu.memory_space<vmem>>, vector<2x128xf32>
    %cst_71 = arith.constant dense<0.000000e+00> : vector<128xf32>
    %145 = vector.multi_reduction <add>, %143, %cst_71 [0] : vector<32x128xf32> to vector<128xf32>
    %146 = vector.shape_cast %145 : vector<128xf32> to vector<1x128xf32>
    %cst_72 = arith.constant 3.200000e+01 : f32
    %147 = vector.broadcast %cst_72 : f32 to vector<1x128xf32>
    %148 = arith.divf %146, %147 : vector<1x128xf32>
    %149 = vector.broadcast %148 : vector<1x128xf32> to vector<32x128xf32>
    %150 = arith.subf %143, %149 : vector<32x128xf32>
    %151 = arith.mulf %150, %150 : vector<32x128xf32>
    %cst_73 = arith.constant dense<0.000000e+00> : vector<128xf32>
    %152 = vector.multi_reduction <add>, %151, %cst_73 [0] : vector<32x128xf32> to vector<128xf32>
    %153 = vector.shape_cast %152 : vector<128xf32> to vector<1x128xf32>
    %cst_74 = arith.constant 3.200000e+01 : f32
    %154 = vector.broadcast %cst_74 : f32 to vector<1x128xf32>
    %155 = arith.divf %153, %154 : vector<1x128xf32>
    %156 = vector.broadcast %148 : vector<1x128xf32> to vector<32x128xf32>
    %157 = arith.subf %143, %156 : vector<32x128xf32>
    %cst_75 = arith.constant 9.99999974E-6 : f32
    %158 = vector.broadcast %cst_75 : f32 to vector<1x128xf32>
    %159 = arith.addf %155, %158 : vector<1x128xf32>
    %160 = math.rsqrt %159 : vector<1x128xf32>
    %161 = vector.broadcast %160 : vector<1x128xf32> to vector<32x128xf32>
    %162 = arith.mulf %157, %161 : vector<32x128xf32>
    %163 = vector.extract_strided_slice %144 {offsets = [0, 0], sizes = [1, 128], strides = [1, 1]} : vector<2x128xf32> to vector<1x128xf32>
    %164 = vector.broadcast %163 : vector<1x128xf32> to vector<32x128xf32>
    %165 = arith.mulf %162, %164 : vector<32x128xf32>
    %166 = vector.extract_strided_slice %144 {offsets = [1, 0], sizes = [1, 128], strides = [1, 1]} : vector<2x128xf32> to vector<1x128xf32>
    %167 = vector.broadcast %166 : vector<1x128xf32> to vector<32x128xf32>
    %168 = arith.addf %165, %167 : vector<32x128xf32>
    %169 = arith.addf %140, %168 : vector<32x128xf32>
    %cst_76 = arith.constant 0.000000e+00 : f32
    %170 = vector.broadcast %cst_76 : f32 to vector<32x128xf32>
    %171 = arith.maximumf %169, %170 : vector<32x128xf32>
    %c0_77 = arith.constant 0 : index
    %c0_78 = arith.constant 0 : index
    %172 = vector.load %arg7[%c0_77, %c0_78] : memref<32x128xf32, #tpu.memory_space<vmem>>, vector<32x128xf32>
    tpu.vector_store %arg7[%c0_77, %c0_78], %171 {strides = array<i32>} : memref<32x128xf32, #tpu.memory_space<vmem>>, vector<32x128xf32>,
    return
  }
}

module attributes {stable_mosaic.version = 11 : i64} {
  func.func @_block_kernel(%arg0: memref<16x256xf32, #tpu.memory_space<vmem>>, %arg1: memref<3x128x256xbf16, #tpu.memory_space<vmem>>, %arg2: memref<2x256xf32, #tpu.memory_space<vmem>>, %arg3: memref<3x256x256xbf16, #tpu.memory_space<vmem>>, %arg4: memref<2x256xf32, #tpu.memory_space<vmem>>, %arg5: memref<128x256xbf16, #tpu.memory_space<vmem>>, %arg6: memref<2x256xf32, #tpu.memory_space<vmem>>, %arg7: memref<16x256xf32, #tpu.memory_space<vmem>>, %arg8: memref<17x128xf32, #tpu.memory_space<vmem>>, %arg9: memref<18x256xf32, #tpu.memory_space<vmem>>) attributes {dimension_semantics = [], scalar_prefetch = 0 : i64, scratch_operands = 2 : i64, tpu.core_type = #tpu.core_type<tc>} {
    %0 = tpu.iota {dimensions = array<i32: 0>} : vector<16x1xi32>
    %c8_i32 = arith.constant 8 : i32
    %c0_i32 = arith.constant 0 : i32
    %1 = arith.cmpi eq, %c8_i32, %c0_i32 : i32
    %c1_i32 = arith.constant 1 : i32
    %2 = arith.select %1, %c1_i32, %c8_i32 : i32
    %3 = vector.broadcast %2 : i32 to vector<16x1xi32>
    %4 = arith.remsi %0, %3 : vector<16x1xi32>
    %c0_i32_0 = arith.constant 0 : i32
    %5 = vector.broadcast %c0_i32_0 : i32 to vector<16x1xi32>
    %6 = arith.cmpi ne, %4, %5 : vector<16x1xi32>
    %c0_i32_1 = arith.constant 0 : i32
    %7 = vector.broadcast %c0_i32_1 : i32 to vector<16x1xi32>
    %8 = arith.cmpi slt, %4, %7 : vector<16x1xi32>
    %c0_i32_2 = arith.constant 0 : i32
    %9 = arith.cmpi slt, %2, %c0_i32_2 : i32
    %10 = vector.broadcast %9 : i1 to vector<16x1xi1>
    %11 = vector.broadcast %10 : vector<16x1xi1> to vector<16x1xi1>
    %12 = arith.xori %8, %11 : vector<16x1xi1>
    %13 = arith.andi %12, %6 : vector<16x1xi1>
    %14 = vector.broadcast %2 : i32 to vector<16x1xi32>
    %15 = arith.addi %4, %14 : vector<16x1xi32>
    %16 = arith.select %13, %15, %4 : vector<16x1xi1>, vector<16x1xi32>
    %c0_i32_3 = arith.constant 0 : i32
    %17 = vector.broadcast %c0_i32_3 : i32 to vector<16x1xi32>
    %18 = arith.cmpi eq, %16, %17 : vector<16x1xi32>
    %c8_i32_4 = arith.constant 8 : i32
    %c0_i32_5 = arith.constant 0 : i32
    %19 = arith.cmpi eq, %c8_i32_4, %c0_i32_5 : i32
    %c1_i32_6 = arith.constant 1 : i32
    %20 = arith.select %19, %c1_i32_6, %c8_i32_4 : i32
    %21 = vector.broadcast %20 : i32 to vector<16x1xi32>
    %22 = arith.remsi %0, %21 : vector<16x1xi32>
    %c0_i32_7 = arith.constant 0 : i32
    %23 = vector.broadcast %c0_i32_7 : i32 to vector<16x1xi32>
    %24 = arith.cmpi ne, %22, %23 : vector<16x1xi32>
    %c0_i32_8 = arith.constant 0 : i32
    %25 = vector.broadcast %c0_i32_8 : i32 to vector<16x1xi32>
    %26 = arith.cmpi slt, %22, %25 : vector<16x1xi32>
    %c0_i32_9 = arith.constant 0 : i32
    %27 = arith.cmpi slt, %20, %c0_i32_9 : i32
    %28 = vector.broadcast %27 : i1 to vector<16x1xi1>
    %29 = vector.broadcast %28 : vector<16x1xi1> to vector<16x1xi1>
    %30 = arith.xori %26, %29 : vector<16x1xi1>
    %31 = arith.andi %30, %24 : vector<16x1xi1>
    %32 = vector.broadcast %20 : i32 to vector<16x1xi32>
    %33 = arith.addi %22, %32 : vector<16x1xi32>
    %34 = arith.select %31, %33, %22 : vector<16x1xi1>, vector<16x1xi32>
    %c7_i32 = arith.constant 7 : i32
    %35 = vector.broadcast %c7_i32 : i32 to vector<16x1xi32>
    %36 = arith.cmpi eq, %34, %35 : vector<16x1xi32>
    %c0 = arith.constant 0 : index
    %c0_10 = arith.constant 0 : index
    %37 = vector.load %arg0[%c0, %c0_10] : memref<16x256xf32, #tpu.memory_space<vmem>>, vector<16x256xf32>
    %38 = vector.extract_strided_slice %37 {offsets = [0, 0], sizes = [16, 128], strides = [1, 1]} : vector<16x256xf32> to vector<16x128xf32>
    %39 = vector.extract_strided_slice %37 {offsets = [0, 128], sizes = [16, 128], strides = [1, 1]} : vector<16x256xf32> to vector<16x128xf32>
    %cst = arith.constant 0.000000e+00 : f32
    %40 = vector.broadcast %cst : f32 to vector<17x128xf32>
    %c0_11 = arith.constant 0 : index
    %c0_12 = arith.constant 0 : index
    %41 = vector.load %arg8[%c0_11, %c0_12] : memref<17x128xf32, #tpu.memory_space<vmem>>, vector<17x128xf32>
    tpu.vector_store %arg8[%c0_11, %c0_12], %40 {strides = array<i32>} : memref<17x128xf32, #tpu.memory_space<vmem>>, vector<17x128xf32>,
    %c1 = arith.constant 1 : index
    %c0_13 = arith.constant 0 : index
    %42 = vector.load %arg8[%c1, %c0_13] : memref<17x128xf32, #tpu.memory_space<vmem>>, vector<16x128xf32>
    tpu.vector_store %arg8[%c1, %c0_13], %39 {strides = array<i32>} : memref<17x128xf32, #tpu.memory_space<vmem>>, vector<16x128xf32>,
    %c0_14 = arith.constant 0 : index
    %c0_15 = arith.constant 0 : index
    %43 = vector.load %arg8[%c0_14, %c0_15] : memref<17x128xf32, #tpu.memory_space<vmem>>, vector<16x128xf32>
    %cst_16 = arith.constant 0.000000e+00 : f32
    %44 = vector.shape_cast %18 : vector<16x1xi1> to vector<16x1xi1>
    %45 = vector.broadcast %44 : vector<16x1xi1> to vector<16x128xi1>
    %46 = vector.broadcast %cst_16 : f32 to vector<16x128xf32>
    %47 = arith.select %45, %46, %43 : vector<16x128xi1>, vector<16x128xf32>
    %c0_17 = arith.constant 0 : index
    %c0_18 = arith.constant 0 : index
    %c0_19 = arith.constant 0 : index
    %48 = vector.load %arg1[%c0_17, %c0_18, %c0_19] : memref<3x128x256xbf16, #tpu.memory_space<vmem>>, vector<1x128x256xbf16>
    %49 = vector.shape_cast %48 : vector<1x128x256xbf16> to vector<128x256xbf16>
    %50 = arith.truncf %47 : vector<16x128xf32> to vector<16x128xbf16>
    %cst_20 = arith.constant dense<0.000000e+00> : vector<16x256xf32>
    %51 = tpu.matmul %50, %49, %cst_20 {dimension_numbers = #tpu.dot_dimension_numbers<[1], [0], [0], [1], [0, 0, 1, 1], [], []>} : vector<16x128xbf16>, vector<128x256xbf16>, vector<16x256xf32> -> vector<16x256xf32>
    %c1_21 = arith.constant 1 : index
    %c0_22 = arith.constant 0 : index
    %c0_23 = arith.constant 0 : index
    %52 = vector.load %arg1[%c1_21, %c0_22, %c0_23] : memref<3x128x256xbf16, #tpu.memory_space<vmem>>, vector<1x128x256xbf16>
    %53 = vector.shape_cast %52 : vector<1x128x256xbf16> to vector<128x256xbf16>
    %54 = arith.truncf %38 : vector<16x128xf32> to vector<16x128xbf16>
    %cst_24 = arith.constant dense<0.000000e+00> : vector<16x256xf32>
    %55 = tpu.matmul %54, %53, %cst_24 {dimension_numbers = #tpu.dot_dimension_numbers<[1], [0], [0], [1], [0, 0, 1, 1], [], []>} : vector<16x128xbf16>, vector<128x256xbf16>, vector<16x256xf32> -> vector<16x256xf32>
    %56 = arith.addf %51, %55 : vector<16x256xf32>
    %c2 = arith.constant 2 : index
    %c0_25 = arith.constant 0 : index
    %c0_26 = arith.constant 0 : index
    %57 = vector.load %arg1[%c2, %c0_25, %c0_26] : memref<3x128x256xbf16, #tpu.memory_space<vmem>>, vector<1x128x256xbf16>
    %58 = vector.shape_cast %57 : vector<1x128x256xbf16> to vector<128x256xbf16>
    %59 = arith.truncf %39 : vector<16x128xf32> to vector<16x128xbf16>
    %cst_27 = arith.constant dense<0.000000e+00> : vector<16x256xf32>
    %60 = tpu.matmul %59, %58, %cst_27 {dimension_numbers = #tpu.dot_dimension_numbers<[1], [0], [0], [1], [0, 0, 1, 1], [], []>} : vector<16x128xbf16>, vector<128x256xbf16>, vector<16x256xf32> -> vector<16x256xf32>
    %61 = arith.addf %56, %60 : vector<16x256xf32>
    %c0_28 = arith.constant 0 : index
    %c0_29 = arith.constant 0 : index
    %62 = vector.load %arg2[%c0_28, %c0_29] : memref<2x256xf32, #tpu.memory_space<vmem>>, vector<2x256xf32>
    %cst_30 = arith.constant dense<0.000000e+00> : vector<256xf32>
    %63 = vector.multi_reduction <add>, %61, %cst_30 [0] : vector<16x256xf32> to vector<256xf32>
    %64 = vector.shape_cast %63 : vector<256xf32> to vector<1x256xf32>
    %cst_31 = arith.constant 1.600000e+01 : f32
    %65 = vector.broadcast %cst_31 : f32 to vector<1x256xf32>
    %66 = arith.divf %64, %65 : vector<1x256xf32>
    %67 = vector.broadcast %66 : vector<1x256xf32> to vector<16x256xf32>
    %68 = arith.subf %61, %67 : vector<16x256xf32>
    %69 = arith.mulf %68, %68 : vector<16x256xf32>
    %cst_32 = arith.constant dense<0.000000e+00> : vector<256xf32>
    %70 = vector.multi_reduction <add>, %69, %cst_32 [0] : vector<16x256xf32> to vector<256xf32>
    %71 = vector.shape_cast %70 : vector<256xf32> to vector<1x256xf32>
    %cst_33 = arith.constant 1.600000e+01 : f32
    %72 = vector.broadcast %cst_33 : f32 to vector<1x256xf32>
    %73 = arith.divf %71, %72 : vector<1x256xf32>
    %74 = vector.broadcast %66 : vector<1x256xf32> to vector<16x256xf32>
    %75 = arith.subf %61, %74 : vector<16x256xf32>
    %cst_34 = arith.constant 9.99999974E-6 : f32
    %76 = vector.broadcast %cst_34 : f32 to vector<1x256xf32>
    %77 = arith.addf %73, %76 : vector<1x256xf32>
    %78 = math.rsqrt %77 : vector<1x256xf32>
    %79 = vector.broadcast %78 : vector<1x256xf32> to vector<16x256xf32>
    %80 = arith.mulf %75, %79 : vector<16x256xf32>
    %81 = vector.extract_strided_slice %62 {offsets = [0, 0], sizes = [1, 256], strides = [1, 1]} : vector<2x256xf32> to vector<1x256xf32>
    %82 = vector.broadcast %81 : vector<1x256xf32> to vector<16x256xf32>
    %83 = arith.mulf %80, %82 : vector<16x256xf32>
    %84 = vector.extract_strided_slice %62 {offsets = [1, 0], sizes = [1, 256], strides = [1, 1]} : vector<2x256xf32> to vector<1x256xf32>
    %85 = vector.broadcast %84 : vector<1x256xf32> to vector<16x256xf32>
    %86 = arith.addf %83, %85 : vector<16x256xf32>
    %cst_35 = arith.constant 0.000000e+00 : f32
    %87 = vector.broadcast %cst_35 : f32 to vector<16x256xf32>
    %88 = arith.maximumf %86, %87 : vector<16x256xf32>
    %cst_36 = arith.constant 0.000000e+00 : f32
    %89 = vector.broadcast %cst_36 : f32 to vector<18x256xf32>
    %c0_37 = arith.constant 0 : index
    %c0_38 = arith.constant 0 : index
    %90 = vector.load %arg9[%c0_37, %c0_38] : memref<18x256xf32, #tpu.memory_space<vmem>>, vector<18x256xf32>
    tpu.vector_store %arg9[%c0_37, %c0_38], %89 {strides = array<i32>} : memref<18x256xf32, #tpu.memory_space<vmem>>, vector<18x256xf32>,
    %c1_39 = arith.constant 1 : index
    %c0_40 = arith.constant 0 : index
    %91 = vector.load %arg9[%c1_39, %c0_40] : memref<18x256xf32, #tpu.memory_space<vmem>>, vector<16x256xf32>
    tpu.vector_store %arg9[%c1_39, %c0_40], %88 {strides = array<i32>} : memref<18x256xf32, #tpu.memory_space<vmem>>, vector<16x256xf32>,
    %c0_41 = arith.constant 0 : index
    %c0_42 = arith.constant 0 : index
    %92 = vector.load %arg9[%c0_41, %c0_42] : memref<18x256xf32, #tpu.memory_space<vmem>>, vector<16x256xf32>
    %cst_43 = arith.constant 0.000000e+00 : f32
    %93 = vector.shape_cast %18 : vector<16x1xi1> to vector<16x1xi1>
    %94 = vector.broadcast %93 : vector<16x1xi1> to vector<16x256xi1>
    %95 = vector.broadcast %cst_43 : f32 to vector<16x256xf32>
    %96 = arith.select %94, %95, %92 : vector<16x256xi1>, vector<16x256xf32>
    %c2_44 = arith.constant 2 : index
    %c0_45 = arith.constant 0 : index
    %97 = vector.load %arg9[%c2_44, %c0_45] : memref<18x256xf32, #tpu.memory_space<vmem>>, vector<16x256xf32>
    %cst_46 = arith.constant 0.000000e+00 : f32
    %98 = vector.shape_cast %36 : vector<16x1xi1> to vector<16x1xi1>
    %99 = vector.broadcast %98 : vector<16x1xi1> to vector<16x256xi1>
    %100 = vector.broadcast %cst_46 : f32 to vector<16x256xf32>
    %101 = arith.select %99, %100, %97 : vector<16x256xi1>, vector<16x256xf32>
    %c0_47 = arith.constant 0 : index
    %c0_48 = arith.constant 0 : index
    %c0_49 = arith.constant 0 : index
    %102 = vector.load %arg3[%c0_47, %c0_48, %c0_49] : memref<3x256x256xbf16, #tpu.memory_space<vmem>>, vector<1x256x256xbf16>
    %103 = vector.shape_cast %102 : vector<1x256x256xbf16> to vector<256x256xbf16>
    %104 = arith.truncf %96 : vector<16x256xf32> to vector<16x256xbf16>
    %cst_50 = arith.constant dense<0.000000e+00> : vector<16x256xf32>
    %105 = tpu.matmul %104, %103, %cst_50 {dimension_numbers = #tpu.dot_dimension_numbers<[1], [0], [0], [1], [0, 0, 1, 1], [], []>} : vector<16x256xbf16>, vector<256x256xbf16>, vector<16x256xf32> -> vector<16x256xf32>
    %c1_51 = arith.constant 1 : index
    %c0_52 = arith.constant 0 : index
    %c0_53 = arith.constant 0 : index
    %106 = vector.load %arg3[%c1_51, %c0_52, %c0_53] : memref<3x256x256xbf16, #tpu.memory_space<vmem>>, vector<1x256x256xbf16>
    %107 = vector.shape_cast %106 : vector<1x256x256xbf16> to vector<256x256xbf16>
    %108 = arith.truncf %88 : vector<16x256xf32> to vector<16x256xbf16>
    %cst_54 = arith.constant dense<0.000000e+00> : vector<16x256xf32>
    %109 = tpu.matmul %108, %107, %cst_54 {dimension_numbers = #tpu.dot_dimension_numbers<[1], [0], [0], [1], [0, 0, 1, 1], [], []>} : vector<16x256xbf16>, vector<256x256xbf16>, vector<16x256xf32> -> vector<16x256xf32>
    %110 = arith.addf %105, %109 : vector<16x256xf32>
    %c2_55 = arith.constant 2 : index
    %c0_56 = arith.constant 0 : index
    %c0_57 = arith.constant 0 : index
    %111 = vector.load %arg3[%c2_55, %c0_56, %c0_57] : memref<3x256x256xbf16, #tpu.memory_space<vmem>>, vector<1x256x256xbf16>
    %112 = vector.shape_cast %111 : vector<1x256x256xbf16> to vector<256x256xbf16>
    %113 = arith.truncf %101 : vector<16x256xf32> to vector<16x256xbf16>
    %cst_58 = arith.constant dense<0.000000e+00> : vector<16x256xf32>
    %114 = tpu.matmul %113, %112, %cst_58 {dimension_numbers = #tpu.dot_dimension_numbers<[1], [0], [0], [1], [0, 0, 1, 1], [], []>} : vector<16x256xbf16>, vector<256x256xbf16>, vector<16x256xf32> -> vector<16x256xf32>
    %115 = arith.addf %110, %114 : vector<16x256xf32>
    %c0_59 = arith.constant 0 : index
    %c0_60 = arith.constant 0 : index
    %116 = vector.load %arg4[%c0_59, %c0_60] : memref<2x256xf32, #tpu.memory_space<vmem>>, vector<2x256xf32>
    %cst_61 = arith.constant dense<0.000000e+00> : vector<256xf32>
    %117 = vector.multi_reduction <add>, %115, %cst_61 [0] : vector<16x256xf32> to vector<256xf32>
    %118 = vector.shape_cast %117 : vector<256xf32> to vector<1x256xf32>
    %cst_62 = arith.constant 1.600000e+01 : f32
    %119 = vector.broadcast %cst_62 : f32 to vector<1x256xf32>
    %120 = arith.divf %118, %119 : vector<1x256xf32>
    %121 = vector.broadcast %120 : vector<1x256xf32> to vector<16x256xf32>
    %122 = arith.subf %115, %121 : vector<16x256xf32>
    %123 = arith.mulf %122, %122 : vector<16x256xf32>
    %cst_63 = arith.constant dense<0.000000e+00> : vector<256xf32>
    %124 = vector.multi_reduction <add>, %123, %cst_63 [0] : vector<16x256xf32> to vector<256xf32>
    %125 = vector.shape_cast %124 : vector<256xf32> to vector<1x256xf32>
    %cst_64 = arith.constant 1.600000e+01 : f32
    %126 = vector.broadcast %cst_64 : f32 to vector<1x256xf32>
    %127 = arith.divf %125, %126 : vector<1x256xf32>
    %128 = vector.broadcast %120 : vector<1x256xf32> to vector<16x256xf32>
    %129 = arith.subf %115, %128 : vector<16x256xf32>
    %cst_65 = arith.constant 9.99999974E-6 : f32
    %130 = vector.broadcast %cst_65 : f32 to vector<1x256xf32>
    %131 = arith.addf %127, %130 : vector<1x256xf32>
    %132 = math.rsqrt %131 : vector<1x256xf32>
    %133 = vector.broadcast %132 : vector<1x256xf32> to vector<16x256xf32>
    %134 = arith.mulf %129, %133 : vector<16x256xf32>
    %135 = vector.extract_strided_slice %116 {offsets = [0, 0], sizes = [1, 256], strides = [1, 1]} : vector<2x256xf32> to vector<1x256xf32>
    %136 = vector.broadcast %135 : vector<1x256xf32> to vector<16x256xf32>
    %137 = arith.mulf %134, %136 : vector<16x256xf32>
    %138 = vector.extract_strided_slice %116 {offsets = [1, 0], sizes = [1, 256], strides = [1, 1]} : vector<2x256xf32> to vector<1x256xf32>
    %139 = vector.broadcast %138 : vector<1x256xf32> to vector<16x256xf32>
    %140 = arith.addf %137, %139 : vector<16x256xf32>
    %c0_66 = arith.constant 0 : index
    %c0_67 = arith.constant 0 : index
    %141 = vector.load %arg5[%c0_66, %c0_67] : memref<128x256xbf16, #tpu.memory_space<vmem>>, vector<128x256xbf16>
    %142 = arith.truncf %38 : vector<16x128xf32> to vector<16x128xbf16>
    %cst_68 = arith.constant dense<0.000000e+00> : vector<16x256xf32>
    %143 = tpu.matmul %142, %141, %cst_68 {dimension_numbers = #tpu.dot_dimension_numbers<[1], [0], [0], [1], [0, 0, 1, 1], [], []>} : vector<16x128xbf16>, vector<128x256xbf16>, vector<16x256xf32> -> vector<16x256xf32>
    %c0_69 = arith.constant 0 : index
    %c0_70 = arith.constant 0 : index
    %144 = vector.load %arg6[%c0_69, %c0_70] : memref<2x256xf32, #tpu.memory_space<vmem>>, vector<2x256xf32>
    %cst_71 = arith.constant dense<0.000000e+00> : vector<256xf32>
    %145 = vector.multi_reduction <add>, %143, %cst_71 [0] : vector<16x256xf32> to vector<256xf32>
    %146 = vector.shape_cast %145 : vector<256xf32> to vector<1x256xf32>
    %cst_72 = arith.constant 1.600000e+01 : f32
    %147 = vector.broadcast %cst_72 : f32 to vector<1x256xf32>
    %148 = arith.divf %146, %147 : vector<1x256xf32>
    %149 = vector.broadcast %148 : vector<1x256xf32> to vector<16x256xf32>
    %150 = arith.subf %143, %149 : vector<16x256xf32>
    %151 = arith.mulf %150, %150 : vector<16x256xf32>
    %cst_73 = arith.constant dense<0.000000e+00> : vector<256xf32>
    %152 = vector.multi_reduction <add>, %151, %cst_73 [0] : vector<16x256xf32> to vector<256xf32>
    %153 = vector.shape_cast %152 : vector<256xf32> to vector<1x256xf32>
    %cst_74 = arith.constant 1.600000e+01 : f32
    %154 = vector.broadcast %cst_74 : f32 to vector<1x256xf32>
    %155 = arith.divf %153, %154 : vector<1x256xf32>
    %156 = vector.broadcast %148 : vector<1x256xf32> to vector<16x256xf32>
    %157 = arith.subf %143, %156 : vector<16x256xf32>
    %cst_75 = arith.constant 9.99999974E-6 : f32
    %158 = vector.broadcast %cst_75 : f32 to vector<1x256xf32>
    %159 = arith.addf %155, %158 : vector<1x256xf32>
    %160 = math.rsqrt %159 : vector<1x256xf32>
    %161 = vector.broadcast %160 : vector<1x256xf32> to vector<16x256xf32>
    %162 = arith.mulf %157, %161 : vector<16x256xf32>
    %163 = vector.extract_strided_slice %144 {offsets = [0, 0], sizes = [1, 256], strides = [1, 1]} : vector<2x256xf32> to vector<1x256xf32>
    %164 = vector.broadcast %163 : vector<1x256xf32> to vector<16x256xf32>
    %165 = arith.mulf %162, %164 : vector<16x256xf32>
    %166 = vector.extract_strided_slice %144 {offsets = [1, 0], sizes = [1, 256], strides = [1, 1]} : vector<2x256xf32> to vector<1x256xf32>
    %167 = vector.broadcast %166 : vector<1x256xf32> to vector<16x256xf32>
    %168 = arith.addf %165, %167 : vector<16x256xf32>
    %169 = arith.addf %140, %168 : vector<16x256xf32>
    %cst_76 = arith.constant 0.000000e+00 : f32
    %170 = vector.broadcast %cst_76 : f32 to vector<16x256xf32>
    %171 = arith.maximumf %169, %170 : vector<16x256xf32>
    %c0_77 = arith.constant 0 : index
    %c0_78 = arith.constant 0 : index
    %172 = vector.load %arg7[%c0_77, %c0_78] : memref<16x256xf32, #tpu.memory_space<vmem>>, vector<16x256xf32>
    tpu.vector_store %arg7[%c0_77, %c0_78], %171 {strides = array<i32>} : memref<16x256xf32, #tpu.memory_space<vmem>>, vector<16x256xf32>,
    return
  }
}

module attributes {stable_mosaic.version = 11 : i64} {
  func.func @_block_kernel(%arg0: memref<8x512xf32, #tpu.memory_space<vmem>>, %arg1: memref<3x256x512xbf16, #tpu.memory_space<vmem>>, %arg2: memref<2x512xf32, #tpu.memory_space<vmem>>, %arg3: memref<3x512x512xbf16, #tpu.memory_space<vmem>>, %arg4: memref<2x512xf32, #tpu.memory_space<vmem>>, %arg5: memref<256x512xbf16, #tpu.memory_space<vmem>>, %arg6: memref<2x512xf32, #tpu.memory_space<vmem>>, %arg7: memref<8x512xf32, #tpu.memory_space<vmem>>, %arg8: memref<9x256xf32, #tpu.memory_space<vmem>>, %arg9: memref<10x512xf32, #tpu.memory_space<vmem>>) attributes {dimension_semantics = [], scalar_prefetch = 0 : i64, scratch_operands = 2 : i64, tpu.core_type = #tpu.core_type<tc>} {
    %0 = tpu.iota {dimensions = array<i32: 0>} : vector<8x1xi32>
    %c4_i32 = arith.constant 4 : i32
    %c0_i32 = arith.constant 0 : i32
    %1 = arith.cmpi eq, %c4_i32, %c0_i32 : i32
    %c1_i32 = arith.constant 1 : i32
    %2 = arith.select %1, %c1_i32, %c4_i32 : i32
    %3 = vector.broadcast %2 : i32 to vector<8x1xi32>
    %4 = arith.remsi %0, %3 : vector<8x1xi32>
    %c0_i32_0 = arith.constant 0 : i32
    %5 = vector.broadcast %c0_i32_0 : i32 to vector<8x1xi32>
    %6 = arith.cmpi ne, %4, %5 : vector<8x1xi32>
    %c0_i32_1 = arith.constant 0 : i32
    %7 = vector.broadcast %c0_i32_1 : i32 to vector<8x1xi32>
    %8 = arith.cmpi slt, %4, %7 : vector<8x1xi32>
    %c0_i32_2 = arith.constant 0 : i32
    %9 = arith.cmpi slt, %2, %c0_i32_2 : i32
    %10 = vector.broadcast %9 : i1 to vector<8x1xi1>
    %11 = vector.broadcast %10 : vector<8x1xi1> to vector<8x1xi1>
    %12 = arith.xori %8, %11 : vector<8x1xi1>
    %13 = arith.andi %12, %6 : vector<8x1xi1>
    %14 = vector.broadcast %2 : i32 to vector<8x1xi32>
    %15 = arith.addi %4, %14 : vector<8x1xi32>
    %16 = arith.select %13, %15, %4 : vector<8x1xi1>, vector<8x1xi32>
    %c0_i32_3 = arith.constant 0 : i32
    %17 = vector.broadcast %c0_i32_3 : i32 to vector<8x1xi32>
    %18 = arith.cmpi eq, %16, %17 : vector<8x1xi32>
    %c4_i32_4 = arith.constant 4 : i32
    %c0_i32_5 = arith.constant 0 : i32
    %19 = arith.cmpi eq, %c4_i32_4, %c0_i32_5 : i32
    %c1_i32_6 = arith.constant 1 : i32
    %20 = arith.select %19, %c1_i32_6, %c4_i32_4 : i32
    %21 = vector.broadcast %20 : i32 to vector<8x1xi32>
    %22 = arith.remsi %0, %21 : vector<8x1xi32>
    %c0_i32_7 = arith.constant 0 : i32
    %23 = vector.broadcast %c0_i32_7 : i32 to vector<8x1xi32>
    %24 = arith.cmpi ne, %22, %23 : vector<8x1xi32>
    %c0_i32_8 = arith.constant 0 : i32
    %25 = vector.broadcast %c0_i32_8 : i32 to vector<8x1xi32>
    %26 = arith.cmpi slt, %22, %25 : vector<8x1xi32>
    %c0_i32_9 = arith.constant 0 : i32
    %27 = arith.cmpi slt, %20, %c0_i32_9 : i32
    %28 = vector.broadcast %27 : i1 to vector<8x1xi1>
    %29 = vector.broadcast %28 : vector<8x1xi1> to vector<8x1xi1>
    %30 = arith.xori %26, %29 : vector<8x1xi1>
    %31 = arith.andi %30, %24 : vector<8x1xi1>
    %32 = vector.broadcast %20 : i32 to vector<8x1xi32>
    %33 = arith.addi %22, %32 : vector<8x1xi32>
    %34 = arith.select %31, %33, %22 : vector<8x1xi1>, vector<8x1xi32>
    %c3_i32 = arith.constant 3 : i32
    %35 = vector.broadcast %c3_i32 : i32 to vector<8x1xi32>
    %36 = arith.cmpi eq, %34, %35 : vector<8x1xi32>
    %c0 = arith.constant 0 : index
    %c0_10 = arith.constant 0 : index
    %37 = vector.load %arg0[%c0, %c0_10] : memref<8x512xf32, #tpu.memory_space<vmem>>, vector<8x512xf32>
    %38 = vector.extract_strided_slice %37 {offsets = [0, 0], sizes = [8, 256], strides = [1, 1]} : vector<8x512xf32> to vector<8x256xf32>
    %39 = vector.extract_strided_slice %37 {offsets = [0, 256], sizes = [8, 256], strides = [1, 1]} : vector<8x512xf32> to vector<8x256xf32>
    %cst = arith.constant 0.000000e+00 : f32
    %40 = vector.broadcast %cst : f32 to vector<9x256xf32>
    %c0_11 = arith.constant 0 : index
    %c0_12 = arith.constant 0 : index
    %41 = vector.load %arg8[%c0_11, %c0_12] : memref<9x256xf32, #tpu.memory_space<vmem>>, vector<9x256xf32>
    tpu.vector_store %arg8[%c0_11, %c0_12], %40 {strides = array<i32>} : memref<9x256xf32, #tpu.memory_space<vmem>>, vector<9x256xf32>,
    %c1 = arith.constant 1 : index
    %c0_13 = arith.constant 0 : index
    %42 = vector.load %arg8[%c1, %c0_13] : memref<9x256xf32, #tpu.memory_space<vmem>>, vector<8x256xf32>
    tpu.vector_store %arg8[%c1, %c0_13], %39 {strides = array<i32>} : memref<9x256xf32, #tpu.memory_space<vmem>>, vector<8x256xf32>,
    %c0_14 = arith.constant 0 : index
    %c0_15 = arith.constant 0 : index
    %43 = vector.load %arg8[%c0_14, %c0_15] : memref<9x256xf32, #tpu.memory_space<vmem>>, vector<8x256xf32>
    %cst_16 = arith.constant 0.000000e+00 : f32
    %44 = vector.shape_cast %18 : vector<8x1xi1> to vector<8x1xi1>
    %45 = vector.broadcast %44 : vector<8x1xi1> to vector<8x256xi1>
    %46 = vector.broadcast %cst_16 : f32 to vector<8x256xf32>
    %47 = arith.select %45, %46, %43 : vector<8x256xi1>, vector<8x256xf32>
    %c0_17 = arith.constant 0 : index
    %c0_18 = arith.constant 0 : index
    %c0_19 = arith.constant 0 : index
    %48 = vector.load %arg1[%c0_17, %c0_18, %c0_19] : memref<3x256x512xbf16, #tpu.memory_space<vmem>>, vector<1x256x512xbf16>
    %49 = vector.shape_cast %48 : vector<1x256x512xbf16> to vector<256x512xbf16>
    %50 = arith.truncf %47 : vector<8x256xf32> to vector<8x256xbf16>
    %cst_20 = arith.constant dense<0.000000e+00> : vector<8x512xf32>
    %51 = tpu.matmul %50, %49, %cst_20 {dimension_numbers = #tpu.dot_dimension_numbers<[1], [0], [0], [1], [0, 0, 1, 1], [], []>} : vector<8x256xbf16>, vector<256x512xbf16>, vector<8x512xf32> -> vector<8x512xf32>
    %c1_21 = arith.constant 1 : index
    %c0_22 = arith.constant 0 : index
    %c0_23 = arith.constant 0 : index
    %52 = vector.load %arg1[%c1_21, %c0_22, %c0_23] : memref<3x256x512xbf16, #tpu.memory_space<vmem>>, vector<1x256x512xbf16>
    %53 = vector.shape_cast %52 : vector<1x256x512xbf16> to vector<256x512xbf16>
    %54 = arith.truncf %38 : vector<8x256xf32> to vector<8x256xbf16>
    %cst_24 = arith.constant dense<0.000000e+00> : vector<8x512xf32>
    %55 = tpu.matmul %54, %53, %cst_24 {dimension_numbers = #tpu.dot_dimension_numbers<[1], [0], [0], [1], [0, 0, 1, 1], [], []>} : vector<8x256xbf16>, vector<256x512xbf16>, vector<8x512xf32> -> vector<8x512xf32>
    %56 = arith.addf %51, %55 : vector<8x512xf32>
    %c2 = arith.constant 2 : index
    %c0_25 = arith.constant 0 : index
    %c0_26 = arith.constant 0 : index
    %57 = vector.load %arg1[%c2, %c0_25, %c0_26] : memref<3x256x512xbf16, #tpu.memory_space<vmem>>, vector<1x256x512xbf16>
    %58 = vector.shape_cast %57 : vector<1x256x512xbf16> to vector<256x512xbf16>
    %59 = arith.truncf %39 : vector<8x256xf32> to vector<8x256xbf16>
    %cst_27 = arith.constant dense<0.000000e+00> : vector<8x512xf32>
    %60 = tpu.matmul %59, %58, %cst_27 {dimension_numbers = #tpu.dot_dimension_numbers<[1], [0], [0], [1], [0, 0, 1, 1], [], []>} : vector<8x256xbf16>, vector<256x512xbf16>, vector<8x512xf32> -> vector<8x512xf32>
    %61 = arith.addf %56, %60 : vector<8x512xf32>
    %c0_28 = arith.constant 0 : index
    %c0_29 = arith.constant 0 : index
    %62 = vector.load %arg2[%c0_28, %c0_29] : memref<2x512xf32, #tpu.memory_space<vmem>>, vector<2x512xf32>
    %cst_30 = arith.constant dense<0.000000e+00> : vector<512xf32>
    %63 = vector.multi_reduction <add>, %61, %cst_30 [0] : vector<8x512xf32> to vector<512xf32>
    %64 = vector.shape_cast %63 : vector<512xf32> to vector<1x512xf32>
    %cst_31 = arith.constant 8.000000e+00 : f32
    %65 = vector.broadcast %cst_31 : f32 to vector<1x512xf32>
    %66 = arith.divf %64, %65 : vector<1x512xf32>
    %67 = vector.broadcast %66 : vector<1x512xf32> to vector<8x512xf32>
    %68 = arith.subf %61, %67 : vector<8x512xf32>
    %69 = arith.mulf %68, %68 : vector<8x512xf32>
    %cst_32 = arith.constant dense<0.000000e+00> : vector<512xf32>
    %70 = vector.multi_reduction <add>, %69, %cst_32 [0] : vector<8x512xf32> to vector<512xf32>
    %71 = vector.shape_cast %70 : vector<512xf32> to vector<1x512xf32>
    %cst_33 = arith.constant 8.000000e+00 : f32
    %72 = vector.broadcast %cst_33 : f32 to vector<1x512xf32>
    %73 = arith.divf %71, %72 : vector<1x512xf32>
    %74 = vector.broadcast %66 : vector<1x512xf32> to vector<8x512xf32>
    %75 = arith.subf %61, %74 : vector<8x512xf32>
    %cst_34 = arith.constant 9.99999974E-6 : f32
    %76 = vector.broadcast %cst_34 : f32 to vector<1x512xf32>
    %77 = arith.addf %73, %76 : vector<1x512xf32>
    %78 = math.rsqrt %77 : vector<1x512xf32>
    %79 = vector.broadcast %78 : vector<1x512xf32> to vector<8x512xf32>
    %80 = arith.mulf %75, %79 : vector<8x512xf32>
    %81 = vector.extract_strided_slice %62 {offsets = [0, 0], sizes = [1, 512], strides = [1, 1]} : vector<2x512xf32> to vector<1x512xf32>
    %82 = vector.broadcast %81 : vector<1x512xf32> to vector<8x512xf32>
    %83 = arith.mulf %80, %82 : vector<8x512xf32>
    %84 = vector.extract_strided_slice %62 {offsets = [1, 0], sizes = [1, 512], strides = [1, 1]} : vector<2x512xf32> to vector<1x512xf32>
    %85 = vector.broadcast %84 : vector<1x512xf32> to vector<8x512xf32>
    %86 = arith.addf %83, %85 : vector<8x512xf32>
    %cst_35 = arith.constant 0.000000e+00 : f32
    %87 = vector.broadcast %cst_35 : f32 to vector<8x512xf32>
    %88 = arith.maximumf %86, %87 : vector<8x512xf32>
    %cst_36 = arith.constant 0.000000e+00 : f32
    %89 = vector.broadcast %cst_36 : f32 to vector<10x512xf32>
    %c0_37 = arith.constant 0 : index
    %c0_38 = arith.constant 0 : index
    %90 = vector.load %arg9[%c0_37, %c0_38] : memref<10x512xf32, #tpu.memory_space<vmem>>, vector<10x512xf32>
    tpu.vector_store %arg9[%c0_37, %c0_38], %89 {strides = array<i32>} : memref<10x512xf32, #tpu.memory_space<vmem>>, vector<10x512xf32>,
    %c1_39 = arith.constant 1 : index
    %c0_40 = arith.constant 0 : index
    %91 = vector.load %arg9[%c1_39, %c0_40] : memref<10x512xf32, #tpu.memory_space<vmem>>, vector<8x512xf32>
    tpu.vector_store %arg9[%c1_39, %c0_40], %88 {strides = array<i32>} : memref<10x512xf32, #tpu.memory_space<vmem>>, vector<8x512xf32>,
    %c0_41 = arith.constant 0 : index
    %c0_42 = arith.constant 0 : index
    %92 = vector.load %arg9[%c0_41, %c0_42] : memref<10x512xf32, #tpu.memory_space<vmem>>, vector<8x512xf32>
    %cst_43 = arith.constant 0.000000e+00 : f32
    %93 = vector.shape_cast %18 : vector<8x1xi1> to vector<8x1xi1>
    %94 = vector.broadcast %93 : vector<8x1xi1> to vector<8x512xi1>
    %95 = vector.broadcast %cst_43 : f32 to vector<8x512xf32>
    %96 = arith.select %94, %95, %92 : vector<8x512xi1>, vector<8x512xf32>
    %c2_44 = arith.constant 2 : index
    %c0_45 = arith.constant 0 : index
    %97 = vector.load %arg9[%c2_44, %c0_45] : memref<10x512xf32, #tpu.memory_space<vmem>>, vector<8x512xf32>
    %cst_46 = arith.constant 0.000000e+00 : f32
    %98 = vector.shape_cast %36 : vector<8x1xi1> to vector<8x1xi1>
    %99 = vector.broadcast %98 : vector<8x1xi1> to vector<8x512xi1>
    %100 = vector.broadcast %cst_46 : f32 to vector<8x512xf32>
    %101 = arith.select %99, %100, %97 : vector<8x512xi1>, vector<8x512xf32>
    %c0_47 = arith.constant 0 : index
    %c0_48 = arith.constant 0 : index
    %c0_49 = arith.constant 0 : index
    %102 = vector.load %arg3[%c0_47, %c0_48, %c0_49] : memref<3x512x512xbf16, #tpu.memory_space<vmem>>, vector<1x512x512xbf16>
    %103 = vector.shape_cast %102 : vector<1x512x512xbf16> to vector<512x512xbf16>
    %104 = arith.truncf %96 : vector<8x512xf32> to vector<8x512xbf16>
    %cst_50 = arith.constant dense<0.000000e+00> : vector<8x512xf32>
    %105 = tpu.matmul %104, %103, %cst_50 {dimension_numbers = #tpu.dot_dimension_numbers<[1], [0], [0], [1], [0, 0, 1, 1], [], []>} : vector<8x512xbf16>, vector<512x512xbf16>, vector<8x512xf32> -> vector<8x512xf32>
    %c1_51 = arith.constant 1 : index
    %c0_52 = arith.constant 0 : index
    %c0_53 = arith.constant 0 : index
    %106 = vector.load %arg3[%c1_51, %c0_52, %c0_53] : memref<3x512x512xbf16, #tpu.memory_space<vmem>>, vector<1x512x512xbf16>
    %107 = vector.shape_cast %106 : vector<1x512x512xbf16> to vector<512x512xbf16>
    %108 = arith.truncf %88 : vector<8x512xf32> to vector<8x512xbf16>
    %cst_54 = arith.constant dense<0.000000e+00> : vector<8x512xf32>
    %109 = tpu.matmul %108, %107, %cst_54 {dimension_numbers = #tpu.dot_dimension_numbers<[1], [0], [0], [1], [0, 0, 1, 1], [], []>} : vector<8x512xbf16>, vector<512x512xbf16>, vector<8x512xf32> -> vector<8x512xf32>
    %110 = arith.addf %105, %109 : vector<8x512xf32>
    %c2_55 = arith.constant 2 : index
    %c0_56 = arith.constant 0 : index
    %c0_57 = arith.constant 0 : index
    %111 = vector.load %arg3[%c2_55, %c0_56, %c0_57] : memref<3x512x512xbf16, #tpu.memory_space<vmem>>, vector<1x512x512xbf16>
    %112 = vector.shape_cast %111 : vector<1x512x512xbf16> to vector<512x512xbf16>
    %113 = arith.truncf %101 : vector<8x512xf32> to vector<8x512xbf16>
    %cst_58 = arith.constant dense<0.000000e+00> : vector<8x512xf32>
    %114 = tpu.matmul %113, %112, %cst_58 {dimension_numbers = #tpu.dot_dimension_numbers<[1], [0], [0], [1], [0, 0, 1, 1], [], []>} : vector<8x512xbf16>, vector<512x512xbf16>, vector<8x512xf32> -> vector<8x512xf32>
    %115 = arith.addf %110, %114 : vector<8x512xf32>
    %c0_59 = arith.constant 0 : index
    %c0_60 = arith.constant 0 : index
    %116 = vector.load %arg4[%c0_59, %c0_60] : memref<2x512xf32, #tpu.memory_space<vmem>>, vector<2x512xf32>
    %cst_61 = arith.constant dense<0.000000e+00> : vector<512xf32>
    %117 = vector.multi_reduction <add>, %115, %cst_61 [0] : vector<8x512xf32> to vector<512xf32>
    %118 = vector.shape_cast %117 : vector<512xf32> to vector<1x512xf32>
    %cst_62 = arith.constant 8.000000e+00 : f32
    %119 = vector.broadcast %cst_62 : f32 to vector<1x512xf32>
    %120 = arith.divf %118, %119 : vector<1x512xf32>
    %121 = vector.broadcast %120 : vector<1x512xf32> to vector<8x512xf32>
    %122 = arith.subf %115, %121 : vector<8x512xf32>
    %123 = arith.mulf %122, %122 : vector<8x512xf32>
    %cst_63 = arith.constant dense<0.000000e+00> : vector<512xf32>
    %124 = vector.multi_reduction <add>, %123, %cst_63 [0] : vector<8x512xf32> to vector<512xf32>
    %125 = vector.shape_cast %124 : vector<512xf32> to vector<1x512xf32>
    %cst_64 = arith.constant 8.000000e+00 : f32
    %126 = vector.broadcast %cst_64 : f32 to vector<1x512xf32>
    %127 = arith.divf %125, %126 : vector<1x512xf32>
    %128 = vector.broadcast %120 : vector<1x512xf32> to vector<8x512xf32>
    %129 = arith.subf %115, %128 : vector<8x512xf32>
    %cst_65 = arith.constant 9.99999974E-6 : f32
    %130 = vector.broadcast %cst_65 : f32 to vector<1x512xf32>
    %131 = arith.addf %127, %130 : vector<1x512xf32>
    %132 = math.rsqrt %131 : vector<1x512xf32>
    %133 = vector.broadcast %132 : vector<1x512xf32> to vector<8x512xf32>
    %134 = arith.mulf %129, %133 : vector<8x512xf32>
    %135 = vector.extract_strided_slice %116 {offsets = [0, 0], sizes = [1, 512], strides = [1, 1]} : vector<2x512xf32> to vector<1x512xf32>
    %136 = vector.broadcast %135 : vector<1x512xf32> to vector<8x512xf32>
    %137 = arith.mulf %134, %136 : vector<8x512xf32>
    %138 = vector.extract_strided_slice %116 {offsets = [1, 0], sizes = [1, 512], strides = [1, 1]} : vector<2x512xf32> to vector<1x512xf32>
    %139 = vector.broadcast %138 : vector<1x512xf32> to vector<8x512xf32>
    %140 = arith.addf %137, %139 : vector<8x512xf32>
    %c0_66 = arith.constant 0 : index
    %c0_67 = arith.constant 0 : index
    %141 = vector.load %arg5[%c0_66, %c0_67] : memref<256x512xbf16, #tpu.memory_space<vmem>>, vector<256x512xbf16>
    %142 = arith.truncf %38 : vector<8x256xf32> to vector<8x256xbf16>
    %cst_68 = arith.constant dense<0.000000e+00> : vector<8x512xf32>
    %143 = tpu.matmul %142, %141, %cst_68 {dimension_numbers = #tpu.dot_dimension_numbers<[1], [0], [0], [1], [0, 0, 1, 1], [], []>} : vector<8x256xbf16>, vector<256x512xbf16>, vector<8x512xf32> -> vector<8x512xf32>
    %c0_69 = arith.constant 0 : index
    %c0_70 = arith.constant 0 : index
    %144 = vector.load %arg6[%c0_69, %c0_70] : memref<2x512xf32, #tpu.memory_space<vmem>>, vector<2x512xf32>
    %cst_71 = arith.constant dense<0.000000e+00> : vector<512xf32>
    %145 = vector.multi_reduction <add>, %143, %cst_71 [0] : vector<8x512xf32> to vector<512xf32>
    %146 = vector.shape_cast %145 : vector<512xf32> to vector<1x512xf32>
    %cst_72 = arith.constant 8.000000e+00 : f32
    %147 = vector.broadcast %cst_72 : f32 to vector<1x512xf32>
    %148 = arith.divf %146, %147 : vector<1x512xf32>
    %149 = vector.broadcast %148 : vector<1x512xf32> to vector<8x512xf32>
    %150 = arith.subf %143, %149 : vector<8x512xf32>
    %151 = arith.mulf %150, %150 : vector<8x512xf32>
    %cst_73 = arith.constant dense<0.000000e+00> : vector<512xf32>
    %152 = vector.multi_reduction <add>, %151, %cst_73 [0] : vector<8x512xf32> to vector<512xf32>
    %153 = vector.shape_cast %152 : vector<512xf32> to vector<1x512xf32>
    %cst_74 = arith.constant 8.000000e+00 : f32
    %154 = vector.broadcast %cst_74 : f32 to vector<1x512xf32>
    %155 = arith.divf %153, %154 : vector<1x512xf32>
    %156 = vector.broadcast %148 : vector<1x512xf32> to vector<8x512xf32>
    %157 = arith.subf %143, %156 : vector<8x512xf32>
    %cst_75 = arith.constant 9.99999974E-6 : f32
    %158 = vector.broadcast %cst_75 : f32 to vector<1x512xf32>
    %159 = arith.addf %155, %158 : vector<1x512xf32>
    %160 = math.rsqrt %159 : vector<1x512xf32>
    %161 = vector.broadcast %160 : vector<1x512xf32> to vector<8x512xf32>
    %162 = arith.mulf %157, %161 : vector<8x512xf32>
    %163 = vector.extract_strided_slice %144 {offsets = [0, 0], sizes = [1, 512], strides = [1, 1]} : vector<2x512xf32> to vector<1x512xf32>
    %164 = vector.broadcast %163 : vector<1x512xf32> to vector<8x512xf32>
    %165 = arith.mulf %162, %164 : vector<8x512xf32>
    %166 = vector.extract_strided_slice %144 {offsets = [1, 0], sizes = [1, 512], strides = [1, 1]} : vector<2x512xf32> to vector<1x512xf32>
    %167 = vector.broadcast %166 : vector<1x512xf32> to vector<8x512xf32>
    %168 = arith.addf %165, %167 : vector<8x512xf32>
    %169 = arith.addf %140, %168 : vector<8x512xf32>
    %cst_76 = arith.constant 0.000000e+00 : f32
    %170 = vector.broadcast %cst_76 : f32 to vector<8x512xf32>
    %171 = arith.maximumf %169, %170 : vector<8x512xf32>
    %c0_77 = arith.constant 0 : index
    %c0_78 = arith.constant 0 : index
    %172 = vector.load %arg7[%c0_77, %c0_78] : memref<8x512xf32, #tpu.memory_space<vmem>>, vector<8x512xf32>
    tpu.vector_store %arg7[%c0_77, %c0_78], %171 {strides = array<i32>} : memref<8x512xf32, #tpu.memory_space<vmem>>, vector<8x512xf32>,
    return
  }
}

module attributes {stable_mosaic.version = 11 : i64} {
  func.func @_head_kernel(%arg0: memref<8x512xf32, #tpu.memory_space<vmem>>, %arg1: memref<2x8xf32, #tpu.memory_space<vmem>>, %arg2: memref<512x4xf32, #tpu.memory_space<vmem>>, %arg3: memref<1x4xf32, #tpu.memory_space<vmem>>, %arg4: memref<2x4xf32, #tpu.memory_space<vmem>>) attributes {dimension_semantics = [], scalar_prefetch = 0 : i64, scratch_operands = 0 : i64, tpu.core_type = #tpu.core_type<tc>} {
    %c0 = arith.constant 0 : index
    %c0_0 = arith.constant 0 : index
    %0 = vector.load %arg1[%c0, %c0_0] : memref<2x8xf32, #tpu.memory_space<vmem>>, vector<2x8xf32>
    %c0_1 = arith.constant 0 : index
    %c0_2 = arith.constant 0 : index
    %1 = vector.load %arg0[%c0_1, %c0_2] : memref<8x512xf32, #tpu.memory_space<vmem>>, vector<8x512xf32>
    %cst = arith.constant dense<0.000000e+00> : vector<2x512xf32>
    %2 = tpu.matmul %0, %1, %cst {dimension_numbers = #tpu.dot_dimension_numbers<[1], [0], [0], [1], [0, 0, 1, 1], [], []>} : vector<2x8xf32>, vector<8x512xf32>, vector<2x512xf32> -> vector<2x512xf32>
    %c0_3 = arith.constant 0 : index
    %c0_4 = arith.constant 0 : index
    %3 = vector.load %arg2[%c0_3, %c0_4] : memref<512x4xf32, #tpu.memory_space<vmem>>, vector<512x4xf32>
    %cst_5 = arith.constant dense<0.000000e+00> : vector<2x4xf32>
    %4 = tpu.matmul %2, %3, %cst_5 {dimension_numbers = #tpu.dot_dimension_numbers<[1], [0], [0], [1], [0, 0, 1, 1], [], []>} : vector<2x512xf32>, vector<512x4xf32>, vector<2x4xf32> -> vector<2x4xf32>
    %c0_6 = arith.constant 0 : index
    %c0_7 = arith.constant 0 : index
    %5 = vector.load %arg3[%c0_6, %c0_7] : memref<1x4xf32, #tpu.memory_space<vmem>>, vector<1x4xf32>
    %6 = vector.broadcast %5 : vector<1x4xf32> to vector<2x4xf32>
    %7 = arith.addf %4, %6 : vector<2x4xf32>
    %c0_8 = arith.constant 0 : index
    %c0_9 = arith.constant 0 : index
    %8 = vector.load %arg4[%c0_8, %c0_9] : memref<2x4xf32, #tpu.memory_space<vmem>>, vector<2x4xf32>
    tpu.vector_store %arg4[%c0_8, %c0_9], %7 {strides = array<i32>} : memref<2x4xf32, #tpu.memory_space<vmem>>, vector<2x4xf32>,
    return
  }
}

</mosaic_0001>

<llo_original>
// kernel: _lambda_.6
$region0: #{_lambda_.6}
  #allocation0 [shape = 'u32[]', space=smem, size = 0x4, offset = 0x4, fixed_abs, tag = 'smem constant byte address 0x4 - core index']
  #allocation1 [shape = 'u32[144,128]{1,0:T(1,128)}', space=vmem, size = 0x12000, scoped, tag = 'internal scratch']
  #allocation2 [shape = 'f32[33,64]{1,0:T(8,128)}', space=vmem, size = 0x5000, scoped, tag = 'scratch operand']
  %s0 = inlined_call_operand.vmem [shape: f32[128,7], index: 0, kind: input, shape index: {}]
  %s1 = inlined_call_operand.vmem [shape: bf16[7,64], index: 1, kind: input, shape index: {}]
  %s2 = inlined_call_operand.vmem [shape: f32[2,64], index: 2, kind: input, shape index: {}]
  %s3 = inlined_call_operand.vmem [shape: f32[64,64], index: 3, kind: output, shape index: {}]
  %s4 = sld [smem:[#allocation0]]
  $region22: #{_lambda_.6} parent=0
    _
  %s6 = ssub.s32 1, %s4
  %s7 = scalar_select 0, %s6, %s4
  // Predicated region
  $region2: #{_lambda_.6} parent=0 // pred_check
    _
  $region3: #{_lambda_.6} parent=0 // pred_check_branch
    %9 = sbr.rel (0) target = $region5
  $region4: #{_lambda_.6} parent=0 // pred_region
    _
  $region5: #{_lambda_.6} parent=0 // pred_fallthru
    _
  // Predicated region
  $region6: #{_lambda_.6} parent=0 // pred_check
    _
  $region7: #{_lambda_.6} parent=0 // pred_check_branch
    %11 = sbr.rel (0) target = $region9
  $region8: #{_lambda_.6} parent=0 // pred_region
    _
  $region9: #{_lambda_.6} parent=0 // pred_fallthru
    _
  // Predicated region
  $region10: #{_lambda_.6} parent=0 // pred_check
    _
  $region11: #{_lambda_.6} parent=0 // pred_check_branch
    %13 = sbr.rel (0) target = $region13
  $region12: #{_lambda_.6} parent=0 // pred_region
    _
  $region13: #{_lambda_.6} parent=0 // pred_fallthru
    _
  %v15 = vld [vmem:[%s0] sm:$0xff]
  %v16 = vld [vmem:[%s0 + $0x8] sm:$0xff]
  %v17 = vld [vmem:[%s0 + $0x10] sm:$0xff]
  %v18 = vld [vmem:[%s0 + $0x18] sm:$0xff]
  %v19 = vld [vmem:[%s0 + $0x20] sm:$0xff]
  %v20 = vld [vmem:[%s0 + $0x28] sm:$0xff]
  %v21 = vld [vmem:[%s0 + $0x30] sm:$0xff]
  %v22 = vld [vmem:[%s0 + $0x38] sm:$0xff]
  %v23 = vld [vmem:[%s0 + $0x40] sm:$0xff]
  %v24 = vld [vmem:[%s0 + $0x48] sm:$0xff]
  %v25 = vld [vmem:[%s0 + $0x50] sm:$0xff]
  %v26 = vld [vmem:[%s0 + $0x58] sm:$0xff]
  %v27 = vld [vmem:[%s0 + $0x60] sm:$0xff]
  %v28 = vld [vmem:[%s0 + $0x68] sm:$0xff]
  %v29 = vld [vmem:[%s0 + $0x70] sm:$0xff]
  %v30 = vld [vmem:[%s0 + $0x78] sm:$0xff]
  %v31 = vpack.c.bf16 %v16, %v15
  %v32 = vpack.c.bf16 %v18, %v17
  %v33 = vpack.c.bf16 %v20, %v19
  %v34 = vpack.c.bf16 %v22, %v21
  %v35 = vpack.c.bf16 %v24, %v23
  %v36 = vpack.c.bf16 %v26, %v25
  %v37 = vpack.c.bf16 %v28, %v27
  %v38 = vpack.c.bf16 %v30, %v29
  %v39 = vld [vmem:[%s1] sm:$0xf]
  %vm40 = vcmask 56320
  %v42 = vsel %vm40, %v31, 0
  %v45 = vsel %vm40, %v32, 0
  %v48 = vsel %vm40, %v33, 0
  %v51 = vsel %vm40, %v34, 0
  %v54 = vsel %vm40, %v35, 0
  %v57 = vsel %vm40, %v36, 0
  %v60 = vsel %vm40, %v37, 0
  %v63 = vsel %vm40, %v38, 0
  %vm65 = vcmask 1042432
  %vm66 = vcmask 1043456
  %v67 = vsel %vm65, 4294967295, 65535
  %v68 = vsel %vm66, %v67, 0
  %v70 = vand.u32 %v39, %v68
  %72 = vmatprep.subr.bf16.mxu0 0
  %73 = vmatpush1.bf16.msra.mxu0 %v70
  %74 = vmatprep.subr.bf16.mxu0 0
  %75 = vmatpush1.bf16.msra.mxu0 0
  %76 = vmatprep.subr.bf16.mxu0 0
  %77 = vmatpush1.bf16.msra.mxu0 0
  %78 = vmatprep.subr.bf16.mxu0 0
  %79 = vmatpush1.bf16.msra.mxu0 0
  %80 = vmatprep.subr.bf16.mxu0 0
  %81 = vmatpush1.bf16.msra.mxu0 0
  %82 = vmatprep.subr.bf16.mxu0 0
  %83 = vmatpush1.bf16.msra.mxu0 0
  %84 = vmatprep.subr.bf16.mxu0 0
  %85 = vmatpush1.bf16.msra.mxu0 0
  %86 = vmatprep.subr.bf16.mxu0 0
  %87 = vmatpush1.bf16.msra.mxu0 0
  %88 = vmatprep.subr.bf16.mxu0 0
  %89 = vmatpush1.bf16.msra.mxu0 0
  %90 = vmatprep.subr.bf16.mxu0 0
  %91 = vmatpush1.bf16.msra.mxu0 0
  %92 = vmatprep.subr.bf16.mxu0 0
  %93 = vmatpush1.bf16.msra.mxu0 0
  %94 = vmatprep.subr.bf16.mxu0 0
  %95 = vmatpush1.bf16.msra.mxu0 0
  %96 = vmatprep.subr.bf16.mxu0 0
  %97 = vmatpush1.bf16.msra.mxu0 0
  %98 = vmatprep.subr.bf16.mxu0 0
  %99 = vmatpush1.bf16.msra.mxu0 0
  %100 = vmatprep.subr.bf16.mxu0 0
  %101 = vmatpush1.bf16.msra.mxu0 0
  %102 = vmatprep.subr.bf16.mxu0 0
  %103 = vmatpush1.bf16.msra.mxu0 0
  %104 = vmatprep.mubr.bf16.mxu0 0
  %105 = vmatmul.mubr.bf16.gmra.mrb[0].mxu0 %v42
  %v106 = vpop.f32.mrb[0].mxu0
  %v107 = vadd.f32 0.0, %v106
  %v108 = vpop.f32.mrb[0].mxu0
  %v109 = vpop.f32.mrb[0].mxu0
  %v110 = vadd.f32 0.0, %v109
  %v111 = vpop.f32.mrb[0].mxu0
  %112 = vmatprep.mubr.bf16.mxu0 0
  %113 = vmatmul.mubr.bf16.gmra.mrb[0].mxu0 %v45
  %v114 = vpop.f32.mrb[0].mxu0
  %v115 = vadd.f32 0.0, %v114
  %v116 = vpop.f32.mrb[0].mxu0
  %v117 = vpop.f32.mrb[0].mxu0
  %v118 = vadd.f32 0.0, %v117
  %v119 = vpop.f32.mrb[0].mxu0
  %120 = vmatprep.mubr.bf16.mxu0 0
  %121 = vmatmul.mubr.bf16.gmra.mrb[0].mxu0 %v48
  %v122 = vpop.f32.mrb[0].mxu0
  %v123 = vadd.f32 0.0, %v122
  %v124 = vpop.f32.mrb[0].mxu0
  %v125 = vpop.f32.mrb[0].mxu0
  %v126 = vadd.f32 0.0, %v125
  %v127 = vpop.f32.mrb[0].mxu0
  %128 = vmatprep.mubr.bf16.mxu0 0
  %129 = vmatmul.mubr.bf16.gmra.mrb[0].mxu0 %v51
  %v130 = vpop.f32.mrb[0].mxu0
  %v131 = vadd.f32 0.0, %v130
  %v132 = vpop.f32.mrb[0].mxu0
  %v133 = vpop.f32.mrb[0].mxu0
  %v134 = vadd.f32 0.0, %v133
  %v135 = vpop.f32.mrb[0].mxu0
  %136 = vmatprep.mubr.bf16.mxu0 0
  %137 = vmatmul.mubr.bf16.gmra.mrb[0].mxu0 %v54
  %v138 = vpop.f32.mrb[0].mxu0
  %v139 = vadd.f32 0.0, %v138
  %v140 = vpop.f32.mrb[0].mxu0
  %v141 = vpop.f32.mrb[0].mxu0
  %v142 = vadd.f32 0.0, %v141
  %v143 = vpop.f32.mrb[0].mxu0
  %144 = vmatprep.mubr.bf16.mxu0 0
  %145 = vmatmul.mubr.bf16.gmra.mrb[0].mxu0 %v57
  %v146 = vpop.f32.mrb[0].mxu0
  %v147 = vadd.f32 0.0, %v146
  %v148 = vpop.f32.mrb[0].mxu0
  %v149 = vpop.f32.mrb[0].mxu0
  %v150 = vadd.f32 0.0, %v149
  %v151 = vpop.f32.mrb[0].mxu0
  %152 = vmatprep.mubr.bf16.mxu0 0
  %153 = vmatmul.mubr.bf16.gmra.mrb[0].mxu0 %v60
  %v154 = vpop.f32.mrb[0].mxu0
  %v155 = vadd.f32 0.0, %v154
  %v156 = vpop.f32.mrb[0].mxu0
  %v157 = vpop.f32.mrb[0].mxu0
  %v158 = vadd.f32 0.0, %v157
  %v159 = vpop.f32.mrb[0].mxu0
  %160 = vmatprep.mubr.bf16.mxu0 0
  %161 = vmatmul.mubr.bf16.gmra.mrb[0].mxu0 %v63
  %v162 = vpop.f32.mrb[0].mxu0
  %v163 = vadd.f32 0.0, %v162
  %v164 = vpop.f32.mrb[0].mxu0
  %v165 = vpop.f32.mrb[0].mxu0
  %v166 = vadd.f32 0.0, %v165
  %v167 = vpop.f32.mrb[0].mxu0
  %168 = vdwg.mxu0
  %v169 = vld [vmem:[%s2] sm:$0x3]
  %vm170 = vcmask 523264
  %v171 = vsel %vm170, %v107, 0.0
  %v172 = vsel %vm170, %v110, 0.0
  %v173 = vadd.f32 %v171, %v172
  %v174 = vsel %vm170, %v115, 0.0
  %v175 = vadd.f32 %v173, %v174
  %v176 = vsel %vm170, %v118, 0.0
  %v177 = vadd.f32 %v175, %v176
  %v178 = vsel %vm170, %v123, 0.0
  %v179 = vadd.f32 %v177, %v178
  %v180 = vsel %vm170, %v126, 0.0
  %v181 = vadd.f32 %v179, %v180
  %v182 = vsel %vm170, %v131, 0.0
  %v183 = vadd.f32 %v181, %v182
  %v184 = vsel %vm170, %v134, 0.0
  %v185 = vadd.f32 %v183, %v184
  %v186 = vsel %vm170, %v139, 0.0
  %v187 = vadd.f32 %v185, %v186
  %v188 = vsel %vm170, %v142, 0.0
  %v189 = vadd.f32 %v187, %v188
  %v190 = vsel %vm170, %v147, 0.0
  %v191 = vadd.f32 %v189, %v190
  %v192 = vsel %vm170, %v150, 0.0
  %v193 = vadd.f32 %v191, %v192
  %v194 = vsel %vm170, %v155, 0.0
  %v195 = vadd.f32 %v193, %v194
  %v196 = vsel %vm170, %v158, 0.0
  %v197 = vadd.f32 %v195, %v196
  %v198 = vsel %vm170, %v163, 0.0
  %v199 = vadd.f32 %v197, %v198
  %v200 = vsel %vm170, %v166, 0.0
  %v201 = vadd.f32 %v199, %v200
  %v202 = vrot.slane %v201, 4
  %v203 = vadd.f32 %v201, %v202
  %v204 = vrot.slane %v203, 2
  %v205 = vadd.f32 %v203, %v204
  %v206 = vrot.slane %v205, 1
  %v207 = vadd.f32 %v205, %v206
  %v208 = vrcp.pop 128.0
  %v209 = vmul.f32 %v207, %v208
  %v210 = vsub.f32 %v107, %v209
  %v211 = vsub.f32 %v110, %v209
  %v212 = vsub.f32 %v115, %v209
  %v213 = vsub.f32 %v118, %v209
  %v214 = vsub.f32 %v123, %v209
  %v215 = vsub.f32 %v126, %v209
  %v216 = vsub.f32 %v131, %v209
  %v217 = vsub.f32 %v134, %v209
  %v218 = vsub.f32 %v139, %v209
  %v219 = vsub.f32 %v142, %v209
  %v220 = vsub.f32 %v147, %v209
  %v221 = vsub.f32 %v150, %v209
  %v222 = vsub.f32 %v155, %v209
  %v223 = vsub.f32 %v158, %v209
  %v224 = vsub.f32 %v163, %v209
  %v225 = vsub.f32 %v166, %v209
  %v226 = vmul.f32 %v210, %v210
  %v227 = vmul.f32 %v211, %v211
  %v228 = vmul.f32 %v212, %v212
  %v229 = vmul.f32 %v213, %v213
  %v230 = vmul.f32 %v214, %v214
  %v231 = vmul.f32 %v215, %v215
  %v232 = vmul.f32 %v216, %v216
  %v233 = vmul.f32 %v217, %v217
  %v234 = vmul.f32 %v218, %v218
  %v235 = vmul.f32 %v219, %v219
  %v236 = vmul.f32 %v220, %v220
  %v237 = vmul.f32 %v221, %v221
  %v238 = vmul.f32 %v222, %v222
  %v239 = vmul.f32 %v223, %v223
  %v240 = vmul.f32 %v224, %v224
  %v241 = vmul.f32 %v225, %v225
  %v242 = vsel %vm170, %v226, 0.0
  %v243 = vsel %vm170, %v227, 0.0
  %v244 = vadd.f32 %v242, %v243
  %v245 = vsel %vm170, %v228, 0.0
  %v246 = vadd.f32 %v244, %v245
  %v247 = vsel %vm170, %v229, 0.0
  %v248 = vadd.f32 %v246, %v247
  %v249 = vsel %vm170, %v230, 0.0
  %v250 = vadd.f32 %v248, %v249
  %v251 = vsel %vm170, %v231, 0.0
  %v252 = vadd.f32 %v250, %v251
  %v253 = vsel %vm170, %v232, 0.0
  %v254 = vadd.f32 %v252, %v253
  %v255 = vsel %vm170, %v233, 0.0
  %v256 = vadd.f32 %v254, %v255
  %v257 = vsel %vm170, %v234, 0.0
  %v258 = vadd.f32 %v256, %v257
  %v259 = vsel %vm170, %v235, 0.0
  %v260 = vadd.f32 %v258, %v259
  %v261 = vsel %vm170, %v236, 0.0
  %v262 = vadd.f32 %v260, %v261
  %v263 = vsel %vm170, %v237, 0.0
  %v264 = vadd.f32 %v262, %v263
  %v265 = vsel %vm170, %v238, 0.0
  %v266 = vadd.f32 %v264, %v265
  %v267 = vsel %vm170, %v239, 0.0
  %v268 = vadd.f32 %v266, %v267
  %v269 = vsel %vm170, %v240, 0.0
  %v270 = vadd.f32 %v268, %v269
  %v271 = vsel %vm170, %v241, 0.0
  %v272 = vadd.f32 %v270, %v271
  %v273 = vrot.slane %v272, 4
  %v274 = vadd.f32 %v272, %v273
  %v275 = vrot.slane %v274, 2
  %v276 = vadd.f32 %v274, %v275
  %v277 = vrot.slane %v276, 1
  %v278 = vadd.f32 %v276, %v277
  %v279 = vmul.f32 %v278, %v208
  %v280 = vadd.f32 %v279, 1e-05
  %v281 = vrsqrt.pop %v280
  %v282 = vmul.f32 %v210, %v281
  %v283 = vmul.f32 %v211, %v281
  %v284 = vmul.f32 %v212, %v281
  %v285 = vmul.f32 %v213, %v281
  %v286 = vmul.f32 %v214, %v281
  %v287 = vmul.f32 %v215, %v281
  %v288 = vmul.f32 %v216, %v281
  %v289 = vmul.f32 %v217, %v281
  %v290 = vmul.f32 %v218, %v281
  %v291 = vmul.f32 %v219, %v281
  %v292 = vmul.f32 %v220, %v281
  %v293 = vmul.f32 %v221, %v281
  %v294 = vmul.f32 %v222, %v281
  %v295 = vmul.f32 %v223, %v281
  %v296 = vmul.f32 %v224, %v281
  %v297 = vmul.f32 %v225, %v281
  %v298 = vlaneseq
  %v299 = vshrl.u32 %v298, 7
  %v300 = vsub.s32 0, %v299
  %v301 = vrot.slane %v169, %v300
  %v302 = vmul.f32 %v282, %v301
  %v303 = vmul.f32 %v283, %v301
  %v304 = vmul.f32 %v284, %v301
  %v305 = vmul.f32 %v285, %v301
  %v306 = vmul.f32 %v286, %v301
  %v307 = vmul.f32 %v287, %v301
  %v308 = vmul.f32 %v288, %v301
  %v309 = vmul.f32 %v289, %v301
  %v310 = vmul.f32 %v290, %v301
  %v311 = vmul.f32 %v291, %v301
  %v312 = vmul.f32 %v292, %v301
  %v313 = vmul.f32 %v293, %v301
  %v314 = vmul.f32 %v294, %v301
  %v315 = vmul.f32 %v295, %v301
  %v316 = vmul.f32 %v296, %v301
  %v317 = vmul.f32 %v297, %v301
  %v318 = vlaneseq
  %v319 = vshrl.u32 %v318, 7
  %v320 = vsub.s32 1, %v319
  %v321 = vrot.slane %v169, %v320
  %v322 = vadd.f32 %v302, %v321
  %v323 = vadd.f32 %v303, %v321
  %v324 = vadd.f32 %v304, %v321
  %v325 = vadd.f32 %v305, %v321
  %v326 = vadd.f32 %v306, %v321
  %v327 = vadd.f32 %v307, %v321
  %v328 = vadd.f32 %v308, %v321
  %v329 = vadd.f32 %v309, %v321
  %v330 = vadd.f32 %v310, %v321
  %v331 = vadd.f32 %v311, %v321
  %v332 = vadd.f32 %v312, %v321
  %v333 = vadd.f32 %v313, %v321
  %v334 = vadd.f32 %v314, %v321
  %v335 = vadd.f32 %v315, %v321
  %v336 = vadd.f32 %v316, %v321
  %v337 = vadd.f32 %v317, %v321
  %v338 = vmax.f32 %v322, 0.0
  %v339 = vmax.f32 %v323, 0.0
  %v340 = vmax.f32 %v324, 0.0
  %v341 = vmax.f32 %v325, 0.0
  %v342 = vmax.f32 %v326, 0.0
  %v343 = vmax.f32 %v327, 0.0
  %v344 = vmax.f32 %v328, 0.0
  %v345 = vmax.f32 %v329, 0.0
  %v346 = vmax.f32 %v330, 0.0
  %v347 = vmax.f32 %v331, 0.0
  %v348 = vmax.f32 %v332, 0.0
  %v349 = vmax.f32 %v333, 0.0
  %v350 = vmax.f32 %v334, 0.0
  %v351 = vmax.f32 %v335, 0.0
  %v352 = vmax.f32 %v336, 0.0
  %v353 = vmax.f32 %v337, 0.0
  %354 = vst.msk [vmem:[#allocation2] sm:$0xff] %vm170, 0.0
  %355 = vst.msk [vmem:[#allocation2 + $0x8] sm:$0xff] %vm170, 0.0
  %356 = vst.msk [vmem:[#allocation2 + $0x10] sm:$0xff] %vm170, 0.0
  %357 = vst.msk [vmem:[#allocation2 + $0x18] sm:$0xff] %vm170, 0.0
  %vm358 = vcmask 516096
  %359 = vst.msk [vmem:[#allocation2 + $0x20] sm:$0x1] %vm358, 0.0
  %360 = vst.msk [vmem:[#allocation2 + $0x1] sm:$0xff] %vm170, %v342
  %361 = vst.msk [vmem:[#allocation2 + $0x9] sm:$0xff] %vm170, %v343
  %362 = vst.msk [vmem:[#allocation2 + $0x11] sm:$0xff] %vm170, %v344
  %363 = vst.msk [vmem:[#allocation2 + $0x19] sm:$0xff] %vm170, %v345
  %v364 = vld [vmem:[#allocation2] sm:$0xff]
  %v365 = vld [vmem:[#allocation2 + $0x8] sm:$0xff]
  %v366 = vld [vmem:[#allocation2 + $0x10] sm:$0xff]
  %v367 = vld [vmem:[#allocation2 + $0x18] sm:$0xff]
  %v368 = vmax.f32 %v338, %v342
  %v369 = vmax.f32 %v339, %v343
  %v370 = vmax.f32 %v340, %v344
  %v371 = vmax.f32 %v341, %v345
  %v372 = vmax.f32 %v368, %v364
  %v373 = vmax.f32 %v369, %v365
  %v374 = vmax.f32 %v370, %v366
  %v375 = vmax.f32 %v371, %v367
  %376 = vst.msk [vmem:[%s3] sm:$0xff] %vm170, %v372
  %377 = vst.msk [vmem:[%s3 + $0x8] sm:$0xff] %vm170, %v373
  %378 = vst.msk [vmem:[%s3 + $0x10] sm:$0xff] %vm170, %v374
  %379 = vst.msk [vmem:[%s3 + $0x18] sm:$0xff] %vm170, %v375
  %380 = vst.msk [vmem:[#allocation2] sm:$0xff] %vm170, 0.0
  %381 = vst.msk [vmem:[#allocation2 + $0x8] sm:$0xff] %vm170, 0.0
  %382 = vst.msk [vmem:[#allocation2 + $0x10] sm:$0xff] %vm170, 0.0
  %383 = vst.msk [vmem:[#allocation2 + $0x18] sm:$0xff] %vm170, 0.0
  %384 = vst.msk [vmem:[#allocation2 + $0x20] sm:$0x1] %vm358, 0.0
  %385 = vst.msk [vmem:[#allocation2 + $0x1] sm:$0xff] %vm170, %v350
  %386 = vst.msk [vmem:[#allocation2 + $0x9] sm:$0xff] %vm170, %v351
  %387 = vst.msk [vmem:[#allocation2 + $0x11] sm:$0xff] %vm170, %v352
  %388 = vst.msk [vmem:[#allocation2 + $0x19] sm:$0xff] %vm170, %v353
  %v389 = vld [vmem:[#allocation2] sm:$0xff]
  %v390 = vld [vmem:[#allocation2 + $0x8] sm:$0xff]
  %v391 = vld [vmem:[#allocation2 + $0x10] sm:$0xff]
  %v392 = vld [vmem:[#allocation2 + $0x18] sm:$0xff]
  %v393 = vmax.f32 %v346, %v350
  %v394 = vmax.f32 %v347, %v351
  %v395 = vmax.f32 %v348, %v352
  %v396 = vmax.f32 %v349, %v353
  %v397 = vmax.f32 %v393, %v389
  %v398 = vmax.f32 %v394, %v390
  %v399 = vmax.f32 %v395, %v391
  %v400 = vmax.f32 %v396, %v392
  %401 = vst.msk [vmem:[%s3 + $0x20] sm:$0xff] %vm170, %v397
  %402 = vst.msk [vmem:[%s3 + $0x28] sm:$0xff] %vm170, %v398
  %403 = vst.msk [vmem:[%s3 + $0x30] sm:$0xff] %vm170, %v399
  %404 = vst.msk [vmem:[%s3 + $0x38] sm:$0xff] %vm170, %v400
  // Predicated region
  $region14: #{_lambda_.6} parent=0 // pred_check
    _
  $region15: #{_lambda_.6} parent=0 // pred_check_branch
    %406 = sbr.rel (0) target = $region17
  $region16: #{_lambda_.6} parent=0 // pred_region
    _
  $region17: #{_lambda_.6} parent=0 // pred_fallthru
    _
  // Predicated region
  $region18: #{_lambda_.6} parent=0 // pred_check
    _
  $region19: #{_lambda_.6} parent=0 // pred_check_branch
    %408 = sbr.rel (0) target = $region21
  $region20: #{_lambda_.6} parent=0 // pred_region
    _
  $region21: #{_lambda_.6} parent=0 // pred_fallthru
    _

// kernel: _lambda_.7
$region0: #{_lambda_.7}
  #allocation0 [shape = 'u32[]', space=smem, size = 0x4, offset = 0x4, fixed_abs, tag = 'smem constant byte address 0x4 - core index']
  #allocation1 [shape = 'u32[144,128]{1,0:T(1,128)}', space=vmem, size = 0x12000, scoped, tag = 'internal scratch']
  #allocation2 [shape = 'f32[66,64]{1,0:T(8,128)}', space=vmem, size = 0x9000, scoped, tag = 'scratch operand']
  #allocation3 [shape = 'f32[66,64]{1,0:T(8,128)}', space=vmem, size = 0x9000, scoped, tag = 'scratch operand']
  %s0 = inlined_call_operand.vmem [shape: f32[64,64], index: 0, kind: input, shape index: {}]
  %s1 = inlined_call_operand.vmem [shape: bf16[3,64,64], index: 1, kind: input, shape index: {}]
  %s2 = inlined_call_operand.vmem [shape: f32[2,64], index: 2, kind: input, shape index: {}]
  %s3 = inlined_call_operand.vmem [shape: bf16[3,64,64], index: 3, kind: input, shape index: {}]
  %s4 = inlined_call_operand.vmem [shape: f32[2,64], index: 4, kind: input, shape index: {}]
  %s5 = inlined_call_operand.vmem [shape: f32[64,64], index: 5, kind: output, shape index: {}]
  %s6 = sld [smem:[#allocation0]]
  $region30: #{_lambda_.7} parent=0
    _
  %s8 = ssub.s32 1, %s6
  %s9 = scalar_select 0, %s8, %s6
  // Predicated region
  $region2: #{_lambda_.7} parent=0 // pred_check
    _
  $region3: #{_lambda_.7} parent=0 // pred_check_branch
    %11 = sbr.rel (0) target = $region5
  $region4: #{_lambda_.7} parent=0 // pred_region
    _
  $region5: #{_lambda_.7} parent=0 // pred_fallthru
    _
  // Predicated region
  $region6: #{_lambda_.7} parent=0 // pred_check
    _
  $region7: #{_lambda_.7} parent=0 // pred_check_branch
    %13 = sbr.rel (0) target = $region9
  $region8: #{_lambda_.7} parent=0 // pred_region
    _
  $region9: #{_lambda_.7} parent=0 // pred_fallthru
    _
  // Predicated region
  $region10: #{_lambda_.7} parent=0 // pred_check
    _
  $region11: #{_lambda_.7} parent=0 // pred_check_branch
    %15 = sbr.rel (0) target = $region13
  $region12: #{_lambda_.7} parent=0 // pred_region
    _
  $region13: #{_lambda_.7} parent=0 // pred_fallthru
    _
  // Predicated region
  $region14: #{_lambda_.7} parent=0 // pred_check
    _
  $region15: #{_lambda_.7} parent=0 // pred_check_branch
    %17 = sbr.rel (0) target = $region17
  $region16: #{_lambda_.7} parent=0 // pred_region
    _
  $region17: #{_lambda_.7} parent=0 // pred_fallthru
    _
  // Predicated region
  $region18: #{_lambda_.7} parent=0 // pred_check
    _
  $region19: #{_lambda_.7} parent=0 // pred_check_branch
    %19 = sbr.rel (0) target = $region21
  $region20: #{_lambda_.7} parent=0 // pred_region
    _
  $region21: #{_lambda_.7} parent=0 // pred_fallthru
    _
  %v21 = vlaneseq
  %v22 = vshrl.u32 %v21, 7
  %v23 = vadd.s32 %v22, 8
  %v24 = vadd.s32 %v22, 16
  %v25 = vadd.s32 %v22, 24
  %v26 = vadd.s32 %v22, 32
  %v27 = vadd.s32 %v22, 40
  %v28 = vadd.s32 %v22, 48
  %v29 = vadd.s32 %v22, 56
  %vm30 = vcmp.lt.s32.totalorder %v22, 0
  %v31 = vsub.s32 0, %v22
  %v32 = vsel %vm30, %v31, %v22
  %v33 = vshrl.u32 %v32, 5
  %v34 = vand.u32 %v32, 31
  %v35 = vsub.s32 0, %v34
  %v36 = vsel %vm30, %v35, %v34
  %vm37 = vcmp.lt.s32.totalorder %v23, 0
  %v38 = vsub.s32 0, %v23
  %v39 = vsel %vm37, %v38, %v23
  %v40 = vshrl.u32 %v39, 5
  %v41 = vand.u32 %v39, 31
  %v42 = vsub.s32 0, %v41
  %v43 = vsel %vm37, %v42, %v41
  %vm44 = vcmp.lt.s32.totalorder %v24, 0
  %v45 = vsub.s32 0, %v24
  %v46 = vsel %vm44, %v45, %v24
  %v47 = vshrl.u32 %v46, 5
  %v48 = vand.u32 %v46, 31
  %v49 = vsub.s32 0, %v48
  %v50 = vsel %vm44, %v49, %v48
  %vm51 = vcmp.lt.s32.totalorder %v25, 0
  %v52 = vsub.s32 0, %v25
  %v53 = vsel %vm51, %v52, %v25
  %v54 = vshrl.u32 %v53, 5
  %v55 = vand.u32 %v53, 31
  %v56 = vsub.s32 0, %v55
  %v57 = vsel %vm51, %v56, %v55
  %vm58 = vcmp.lt.s32.totalorder %v26, 0
  %v59 = vsub.s32 0, %v26
  %v60 = vsel %vm58, %v59, %v26
  %v61 = vshrl.u32 %v60, 5
  %v62 = vand.u32 %v60, 31
  %v63 = vsub.s32 0, %v62
  %v64 = vsel %vm58, %v63, %v62
  %vm65 = vcmp.lt.s32.totalorder %v27, 0
  %v66 = vsub.s32 0, %v27
  %v67 = vsel %vm65, %v66, %v27
  %v68 = vshrl.u32 %v67, 5
  %v69 = vand.u32 %v67, 31
  %v70 = vsub.s32 0, %v69
  %v71 = vsel %vm65, %v70, %v69
  %vm72 = vcmp.lt.s32.totalorder %v28, 0
  %v73 = vsub.s32 0, %v28
  %v74 = vsel %vm72, %v73, %v28
  %v75 = vshrl.u32 %v74, 5
  %v76 = vand.u32 %v74, 31
  %v77 = vsub.s32 0, %v76
  %v78 = vsel %vm72, %v77, %v76
  %vm79 = vcmp.lt.s32.totalorder %v29, 0
  %v80 = vsub.s32 0, %v29
  %v81 = vsel %vm79, %v80, %v29
  %v82 = vshrl.u32 %v81, 5
  %v83 = vand.u32 %v81, 31
  %v84 = vsub.s32 0, %v83
  %v85 = vsel %vm79, %v84, %v83
  %vm86 = vcmp.ne.s32.totalorder %v36, 0
  %vm87 = vcmp.ne.s32.totalorder %v43, 0
  %vm88 = vcmp.ne.s32.totalorder %v50, 0
  %vm89 = vcmp.ne.s32.totalorder %v57, 0
  %vm90 = vcmp.ne.s32.totalorder %v64, 0
  %vm91 = vcmp.ne.s32.totalorder %v71, 0
  %vm92 = vcmp.ne.s32.totalorder %v78, 0
  %vm93 = vcmp.ne.s32.totalorder %v85, 0
  %vm94 = vcmp.lt.s32.totalorder %v36, 0
  %vm95 = vcmp.lt.s32.totalorder %v43, 0
  %vm96 = vcmp.lt.s32.totalorder %v50, 0
  %vm97 = vcmp.lt.s32.totalorder %v57, 0
  %vm98 = vcmp.lt.s32.totalorder %v64, 0
  %vm99 = vcmp.lt.s32.totalorder %v71, 0
  %vm100 = vcmp.lt.s32.totalorder %v78, 0
  %vm101 = vcmp.lt.s32.totalorder %v85, 0
  %vm102 = vmand %vm94, %vm86
  %vm103 = vmand %vm95, %vm87
  %vm104 = vmand %vm96, %vm88
  %vm105 = vmand %vm97, %vm89
  %vm106 = vmand %vm98, %vm90
  %vm107 = vmand %vm99, %vm91
  %vm108 = vmand %vm100, %vm92
  %vm109 = vmand %vm101, %vm93
  %v110 = vadd.s32 %v36, 32
  %v111 = vadd.s32 %v43, 32
  %v112 = vadd.s32 %v50, 32
  %v113 = vadd.s32 %v57, 32
  %v114 = vadd.s32 %v64, 32
  %v115 = vadd.s32 %v71, 32
  %v116 = vadd.s32 %v78, 32
  %v117 = vadd.s32 %v85, 32
  %v118 = vsel %vm102, %v110, %v36
  %v119 = vsel %vm103, %v111, %v43
  %v120 = vsel %vm104, %v112, %v50
  %v121 = vsel %vm105, %v113, %v57
  %v122 = vsel %vm106, %v114, %v64
  %v123 = vsel %vm107, %v115, %v71
  %v124 = vsel %vm108, %v116, %v78
  %v125 = vsel %vm109, %v117, %v85
  %vm126 = vcmp.eq.s32.totalorder %v118, 0
  %vm127 = vcmp.eq.s32.totalorder %v119, 0
  %vm128 = vcmp.eq.s32.totalorder %v120, 0
  %vm129 = vcmp.eq.s32.totalorder %v121, 0
  %vm130 = vcmp.eq.s32.totalorder %v122, 0
  %vm131 = vcmp.eq.s32.totalorder %v123, 0
  %vm132 = vcmp.eq.s32.totalorder %v124, 0
  %vm133 = vcmp.eq.s32.totalorder %v125, 0
  %vm134 = vcmp.eq.s32.totalorder %v118, 31
  %vm135 = vcmp.eq.s32.totalorder %v119, 31
  %vm136 = vcmp.eq.s32.totalorder %v120, 31
  %vm137 = vcmp.eq.s32.totalorder %v121, 31
  %vm138 = vcmp.eq.s32.totalorder %v122, 31
  %vm139 = vcmp.eq.s32.totalorder %v123, 31
  %vm140 = vcmp.eq.s32.totalorder %v124, 31
  %vm141 = vcmp.eq.s32.totalorder %v125, 31
  %v142 = vld [vmem:[%s0] sm:$0xff]
  %v143 = vld [vmem:[%s0 + $0x8] sm:$0xff]
  %v144 = vld [vmem:[%s0 + $0x10] sm:$0xff]
  %v145 = vld [vmem:[%s0 + $0x18] sm:$0xff]
  %v146 = vld [vmem:[%s0 + $0x20] sm:$0xff]
  %v147 = vld [vmem:[%s0 + $0x28] sm:$0xff]
  %v148 = vld [vmem:[%s0 + $0x30] sm:$0xff]
  %v149 = vld [vmem:[%s0 + $0x38] sm:$0xff]
  %vm150 = vcmask 523264
  %151 = vst.msk [vmem:[#allocation2] sm:$0xff] %vm150, 0.0
  %152 = vst.msk [vmem:[#allocation2 + $0x8] sm:$0xff] %vm150, 0.0
  %153 = vst.msk [vmem:[#allocation2 + $0x10] sm:$0xff] %vm150, 0.0
  %154 = vst.msk [vmem:[#allocation2 + $0x18] sm:$0xff] %vm150, 0.0
  %155 = vst.msk [vmem:[#allocation2 + $0x20] sm:$0xff] %vm150, 0.0
  %156 = vst.msk [vmem:[#allocation2 + $0x28] sm:$0xff] %vm150, 0.0
  %157 = vst.msk [vmem:[#allocation2 + $0x30] sm:$0xff] %vm150, 0.0
  %158 = vst.msk [vmem:[#allocation2 + $0x38] sm:$0xff] %vm150, 0.0
  %vm159 = vcmask 517120
  %160 = vst.msk [vmem:[#allocation2 + $0x40] sm:$0x3] %vm159, 0.0
  %161 = vst.msk [vmem:[#allocation2 + $0x1] sm:$0xff] %vm150, %v142
  %162 = vst.msk [vmem:[#allocation2 + $0x9] sm:$0xff] %vm150, %v143
  %163 = vst.msk [vmem:[#allocation2 + $0x11] sm:$0xff] %vm150, %v144
  %164 = vst.msk [vmem:[#allocation2 + $0x19] sm:$0xff] %vm150, %v145
  %165 = vst.msk [vmem:[#allocation2 + $0x21] sm:$0xff] %vm150, %v146
  %166 = vst.msk [vmem:[#allocation2 + $0x29] sm:$0xff] %vm150, %v147
  %167 = vst.msk [vmem:[#allocation2 + $0x31] sm:$0xff] %vm150, %v148
  %168 = vst.msk [vmem:[#allocation2 + $0x39] sm:$0xff] %vm150, %v149
  %v169 = vld [vmem:[#allocation2] sm:$0xff]
  %v170 = vld [vmem:[#allocation2 + $0x8] sm:$0xff]
  %v171 = vld [vmem:[#allocation2 + $0x10] sm:$0xff]
  %v172 = vld [vmem:[#allocation2 + $0x18] sm:$0xff]
  %v173 = vld [vmem:[#allocation2 + $0x20] sm:$0xff]
  %v174 = vld [vmem:[#allocation2 + $0x28] sm:$0xff]
  %v175 = vld [vmem:[#allocation2 + $0x30] sm:$0xff]
  %v176 = vld [vmem:[#allocation2 + $0x38] sm:$0xff]
  %v177 = vsel %vm126, 1, 0
  %v178 = vsel %vm127, 1, 0
  %v179 = vsel %vm128, 1, 0
  %v180 = vsel %vm129, 1, 0
  %v181 = vsel %vm130, 1, 0
  %v182 = vsel %vm131, 1, 0
  %v183 = vsel %vm132, 1, 0
  %v184 = vsel %vm133, 1, 0
  %vm185 = vcmp.eq.s32.totalorder %v177, 1
  %vm186 = vcmp.eq.s32.totalorder %v178, 1
  %vm187 = vcmp.eq.s32.totalorder %v179, 1
  %vm188 = vcmp.eq.s32.totalorder %v180, 1
  %vm189 = vcmp.eq.s32.totalorder %v181, 1
  %vm190 = vcmp.eq.s32.totalorder %v182, 1
  %vm191 = vcmp.eq.s32.totalorder %v183, 1
  %vm192 = vcmp.eq.s32.totalorder %v184, 1
  %v193 = vsel %vm185, 0.0, %v169
  %v194 = vsel %vm186, 0.0, %v170
  %v195 = vsel %vm187, 0.0, %v171
  %v196 = vsel %vm188, 0.0, %v172
  %v197 = vsel %vm189, 0.0, %v173
  %v198 = vsel %vm190, 0.0, %v174
  %v199 = vsel %vm191, 0.0, %v175
  %v200 = vsel %vm192, 0.0, %v176
  %v201 = vld [vmem:[#allocation2 + $0x2] sm:$0xff]
  %v202 = vld [vmem:[#allocation2 + $0xa] sm:$0xff]
  %v203 = vld [vmem:[#allocation2 + $0x12] sm:$0xff]
  %v204 = vld [vmem:[#allocation2 + $0x1a] sm:$0xff]
  %v205 = vld [vmem:[#allocation2 + $0x22] sm:$0xff]
  %v206 = vld [vmem:[#allocation2 + $0x2a] sm:$0xff]
  %v207 = vld [vmem:[#allocation2 + $0x32] sm:$0xff]
  %v208 = vld [vmem:[#allocation2 + $0x3a] sm:$0xff]
  %v209 = vsel %vm134, 1, 0
  %v210 = vsel %vm135, 1, 0
  %v211 = vsel %vm136, 1, 0
  %v212 = vsel %vm137, 1, 0
  %v213 = vsel %vm138, 1, 0
  %v214 = vsel %vm139, 1, 0
  %v215 = vsel %vm140, 1, 0
  %v216 = vsel %vm141, 1, 0
  %vm217 = vcmp.eq.s32.totalorder %v209, 1
  %vm218 = vcmp.eq.s32.totalorder %v210, 1
  %vm219 = vcmp.eq.s32.totalorder %v211, 1
  %vm220 = vcmp.eq.s32.totalorder %v212, 1
  %vm221 = vcmp.eq.s32.totalorder %v213, 1
  %vm222 = vcmp.eq.s32.totalorder %v214, 1
  %vm223 = vcmp.eq.s32.totalorder %v215, 1
  %vm224 = vcmp.eq.s32.totalorder %v216, 1
  %v225 = vsel %vm217, 0.0, %v201
  %v226 = vsel %vm218, 0.0, %v202
  %v227 = vsel %vm219, 0.0, %v203
  %v228 = vsel %vm220, 0.0, %v204
  %v229 = vsel %vm221, 0.0, %v205
  %v230 = vsel %vm222, 0.0, %v206
  %v231 = vsel %vm223, 0.0, %v207
  %v232 = vsel %vm224, 0.0, %v208
  %v233 = vld [vmem:[%s1] sm:$0xf]
  %v234 = vld [vmem:[%s1 + $0x4] sm:$0xf]
  %v235 = vld [vmem:[%s1 + $0x8] sm:$0xf]
  %v236 = vld [vmem:[%s1 + $0xc] sm:$0xf]
  %v237 = vld [vmem:[%s1 + $0x10] sm:$0xf]
  %v238 = vld [vmem:[%s1 + $0x14] sm:$0xf]
  %v239 = vld [vmem:[%s1 + $0x18] sm:$0xf]
  %v240 = vld [vmem:[%s1 + $0x1c] sm:$0xf]
  %v241 = vpack.c.bf16 %v194, %v193
  %v242 = vpack.c.bf16 %v196, %v195
  %v243 = vpack.c.bf16 %v198, %v197
  %v244 = vpack.c.bf16 %v200, %v199
  %s245 = scalar_lea.vmem %s1, 32
  %v246 = vld [vmem:[%s245] sm:$0xf]
  %v247 = vld [vmem:[%s245 + $0x4] sm:$0xf]
  %v248 = vld [vmem:[%s245 + $0x8] sm:$0xf]
  %v249 = vld [vmem:[%s245 + $0xc] sm:$0xf]
  %v250 = vld [vmem:[%s245 + $0x10] sm:$0xf]
  %v251 = vld [vmem:[%s245 + $0x14] sm:$0xf]
  %v252 = vld [vmem:[%s245 + $0x18] sm:$0xf]
  %v253 = vld [vmem:[%s245 + $0x1c] sm:$0xf]
  %v254 = vpack.c.bf16 %v143, %v142
  %v255 = vpack.c.bf16 %v145, %v144
  %v256 = vpack.c.bf16 %v147, %v146
  %v257 = vpack.c.bf16 %v149, %v148
  %v266 = vunpack.c.l.b16 %v246
  %v267 = vunpack.c.l.b16 %v247
  %v268 = vunpack.c.l.b16 %v248
  %v269 = vunpack.c.l.b16 %v249
  %v270 = vunpack.c.l.b16 %v250
  %v271 = vunpack.c.l.b16 %v251
  %v272 = vunpack.c.l.b16 %v252
  %v273 = vunpack.c.l.b16 %v253
  %v274 = vpack.c.b16 %v267, %v266
  %v275 = vpack.c.b16 %v269, %v268
  %v276 = vpack.c.b16 %v271, %v270
  %v277 = vpack.c.b16 %v273, %v272
  %v283 = vsel %vm150, %v254, 0
  %v286 = vsel %vm150, %v255, 0
  %v289 = vsel %vm150, %v256, 0
  %v292 = vsel %vm150, %v257, 0
  %294 = vmatprep.subr.bf16.mxu0 0
  %295 = vmatpush1.bf16.msra.mxu0 %v274
  %296 = vmatprep.subr.bf16.mxu0 0
  %297 = vmatpush1.bf16.msra.mxu0 %v275
  %298 = vmatprep.subr.bf16.mxu0 0
  %299 = vmatpush1.bf16.msra.mxu0 %v276
  %300 = vmatprep.subr.bf16.mxu0 0
  %301 = vmatpush1.bf16.msra.mxu0 %v277
  %302 = vmatprep.subr.bf16.mxu0 0
  %303 = vmatpush1.bf16.msra.mxu0 0
  %304 = vmatprep.subr.bf16.mxu0 0
  %305 = vmatpush1.bf16.msra.mxu0 0
  %306 = vmatprep.subr.bf16.mxu0 0
  %307 = vmatpush1.bf16.msra.mxu0 0
  %308 = vmatprep.subr.bf16.mxu0 0
  %309 = vmatpush1.bf16.msra.mxu0 0
  %310 = vmatprep.subr.bf16.mxu0 0
  %311 = vmatpush1.bf16.msra.mxu0 0
  %312 = vmatprep.subr.bf16.mxu0 0
  %313 = vmatpush1.bf16.msra.mxu0 0
  %314 = vmatprep.subr.bf16.mxu0 0
  %315 = vmatpush1.bf16.msra.mxu0 0
  %316 = vmatprep.subr.bf16.mxu0 0
  %317 = vmatpush1.bf16.msra.mxu0 0
  %318 = vmatprep.subr.bf16.mxu0 0
  %319 = vmatpush1.bf16.msra.mxu0 0
  %320 = vmatprep.subr.bf16.mxu0 0
  %321 = vmatpush1.bf16.msra.mxu0 0
  %322 = vmatprep.subr.bf16.mxu0 0
  %323 = vmatpush1.bf16.msra.mxu0 0
  %324 = vmatprep.subr.bf16.mxu0 0
  %325 = vmatpush1.bf16.msra.mxu0 0
  %326 = vmatprep.mubr.bf16.mxu0 0
  %327 = vmatmul.mubr.bf16.gmra.mrb[0].mxu0 %v283
  %v328 = vpop.f32.mrb[0].mxu0
  %v329 = vadd.f32 0.0, %v328
  %v330 = vpop.f32.mrb[0].mxu0
  %v331 = vpop.f32.mrb[0].mxu0
  %v332 = vadd.f32 0.0, %v331
  %v333 = vpop.f32.mrb[0].mxu0
  %334 = vmatprep.mubr.bf16.mxu0 0
  %335 = vmatmul.mubr.bf16.gmra.mrb[0].mxu0 %v286
  %v336 = vpop.f32.mrb[0].mxu0
  %v337 = vadd.f32 0.0, %v336
  %v338 = vpop.f32.mrb[0].mxu0
  %v339 = vpop.f32.mrb[0].mxu0
  %v340 = vadd.f32 0.0, %v339
  %v341 = vpop.f32.mrb[0].mxu0
  %342 = vmatprep.mubr.bf16.mxu0 0
  %343 = vmatmul.mubr.bf16.gmra.mrb[0].mxu0 %v289
  %v344 = vpop.f32.mrb[0].mxu0
  %v345 = vadd.f32 0.0, %v344
  %v346 = vpop.f32.mrb[0].mxu0
  %v347 = vpop.f32.mrb[0].mxu0
  %v348 = vadd.f32 0.0, %v347
  %v349 = vpop.f32.mrb[0].mxu0
  %350 = vmatprep.mubr.bf16.mxu0 0
  %351 = vmatmul.mubr.bf16.gmra.mrb[0].mxu0 %v292
  %v352 = vpop.f32.mrb[0].mxu0
  %v353 = vadd.f32 0.0, %v352
  %v354 = vpop.f32.mrb[0].mxu0
  %v355 = vpop.f32.mrb[0].mxu0
  %v356 = vadd.f32 0.0, %v355
  %v357 = vpop.f32.mrb[0].mxu0
  %358 = vdwg.mxu0
  %v367 = vunpack.c.l.b16 %v233
  %v368 = vunpack.c.l.b16 %v234
  %v369 = vunpack.c.l.b16 %v235
  %v370 = vunpack.c.l.b16 %v236
  %v371 = vunpack.c.l.b16 %v237
  %v372 = vunpack.c.l.b16 %v238
  %v373 = vunpack.c.l.b16 %v239
  %v374 = vunpack.c.l.b16 %v240
  %v375 = vpack.c.b16 %v368, %v367
  %v376 = vpack.c.b16 %v370, %v369
  %v377 = vpack.c.b16 %v372, %v371
  %v378 = vpack.c.b16 %v374, %v373
  %v384 = vsel %vm150, %v241, 0
  %v387 = vsel %vm150, %v242, 0
  %v390 = vsel %vm150, %v243, 0
  %v393 = vsel %vm150, %v244, 0
  %395 = vmatprep.subr.bf16.mxu0 0
  %396 = vmatpush1.bf16.msra.mxu0 %v375
  %397 = vmatprep.subr.bf16.mxu0 0
  %398 = vmatpush1.bf16.msra.mxu0 %v376
  %399 = vmatprep.subr.bf16.mxu0 0
  %400 = vmatpush1.bf16.msra.mxu0 %v377
  %401 = vmatprep.subr.bf16.mxu0 0
  %402 = vmatpush1.bf16.msra.mxu0 %v378
  %403 = vmatprep.subr.bf16.mxu0 0
  %404 = vmatpush1.bf16.msra.mxu0 0
  %405 = vmatprep.subr.bf16.mxu0 0
  %406 = vmatpush1.bf16.msra.mxu0 0
  %407 = vmatprep.subr.bf16.mxu0 0
  %408 = vmatpush1.bf16.msra.mxu0 0
  %409 = vmatprep.subr.bf16.mxu0 0
  %410 = vmatpush1.bf16.msra.mxu0 0
  %411 = vmatprep.subr.bf16.mxu0 0
  %412 = vmatpush1.bf16.msra.mxu0 0
  %413 = vmatprep.subr.bf16.mxu0 0
  %414 = vmatpush1.bf16.msra.mxu0 0
  %415 = vmatprep.subr.bf16.mxu0 0
  %416 = vmatpush1.bf16.msra.mxu0 0
  %417 = vmatprep.subr.bf16.mxu0 0
  %418 = vmatpush1.bf16.msra.mxu0 0
  %419 = vmatprep.subr.bf16.mxu0 0
  %420 = vmatpush1.bf16.msra.mxu0 0
  %421 = vmatprep.subr.bf16.mxu0 0
  %422 = vmatpush1.bf16.msra.mxu0 0
  %423 = vmatprep.subr.bf16.mxu0 0
  %424 = vmatpush1.bf16.msra.mxu0 0
  %425 = vmatprep.subr.bf16.mxu0 0
  %426 = vmatpush1.bf16.msra.mxu0 0
  %427 = vmatprep.mubr.bf16.mxu0 0
  %428 = vmatmul.mubr.bf16.gmra.mrb[0].mxu0 %v384
  %v429 = vpop.f32.mrb[0].mxu0
  %v430 = vadd.f32 %v329, %v429
  %v431 = vpop.f32.mrb[0].mxu0
  %v432 = vpop.f32.mrb[0].mxu0
  %v433 = vadd.f32 %v332, %v432
  %v434 = vpop.f32.mrb[0].mxu0
  %435 = vmatprep.mubr.bf16.mxu0 0
  %436 = vmatmul.mubr.bf16.gmra.mrb[0].mxu0 %v387
  %v437 = vpop.f32.mrb[0].mxu0
  %v438 = vadd.f32 %v337, %v437
  %v439 = vpop.f32.mrb[0].mxu0
  %v440 = vpop.f32.mrb[0].mxu0
  %v441 = vadd.f32 %v340, %v440
  %v442 = vpop.f32.mrb[0].mxu0
  %443 = vmatprep.mubr.bf16.mxu0 0
  %444 = vmatmul.mubr.bf16.gmra.mrb[0].mxu0 %v390
  %v445 = vpop.f32.mrb[0].mxu0
  %v446 = vadd.f32 %v345, %v445
  %v447 = vpop.f32.mrb[0].mxu0
  %v448 = vpop.f32.mrb[0].mxu0
  %v449 = vadd.f32 %v348, %v448
  %v450 = vpop.f32.mrb[0].mxu0
  %451 = vmatprep.mubr.bf16.mxu0 0
  %452 = vmatmul.mubr.bf16.gmra.mrb[0].mxu0 %v393
  %v453 = vpop.f32.mrb[0].mxu0
  %v454 = vadd.f32 %v353, %v453
  %v455 = vpop.f32.mrb[0].mxu0
  %v456 = vpop.f32.mrb[0].mxu0
  %v457 = vadd.f32 %v356, %v456
  %v458 = vpop.f32.mrb[0].mxu0
  %459 = vdwg.mxu0
  %s460 = scalar_lea.vmem %s1, 64
  %v461 = vld [vmem:[%s460] sm:$0xf]
  %v462 = vld [vmem:[%s460 + $0x4] sm:$0xf]
  %v463 = vld [vmem:[%s460 + $0x8] sm:$0xf]
  %v464 = vld [vmem:[%s460 + $0xc] sm:$0xf]
  %v465 = vld [vmem:[%s460 + $0x10] sm:$0xf]
  %v466 = vld [vmem:[%s460 + $0x14] sm:$0xf]
  %v467 = vld [vmem:[%s460 + $0x18] sm:$0xf]
  %v468 = vld [vmem:[%s460 + $0x1c] sm:$0xf]
  %v469 = vpack.c.bf16 %v226, %v225
  %v470 = vpack.c.bf16 %v228, %v227
  %v471 = vpack.c.bf16 %v230, %v229
  %v472 = vpack.c.bf16 %v232, %v231
  %v481 = vunpack.c.l.b16 %v461
  %v482 = vunpack.c.l.b16 %v462
  %v483 = vunpack.c.l.b16 %v463
  %v484 = vunpack.c.l.b16 %v464
  %v485 = vunpack.c.l.b16 %v465
  %v486 = vunpack.c.l.b16 %v466
  %v487 = vunpack.c.l.b16 %v467
  %v488 = vunpack.c.l.b16 %v468
  %v489 = vpack.c.b16 %v482, %v481
  %v490 = vpack.c.b16 %v484, %v483
  %v491 = vpack.c.b16 %v486, %v485
  %v492 = vpack.c.b16 %v488, %v487
  %v498 = vsel %vm150, %v469, 0
  %v501 = vsel %vm150, %v470, 0
  %v504 = vsel %vm150, %v471, 0
  %v507 = vsel %vm150, %v472, 0
  %509 = vmatprep.subr.bf16.mxu0 0
  %510 = vmatpush1.bf16.msra.mxu0 %v489
  %511 = vmatprep.subr.bf16.mxu0 0
  %512 = vmatpush1.bf16.msra.mxu0 %v490
  %513 = vmatprep.subr.bf16.mxu0 0
  %514 = vmatpush1.bf16.msra.mxu0 %v491
  %515 = vmatprep.subr.bf16.mxu0 0
  %516 = vmatpush1.bf16.msra.mxu0 %v492
  %517 = vmatprep.subr.bf16.mxu0 0
  %518 = vmatpush1.bf16.msra.mxu0 0
  %519 = vmatprep.subr.bf16.mxu0 0
  %520 = vmatpush1.bf16.msra.mxu0 0
  %521 = vmatprep.subr.bf16.mxu0 0
  %522 = vmatpush1.bf16.msra.mxu0 0
  %523 = vmatprep.subr.bf16.mxu0 0
  %524 = vmatpush1.bf16.msra.mxu0 0
  %525 = vmatprep.subr.bf16.mxu0 0
  %526 = vmatpush1.bf16.msra.mxu0 0
  %527 = vmatprep.subr.bf16.mxu0 0
  %528 = vmatpush1.bf16.msra.mxu0 0
  %529 = vmatprep.subr.bf16.mxu0 0
  %530 = vmatpush1.bf16.msra.mxu0 0
  %531 = vmatprep.subr.bf16.mxu0 0
  %532 = vmatpush1.bf16.msra.mxu0 0
  %533 = vmatprep.subr.bf16.mxu0 0
  %534 = vmatpush1.bf16.msra.mxu0 0
  %535 = vmatprep.subr.bf16.mxu0 0
  %536 = vmatpush1.bf16.msra.mxu0 0
  %537 = vmatprep.subr.bf16.mxu0 0
  %538 = vmatpush1.bf16.msra.mxu0 0
  %539 = vmatprep.subr.bf16.mxu0 0
  %540 = vmatpush1.bf16.msra.mxu0 0
  %541 = vmatprep.mubr.bf16.mxu0 0
  %542 = vmatmul.mubr.bf16.gmra.mrb[0].mxu0 %v498
  %v543 = vpop.f32.mrb[0].mxu0
  %v544 = vadd.f32 0.0, %v543
  %v545 = vpop.f32.mrb[0].mxu0
  %v546 = vpop.f32.mrb[0].mxu0
  %v547 = vadd.f32 0.0, %v546
  %v548 = vpop.f32.mrb[0].mxu0
  %549 = vmatprep.mubr.bf16.mxu0 0
  %550 = vmatmul.mubr.bf16.gmra.mrb[0].mxu0 %v501
  %v551 = vpop.f32.mrb[0].mxu0
  %v552 = vadd.f32 0.0, %v551
  %v553 = vpop.f32.mrb[0].mxu0
  %v554 = vpop.f32.mrb[0].mxu0
  %v555 = vadd.f32 0.0, %v554
  %v556 = vpop.f32.mrb[0].mxu0
  %557 = vmatprep.mubr.bf16.mxu0 0
  %558 = vmatmul.mubr.bf16.gmra.mrb[0].mxu0 %v504
  %v559 = vpop.f32.mrb[0].mxu0
  %v560 = vadd.f32 0.0, %v559
  %v561 = vpop.f32.mrb[0].mxu0
  %v562 = vpop.f32.mrb[0].mxu0
  %v563 = vadd.f32 0.0, %v562
  %v564 = vpop.f32.mrb[0].mxu0
  %565 = vmatprep.mubr.bf16.mxu0 0
  %566 = vmatmul.mubr.bf16.gmra.mrb[0].mxu0 %v507
  %v567 = vpop.f32.mrb[0].mxu0
  %v568 = vadd.f32 0.0, %v567
  %v569 = vpop.f32.mrb[0].mxu0
  %v570 = vpop.f32.mrb[0].mxu0
  %v571 = vadd.f32 0.0, %v570
  %v572 = vpop.f32.mrb[0].mxu0
  %573 = vdwg.mxu0
  %v574 = vadd.f32 %v430, %v544
  %v575 = vadd.f32 %v433, %v547
  %v576 = vadd.f32 %v438, %v552
  %v577 = vadd.f32 %v441, %v555
  %v578 = vadd.f32 %v446, %v560
  %v579 = vadd.f32 %v449, %v563
  %v580 = vadd.f32 %v454, %v568
  %v581 = vadd.f32 %v457, %v571
  %v582 = vld [vmem:[%s2] sm:$0x3]
  %v583 = vsel %vm150, %v574, 0.0
  %v584 = vsel %vm150, %v575, 0.0
  %v585 = vadd.f32 %v583, %v584
  %v586 = vsel %vm150, %v576, 0.0
  %v587 = vadd.f32 %v585, %v586
  %v588 = vsel %vm150, %v577, 0.0
  %v589 = vadd.f32 %v587, %v588
  %v590 = vsel %vm150, %v578, 0.0
  %v591 = vadd.f32 %v589, %v590
  %v592 = vsel %vm150, %v579, 0.0
  %v593 = vadd.f32 %v591, %v592
  %v594 = vsel %vm150, %v580, 0.0
  %v595 = vadd.f32 %v593, %v594
  %v596 = vsel %vm150, %v581, 0.0
  %v597 = vadd.f32 %v595, %v596
  %v598 = vrot.slane %v597, 4
  %v599 = vadd.f32 %v597, %v598
  %v600 = vrot.slane %v599, 2
  %v601 = vadd.f32 %v599, %v600
  %v602 = vrot.slane %v601, 1
  %v603 = vadd.f32 %v601, %v602
  %v604 = vrcp.pop 64.0
  %v605 = vmul.f32 %v603, %v604
  %v606 = vsub.f32 %v574, %v605
  %v607 = vsub.f32 %v575, %v605
  %v608 = vsub.f32 %v576, %v605
  %v609 = vsub.f32 %v577, %v605
  %v610 = vsub.f32 %v578, %v605
  %v611 = vsub.f32 %v579, %v605
  %v612 = vsub.f32 %v580, %v605
  %v613 = vsub.f32 %v581, %v605
  %v614 = vmul.f32 %v606, %v606
  %v615 = vmul.f32 %v607, %v607
  %v616 = vmul.f32 %v608, %v608
  %v617 = vmul.f32 %v609, %v609
  %v618 = vmul.f32 %v610, %v610
  %v619 = vmul.f32 %v611, %v611
  %v620 = vmul.f32 %v612, %v612
  %v621 = vmul.f32 %v613, %v613
  %v622 = vsel %vm150, %v614, 0.0
  %v623 = vsel %vm150, %v615, 0.0
  %v624 = vadd.f32 %v622, %v623
  %v625 = vsel %vm150, %v616, 0.0
  %v626 = vadd.f32 %v624, %v625
  %v627 = vsel %vm150, %v617, 0.0
  %v628 = vadd.f32 %v626, %v627
  %v629 = vsel %vm150, %v618, 0.0
  %v630 = vadd.f32 %v628, %v629
  %v631 = vsel %vm150, %v619, 0.0
  %v632 = vadd.f32 %v630, %v631
  %v633 = vsel %vm150, %v620, 0.0
  %v634 = vadd.f32 %v632, %v633
  %v635 = vsel %vm150, %v621, 0.0
  %v636 = vadd.f32 %v634, %v635
  %v637 = vrot.slane %v636, 4
  %v638 = vadd.f32 %v636, %v637
  %v639 = vrot.slane %v638, 2
  %v640 = vadd.f32 %v638, %v639
  %v641 = vrot.slane %v640, 1
  %v642 = vadd.f32 %v640, %v641
  %v643 = vmul.f32 %v642, %v604
  %v644 = vadd.f32 %v643, 1e-05
  %v645 = vrsqrt.pop %v644
  %v646 = vmul.f32 %v606, %v645
  %v647 = vmul.f32 %v607, %v645
  %v648 = vmul.f32 %v608, %v645
  %v649 = vmul.f32 %v609, %v645
  %v650 = vmul.f32 %v610, %v645
  %v651 = vmul.f32 %v611, %v645
  %v652 = vmul.f32 %v612, %v645
  %v653 = vmul.f32 %v613, %v645
  %v654 = vlaneseq
  %v655 = vshrl.u32 %v654, 7
  %v656 = vsub.s32 0, %v655
  %v657 = vrot.slane %v582, %v656
  %v658 = vmul.f32 %v646, %v657
  %v659 = vmul.f32 %v647, %v657
  %v660 = vmul.f32 %v648, %v657
  %v661 = vmul.f32 %v649, %v657
  %v662 = vmul.f32 %v650, %v657
  %v663 = vmul.f32 %v651, %v657
  %v664 = vmul.f32 %v652, %v657
  %v665 = vmul.f32 %v653, %v657
  %v666 = vlaneseq
  %v667 = vshrl.u32 %v666, 7
  %v668 = vsub.s32 1, %v667
  %v669 = vrot.slane %v582, %v668
  %v670 = vadd.f32 %v658, %v669
  %v671 = vadd.f32 %v659, %v669
  %v672 = vadd.f32 %v660, %v669
  %v673 = vadd.f32 %v661, %v669
  %v674 = vadd.f32 %v662, %v669
  %v675 = vadd.f32 %v663, %v669
  %v676 = vadd.f32 %v664, %v669
  %v677 = vadd.f32 %v665, %v669
  %v678 = vmax.f32 %v670, 0.0
  %v679 = vmax.f32 %v671, 0.0
  %v680 = vmax.f32 %v672, 0.0
  %v681 = vmax.f32 %v673, 0.0
  %v682 = vmax.f32 %v674, 0.0
  %v683 = vmax.f32 %v675, 0.0
  %v684 = vmax.f32 %v676, 0.0
  %v685 = vmax.f32 %v677, 0.0
  %686 = vst.msk [vmem:[#allocation3] sm:$0xff] %vm150, 0.0
  %687 = vst.msk [vmem:[#allocation3 + $0x8] sm:$0xff] %vm150, 0.0
  %688 = vst.msk [vmem:[#allocation3 + $0x10] sm:$0xff] %vm150, 0.0
  %689 = vst.msk [vmem:[#allocation3 + $0x18] sm:$0xff] %vm150, 0.0
  %690 = vst.msk [vmem:[#allocation3 + $0x20] sm:$0xff] %vm150, 0.0
  %691 = vst.msk [vmem:[#allocation3 + $0x28] sm:$0xff] %vm150, 0.0
  %692 = vst.msk [vmem:[#allocation3 + $0x30] sm:$0xff] %vm150, 0.0
  %693 = vst.msk [vmem:[#allocation3 + $0x38] sm:$0xff] %vm150, 0.0
  %694 = vst.msk [vmem:[#allocation3 + $0x40] sm:$0x3] %vm159, 0.0
  %695 = vst.msk [vmem:[#allocation3 + $0x1] sm:$0xff] %vm150, %v678
  %696 = vst.msk [vmem:[#allocation3 + $0x9] sm:$0xff] %vm150, %v679
  %697 = vst.msk [vmem:[#allocation3 + $0x11] sm:$0xff] %vm150, %v680
  %698 = vst.msk [vmem:[#allocation3 + $0x19] sm:$0xff] %vm150, %v681
  %699 = vst.msk [vmem:[#allocation3 + $0x21] sm:$0xff] %vm150, %v682
  %700 = vst.msk [vmem:[#allocation3 + $0x29] sm:$0xff] %vm150, %v683
  %701 = vst.msk [vmem:[#allocation3 + $0x31] sm:$0xff] %vm150, %v684
  %702 = vst.msk [vmem:[#allocation3 + $0x39] sm:$0xff] %vm150, %v685
  %v703 = vld [vmem:[#allocation3] sm:$0xff]
  %v704 = vld [vmem:[#allocation3 + $0x8] sm:$0xff]
  %v705 = vld [vmem:[#allocation3 + $0x10] sm:$0xff]
  %v706 = vld [vmem:[#allocation3 + $0x18] sm:$0xff]
  %v707 = vld [vmem:[#allocation3 + $0x20] sm:$0xff]
  %v708 = vld [vmem:[#allocation3 + $0x28] sm:$0xff]
  %v709 = vld [vmem:[#allocation3 + $0x30] sm:$0xff]
  %v710 = vld [vmem:[#allocation3 + $0x38] sm:$0xff]
  %v711 = vsel %vm185, 0.0, %v703
  %v712 = vsel %vm186, 0.0, %v704
  %v713 = vsel %vm187, 0.0, %v705
  %v714 = vsel %vm188, 0.0, %v706
  %v715 = vsel %vm189, 0.0, %v707
  %v716 = vsel %vm190, 0.0, %v708
  %v717 = vsel %vm191, 0.0, %v709
  %v718 = vsel %vm192, 0.0, %v710
  %v719 = vld [vmem:[#allocation3 + $0x2] sm:$0xff]
  %v720 = vld [vmem:[#allocation3 + $0xa] sm:$0xff]
  %v721 = vld [vmem:[#allocation3 + $0x12] sm:$0xff]
  %v722 = vld [vmem:[#allocation3 + $0x1a] sm:$0xff]
  %v723 = vld [vmem:[#allocation3 + $0x22] sm:$0xff]
  %v724 = vld [vmem:[#allocation3 + $0x2a] sm:$0xff]
  %v725 = vld [vmem:[#allocation3 + $0x32] sm:$0xff]
  %v726 = vld [vmem:[#allocation3 + $0x3a] sm:$0xff]
  %v727 = vsel %vm217, 0.0, %v719
  %v728 = vsel %vm218, 0.0, %v720
  %v729 = vsel %vm219, 0.0, %v721
  %v730 = vsel %vm220, 0.0, %v722
  %v731 = vsel %vm221, 0.0, %v723
  %v732 = vsel %vm222, 0.0, %v724
  %v733 = vsel %vm223, 0.0, %v725
  %v734 = vsel %vm224, 0.0, %v726
  %v735 = vld [vmem:[%s3] sm:$0xf]
  %v736 = vld [vmem:[%s3 + $0x4] sm:$0xf]
  %v737 = vld [vmem:[%s3 + $0x8] sm:$0xf]
  %v738 = vld [vmem:[%s3 + $0xc] sm:$0xf]
  %v739 = vld [vmem:[%s3 + $0x10] sm:$0xf]
  %v740 = vld [vmem:[%s3 + $0x14] sm:$0xf]
  %v741 = vld [vmem:[%s3 + $0x18] sm:$0xf]
  %v742 = vld [vmem:[%s3 + $0x1c] sm:$0xf]
  %v743 = vpack.c.bf16 %v712, %v711
  %v744 = vpack.c.bf16 %v714, %v713
  %v745 = vpack.c.bf16 %v716, %v715
  %v746 = vpack.c.bf16 %v718, %v717
  %s747 = scalar_lea.vmem %s3, 32
  %v748 = vld [vmem:[%s747] sm:$0xf]
  %v749 = vld [vmem:[%s747 + $0x4] sm:$0xf]
  %v750 = vld [vmem:[%s747 + $0x8] sm:$0xf]
  %v751 = vld [vmem:[%s747 + $0xc] sm:$0xf]
  %v752 = vld [vmem:[%s747 + $0x10] sm:$0xf]
  %v753 = vld [vmem:[%s747 + $0x14] sm:$0xf]
  %v754 = vld [vmem:[%s747 + $0x18] sm:$0xf]
  %v755 = vld [vmem:[%s747 + $0x1c] sm:$0xf]
  %v756 = vpack.c.bf16 %v679, %v678
  %v757 = vpack.c.bf16 %v681, %v680
  %v758 = vpack.c.bf16 %v683, %v682
  %v759 = vpack.c.bf16 %v685, %v684
  %v768 = vunpack.c.l.b16 %v748
  %v769 = vunpack.c.l.b16 %v749
  %v770 = vunpack.c.l.b16 %v750
  %v771 = vunpack.c.l.b16 %v751
  %v772 = vunpack.c.l.b16 %v752
  %v773 = vunpack.c.l.b16 %v753
  %v774 = vunpack.c.l.b16 %v754
  %v775 = vunpack.c.l.b16 %v755
  %v776 = vpack.c.b16 %v769, %v768
  %v777 = vpack.c.b16 %v771, %v770
  %v778 = vpack.c.b16 %v773, %v772
  %v779 = vpack.c.b16 %v775, %v774
  %v785 = vsel %vm150, %v756, 0
  %v788 = vsel %vm150, %v757, 0
  %v791 = vsel %vm150, %v758, 0
  %v794 = vsel %vm150, %v759, 0
  %796 = vmatprep.subr.bf16.mxu0 0
  %797 = vmatpush1.bf16.msra.mxu0 %v776
  %798 = vmatprep.subr.bf16.mxu0 0
  %799 = vmatpush1.bf16.msra.mxu0 %v777
  %800 = vmatprep.subr.bf16.mxu0 0
  %801 = vmatpush1.bf16.msra.mxu0 %v778
  %802 = vmatprep.subr.bf16.mxu0 0
  %803 = vmatpush1.bf16.msra.mxu0 %v779
  %804 = vmatprep.subr.bf16.mxu0 0
  %805 = vmatpush1.bf16.msra.mxu0 0
  %806 = vmatprep.subr.bf16.mxu0 0
  %807 = vmatpush1.bf16.msra.mxu0 0
  %808 = vmatprep.subr.bf16.mxu0 0
  %809 = vmatpush1.bf16.msra.mxu0 0
  %810 = vmatprep.subr.bf16.mxu0 0
  %811 = vmatpush1.bf16.msra.mxu0 0
  %812 = vmatprep.subr.bf16.mxu0 0
  %813 = vmatpush1.bf16.msra.mxu0 0
  %814 = vmatprep.subr.bf16.mxu0 0
  %815 = vmatpush1.bf16.msra.mxu0 0
  %816 = vmatprep.subr.bf16.mxu0 0
  %817 = vmatpush1.bf16.msra.mxu0 0
  %818 = vmatprep.subr.bf16.mxu0 0
  %819 = vmatpush1.bf16.msra.mxu0 0
  %820 = vmatprep.subr.bf16.mxu0 0
  %821 = vmatpush1.bf16.msra.mxu0 0
  %822 = vmatprep.subr.bf16.mxu0 0
  %823 = vmatpush1.bf16.msra.mxu0 0
  %824 = vmatprep.subr.bf16.mxu0 0
  %825 = vmatpush1.bf16.msra.mxu0 0
  %826 = vmatprep.subr.bf16.mxu0 0
  %827 = vmatpush1.bf16.msra.mxu0 0
  %828 = vmatprep.mubr.bf16.mxu0 0
  %829 = vmatmul.mubr.bf16.gmra.mrb[0].mxu0 %v785
  %v830 = vpop.f32.mrb[0].mxu0
  %v831 = vadd.f32 0.0, %v830
  %v832 = vpop.f32.mrb[0].mxu0
  %v833 = vpop.f32.mrb[0].mxu0
  %v834 = vadd.f32 0.0, %v833
  %v835 = vpop.f32.mrb[0].mxu0
  %836 = vmatprep.mubr.bf16.mxu0 0
  %837 = vmatmul.mubr.bf16.gmra.mrb[0].mxu0 %v788
  %v838 = vpop.f32.mrb[0].mxu0
  %v839 = vadd.f32 0.0, %v838
  %v840 = vpop.f32.mrb[0].mxu0
  %v841 = vpop.f32.mrb[0].mxu0
  %v842 = vadd.f32 0.0, %v841
  %v843 = vpop.f32.mrb[0].mxu0
  %844 = vmatprep.mubr.bf16.mxu0 0
  %845 = vmatmul.mubr.bf16.gmra.mrb[0].mxu0 %v791
  %v846 = vpop.f32.mrb[0].mxu0
  %v847 = vadd.f32 0.0, %v846
  %v848 = vpop.f32.mrb[0].mxu0
  %v849 = vpop.f32.mrb[0].mxu0
  %v850 = vadd.f32 0.0, %v849
  %v851 = vpop.f32.mrb[0].mxu0
  %852 = vmatprep.mubr.bf16.mxu0 0
  %853 = vmatmul.mubr.bf16.gmra.mrb[0].mxu0 %v794
  %v854 = vpop.f32.mrb[0].mxu0
  %v855 = vadd.f32 0.0, %v854
  %v856 = vpop.f32.mrb[0].mxu0
  %v857 = vpop.f32.mrb[0].mxu0
  %v858 = vadd.f32 0.0, %v857
  %v859 = vpop.f32.mrb[0].mxu0
  %860 = vdwg.mxu0
  %v869 = vunpack.c.l.b16 %v735
  %v870 = vunpack.c.l.b16 %v736
  %v871 = vunpack.c.l.b16 %v737
  %v872 = vunpack.c.l.b16 %v738
  %v873 = vunpack.c.l.b16 %v739
  %v874 = vunpack.c.l.b16 %v740
  %v875 = vunpack.c.l.b16 %v741
  %v876 = vunpack.c.l.b16 %v742
  %v877 = vpack.c.b16 %v870, %v869
  %v878 = vpack.c.b16 %v872, %v871
  %v879 = vpack.c.b16 %v874, %v873
  %v880 = vpack.c.b16 %v876, %v875
  %v886 = vsel %vm150, %v743, 0
  %v889 = vsel %vm150, %v744, 0
  %v892 = vsel %vm150, %v745, 0
  %v895 = vsel %vm150, %v746, 0
  %897 = vmatprep.subr.bf16.mxu0 0
  %898 = vmatpush1.bf16.msra.mxu0 %v877
  %899 = vmatprep.subr.bf16.mxu0 0
  %900 = vmatpush1.bf16.msra.mxu0 %v878
  %901 = vmatprep.subr.bf16.mxu0 0
  %902 = vmatpush1.bf16.msra.mxu0 %v879
  %903 = vmatprep.subr.bf16.mxu0 0
  %904 = vmatpush1.bf16.msra.mxu0 %v880
  %905 = vmatprep.subr.bf16.mxu0 0
  %906 = vmatpush1.bf16.msra.mxu0 0
  %907 = vmatprep.subr.bf16.mxu0 0
  %908 = vmatpush1.bf16.msra.mxu0 0
  %909 = vmatprep.subr.bf16.mxu0 0
  %910 = vmatpush1.bf16.msra.mxu0 0
  %911 = vmatprep.subr.bf16.mxu0 0
  %912 = vmatpush1.bf16.msra.mxu0 0
  %913 = vmatprep.subr.bf16.mxu0 0
  %914 = vmatpush1.bf16.msra.mxu0 0
  %915 = vmatprep.subr.bf16.mxu0 0
  %916 = vmatpush1.bf16.msra.mxu0 0
  %917 = vmatprep.subr.bf16.mxu0 0
  %918 = vmatpush1.bf16.msra.mxu0 0
  %919 = vmatprep.subr.bf16.mxu0 0
  %920 = vmatpush1.bf16.msra.mxu0 0
  %921 = vmatprep.subr.bf16.mxu0 0
  %922 = vmatpush1.bf16.msra.mxu0 0
  %923 = vmatprep.subr.bf16.mxu0 0
  %924 = vmatpush1.bf16.msra.mxu0 0
  %925 = vmatprep.subr.bf16.mxu0 0
  %926 = vmatpush1.bf16.msra.mxu0 0
  %927 = vmatprep.subr.bf16.mxu0 0
  %928 = vmatpush1.bf16.msra.mxu0 0
  %929 = vmatprep.mubr.bf16.mxu0 0
  %930 = vmatmul.mubr.bf16.gmra.mrb[0].mxu0 %v886
  %v931 = vpop.f32.mrb[0].mxu0
  %v932 = vadd.f32 %v831, %v931
  %v933 = vpop.f32.mrb[0].mxu0
  %v934 = vpop.f32.mrb[0].mxu0
  %v935 = vadd.f32 %v834, %v934
  %v936 = vpop.f32.mrb[0].mxu0
  %937 = vmatprep.mubr.bf16.mxu0 0
  %938 = vmatmul.mubr.bf16.gmra.mrb[0].mxu0 %v889
  %v939 = vpop.f32.mrb[0].mxu0
  %v940 = vadd.f32 %v839, %v939
  %v941 = vpop.f32.mrb[0].mxu0
  %v942 = vpop.f32.mrb[0].mxu0
  %v943 = vadd.f32 %v842, %v942
  %v944 = vpop.f32.mrb[0].mxu0
  %945 = vmatprep.mubr.bf16.mxu0 0
  %946 = vmatmul.mubr.bf16.gmra.mrb[0].mxu0 %v892
  %v947 = vpop.f32.mrb[0].mxu0
  %v948 = vadd.f32 %v847, %v947
  %v949 = vpop.f32.mrb[0].mxu0
  %v950 = vpop.f32.mrb[0].mxu0
  %v951 = vadd.f32 %v850, %v950
  %v952 = vpop.f32.mrb[0].mxu0
  %953 = vmatprep.mubr.bf16.mxu0 0
  %954 = vmatmul.mubr.bf16.gmra.mrb[0].mxu0 %v895
  %v955 = vpop.f32.mrb[0].mxu0
  %v956 = vadd.f32 %v855, %v955
  %v957 = vpop.f32.mrb[0].mxu0
  %v958 = vpop.f32.mrb[0].mxu0
  %v959 = vadd.f32 %v858, %v958
  %v960 = vpop.f32.mrb[0].mxu0
  %961 = vdwg.mxu0
  %s962 = scalar_lea.vmem %s3, 64
  %v963 = vld [vmem:[%s962] sm:$0xf]
  %v964 = vld [vmem:[%s962 + $0x4] sm:$0xf]
  %v965 = vld [vmem:[%s962 + $0x8] sm:$0xf]
  %v966 = vld [vmem:[%s962 + $0xc] sm:$0xf]
  %v967 = vld [vmem:[%s962 + $0x10] sm:$0xf]
  %v968 = vld [vmem:[%s962 + $0x14] sm:$0xf]
  %v969 = vld [vmem:[%s962 + $0x18] sm:$0xf]
  %v970 = vld [vmem:[%s962 + $0x1c] sm:$0xf]
  %v971 = vpack.c.bf16 %v728, %v727
  %v972 = vpack.c.bf16 %v730, %v729
  %v973 = vpack.c.bf16 %v732, %v731
  %v974 = vpack.c.bf16 %v734, %v733
  %v983 = vunpack.c.l.b16 %v963
  %v984 = vunpack.c.l.b16 %v964
  %v985 = vunpack.c.l.b16 %v965
  %v986 = vunpack.c.l.b16 %v966
  %v987 = vunpack.c.l.b16 %v967
  %v988 = vunpack.c.l.b16 %v968
  %v989 = vunpack.c.l.b16 %v969
  %v990 = vunpack.c.l.b16 %v970
  %v991 = vpack.c.b16 %v984, %v983
  %v992 = vpack.c.b16 %v986, %v985
  %v993 = vpack.c.b16 %v988, %v987
  %v994 = vpack.c.b16 %v990, %v989
  %v1000 = vsel %vm150, %v971, 0
  %v1003 = vsel %vm150, %v972, 0
  %v1006 = vsel %vm150, %v973, 0
  %v1009 = vsel %vm150, %v974, 0
  %1011 = vmatprep.subr.bf16.mxu0 0
  %1012 = vmatpush1.bf16.msra.mxu0 %v991
  %1013 = vmatprep.subr.bf16.mxu0 0
  %1014 = vmatpush1.bf16.msra.mxu0 %v992
  %1015 = vmatprep.subr.bf16.mxu0 0
  %1016 = vmatpush1.bf16.msra.mxu0 %v993
  %1017 = vmatprep.subr.bf16.mxu0 0
  %1018 = vmatpush1.bf16.msra.mxu0 %v994
  %1019 = vmatprep.subr.bf16.mxu0 0
  %1020 = vmatpush1.bf16.msra.mxu0 0
  %1021 = vmatprep.subr.bf16.mxu0 0
  %1022 = vmatpush1.bf16.msra.mxu0 0
  %1023 = vmatprep.subr.bf16.mxu0 0
  %1024 = vmatpush1.bf16.msra.mxu0 0
  %1025 = vmatprep.subr.bf16.mxu0 0
  %1026 = vmatpush1.bf16.msra.mxu0 0
  %1027 = vmatprep.subr.bf16.mxu0 0
  %1028 = vmatpush1.bf16.msra.mxu0 0
  %1029 = vmatprep.subr.bf16.mxu0 0
  %1030 = vmatpush1.bf16.msra.mxu0 0
  %1031 = vmatprep.subr.bf16.mxu0 0
  %1032 = vmatpush1.bf16.msra.mxu0 0
  %1033 = vmatprep.subr.bf16.mxu0 0
  %1034 = vmatpush1.bf16.msra.mxu0 0
  %1035 = vmatprep.subr.bf16.mxu0 0
  %1036 = vmatpush1.bf16.msra.mxu0 0
  %1037 = vmatprep.subr.bf16.mxu0 0
  %1038 = vmatpush1.bf16.msra.mxu0 0
  %1039 = vmatprep.subr.bf16.mxu0 0
  %1040 = vmatpush1.bf16.msra.mxu0 0
  %1041 = vmatprep.subr.bf16.mxu0 0
  %1042 = vmatpush1.bf16.msra.mxu0 0
  %1043 = vmatprep.mubr.bf16.mxu0 0
  %1044 = vmatmul.mubr.bf16.gmra.mrb[0].mxu0 %v1000
  %v1045 = vpop.f32.mrb[0].mxu0
  %v1046 = vadd.f32 0.0, %v1045
  %v1047 = vpop.f32.mrb[0].mxu0
  %v1048 = vpop.f32.mrb[0].mxu0
  %v1049 = vadd.f32 0.0, %v1048
  %v1050 = vpop.f32.mrb[0].mxu0
  %1051 = vmatprep.mubr.bf16.mxu0 0
  %1052 = vmatmul.mubr.bf16.gmra.mrb[0].mxu0 %v1003
  %v1053 = vpop.f32.mrb[0].mxu0
  %v1054 = vadd.f32 0.0, %v1053
  %v1055 = vpop.f32.mrb[0].mxu0
  %v1056 = vpop.f32.mrb[0].mxu0
  %v1057 = vadd.f32 0.0, %v1056
  %v1058 = vpop.f32.mrb[0].mxu0
  %1059 = vmatprep.mubr.bf16.mxu0 0
  %1060 = vmatmul.mubr.bf16.gmra.mrb[0].mxu0 %v1006
  %v1061 = vpop.f32.mrb[0].mxu0
  %v1062 = vadd.f32 0.0, %v1061
  %v1063 = vpop.f32.mrb[0].mxu0
  %v1064 = vpop.f32.mrb[0].mxu0
  %v1065 = vadd.f32 0.0, %v1064
  %v1066 = vpop.f32.mrb[0].mxu0
  %1067 = vmatprep.mubr.bf16.mxu0 0
  %1068 = vmatmul.mubr.bf16.gmra.mrb[0].mxu0 %v1009
  %v1069 = vpop.f32.mrb[0].mxu0
  %v1070 = vadd.f32 0.0, %v1069
  %v1071 = vpop.f32.mrb[0].mxu0
  %v1072 = vpop.f32.mrb[0].mxu0
  %v1073 = vadd.f32 0.0, %v1072
  %v1074 = vpop.f32.mrb[0].mxu0
  %1075 = vdwg.mxu0
  %v1076 = vadd.f32 %v932, %v1046
  %v1077 = vadd.f32 %v935, %v1049
  %v1078 = vadd.f32 %v940, %v1054
  %v1079 = vadd.f32 %v943, %v1057
  %v1080 = vadd.f32 %v948, %v1062
  %v1081 = vadd.f32 %v951, %v1065
  %v1082 = vadd.f32 %v956, %v1070
  %v1083 = vadd.f32 %v959, %v1073
  %v1084 = vld [vmem:[%s4] sm:$0x3]
  %v1085 = vsel %vm150, %v1076, 0.0
  %v1086 = vsel %vm150, %v1077, 0.0
  %v1087 = vadd.f32 %v1085, %v1086
  %v1088 = vsel %vm150, %v1078, 0.0
  %v1089 = vadd.f32 %v1087, %v1088
  %v1090 = vsel %vm150, %v1079, 0.0
  %v1091 = vadd.f32 %v1089, %v1090
  %v1092 = vsel %vm150, %v1080, 0.0
  %v1093 = vadd.f32 %v1091, %v1092
  %v1094 = vsel %vm150, %v1081, 0.0
  %v1095 = vadd.f32 %v1093, %v1094
  %v1096 = vsel %vm150, %v1082, 0.0
  %v1097 = vadd.f32 %v1095, %v1096
  %v1098 = vsel %vm150, %v1083, 0.0
  %v1099 = vadd.f32 %v1097, %v1098
  %v1100 = vrot.slane %v1099, 4
  %v1101 = vadd.f32 %v1099, %v1100
  %v1102 = vrot.slane %v1101, 2
  %v1103 = vadd.f32 %v1101, %v1102
  %v1104 = vrot.slane %v1103, 1
  %v1105 = vadd.f32 %v1103, %v1104
  %v1106 = vmul.f32 %v1105, %v604
  %v1107 = vsub.f32 %v1076, %v1106
  %v1108 = vsub.f32 %v1077, %v1106
  %v1109 = vsub.f32 %v1078, %v1106
  %v1110 = vsub.f32 %v1079, %v1106
  %v1111 = vsub.f32 %v1080, %v1106
  %v1112 = vsub.f32 %v1081, %v1106
  %v1113 = vsub.f32 %v1082, %v1106
  %v1114 = vsub.f32 %v1083, %v1106
  %v1115 = vmul.f32 %v1107, %v1107
  %v1116 = vmul.f32 %v1108, %v1108
  %v1117 = vmul.f32 %v1109, %v1109
  %v1118 = vmul.f32 %v1110, %v1110
  %v1119 = vmul.f32 %v1111, %v1111
  %v1120 = vmul.f32 %v1112, %v1112
  %v1121 = vmul.f32 %v1113, %v1113
  %v1122 = vmul.f32 %v1114, %v1114
  %v1123 = vsel %vm150, %v1115, 0.0
  %v1124 = vsel %vm150, %v1116, 0.0
  %v1125 = vadd.f32 %v1123, %v1124
  %v1126 = vsel %vm150, %v1117, 0.0
  %v1127 = vadd.f32 %v1125, %v1126
  %v1128 = vsel %vm150, %v1118, 0.0
  %v1129 = vadd.f32 %v1127, %v1128
  %v1130 = vsel %vm150, %v1119, 0.0
  %v1131 = vadd.f32 %v1129, %v1130
  %v1132 = vsel %vm150, %v1120, 0.0
  %v1133 = vadd.f32 %v1131, %v1132
  %v1134 = vsel %vm150, %v1121, 0.0
  %v1135 = vadd.f32 %v1133, %v1134
  %v1136 = vsel %vm150, %v1122, 0.0
  %v1137 = vadd.f32 %v1135, %v1136
  %v1138 = vrot.slane %v1137, 4
  %v1139 = vadd.f32 %v1137, %v1138
  %v1140 = vrot.slane %v1139, 2
  %v1141 = vadd.f32 %v1139, %v1140
  %v1142 = vrot.slane %v1141, 1
  %v1143 = vadd.f32 %v1141, %v1142
  %v1144 = vmul.f32 %v1143, %v604
  %v1145 = vadd.f32 %v1144, 1e-05
  %v1146 = vrsqrt.pop %v1145
  %v1147 = vmul.f32 %v1107, %v1146
  %v1148 = vmul.f32 %v1108, %v1146
  %v1149 = vmul.f32 %v1109, %v1146
  %v1150 = vmul.f32 %v1110, %v1146
  %v1151 = vmul.f32 %v1111, %v1146
  %v1152 = vmul.f32 %v1112, %v1146
  %v1153 = vmul.f32 %v1113, %v1146
  %v1154 = vmul.f32 %v1114, %v1146
  %v1155 = vlaneseq
  %v1156 = vshrl.u32 %v1155, 7
  %v1157 = vsub.s32 0, %v1156
  %v1158 = vrot.slane %v1084, %v1157
  %v1159 = vmul.f32 %v1147, %v1158
  %v1160 = vmul.f32 %v1148, %v1158
  %v1161 = vmul.f32 %v1149, %v1158
  %v1162 = vmul.f32 %v1150, %v1158
  %v1163 = vmul.f32 %v1151, %v1158
  %v1164 = vmul.f32 %v1152, %v1158
  %v1165 = vmul.f32 %v1153, %v1158
  %v1166 = vmul.f32 %v1154, %v1158
  %v1167 = vlaneseq
  %v1168 = vshrl.u32 %v1167, 7
  %v1169 = vsub.s32 1, %v1168
  %v1170 = vrot.slane %v1084, %v1169
  %v1171 = vadd.f32 %v1159, %v1170
  %v1172 = vadd.f32 %v1160, %v1170
  %v1173 = vadd.f32 %v1161, %v1170
  %v1174 = vadd.f32 %v1162, %v1170
  %v1175 = vadd.f32 %v1163, %v1170
  %v1176 = vadd.f32 %v1164, %v1170
  %v1177 = vadd.f32 %v1165, %v1170
  %v1178 = vadd.f32 %v1166, %v1170
  %v1179 = vadd.f32 %v1171, %v142
  %v1180 = vadd.f32 %v1172, %v143
  %v1181 = vadd.f32 %v1173, %v144
  %v1182 = vadd.f32 %v1174, %v145
  %v1183 = vadd.f32 %v1175, %v146
  %v1184 = vadd.f32 %v1176, %v147
  %v1185 = vadd.f32 %v1177, %v148
  %v1186 = vadd.f32 %v1178, %v149
  %v1187 = vmax.f32 %v1179, 0.0
  %v1188 = vmax.f32 %v1180, 0.0
  %v1189 = vmax.f32 %v1181, 0.0
  %v1190 = vmax.f32 %v1182, 0.0
  %v1191 = vmax.f32 %v1183, 0.0
  %v1192 = vmax.f32 %v1184, 0.0
  %v1193 = vmax.f32 %v1185, 0.0
  %v1194 = vmax.f32 %v1186, 0.0
  %1195 = vst.msk [vmem:[%s5] sm:$0xff] %vm150, %v1187
  %1196 = vst.msk [vmem:[%s5 + $0x8] sm:$0xff] %vm150, %v1188
  %1197 = vst.msk [vmem:[%s5 + $0x10] sm:$0xff] %vm150, %v1189
  %1198 = vst.msk [vmem:[%s5 + $0x18] sm:$0xff] %vm150, %v1190
  %1199 = vst.msk [vmem:[%s5 + $0x20] sm:$0xff] %vm150, %v1191
  %1200 = vst.msk [vmem:[%s5 + $0x28] sm:$0xff] %vm150, %v1192
  %1201 = vst.msk [vmem:[%s5 + $0x30] sm:$0xff] %vm150, %v1193
  %1202 = vst.msk [vmem:[%s5 + $0x38] sm:$0xff] %vm150, %v1194
  // Predicated region
  $region22: #{_lambda_.7} parent=0 // pred_check
    _
  $region23: #{_lambda_.7} parent=0 // pred_check_branch
    %1204 = sbr.rel (0) target = $region25
  $region24: #{_lambda_.7} parent=0 // pred_region
    _
  $region25: #{_lambda_.7} parent=0 // pred_fallthru
    _
  // Predicated region
  $region26: #{_lambda_.7} parent=0 // pred_check
    _
  $region27: #{_lambda_.7} parent=0 // pred_check_branch
    %1206 = sbr.rel (0) target = $region29
  $region28: #{_lambda_.7} parent=0 // pred_region
    _
  $region29: #{_lambda_.7} parent=0 // pred_fallthru
    _

// kernel: _lambda_.8
$region0: #{_lambda_.8}
  #allocation0 [shape = 'u32[]', space=smem, size = 0x4, offset = 0x4, fixed_abs, tag = 'smem constant byte address 0x4 - core index']
  #allocation1 [shape = 'u32[144,128]{1,0:T(1,128)}', space=vmem, size = 0x12000, scoped, tag = 'internal scratch']
  #allocation2 [shape = 'f32[33,64]{1,0:T(8,128)}', space=vmem, size = 0x5000, scoped, tag = 'scratch operand']
  #allocation3 [shape = 'f32[34,128]{1,0:T(8,128)}', space=vmem, size = 0x5000, scoped, tag = 'scratch operand']
  %s0 = inlined_call_operand.vmem [shape: f32[32,128], index: 0, kind: input, shape index: {}]
  %s1 = inlined_call_operand.vmem [shape: bf16[3,64,128], index: 1, kind: input, shape index: {}]
  %s2 = inlined_call_operand.vmem [shape: f32[2,128], index: 2, kind: input, shape index: {}]
  %s3 = inlined_call_operand.vmem [shape: bf16[3,128,128], index: 3, kind: input, shape index: {}]
  %s4 = inlined_call_operand.vmem [shape: f32[2,128], index: 4, kind: input, shape index: {}]
  %s5 = inlined_call_operand.vmem [shape: bf16[64,128], index: 5, kind: input, shape index: {}]
  %s6 = inlined_call_operand.vmem [shape: f32[2,128], index: 6, kind: input, shape index: {}]
  %s7 = inlined_call_operand.vmem [shape: f32[32,128], index: 7, kind: output, shape index: {}]
  %s8 = sld [smem:[#allocation0]]
  $region38: #{_lambda_.8} parent=0
    _
  %s10 = ssub.s32 1, %s8
  %s11 = scalar_select 0, %s10, %s8
  // Predicated region
  $region2: #{_lambda_.8} parent=0 // pred_check
    _
  $region3: #{_lambda_.8} parent=0 // pred_check_branch
    %13 = sbr.rel (0) target = $region5
  $region4: #{_lambda_.8} parent=0 // pred_region
    _
  $region5: #{_lambda_.8} parent=0 // pred_fallthru
    _
  // Predicated region
  $region6: #{_lambda_.8} parent=0 // pred_check
    _
  $region7: #{_lambda_.8} parent=0 // pred_check_branch
    %15 = sbr.rel (0) target = $region9
  $region8: #{_lambda_.8} parent=0 // pred_region
    _
  $region9: #{_lambda_.8} parent=0 // pred_fallthru
    _
  // Predicated region
  $region10: #{_lambda_.8} parent=0 // pred_check
    _
  $region11: #{_lambda_.8} parent=0 // pred_check_branch
    %17 = sbr.rel (0) target = $region13
  $region12: #{_lambda_.8} parent=0 // pred_region
    _
  $region13: #{_lambda_.8} parent=0 // pred_fallthru
    _
  // Predicated region
  $region14: #{_lambda_.8} parent=0 // pred_check
    _
  $region15: #{_lambda_.8} parent=0 // pred_check_branch
    %19 = sbr.rel (0) target = $region17
  $region16: #{_lambda_.8} parent=0 // pred_region
    _
  $region17: #{_lambda_.8} parent=0 // pred_fallthru
    _
  // Predicated region
  $region18: #{_lambda_.8} parent=0 // pred_check
    _
  $region19: #{_lambda_.8} parent=0 // pred_check_branch
    %21 = sbr.rel (0) target = $region21
  $region20: #{_lambda_.8} parent=0 // pred_region
    _
  $region21: #{_lambda_.8} parent=0 // pred_fallthru
    _
  // Predicated region
  $region22: #{_lambda_.8} parent=0 // pred_check
    _
  $region23: #{_lambda_.8} parent=0 // pred_check_branch
    %23 = sbr.rel (0) target = $region25
  $region24: #{_lambda_.8} parent=0 // pred_region
    _
  $region25: #{_lambda_.8} parent=0 // pred_fallthru
    _
  // Predicated region
  $region26: #{_lambda_.8} parent=0 // pred_check
    _
  $region27: #{_lambda_.8} parent=0 // pred_check_branch
    %25 = sbr.rel (0) target = $region29
  $region28: #{_lambda_.8} parent=0 // pred_region
    _
  $region29: #{_lambda_.8} parent=0 // pred_fallthru
    _
  %v27 = vlaneseq
  %v28 = vshrl.u32 %v27, 7
  %v29 = vadd.s32 %v28, 8
  %v30 = vadd.s32 %v28, 16
  %v31 = vadd.s32 %v28, 24
  %vm32 = vcmp.lt.s32.totalorder %v28, 0
  %v33 = vsub.s32 0, %v28
  %v34 = vsel %vm32, %v33, %v28
  %v35 = vshrl.u32 %v34, 4
  %v36 = vand.u32 %v34, 15
  %v37 = vsub.s32 0, %v36
  %v38 = vsel %vm32, %v37, %v36
  %vm39 = vcmp.lt.s32.totalorder %v29, 0
  %v40 = vsub.s32 0, %v29
  %v41 = vsel %vm39, %v40, %v29
  %v42 = vshrl.u32 %v41, 4
  %v43 = vand.u32 %v41, 15
  %v44 = vsub.s32 0, %v43
  %v45 = vsel %vm39, %v44, %v43
  %vm46 = vcmp.lt.s32.totalorder %v30, 0
  %v47 = vsub.s32 0, %v30
  %v48 = vsel %vm46, %v47, %v30
  %v49 = vshrl.u32 %v48, 4
  %v50 = vand.u32 %v48, 15
  %v51 = vsub.s32 0, %v50
  %v52 = vsel %vm46, %v51, %v50
  %vm53 = vcmp.lt.s32.totalorder %v31, 0
  %v54 = vsub.s32 0, %v31
  %v55 = vsel %vm53, %v54, %v31
  %v56 = vshrl.u32 %v55, 4
  %v57 = vand.u32 %v55, 15
  %v58 = vsub.s32 0, %v57
  %v59 = vsel %vm53, %v58, %v57
  %vm60 = vcmp.ne.s32.totalorder %v38, 0
  %vm61 = vcmp.ne.s32.totalorder %v45, 0
  %vm62 = vcmp.ne.s32.totalorder %v52, 0
  %vm63 = vcmp.ne.s32.totalorder %v59, 0
  %vm64 = vcmp.lt.s32.totalorder %v38, 0
  %vm65 = vcmp.lt.s32.totalorder %v45, 0
  %vm66 = vcmp.lt.s32.totalorder %v52, 0
  %vm67 = vcmp.lt.s32.totalorder %v59, 0
  %vm68 = vmand %vm64, %vm60
  %vm69 = vmand %vm65, %vm61
  %vm70 = vmand %vm66, %vm62
  %vm71 = vmand %vm67, %vm63
  %v72 = vadd.s32 %v38, 16
  %v73 = vadd.s32 %v45, 16
  %v74 = vadd.s32 %v52, 16
  %v75 = vadd.s32 %v59, 16
  %v76 = vsel %vm68, %v72, %v38
  %v77 = vsel %vm69, %v73, %v45
  %v78 = vsel %vm70, %v74, %v52
  %v79 = vsel %vm71, %v75, %v59
  %vm80 = vcmp.eq.s32.totalorder %v76, 0
  %vm81 = vcmp.eq.s32.totalorder %v77, 0
  %vm82 = vcmp.eq.s32.totalorder %v78, 0
  %vm83 = vcmp.eq.s32.totalorder %v79, 0
  %vm84 = vcmp.eq.s32.totalorder %v76, 15
  %vm85 = vcmp.eq.s32.totalorder %v77, 15
  %vm86 = vcmp.eq.s32.totalorder %v78, 15
  %vm87 = vcmp.eq.s32.totalorder %v79, 15
  %v88 = vld [vmem:[%s0] sm:$0xff]
  %v89 = vld [vmem:[%s0 + $0x8] sm:$0xff]
  %v90 = vld [vmem:[%s0 + $0x10] sm:$0xff]
  %v91 = vld [vmem:[%s0 + $0x18] sm:$0xff]
  %vm92 = vcmask 523264
  %93 = vst.msk [vmem:[#allocation2] sm:$0xff] %vm92, 0.0
  %94 = vst.msk [vmem:[#allocation2 + $0x8] sm:$0xff] %vm92, 0.0
  %95 = vst.msk [vmem:[#allocation2 + $0x10] sm:$0xff] %vm92, 0.0
  %96 = vst.msk [vmem:[#allocation2 + $0x18] sm:$0xff] %vm92, 0.0
  %vm97 = vcmask 516096
  %98 = vst.msk [vmem:[#allocation2 + $0x20] sm:$0x1] %vm97, 0.0
  %103 = vrot.lane.b32.xlu0 %v88, 64
  %v104 = vpop.permute.xlu0 %103
  %105 = vrot.lane.b32.xlu0 %v89, 64
  %v106 = vpop.permute.xlu0 %105
  %107 = vrot.lane.b32.xlu0 %v90, 64
  %v108 = vpop.permute.xlu0 %107
  %109 = vrot.lane.b32.xlu0 %v91, 64
  %v110 = vpop.permute.xlu0 %109
  %115 = vst.msk [vmem:[#allocation2 + $0x1] sm:$0xff] %vm92, %v104
  %116 = vst.msk [vmem:[#allocation2 + $0x9] sm:$0xff] %vm92, %v106
  %117 = vst.msk [vmem:[#allocation2 + $0x11] sm:$0xff] %vm92, %v108
  %118 = vst.msk [vmem:[#allocation2 + $0x19] sm:$0xff] %vm92, %v110
  %v119 = vld [vmem:[#allocation2] sm:$0xff]
  %v120 = vld [vmem:[#allocation2 + $0x8] sm:$0xff]
  %v121 = vld [vmem:[#allocation2 + $0x10] sm:$0xff]
  %v122 = vld [vmem:[#allocation2 + $0x18] sm:$0xff]
  %v123 = vsel %vm80, 1, 0
  %v124 = vsel %vm81, 1, 0
  %v125 = vsel %vm82, 1, 0
  %v126 = vsel %vm83, 1, 0
  %vm127 = vcmp.eq.s32.totalorder %v123, 1
  %vm128 = vcmp.eq.s32.totalorder %v124, 1
  %vm129 = vcmp.eq.s32.totalorder %v125, 1
  %vm130 = vcmp.eq.s32.totalorder %v126, 1
  %v131 = vsel %vm127, 0.0, %v119
  %v132 = vsel %vm128, 0.0, %v120
  %v133 = vsel %vm129, 0.0, %v121
  %v134 = vsel %vm130, 0.0, %v122
  %v135 = vld [vmem:[%s1] sm:$0xf]
  %v136 = vld [vmem:[%s1 + $0x4] sm:$0xf]
  %v137 = vld [vmem:[%s1 + $0x8] sm:$0xf]
  %v138 = vld [vmem:[%s1 + $0xc] sm:$0xf]
  %v139 = vld [vmem:[%s1 + $0x10] sm:$0xf]
  %v140 = vld [vmem:[%s1 + $0x14] sm:$0xf]
  %v141 = vld [vmem:[%s1 + $0x18] sm:$0xf]
  %v142 = vld [vmem:[%s1 + $0x1c] sm:$0xf]
  %v143 = vpack.c.bf16 %v132, %v131
  %v144 = vpack.c.bf16 %v134, %v133
  %s145 = scalar_lea.vmem %s1, 32
  %v146 = vld [vmem:[%s145] sm:$0xf]
  %v147 = vld [vmem:[%s145 + $0x4] sm:$0xf]
  %v148 = vld [vmem:[%s145 + $0x8] sm:$0xf]
  %v149 = vld [vmem:[%s145 + $0xc] sm:$0xf]
  %v150 = vld [vmem:[%s145 + $0x10] sm:$0xf]
  %v151 = vld [vmem:[%s145 + $0x14] sm:$0xf]
  %v152 = vld [vmem:[%s145 + $0x18] sm:$0xf]
  %v153 = vld [vmem:[%s145 + $0x1c] sm:$0xf]
  %v154 = vpack.c.bf16 %v89, %v88
  %v155 = vpack.c.bf16 %v91, %v90
  %v164 = vunpack.c.l.b16 %v146
  %v165 = vunpack.c.l.b16 %v147
  %v166 = vunpack.c.l.b16 %v148
  %v167 = vunpack.c.l.b16 %v149
  %v168 = vunpack.c.l.b16 %v150
  %v169 = vunpack.c.l.b16 %v151
  %v170 = vunpack.c.l.b16 %v152
  %v171 = vunpack.c.l.b16 %v153
  %v172 = vpack.c.b16 %v165, %v164
  %v173 = vpack.c.b16 %v167, %v166
  %v174 = vpack.c.b16 %v169, %v168
  %v175 = vpack.c.b16 %v171, %v170
  %v181 = vsel %vm92, %v154, 0
  %v184 = vsel %vm92, %v155, 0
  %186 = vmatprep.subr.bf16.mxu0 0
  %187 = vmatpush1.bf16.msra.mxu0 %v172
  %188 = vmatprep.subr.bf16.mxu0 0
  %189 = vmatpush1.bf16.msra.mxu0 %v173
  %190 = vmatprep.subr.bf16.mxu0 0
  %191 = vmatpush1.bf16.msra.mxu0 %v174
  %192 = vmatprep.subr.bf16.mxu0 0
  %193 = vmatpush1.bf16.msra.mxu0 %v175
  %194 = vmatprep.subr.bf16.mxu0 0
  %195 = vmatpush1.bf16.msra.mxu0 0
  %196 = vmatprep.subr.bf16.mxu0 0
  %197 = vmatpush1.bf16.msra.mxu0 0
  %198 = vmatprep.subr.bf16.mxu0 0
  %199 = vmatpush1.bf16.msra.mxu0 0
  %200 = vmatprep.subr.bf16.mxu0 0
  %201 = vmatpush1.bf16.msra.mxu0 0
  %202 = vmatprep.subr.bf16.mxu0 0
  %203 = vmatpush1.bf16.msra.mxu0 0
  %204 = vmatprep.subr.bf16.mxu0 0
  %205 = vmatpush1.bf16.msra.mxu0 0
  %206 = vmatprep.subr.bf16.mxu0 0
  %207 = vmatpush1.bf16.msra.mxu0 0
  %208 = vmatprep.subr.bf16.mxu0 0
  %209 = vmatpush1.bf16.msra.mxu0 0
  %210 = vmatprep.subr.bf16.mxu0 0
  %211 = vmatpush1.bf16.msra.mxu0 0
  %212 = vmatprep.subr.bf16.mxu0 0
  %213 = vmatpush1.bf16.msra.mxu0 0
  %214 = vmatprep.subr.bf16.mxu0 0
  %215 = vmatpush1.bf16.msra.mxu0 0
  %216 = vmatprep.subr.bf16.mxu0 0
  %217 = vmatpush1.bf16.msra.mxu0 0
  %218 = vmatprep.mubr.bf16.mxu0 0
  %219 = vmatmul.mubr.bf16.gmra.mrb[0].mxu0 %v181
  %v220 = vpop.f32.mrb[0].mxu0
  %v221 = vadd.f32 0.0, %v220
  %v222 = vpop.f32.mrb[0].mxu0
  %v223 = vpop.f32.mrb[0].mxu0
  %v224 = vadd.f32 0.0, %v223
  %v225 = vpop.f32.mrb[0].mxu0
  %226 = vmatprep.mubr.bf16.mxu0 0
  %227 = vmatmul.mubr.bf16.gmra.mrb[0].mxu0 %v184
  %v228 = vpop.f32.mrb[0].mxu0
  %v229 = vadd.f32 0.0, %v228
  %v230 = vpop.f32.mrb[0].mxu0
  %v231 = vpop.f32.mrb[0].mxu0
  %v232 = vadd.f32 0.0, %v231
  %v233 = vpop.f32.mrb[0].mxu0
  %234 = vdwg.mxu0
  %v243 = vunpack.c.l.b16 %v135
  %v244 = vunpack.c.l.b16 %v136
  %v245 = vunpack.c.l.b16 %v137
  %v246 = vunpack.c.l.b16 %v138
  %v247 = vunpack.c.l.b16 %v139
  %v248 = vunpack.c.l.b16 %v140
  %v249 = vunpack.c.l.b16 %v141
  %v250 = vunpack.c.l.b16 %v142
  %v251 = vpack.c.b16 %v244, %v243
  %v252 = vpack.c.b16 %v246, %v245
  %v253 = vpack.c.b16 %v248, %v247
  %v254 = vpack.c.b16 %v250, %v249
  %v260 = vsel %vm92, %v143, 0
  %v263 = vsel %vm92, %v144, 0
  %265 = vmatprep.subr.bf16.mxu0 0
  %266 = vmatpush1.bf16.msra.mxu0 %v251
  %267 = vmatprep.subr.bf16.mxu0 0
  %268 = vmatpush1.bf16.msra.mxu0 %v252
  %269 = vmatprep.subr.bf16.mxu0 0
  %270 = vmatpush1.bf16.msra.mxu0 %v253
  %271 = vmatprep.subr.bf16.mxu0 0
  %272 = vmatpush1.bf16.msra.mxu0 %v254
  %273 = vmatprep.subr.bf16.mxu0 0
  %274 = vmatpush1.bf16.msra.mxu0 0
  %275 = vmatprep.subr.bf16.mxu0 0
  %276 = vmatpush1.bf16.msra.mxu0 0
  %277 = vmatprep.subr.bf16.mxu0 0
  %278 = vmatpush1.bf16.msra.mxu0 0
  %279 = vmatprep.subr.bf16.mxu0 0
  %280 = vmatpush1.bf16.msra.mxu0 0
  %281 = vmatprep.subr.bf16.mxu0 0
  %282 = vmatpush1.bf16.msra.mxu0 0
  %283 = vmatprep.subr.bf16.mxu0 0
  %284 = vmatpush1.bf16.msra.mxu0 0
  %285 = vmatprep.subr.bf16.mxu0 0
  %286 = vmatpush1.bf16.msra.mxu0 0
  %287 = vmatprep.subr.bf16.mxu0 0
  %288 = vmatpush1.bf16.msra.mxu0 0
  %289 = vmatprep.subr.bf16.mxu0 0
  %290 = vmatpush1.bf16.msra.mxu0 0
  %291 = vmatprep.subr.bf16.mxu0 0
  %292 = vmatpush1.bf16.msra.mxu0 0
  %293 = vmatprep.subr.bf16.mxu0 0
  %294 = vmatpush1.bf16.msra.mxu0 0
  %295 = vmatprep.subr.bf16.mxu0 0
  %296 = vmatpush1.bf16.msra.mxu0 0
  %297 = vmatprep.mubr.bf16.mxu0 0
  %298 = vmatmul.mubr.bf16.gmra.mrb[0].mxu0 %v260
  %v299 = vpop.f32.mrb[0].mxu0
  %v300 = vadd.f32 %v221, %v299
  %v301 = vpop.f32.mrb[0].mxu0
  %v302 = vpop.f32.mrb[0].mxu0
  %v303 = vadd.f32 %v224, %v302
  %v304 = vpop.f32.mrb[0].mxu0
  %305 = vmatprep.mubr.bf16.mxu0 0
  %306 = vmatmul.mubr.bf16.gmra.mrb[0].mxu0 %v263
  %v307 = vpop.f32.mrb[0].mxu0
  %v308 = vadd.f32 %v229, %v307
  %v309 = vpop.f32.mrb[0].mxu0
  %v310 = vpop.f32.mrb[0].mxu0
  %v311 = vadd.f32 %v232, %v310
  %v312 = vpop.f32.mrb[0].mxu0
  %313 = vdwg.mxu0
  %s314 = scalar_lea.vmem %s1, 64
  %v315 = vld [vmem:[%s314] sm:$0xf]
  %v316 = vld [vmem:[%s314 + $0x4] sm:$0xf]
  %v317 = vld [vmem:[%s314 + $0x8] sm:$0xf]
  %v318 = vld [vmem:[%s314 + $0xc] sm:$0xf]
  %v319 = vld [vmem:[%s314 + $0x10] sm:$0xf]
  %v320 = vld [vmem:[%s314 + $0x14] sm:$0xf]
  %v321 = vld [vmem:[%s314 + $0x18] sm:$0xf]
  %v322 = vld [vmem:[%s314 + $0x1c] sm:$0xf]
  %325 = vrot.lane.b32.xlu0 %v154, 64
  %v326 = vpop.permute.xlu0 %325
  %327 = vrot.lane.b32.xlu0 %v155, 64
  %v328 = vpop.permute.xlu0 %327
  %v337 = vunpack.c.l.b16 %v315
  %v338 = vunpack.c.l.b16 %v316
  %v339 = vunpack.c.l.b16 %v317
  %v340 = vunpack.c.l.b16 %v318
  %v341 = vunpack.c.l.b16 %v319
  %v342 = vunpack.c.l.b16 %v320
  %v343 = vunpack.c.l.b16 %v321
  %v344 = vunpack.c.l.b16 %v322
  %v345 = vpack.c.b16 %v338, %v337
  %v346 = vpack.c.b16 %v340, %v339
  %v347 = vpack.c.b16 %v342, %v341
  %v348 = vpack.c.b16 %v344, %v343
  %v354 = vsel %vm92, %v326, 0
  %v357 = vsel %vm92, %v328, 0
  %359 = vmatprep.subr.bf16.mxu0 0
  %360 = vmatpush1.bf16.msra.mxu0 %v345
  %361 = vmatprep.subr.bf16.mxu0 0
  %362 = vmatpush1.bf16.msra.mxu0 %v346
  %363 = vmatprep.subr.bf16.mxu0 0
  %364 = vmatpush1.bf16.msra.mxu0 %v347
  %365 = vmatprep.subr.bf16.mxu0 0
  %366 = vmatpush1.bf16.msra.mxu0 %v348
  %367 = vmatprep.subr.bf16.mxu0 0
  %368 = vmatpush1.bf16.msra.mxu0 0
  %369 = vmatprep.subr.bf16.mxu0 0
  %370 = vmatpush1.bf16.msra.mxu0 0
  %371 = vmatprep.subr.bf16.mxu0 0
  %372 = vmatpush1.bf16.msra.mxu0 0
  %373 = vmatprep.subr.bf16.mxu0 0
  %374 = vmatpush1.bf16.msra.mxu0 0
  %375 = vmatprep.subr.bf16.mxu0 0
  %376 = vmatpush1.bf16.msra.mxu0 0
  %377 = vmatprep.subr.bf16.mxu0 0
  %378 = vmatpush1.bf16.msra.mxu0 0
  %379 = vmatprep.subr.bf16.mxu0 0
  %380 = vmatpush1.bf16.msra.mxu0 0
  %381 = vmatprep.subr.bf16.mxu0 0
  %382 = vmatpush1.bf16.msra.mxu0 0
  %383 = vmatprep.subr.bf16.mxu0 0
  %384 = vmatpush1.bf16.msra.mxu0 0
  %385 = vmatprep.subr.bf16.mxu0 0
  %386 = vmatpush1.bf16.msra.mxu0 0
  %387 = vmatprep.subr.bf16.mxu0 0
  %388 = vmatpush1.bf16.msra.mxu0 0
  %389 = vmatprep.subr.bf16.mxu0 0
  %390 = vmatpush1.bf16.msra.mxu0 0
  %391 = vmatprep.mubr.bf16.mxu0 0
  %392 = vmatmul.mubr.bf16.gmra.mrb[0].mxu0 %v354
  %v393 = vpop.f32.mrb[0].mxu0
  %v394 = vadd.f32 0.0, %v393
  %v395 = vpop.f32.mrb[0].mxu0
  %v396 = vpop.f32.mrb[0].mxu0
  %v397 = vadd.f32 0.0, %v396
  %v398 = vpop.f32.mrb[0].mxu0
  %399 = vmatprep.mubr.bf16.mxu0 0
  %400 = vmatmul.mubr.bf16.gmra.mrb[0].mxu0 %v357
  %v401 = vpop.f32.mrb[0].mxu0
  %v402 = vadd.f32 0.0, %v401
  %v403 = vpop.f32.mrb[0].mxu0
  %v404 = vpop.f32.mrb[0].mxu0
  %v405 = vadd.f32 0.0, %v404
  %v406 = vpop.f32.mrb[0].mxu0
  %407 = vdwg.mxu0
  %v408 = vadd.f32 %v300, %v394
  %v409 = vadd.f32 %v303, %v397
  %v410 = vadd.f32 %v308, %v402
  %v411 = vadd.f32 %v311, %v405
  %v412 = vld [vmem:[%s2] sm:$0x3]
  %v413 = vadd.f32 %v408, %v409
  %v414 = vadd.f32 %v413, %v410
  %v415 = vadd.f32 %v414, %v411
  %v416 = vrot.slane %v415, 4
  %v417 = vadd.f32 %v415, %v416
  %v418 = vrot.slane %v417, 2
  %v419 = vadd.f32 %v417, %v418
  %v420 = vrot.slane %v419, 1
  %v421 = vadd.f32 %v419, %v420
  %v422 = vrcp.pop 32.0
  %v423 = vmul.f32 %v421, %v422
  %v424 = vsub.f32 %v408, %v423
  %v425 = vsub.f32 %v409, %v423
  %v426 = vsub.f32 %v410, %v423
  %v427 = vsub.f32 %v411, %v423
  %v428 = vmul.f32 %v424, %v424
  %v429 = vmul.f32 %v425, %v425
  %v430 = vmul.f32 %v426, %v426
  %v431 = vmul.f32 %v427, %v427
  %v432 = vadd.f32 %v428, %v429
  %v433 = vadd.f32 %v432, %v430
  %v434 = vadd.f32 %v433, %v431
  %v435 = vrot.slane %v434, 4
  %v436 = vadd.f32 %v434, %v435
  %v437 = vrot.slane %v436, 2
  %v438 = vadd.f32 %v436, %v437
  %v439 = vrot.slane %v438, 1
  %v440 = vadd.f32 %v438, %v439
  %v441 = vmul.f32 %v440, %v422
  %v442 = vadd.f32 %v441, 1e-05
  %v443 = vrsqrt.pop %v442
  %v444 = vmul.f32 %v424, %v443
  %v445 = vmul.f32 %v425, %v443
  %v446 = vmul.f32 %v426, %v443
  %v447 = vmul.f32 %v427, %v443
  %v448 = vlaneseq
  %v449 = vshrl.u32 %v448, 7
  %v450 = vsub.s32 0, %v449
  %v451 = vrot.slane %v412, %v450
  %v452 = vmul.f32 %v444, %v451
  %v453 = vmul.f32 %v445, %v451
  %v454 = vmul.f32 %v446, %v451
  %v455 = vmul.f32 %v447, %v451
  %v456 = vlaneseq
  %v457 = vshrl.u32 %v456, 7
  %v458 = vsub.s32 1, %v457
  %v459 = vrot.slane %v412, %v458
  %v460 = vadd.f32 %v452, %v459
  %v461 = vadd.f32 %v453, %v459
  %v462 = vadd.f32 %v454, %v459
  %v463 = vadd.f32 %v455, %v459
  %v464 = vmax.f32 %v460, 0.0
  %v465 = vmax.f32 %v461, 0.0
  %v466 = vmax.f32 %v462, 0.0
  %v467 = vmax.f32 %v463, 0.0
  %468 = vst [vmem:[#allocation3] sm:$0xff] 0.0
  %469 = vst [vmem:[#allocation3 + $0x8] sm:$0xff] 0.0
  %470 = vst [vmem:[#allocation3 + $0x10] sm:$0xff] 0.0
  %471 = vst [vmem:[#allocation3 + $0x18] sm:$0xff] 0.0
  %472 = vst [vmem:[#allocation3 + $0x20] sm:$0x3] 0.0
  %473 = vst [vmem:[#allocation3 + $0x1] sm:$0xff] %v464
  %474 = vst [vmem:[#allocation3 + $0x9] sm:$0xff] %v465
  %475 = vst [vmem:[#allocation3 + $0x11] sm:$0xff] %v466
  %476 = vst [vmem:[#allocation3 + $0x19] sm:$0xff] %v467
  %v477 = vld [vmem:[#allocation3] sm:$0xff]
  %v478 = vld [vmem:[#allocation3 + $0x8] sm:$0xff]
  %v479 = vld [vmem:[#allocation3 + $0x10] sm:$0xff]
  %v480 = vld [vmem:[#allocation3 + $0x18] sm:$0xff]
  %v481 = vsel %vm127, 0.0, %v477
  %v482 = vsel %vm128, 0.0, %v478
  %v483 = vsel %vm129, 0.0, %v479
  %v484 = vsel %vm130, 0.0, %v480
  %v485 = vld [vmem:[#allocation3 + $0x2] sm:$0xff]
  %v486 = vld [vmem:[#allocation3 + $0xa] sm:$0xff]
  %v487 = vld [vmem:[#allocation3 + $0x12] sm:$0xff]
  %v488 = vld [vmem:[#allocation3 + $0x1a] sm:$0xff]
  %v489 = vsel %vm84, 1, 0
  %v490 = vsel %vm85, 1, 0
  %v491 = vsel %vm86, 1, 0
  %v492 = vsel %vm87, 1, 0
  %vm493 = vcmp.eq.s32.totalorder %v489, 1
  %vm494 = vcmp.eq.s32.totalorder %v490, 1
  %vm495 = vcmp.eq.s32.totalorder %v491, 1
  %vm496 = vcmp.eq.s32.totalorder %v492, 1
  %v497 = vsel %vm493, 0.0, %v485
  %v498 = vsel %vm494, 0.0, %v486
  %v499 = vsel %vm495, 0.0, %v487
  %v500 = vsel %vm496, 0.0, %v488
  %v501 = vld [vmem:[%s3] sm:$0xf]
  %v502 = vld [vmem:[%s3 + $0x4] sm:$0xf]
  %v503 = vld [vmem:[%s3 + $0x8] sm:$0xf]
  %v504 = vld [vmem:[%s3 + $0xc] sm:$0xf]
  %v505 = vld [vmem:[%s3 + $0x10] sm:$0xf]
  %v506 = vld [vmem:[%s3 + $0x14] sm:$0xf]
  %v507 = vld [vmem:[%s3 + $0x18] sm:$0xf]
  %v508 = vld [vmem:[%s3 + $0x1c] sm:$0xf]
  %v509 = vld [vmem:[%s3 + $0x20] sm:$0xf]
  %v510 = vld [vmem:[%s3 + $0x24] sm:$0xf]
  %v511 = vld [vmem:[%s3 + $0x28] sm:$0xf]
  %v512 = vld [vmem:[%s3 + $0x2c] sm:$0xf]
  %v513 = vld [vmem:[%s3 + $0x30] sm:$0xf]
  %v514 = vld [vmem:[%s3 + $0x34] sm:$0xf]
  %v515 = vld [vmem:[%s3 + $0x38] sm:$0xf]
  %v516 = vld [vmem:[%s3 + $0x3c] sm:$0xf]
  %v517 = vpack.c.bf16 %v482, %v481
  %v518 = vpack.c.bf16 %v484, %v483
  %s519 = scalar_lea.vmem %s3, 64
  %v520 = vld [vmem:[%s519] sm:$0xf]
  %v521 = vld [vmem:[%s519 + $0x4] sm:$0xf]
  %v522 = vld [vmem:[%s519 + $0x8] sm:$0xf]
  %v523 = vld [vmem:[%s519 + $0xc] sm:$0xf]
  %v524 = vld [vmem:[%s519 + $0x10] sm:$0xf]
  %v525 = vld [vmem:[%s519 + $0x14] sm:$0xf]
  %v526 = vld [vmem:[%s519 + $0x18] sm:$0xf]
  %v527 = vld [vmem:[%s519 + $0x1c] sm:$0xf]
  %v528 = vld [vmem:[%s519 + $0x20] sm:$0xf]
  %v529 = vld [vmem:[%s519 + $0x24] sm:$0xf]
  %v530 = vld [vmem:[%s519 + $0x28] sm:$0xf]
  %v531 = vld [vmem:[%s519 + $0x2c] sm:$0xf]
  %v532 = vld [vmem:[%s519 + $0x30] sm:$0xf]
  %v533 = vld [vmem:[%s519 + $0x34] sm:$0xf]
  %v534 = vld [vmem:[%s519 + $0x38] sm:$0xf]
  %v535 = vld [vmem:[%s519 + $0x3c] sm:$0xf]
  %v536 = vpack.c.bf16 %v465, %v464
  %v537 = vpack.c.bf16 %v467, %v466
  %v554 = vunpack.c.l.b16 %v520
  %v555 = vunpack.c.l.b16 %v521
  %v556 = vunpack.c.l.b16 %v522
  %v557 = vunpack.c.l.b16 %v523
  %v558 = vunpack.c.l.b16 %v524
  %v559 = vunpack.c.l.b16 %v525
  %v560 = vunpack.c.l.b16 %v526
  %v561 = vunpack.c.l.b16 %v527
  %v562 = vunpack.c.l.b16 %v528
  %v563 = vunpack.c.l.b16 %v529
  %v564 = vunpack.c.l.b16 %v530
  %v565 = vunpack.c.l.b16 %v531
  %v566 = vunpack.c.l.b16 %v532
  %v567 = vunpack.c.l.b16 %v533
  %v568 = vunpack.c.l.b16 %v534
  %v569 = vunpack.c.l.b16 %v535
  %v570 = vpack.c.b16 %v555, %v554
  %v571 = vpack.c.b16 %v557, %v556
  %v572 = vpack.c.b16 %v559, %v558
  %v573 = vpack.c.b16 %v561, %v560
  %v574 = vpack.c.b16 %v563, %v562
  %v575 = vpack.c.b16 %v565, %v564
  %v576 = vpack.c.b16 %v567, %v566
  %v577 = vpack.c.b16 %v569, %v568
  %586 = vmatprep.subr.bf16.mxu0 0
  %587 = vmatpush1.bf16.msra.mxu0 %v570
  %588 = vmatprep.subr.bf16.mxu0 0
  %589 = vmatpush1.bf16.msra.mxu0 %v571
  %590 = vmatprep.subr.bf16.mxu0 0
  %591 = vmatpush1.bf16.msra.mxu0 %v572
  %592 = vmatprep.subr.bf16.mxu0 0
  %593 = vmatpush1.bf16.msra.mxu0 %v573
  %594 = vmatprep.subr.bf16.mxu0 0
  %595 = vmatpush1.bf16.msra.mxu0 %v574
  %596 = vmatprep.subr.bf16.mxu0 0
  %597 = vmatpush1.bf16.msra.mxu0 %v575
  %598 = vmatprep.subr.bf16.mxu0 0
  %599 = vmatpush1.bf16.msra.mxu0 %v576
  %600 = vmatprep.subr.bf16.mxu0 0
  %601 = vmatpush1.bf16.msra.mxu0 %v577
  %602 = vmatprep.subr.bf16.mxu0 0
  %603 = vmatpush1.bf16.msra.mxu0 0
  %604 = vmatprep.subr.bf16.mxu0 0
  %605 = vmatpush1.bf16.msra.mxu0 0
  %606 = vmatprep.subr.bf16.mxu0 0
  %607 = vmatpush1.bf16.msra.mxu0 0
  %608 = vmatprep.subr.bf16.mxu0 0
  %609 = vmatpush1.bf16.msra.mxu0 0
  %610 = vmatprep.subr.bf16.mxu0 0
  %611 = vmatpush1.bf16.msra.mxu0 0
  %612 = vmatprep.subr.bf16.mxu0 0
  %613 = vmatpush1.bf16.msra.mxu0 0
  %614 = vmatprep.subr.bf16.mxu0 0
  %615 = vmatpush1.bf16.msra.mxu0 0
  %616 = vmatprep.subr.bf16.mxu0 0
  %617 = vmatpush1.bf16.msra.mxu0 0
  %618 = vmatprep.mubr.bf16.mxu0 0
  %619 = vmatmul.mubr.bf16.gmra.mrb[0].mxu0 %v536
  %v620 = vpop.f32.mrb[0].mxu0
  %v621 = vadd.f32 0.0, %v620
  %v622 = vpop.f32.mrb[0].mxu0
  %v623 = vpop.f32.mrb[0].mxu0
  %v624 = vadd.f32 0.0, %v623
  %v625 = vpop.f32.mrb[0].mxu0
  %626 = vmatprep.mubr.bf16.mxu0 0
  %627 = vmatmul.mubr.bf16.gmra.mrb[0].mxu0 %v537
  %v628 = vpop.f32.mrb[0].mxu0
  %v629 = vadd.f32 0.0, %v628
  %v630 = vpop.f32.mrb[0].mxu0
  %v631 = vpop.f32.mrb[0].mxu0
  %v632 = vadd.f32 0.0, %v631
  %v633 = vpop.f32.mrb[0].mxu0
  %634 = vdwg.mxu0
  %v651 = vunpack.c.l.b16 %v501
  %v652 = vunpack.c.l.b16 %v502
  %v653 = vunpack.c.l.b16 %v503
  %v654 = vunpack.c.l.b16 %v504
  %v655 = vunpack.c.l.b16 %v505
  %v656 = vunpack.c.l.b16 %v506
  %v657 = vunpack.c.l.b16 %v507
  %v658 = vunpack.c.l.b16 %v508
  %v659 = vunpack.c.l.b16 %v509
  %v660 = vunpack.c.l.b16 %v510
  %v661 = vunpack.c.l.b16 %v511
  %v662 = vunpack.c.l.b16 %v512
  %v663 = vunpack.c.l.b16 %v513
  %v664 = vunpack.c.l.b16 %v514
  %v665 = vunpack.c.l.b16 %v515
  %v666 = vunpack.c.l.b16 %v516
  %v667 = vpack.c.b16 %v652, %v651
  %v668 = vpack.c.b16 %v654, %v653
  %v669 = vpack.c.b16 %v656, %v655
  %v670 = vpack.c.b16 %v658, %v657
  %v671 = vpack.c.b16 %v660, %v659
  %v672 = vpack.c.b16 %v662, %v661
  %v673 = vpack.c.b16 %v664, %v663
  %v674 = vpack.c.b16 %v666, %v665
  %683 = vmatprep.subr.bf16.mxu0 0
  %684 = vmatpush1.bf16.msra.mxu0 %v667
  %685 = vmatprep.subr.bf16.mxu0 0
  %686 = vmatpush1.bf16.msra.mxu0 %v668
  %687 = vmatprep.subr.bf16.mxu0 0
  %688 = vmatpush1.bf16.msra.mxu0 %v669
  %689 = vmatprep.subr.bf16.mxu0 0
  %690 = vmatpush1.bf16.msra.mxu0 %v670
  %691 = vmatprep.subr.bf16.mxu0 0
  %692 = vmatpush1.bf16.msra.mxu0 %v671
  %693 = vmatprep.subr.bf16.mxu0 0
  %694 = vmatpush1.bf16.msra.mxu0 %v672
  %695 = vmatprep.subr.bf16.mxu0 0
  %696 = vmatpush1.bf16.msra.mxu0 %v673
  %697 = vmatprep.subr.bf16.mxu0 0
  %698 = vmatpush1.bf16.msra.mxu0 %v674
  %699 = vmatprep.subr.bf16.mxu0 0
  %700 = vmatpush1.bf16.msra.mxu0 0
  %701 = vmatprep.subr.bf16.mxu0 0
  %702 = vmatpush1.bf16.msra.mxu0 0
  %703 = vmatprep.subr.bf16.mxu0 0
  %704 = vmatpush1.bf16.msra.mxu0 0
  %705 = vmatprep.subr.bf16.mxu0 0
  %706 = vmatpush1.bf16.msra.mxu0 0
  %707 = vmatprep.subr.bf16.mxu0 0
  %708 = vmatpush1.bf16.msra.mxu0 0
  %709 = vmatprep.subr.bf16.mxu0 0
  %710 = vmatpush1.bf16.msra.mxu0 0
  %711 = vmatprep.subr.bf16.mxu0 0
  %712 = vmatpush1.bf16.msra.mxu0 0
  %713 = vmatprep.subr.bf16.mxu0 0
  %714 = vmatpush1.bf16.msra.mxu0 0
  %715 = vmatprep.mubr.bf16.mxu0 0
  %716 = vmatmul.mubr.bf16.gmra.mrb[0].mxu0 %v517
  %v717 = vpop.f32.mrb[0].mxu0
  %v718 = vadd.f32 %v621, %v717
  %v719 = vpop.f32.mrb[0].mxu0
  %v720 = vpop.f32.mrb[0].mxu0
  %v721 = vadd.f32 %v624, %v720
  %v722 = vpop.f32.mrb[0].mxu0
  %723 = vmatprep.mubr.bf16.mxu0 0
  %724 = vmatmul.mubr.bf16.gmra.mrb[0].mxu0 %v518
  %v725 = vpop.f32.mrb[0].mxu0
  %v726 = vadd.f32 %v629, %v725
  %v727 = vpop.f32.mrb[0].mxu0
  %v728 = vpop.f32.mrb[0].mxu0
  %v729 = vadd.f32 %v632, %v728
  %v730 = vpop.f32.mrb[0].mxu0
  %731 = vdwg.mxu0
  %s732 = scalar_lea.vmem %s3, 128
  %v733 = vld [vmem:[%s732] sm:$0xf]
  %v734 = vld [vmem:[%s732 + $0x4] sm:$0xf]
  %v735 = vld [vmem:[%s732 + $0x8] sm:$0xf]
  %v736 = vld [vmem:[%s732 + $0xc] sm:$0xf]
  %v737 = vld [vmem:[%s732 + $0x10] sm:$0xf]
  %v738 = vld [vmem:[%s732 + $0x14] sm:$0xf]
  %v739 = vld [vmem:[%s732 + $0x18] sm:$0xf]
  %v740 = vld [vmem:[%s732 + $0x1c] sm:$0xf]
  %v741 = vld [vmem:[%s732 + $0x20] sm:$0xf]
  %v742 = vld [vmem:[%s732 + $0x24] sm:$0xf]
  %v743 = vld [vmem:[%s732 + $0x28] sm:$0xf]
  %v744 = vld [vmem:[%s732 + $0x2c] sm:$0xf]
  %v745 = vld [vmem:[%s732 + $0x30] sm:$0xf]
  %v746 = vld [vmem:[%s732 + $0x34] sm:$0xf]
  %v747 = vld [vmem:[%s732 + $0x38] sm:$0xf]
  %v748 = vld [vmem:[%s732 + $0x3c] sm:$0xf]
  %v749 = vpack.c.bf16 %v498, %v497
  %v750 = vpack.c.bf16 %v500, %v499
  %v767 = vunpack.c.l.b16 %v733
  %v768 = vunpack.c.l.b16 %v734
  %v769 = vunpack.c.l.b16 %v735
  %v770 = vunpack.c.l.b16 %v736
  %v771 = vunpack.c.l.b16 %v737
  %v772 = vunpack.c.l.b16 %v738
  %v773 = vunpack.c.l.b16 %v739
  %v774 = vunpack.c.l.b16 %v740
  %v775 = vunpack.c.l.b16 %v741
  %v776 = vunpack.c.l.b16 %v742
  %v777 = vunpack.c.l.b16 %v743
  %v778 = vunpack.c.l.b16 %v744
  %v779 = vunpack.c.l.b16 %v745
  %v780 = vunpack.c.l.b16 %v746
  %v781 = vunpack.c.l.b16 %v747
  %v782 = vunpack.c.l.b16 %v748
  %v783 = vpack.c.b16 %v768, %v767
  %v784 = vpack.c.b16 %v770, %v769
  %v785 = vpack.c.b16 %v772, %v771
  %v786 = vpack.c.b16 %v774, %v773
  %v787 = vpack.c.b16 %v776, %v775
  %v788 = vpack.c.b16 %v778, %v777
  %v789 = vpack.c.b16 %v780, %v779
  %v790 = vpack.c.b16 %v782, %v781
  %799 = vmatprep.subr.bf16.mxu0 0
  %800 = vmatpush1.bf16.msra.mxu0 %v783
  %801 = vmatprep.subr.bf16.mxu0 0
  %802 = vmatpush1.bf16.msra.mxu0 %v784
  %803 = vmatprep.subr.bf16.mxu0 0
  %804 = vmatpush1.bf16.msra.mxu0 %v785
  %805 = vmatprep.subr.bf16.mxu0 0
  %806 = vmatpush1.bf16.msra.mxu0 %v786
  %807 = vmatprep.subr.bf16.mxu0 0
  %808 = vmatpush1.bf16.msra.mxu0 %v787
  %809 = vmatprep.subr.bf16.mxu0 0
  %810 = vmatpush1.bf16.msra.mxu0 %v788
  %811 = vmatprep.subr.bf16.mxu0 0
  %812 = vmatpush1.bf16.msra.mxu0 %v789
  %813 = vmatprep.subr.bf16.mxu0 0
  %814 = vmatpush1.bf16.msra.mxu0 %v790
  %815 = vmatprep.subr.bf16.mxu0 0
  %816 = vmatpush1.bf16.msra.mxu0 0
  %817 = vmatprep.subr.bf16.mxu0 0
  %818 = vmatpush1.bf16.msra.mxu0 0
  %819 = vmatprep.subr.bf16.mxu0 0
  %820 = vmatpush1.bf16.msra.mxu0 0
  %821 = vmatprep.subr.bf16.mxu0 0
  %822 = vmatpush1.bf16.msra.mxu0 0
  %823 = vmatprep.subr.bf16.mxu0 0
  %824 = vmatpush1.bf16.msra.mxu0 0
  %825 = vmatprep.subr.bf16.mxu0 0
  %826 = vmatpush1.bf16.msra.mxu0 0
  %827 = vmatprep.subr.bf16.mxu0 0
  %828 = vmatpush1.bf16.msra.mxu0 0
  %829 = vmatprep.subr.bf16.mxu0 0
  %830 = vmatpush1.bf16.msra.mxu0 0
  %831 = vmatprep.mubr.bf16.mxu0 0
  %832 = vmatmul.mubr.bf16.gmra.mrb[0].mxu0 %v749
  %v833 = vpop.f32.mrb[0].mxu0
  %v834 = vadd.f32 0.0, %v833
  %v835 = vpop.f32.mrb[0].mxu0
  %v836 = vpop.f32.mrb[0].mxu0
  %v837 = vadd.f32 0.0, %v836
  %v838 = vpop.f32.mrb[0].mxu0
  %839 = vmatprep.mubr.bf16.mxu0 0
  %840 = vmatmul.mubr.bf16.gmra.mrb[0].mxu0 %v750
  %v841 = vpop.f32.mrb[0].mxu0
  %v842 = vadd.f32 0.0, %v841
  %v843 = vpop.f32.mrb[0].mxu0
  %v844 = vpop.f32.mrb[0].mxu0
  %v845 = vadd.f32 0.0, %v844
  %v846 = vpop.f32.mrb[0].mxu0
  %847 = vdwg.mxu0
  %v848 = vadd.f32 %v718, %v834
  %v849 = vadd.f32 %v721, %v837
  %v850 = vadd.f32 %v726, %v842
  %v851 = vadd.f32 %v729, %v845
  %v852 = vld [vmem:[%s4] sm:$0x3]
  %v853 = vadd.f32 %v848, %v849
  %v854 = vadd.f32 %v853, %v850
  %v855 = vadd.f32 %v854, %v851
  %v856 = vrot.slane %v855, 4
  %v857 = vadd.f32 %v855, %v856
  %v858 = vrot.slane %v857, 2
  %v859 = vadd.f32 %v857, %v858
  %v860 = vrot.slane %v859, 1
  %v861 = vadd.f32 %v859, %v860
  %v862 = vmul.f32 %v861, %v422
  %v863 = vsub.f32 %v848, %v862
  %v864 = vsub.f32 %v849, %v862
  %v865 = vsub.f32 %v850, %v862
  %v866 = vsub.f32 %v851, %v862
  %v867 = vmul.f32 %v863, %v863
  %v868 = vmul.f32 %v864, %v864
  %v869 = vmul.f32 %v865, %v865
  %v870 = vmul.f32 %v866, %v866
  %v871 = vadd.f32 %v867, %v868
  %v872 = vadd.f32 %v871, %v869
  %v873 = vadd.f32 %v872, %v870
  %v874 = vrot.slane %v873, 4
  %v875 = vadd.f32 %v873, %v874
  %v876 = vrot.slane %v875, 2
  %v877 = vadd.f32 %v875, %v876
  %v878 = vrot.slane %v877, 1
  %v879 = vadd.f32 %v877, %v878
  %v880 = vmul.f32 %v879, %v422
  %v881 = vadd.f32 %v880, 1e-05
  %v882 = vrsqrt.pop %v881
  %v883 = vmul.f32 %v863, %v882
  %v884 = vmul.f32 %v864, %v882
  %v885 = vmul.f32 %v865, %v882
  %v886 = vmul.f32 %v866, %v882
  %v887 = vlaneseq
  %v888 = vshrl.u32 %v887, 7
  %v889 = vsub.s32 0, %v888
  %v890 = vrot.slane %v852, %v889
  %v891 = vmul.f32 %v883, %v890
  %v892 = vmul.f32 %v884, %v890
  %v893 = vmul.f32 %v885, %v890
  %v894 = vmul.f32 %v886, %v890
  %v895 = vlaneseq
  %v896 = vshrl.u32 %v895, 7
  %v897 = vsub.s32 1, %v896
  %v898 = vrot.slane %v852, %v897
  %v899 = vadd.f32 %v891, %v898
  %v900 = vadd.f32 %v892, %v898
  %v901 = vadd.f32 %v893, %v898
  %v902 = vadd.f32 %v894, %v898
  %v903 = vld [vmem:[%s5] sm:$0xf]
  %v904 = vld [vmem:[%s5 + $0x4] sm:$0xf]
  %v905 = vld [vmem:[%s5 + $0x8] sm:$0xf]
  %v906 = vld [vmem:[%s5 + $0xc] sm:$0xf]
  %v907 = vld [vmem:[%s5 + $0x10] sm:$0xf]
  %v908 = vld [vmem:[%s5 + $0x14] sm:$0xf]
  %v909 = vld [vmem:[%s5 + $0x18] sm:$0xf]
  %v910 = vld [vmem:[%s5 + $0x1c] sm:$0xf]
  %v919 = vunpack.c.l.b16 %v903
  %v920 = vunpack.c.l.b16 %v904
  %v921 = vunpack.c.l.b16 %v905
  %v922 = vunpack.c.l.b16 %v906
  %v923 = vunpack.c.l.b16 %v907
  %v924 = vunpack.c.l.b16 %v908
  %v925 = vunpack.c.l.b16 %v909
  %v926 = vunpack.c.l.b16 %v910
  %v927 = vpack.c.b16 %v920, %v919
  %v928 = vpack.c.b16 %v922, %v921
  %v929 = vpack.c.b16 %v924, %v923
  %v930 = vpack.c.b16 %v926, %v925
  %935 = vmatprep.subr.bf16.mxu0 0
  %936 = vmatpush1.bf16.msra.mxu0 %v927
  %937 = vmatprep.subr.bf16.mxu0 0
  %938 = vmatpush1.bf16.msra.mxu0 %v928
  %939 = vmatprep.subr.bf16.mxu0 0
  %940 = vmatpush1.bf16.msra.mxu0 %v929
  %941 = vmatprep.subr.bf16.mxu0 0
  %942 = vmatpush1.bf16.msra.mxu0 %v930
  %943 = vmatprep.subr.bf16.mxu0 0
  %944 = vmatpush1.bf16.msra.mxu0 0
  %945 = vmatprep.subr.bf16.mxu0 0
  %946 = vmatpush1.bf16.msra.mxu0 0
  %947 = vmatprep.subr.bf16.mxu0 0
  %948 = vmatpush1.bf16.msra.mxu0 0
  %949 = vmatprep.subr.bf16.mxu0 0
  %950 = vmatpush1.bf16.msra.mxu0 0
  %951 = vmatprep.subr.bf16.mxu0 0
  %952 = vmatpush1.bf16.msra.mxu0 0
  %953 = vmatprep.subr.bf16.mxu0 0
  %954 = vmatpush1.bf16.msra.mxu0 0
  %955 = vmatprep.subr.bf16.mxu0 0
  %956 = vmatpush1.bf16.msra.mxu0 0
  %957 = vmatprep.subr.bf16.mxu0 0
  %958 = vmatpush1.bf16.msra.mxu0 0
  %959 = vmatprep.subr.bf16.mxu0 0
  %960 = vmatpush1.bf16.msra.mxu0 0
  %961 = vmatprep.subr.bf16.mxu0 0
  %962 = vmatpush1.bf16.msra.mxu0 0
  %963 = vmatprep.subr.bf16.mxu0 0
  %964 = vmatpush1.bf16.msra.mxu0 0
  %965 = vmatprep.subr.bf16.mxu0 0
  %966 = vmatpush1.bf16.msra.mxu0 0
  %967 = vmatprep.mubr.bf16.mxu0 0
  %968 = vmatmul.mubr.bf16.gmra.mrb[0].mxu0 %v181
  %v969 = vpop.f32.mrb[0].mxu0
  %v970 = vadd.f32 0.0, %v969
  %v971 = vpop.f32.mrb[0].mxu0
  %v972 = vpop.f32.mrb[0].mxu0
  %v973 = vadd.f32 0.0, %v972
  %v974 = vpop.f32.mrb[0].mxu0
  %975 = vmatprep.mubr.bf16.mxu0 0
  %976 = vmatmul.mubr.bf16.gmra.mrb[0].mxu0 %v184
  %v977 = vpop.f32.mrb[0].mxu0
  %v978 = vadd.f32 0.0, %v977
  %v979 = vpop.f32.mrb[0].mxu0
  %v980 = vpop.f32.mrb[0].mxu0
  %v981 = vadd.f32 0.0, %v980
  %v982 = vpop.f32.mrb[0].mxu0
  %983 = vdwg.mxu0
  %v984 = vld [vmem:[%s6] sm:$0x3]
  %v985 = vadd.f32 %v970, %v973
  %v986 = vadd.f32 %v985, %v978
  %v987 = vadd.f32 %v986, %v981
  %v988 = vrot.slane %v987, 4
  %v989 = vadd.f32 %v987, %v988
  %v990 = vrot.slane %v989, 2
  %v991 = vadd.f32 %v989, %v990
  %v992 = vrot.slane %v991, 1
  %v993 = vadd.f32 %v991, %v992
  %v994 = vmul.f32 %v993, %v422
  %v995 = vsub.f32 %v970, %v994
  %v996 = vsub.f32 %v973, %v994
  %v997 = vsub.f32 %v978, %v994
  %v998 = vsub.f32 %v981, %v994
  %v999 = vmul.f32 %v995, %v995
  %v1000 = vmul.f32 %v996, %v996
  %v1001 = vmul.f32 %v997, %v997
  %v1002 = vmul.f32 %v998, %v998
  %v1003 = vadd.f32 %v999, %v1000
  %v1004 = vadd.f32 %v1003, %v1001
  %v1005 = vadd.f32 %v1004, %v1002
  %v1006 = vrot.slane %v1005, 4
  %v1007 = vadd.f32 %v1005, %v1006
  %v1008 = vrot.slane %v1007, 2
  %v1009 = vadd.f32 %v1007, %v1008
  %v1010 = vrot.slane %v1009, 1
  %v1011 = vadd.f32 %v1009, %v1010
  %v1012 = vmul.f32 %v1011, %v422
  %v1013 = vadd.f32 %v1012, 1e-05
  %v1014 = vrsqrt.pop %v1013
  %v1015 = vmul.f32 %v995, %v1014
  %v1016 = vmul.f32 %v996, %v1014
  %v1017 = vmul.f32 %v997, %v1014
  %v1018 = vmul.f32 %v998, %v1014
  %v1019 = vlaneseq
  %v1020 = vshrl.u32 %v1019, 7
  %v1021 = vsub.s32 0, %v1020
  %v1022 = vrot.slane %v984, %v1021
  %v1023 = vmul.f32 %v1015, %v1022
  %v1024 = vmul.f32 %v1016, %v1022
  %v1025 = vmul.f32 %v1017, %v1022
  %v1026 = vmul.f32 %v1018, %v1022
  %v1027 = vlaneseq
  %v1028 = vshrl.u32 %v1027, 7
  %v1029 = vsub.s32 1, %v1028
  %v1030 = vrot.slane %v984, %v1029
  %v1031 = vadd.f32 %v1023, %v1030
  %v1032 = vadd.f32 %v1024, %v1030
  %v1033 = vadd.f32 %v1025, %v1030
  %v1034 = vadd.f32 %v1026, %v1030
  %v1035 = vadd.f32 %v899, %v1031
  %v1036 = vadd.f32 %v900, %v1032
  %v1037 = vadd.f32 %v901, %v1033
  %v1038 = vadd.f32 %v902, %v1034
  %v1039 = vmax.f32 %v1035, 0.0
  %v1040 = vmax.f32 %v1036, 0.0
  %v1041 = vmax.f32 %v1037, 0.0
  %v1042 = vmax.f32 %v1038, 0.0
  %1043 = vst [vmem:[%s7] sm:$0xff] %v1039
  %1044 = vst [vmem:[%s7 + $0x8] sm:$0xff] %v1040
  %1045 = vst [vmem:[%s7 + $0x10] sm:$0xff] %v1041
  %1046 = vst [vmem:[%s7 + $0x18] sm:$0xff] %v1042
  // Predicated region
  $region30: #{_lambda_.8} parent=0 // pred_check
    _
  $region31: #{_lambda_.8} parent=0 // pred_check_branch
    %1048 = sbr.rel (0) target = $region33
  $region32: #{_lambda_.8} parent=0 // pred_region
    _
  $region33: #{_lambda_.8} parent=0 // pred_fallthru
    _
  // Predicated region
  $region34: #{_lambda_.8} parent=0 // pred_check
    _
  $region35: #{_lambda_.8} parent=0 // pred_check_branch
    %1050 = sbr.rel (0) target = $region37
  $region36: #{_lambda_.8} parent=0 // pred_region
    _
  $region37: #{_lambda_.8} parent=0 // pred_fallthru
    _

// kernel: _lambda_.11
$region0: #{_lambda_.11}
  #allocation0 [shape = 'u32[]', space=smem, size = 0x4, offset = 0x4, fixed_abs, tag = 'smem constant byte address 0x4 - core index']
  #allocation1 [shape = 'u32[144,128]{1,0:T(1,128)}', space=vmem, size = 0x12000, scoped, tag = 'internal scratch']
  %s0 = inlined_call_operand.vmem [shape: f32[8,512], index: 0, kind: input, shape index: {}]
  %s1 = inlined_call_operand.vmem [shape: f32[2,8], index: 1, kind: input, shape index: {}]
  %s2 = inlined_call_operand.vmem [shape: f32[512,4], index: 2, kind: input, shape index: {}]
  %s3 = inlined_call_operand.vmem [shape: f32[1,4], index: 3, kind: input, shape index: {}]
  %s4 = inlined_call_operand.hbm [shape: f32[2,4], index: 4, kind: output, shape index: {}]
  %s5 = sld [smem:[#allocation0]]
  $region26: #{_lambda_.11} parent=0
    _
  %s7 = ssub.s32 1, %s5
  %s8 = scalar_select 0, %s7, %s5
  $region1: #{_lambda_.11} parent=0
    #allocation2 [shape = 'u8[1024]{0}', space=vmem, size = 0x400, scoped, tag = 'output window, operand 0, single buffered']
    #allocation3 [shape = 's32[1]{0}', space=sflag, size = 0x4, scoped, tag = 'scoped memory for _lambda_.11']
    %9 = vsyncpa [#allocation3], 0
    // Predicated region
    $region2: #{_lambda_.11} parent=1 // pred_check
      _
    $region3: #{_lambda_.11} parent=1 // pred_check_branch
      %11 = sbr.rel (0) target = $region5
    $region4: #{_lambda_.11} parent=1 // pred_region
      _
    $region5: #{_lambda_.11} parent=1 // pred_fallthru
      _
    // Predicated region
    $region6: #{_lambda_.11} parent=1 // pred_check
      _
    $region7: #{_lambda_.11} parent=1 // pred_check_branch
      %13 = sbr.rel (0) target = $region9
    $region8: #{_lambda_.11} parent=1 // pred_region
      _
    $region9: #{_lambda_.11} parent=1 // pred_fallthru
      _
    // Predicated region
    $region10: #{_lambda_.11} parent=1 // pred_check
      _
    $region11: #{_lambda_.11} parent=1 // pred_check_branch
      %15 = sbr.rel (0) target = $region13
    $region12: #{_lambda_.11} parent=1 // pred_region
      _
    $region13: #{_lambda_.11} parent=1 // pred_fallthru
      _
    // Predicated region
    $region14: #{_lambda_.11} parent=1 // pred_check
      _
    $region15: #{_lambda_.11} parent=1 // pred_check_branch
      %17 = sbr.rel (0) target = $region17
    $region16: #{_lambda_.11} parent=1 // pred_region
      _
    $region17: #{_lambda_.11} parent=1 // pred_fallthru
      _
    %v18 = vld [vmem:[%s1] sm:$0x3]
    %v19 = vld [vmem:[%s0] sm:$0xff]
    %v20 = vld [vmem:[%s0 + $0x8] sm:$0xff]
    %v21 = vld [vmem:[%s0 + $0x10] sm:$0xff]
    %v22 = vld [vmem:[%s0 + $0x18] sm:$0xff]
    %vm23 = vcmask 64512
    %v25 = vsel %vm23, %v18, 0
    %27 = vmatprep.subr.mxu0 %v20
    %28 = vmatpush1.msra.mxu0 %v19
    %29 = vmatprep.subr.mxu0 0.0
    %30 = vmatpush1.msra.mxu0 0.0
    %31 = vmatprep.subr.mxu0 0.0
    %32 = vmatpush1.msra.mxu0 0.0
    %33 = vmatprep.subr.mxu0 0.0
    %34 = vmatpush1.msra.mxu0 0.0
    %35 = vmatprep.subr.mxu0 0.0
    %36 = vmatpush1.msra.mxu0 0.0
    %37 = vmatprep.subr.mxu0 0.0
    %38 = vmatpush1.msra.mxu0 0.0
    %39 = vmatprep.subr.mxu0 0.0
    %40 = vmatpush1.msra.mxu0 0.0
    %41 = vmatprep.subr.mxu0 0.0
    %42 = vmatpush1.msra.mxu0 0.0
    %43 = vmatprep.subr.mxu0 0.0
    %44 = vmatpush1.msra.mxu0 0.0
    %45 = vmatprep.subr.mxu0 0.0
    %46 = vmatpush1.msra.mxu0 0.0
    %47 = vmatprep.subr.mxu0 0.0
    %48 = vmatpush1.msra.mxu0 0.0
    %49 = vmatprep.subr.mxu0 0.0
    %50 = vmatpush1.msra.mxu0 0.0
    %51 = vmatprep.subr.mxu0 0.0
    %52 = vmatpush1.msra.mxu0 0.0
    %53 = vmatprep.subr.mxu0 0.0
    %54 = vmatpush1.msra.mxu0 0.0
    %55 = vmatprep.subr.mxu0 0.0
    %56 = vmatpush1.msra.mxu0 0.0
    %57 = vmatprep.subr.mxu0 0.0
    %58 = vmatpush1.msra.mxu0 0.0
    %59 = vmatprep.subr.mxu0 0.0
    %60 = vmatpush1.msra.mxu0 0.0
    %61 = vmatprep.subr.mxu0 0.0
    %62 = vmatpush1.msra.mxu0 0.0
    %63 = vmatprep.subr.mxu0 0.0
    %64 = vmatpush1.msra.mxu0 0.0
    %65 = vmatprep.subr.mxu0 0.0
    %66 = vmatpush1.msra.mxu0 0.0
    %67 = vmatprep.subr.mxu0 0.0
    %68 = vmatpush1.msra.mxu0 0.0
    %69 = vmatprep.subr.mxu0 0.0
    %70 = vmatpush1.msra.mxu0 0.0
    %71 = vmatprep.subr.mxu0 0.0
    %72 = vmatpush1.msra.mxu0 0.0
    %73 = vmatprep.subr.mxu0 0.0
    %74 = vmatpush1.msra.mxu0 0.0
    %75 = vmatprep.subr.mxu0 0.0
    %76 = vmatpush1.msra.mxu0 0.0
    %77 = vmatprep.subr.mxu0 0.0
    %78 = vmatpush1.msra.mxu0 0.0
    %79 = vmatprep.subr.mxu0 0.0
    %80 = vmatpush1.msra.mxu0 0.0
    %81 = vmatprep.subr.mxu0 0.0
    %82 = vmatpush1.msra.mxu0 0.0
    %83 = vmatprep.subr.mxu0 0.0
    %84 = vmatpush1.msra.mxu0 0.0
    %85 = vmatprep.subr.mxu0 0.0
    %86 = vmatpush1.msra.mxu0 0.0
    %87 = vmatprep.subr.mxu0 0.0
    %88 = vmatpush1.msra.mxu0 0.0
    %89 = vmatprep.subr.mxu0 0.0
    %90 = vmatpush1.msra.mxu0 0.0
    %91 = vmatprep.mubr.f32.mxu0 0.0
    %92 = vmatmul.mubr.f32.gmra.mrb[0].mxu0 %v25
    %v93 = vpop.f32.mrb[0].mxu0
    %v94 = vadd.f32 0.0, %v93
    %v95 = vpop.f32.mrb[0].mxu0
    %v96 = vadd.f32 0.0, %v95
    %97 = vdwg.mxu0
    %98 = vmatprep.subr.mxu0 %v22
    %99 = vmatpush1.msra.mxu0 %v21
    %100 = vmatprep.subr.mxu0 0.0
    %101 = vmatpush1.msra.mxu0 0.0
    %102 = vmatprep.subr.mxu0 0.0
    %103 = vmatpush1.msra.mxu0 0.0
    %104 = vmatprep.subr.mxu0 0.0
    %105 = vmatpush1.msra.mxu0 0.0
    %106 = vmatprep.subr.mxu0 0.0
    %107 = vmatpush1.msra.mxu0 0.0
    %108 = vmatprep.subr.mxu0 0.0
    %109 = vmatpush1.msra.mxu0 0.0
    %110 = vmatprep.subr.mxu0 0.0
    %111 = vmatpush1.msra.mxu0 0.0
    %112 = vmatprep.subr.mxu0 0.0
    %113 = vmatpush1.msra.mxu0 0.0
    %114 = vmatprep.subr.mxu0 0.0
    %115 = vmatpush1.msra.mxu0 0.0
    %116 = vmatprep.subr.mxu0 0.0
    %117 = vmatpush1.msra.mxu0 0.0
    %118 = vmatprep.subr.mxu0 0.0
    %119 = vmatpush1.msra.mxu0 0.0
    %120 = vmatprep.subr.mxu0 0.0
    %121 = vmatpush1.msra.mxu0 0.0
    %122 = vmatprep.subr.mxu0 0.0
    %123 = vmatpush1.msra.mxu0 0.0
    %124 = vmatprep.subr.mxu0 0.0
    %125 = vmatpush1.msra.mxu0 0.0
    %126 = vmatprep.subr.mxu0 0.0
    %127 = vmatpush1.msra.mxu0 0.0
    %128 = vmatprep.subr.mxu0 0.0
    %129 = vmatpush1.msra.mxu0 0.0
    %130 = vmatprep.subr.mxu0 0.0
    %131 = vmatpush1.msra.mxu0 0.0
    %132 = vmatprep.subr.mxu0 0.0
    %133 = vmatpush1.msra.mxu0 0.0
    %134 = vmatprep.subr.mxu0 0.0
    %135 = vmatpush1.msra.mxu0 0.0
    %136 = vmatprep.subr.mxu0 0.0
    %137 = vmatpush1.msra.mxu0 0.0
    %138 = vmatprep.subr.mxu0 0.0
    %139 = vmatpush1.msra.mxu0 0.0
    %140 = vmatprep.subr.mxu0 0.0
    %141 = vmatpush1.msra.mxu0 0.0
    %142 = vmatprep.subr.mxu0 0.0
    %143 = vmatpush1.msra.mxu0 0.0
    %144 = vmatprep.subr.mxu0 0.0
    %145 = vmatpush1.msra.mxu0 0.0
    %146 = vmatprep.subr.mxu0 0.0
    %147 = vmatpush1.msra.mxu0 0.0
    %148 = vmatprep.subr.mxu0 0.0
    %149 = vmatpush1.msra.mxu0 0.0
    %150 = vmatprep.subr.mxu0 0.0
    %151 = vmatpush1.msra.mxu0 0.0
    %152 = vmatprep.subr.mxu0 0.0
    %153 = vmatpush1.msra.mxu0 0.0
    %154 = vmatprep.subr.mxu0 0.0
    %155 = vmatpush1.msra.mxu0 0.0
    %156 = vmatprep.subr.mxu0 0.0
    %157 = vmatpush1.msra.mxu0 0.0
    %158 = vmatprep.subr.mxu0 0.0
    %159 = vmatpush1.msra.mxu0 0.0
    %160 = vmatprep.subr.mxu0 0.0
    %161 = vmatpush1.msra.mxu0 0.0
    %162 = vmatprep.mubr.f32.mxu0 0.0
    %163 = vmatmul.mubr.f32.gmra.mrb[0].mxu0 %v25
    %v164 = vpop.f32.mrb[0].mxu0
    %v165 = vadd.f32 0.0, %v164
    %v166 = vpop.f32.mrb[0].mxu0
    %v167 = vadd.f32 0.0, %v166
    %168 = vdwg.mxu0
    %v169 = vld [vmem:[%s2] sm:$0xff]
    %v170 = vld [vmem:[%s2 + $0x8] sm:$0xff]
    %v171 = vld [vmem:[%s2 + $0x10] sm:$0xff]
    %v172 = vld [vmem:[%s2 + $0x18] sm:$0xff]
    %v173 = vld [vmem:[%s2 + $0x20] sm:$0xff]
    %v174 = vld [vmem:[%s2 + $0x28] sm:$0xff]
    %v175 = vld [vmem:[%s2 + $0x30] sm:$0xff]
    %v176 = vld [vmem:[%s2 + $0x38] sm:$0xff]
    %v177 = vld [vmem:[%s2 + $0x40] sm:$0xff]
    %v178 = vld [vmem:[%s2 + $0x48] sm:$0xff]
    %v179 = vld [vmem:[%s2 + $0x50] sm:$0xff]
    %v180 = vld [vmem:[%s2 + $0x58] sm:$0xff]
    %v181 = vld [vmem:[%s2 + $0x60] sm:$0xff]
    %v182 = vld [vmem:[%s2 + $0x68] sm:$0xff]
    %v183 = vld [vmem:[%s2 + $0x70] sm:$0xff]
    %v184 = vld [vmem:[%s2 + $0x78] sm:$0xff]
    %v185 = vld [vmem:[%s2 + $0x80] sm:$0xff]
    %v186 = vld [vmem:[%s2 + $0x88] sm:$0xff]
    %v187 = vld [vmem:[%s2 + $0x90] sm:$0xff]
    %v188 = vld [vmem:[%s2 + $0x98] sm:$0xff]
    %v189 = vld [vmem:[%s2 + $0xa0] sm:$0xff]
    %v190 = vld [vmem:[%s2 + $0xa8] sm:$0xff]
    %v191 = vld [vmem:[%s2 + $0xb0] sm:$0xff]
    %v192 = vld [vmem:[%s2 + $0xb8] sm:$0xff]
    %v193 = vld [vmem:[%s2 + $0xc0] sm:$0xff]
    %v194 = vld [vmem:[%s2 + $0xc8] sm:$0xff]
    %v195 = vld [vmem:[%s2 + $0xd0] sm:$0xff]
    %v196 = vld [vmem:[%s2 + $0xd8] sm:$0xff]
    %v197 = vld [vmem:[%s2 + $0xe0] sm:$0xff]
    %v198 = vld [vmem:[%s2 + $0xe8] sm:$0xff]
    %v199 = vld [vmem:[%s2 + $0xf0] sm:$0xff]
    %v200 = vld [vmem:[%s2 + $0xf8] sm:$0xff]
    %v201 = vld [vmem:[%s2 + $0x100] sm:$0xff]
    %v202 = vld [vmem:[%s2 + $0x108] sm:$0xff]
    %v203 = vld [vmem:[%s2 + $0x110] sm:$0xff]
    %v204 = vld [vmem:[%s2 + $0x118] sm:$0xff]
    %v205 = vld [vmem:[%s2 + $0x120] sm:$0xff]
    %v206 = vld [vmem:[%s2 + $0x128] sm:$0xff]
    %v207 = vld [vmem:[%s2 + $0x130] sm:$0xff]
    %v208 = vld [vmem:[%s2 + $0x138] sm:$0xff]
    %v209 = vld [vmem:[%s2 + $0x140] sm:$0xff]
    %v210 = vld [vmem:[%s2 + $0x148] sm:$0xff]
    %v211 = vld [vmem:[%s2 + $0x150] sm:$0xff]
    %v212 = vld [vmem:[%s2 + $0x158] sm:$0xff]
    %v213 = vld [vmem:[%s2 + $0x160] sm:$0xff]
    %v214 = vld [vmem:[%s2 + $0x168] sm:$0xff]
    %v215 = vld [vmem:[%s2 + $0x170] sm:$0xff]
    %v216 = vld [vmem:[%s2 + $0x178] sm:$0xff]
    %v217 = vld [vmem:[%s2 + $0x180] sm:$0xff]
    %v218 = vld [vmem:[%s2 + $0x188] sm:$0xff]
    %v219 = vld [vmem:[%s2 + $0x190] sm:$0xff]
    %v220 = vld [vmem:[%s2 + $0x198] sm:$0xff]
    %v221 = vld [vmem:[%s2 + $0x1a0] sm:$0xff]
    %v222 = vld [vmem:[%s2 + $0x1a8] sm:$0xff]
    %v223 = vld [vmem:[%s2 + $0x1b0] sm:$0xff]
    %v224 = vld [vmem:[%s2 + $0x1b8] sm:$0xff]
    %v225 = vld [vmem:[%s2 + $0x1c0] sm:$0xff]
    %v226 = vld [vmem:[%s2 + $0x1c8] sm:$0xff]
    %v227 = vld [vmem:[%s2 + $0x1d0] sm:$0xff]
    %v228 = vld [vmem:[%s2 + $0x1d8] sm:$0xff]
    %v229 = vld [vmem:[%s2 + $0x1e0] sm:$0xff]
    %v230 = vld [vmem:[%s2 + $0x1e8] sm:$0xff]
    %v231 = vld [vmem:[%s2 + $0x1f0] sm:$0xff]
    %v232 = vld [vmem:[%s2 + $0x1f8] sm:$0xff]
    %v233 = vld [vmem:[%s3] sm:$0x1]
    %v235 = vlaneseq
    %v236 = vshrl.u32 %v235, 7
    %v237 = vsub.s32 0, %v236
    %v238 = vrot.slane %v233, %v237
    %240 = vmatprep.subr.mxu0 0.0
    %241 = vmatpush1.msra.mxu0 %v169
    %242 = vmatprep.subr.mxu0 0.0
    %243 = vmatpush1.msra.mxu0 %v170
    %244 = vmatprep.subr.mxu0 0.0
    %245 = vmatpush1.msra.mxu0 %v171
    %246 = vmatprep.subr.mxu0 0.0
    %247 = vmatpush1.msra.mxu0 %v172
    %248 = vmatprep.subr.mxu0 0.0
    %249 = vmatpush1.msra.mxu0 %v173
    %250 = vmatprep.subr.mxu0 0.0
    %251 = vmatpush1.msra.mxu0 %v174
    %252 = vmatprep.subr.mxu0 0.0
    %253 = vmatpush1.msra.mxu0 %v175
    %254 = vmatprep.subr.mxu0 0.0
    %255 = vmatpush1.msra.mxu0 %v176
    %256 = vmatprep.subr.mxu0 0.0
    %257 = vmatpush1.msra.mxu0 %v177
    %258 = vmatprep.subr.mxu0 0.0
    %259 = vmatpush1.msra.mxu0 %v178
    %260 = vmatprep.subr.mxu0 0.0
    %261 = vmatpush1.msra.mxu0 %v179
    %262 = vmatprep.subr.mxu0 0.0
    %263 = vmatpush1.msra.mxu0 %v180
    %264 = vmatprep.subr.mxu0 0.0
    %265 = vmatpush1.msra.mxu0 %v181
    %266 = vmatprep.subr.mxu0 0.0
    %267 = vmatpush1.msra.mxu0 %v182
    %268 = vmatprep.subr.mxu0 0.0
    %269 = vmatpush1.msra.mxu0 %v183
    %270 = vmatprep.subr.mxu0 0.0
    %271 = vmatpush1.msra.mxu0 %v184
    %272 = vmatprep.subr.mxu0 0.0
    %273 = vmatpush1.msra.mxu0 %v185
    %274 = vmatprep.subr.mxu0 0.0
    %275 = vmatpush1.msra.mxu0 %v186
    %276 = vmatprep.subr.mxu0 0.0
    %277 = vmatpush1.msra.mxu0 %v187
    %278 = vmatprep.subr.mxu0 0.0
    %279 = vmatpush1.msra.mxu0 %v188
    %280 = vmatprep.subr.mxu0 0.0
    %281 = vmatpush1.msra.mxu0 %v189
    %282 = vmatprep.subr.mxu0 0.0
    %283 = vmatpush1.msra.mxu0 %v190
    %284 = vmatprep.subr.mxu0 0.0
    %285 = vmatpush1.msra.mxu0 %v191
    %286 = vmatprep.subr.mxu0 0.0
    %287 = vmatpush1.msra.mxu0 %v192
    %288 = vmatprep.subr.mxu0 0.0
    %289 = vmatpush1.msra.mxu0 %v193
    %290 = vmatprep.subr.mxu0 0.0
    %291 = vmatpush1.msra.mxu0 %v194
    %292 = vmatprep.subr.mxu0 0.0
    %293 = vmatpush1.msra.mxu0 %v195
    %294 = vmatprep.subr.mxu0 0.0
    %295 = vmatpush1.msra.mxu0 %v196
    %296 = vmatprep.subr.mxu0 0.0
    %297 = vmatpush1.msra.mxu0 %v197
    %298 = vmatprep.subr.mxu0 0.0
    %299 = vmatpush1.msra.mxu0 %v198
    %300 = vmatprep.subr.mxu0 0.0
    %301 = vmatpush1.msra.mxu0 %v199
    %302 = vmatprep.subr.mxu0 0.0
    %303 = vmatpush1.msra.mxu0 %v200
    %304 = vmatprep.mubr.f32.mxu0 %v96
    %305 = vmatmul.mubr.f32.gmra.mrb[0].mxu0 %v94
    %v306 = vpop.f32.mrb[0].mxu0
    %v307 = vadd.f32 %v238, %v306
    %v308 = vpop.f32.mrb[0].mxu0
    %309 = vdwg.mxu0
    %310 = vmatprep.subr.mxu0 0.0
    %311 = vmatpush1.msra.mxu0 %v201
    %312 = vmatprep.subr.mxu0 0.0
    %313 = vmatpush1.msra.mxu0 %v202
    %314 = vmatprep.subr.mxu0 0.0
    %315 = vmatpush1.msra.mxu0 %v203
    %316 = vmatprep.subr.mxu0 0.0
    %317 = vmatpush1.msra.mxu0 %v204
    %318 = vmatprep.subr.mxu0 0.0
    %319 = vmatpush1.msra.mxu0 %v205
    %320 = vmatprep.subr.mxu0 0.0
    %321 = vmatpush1.msra.mxu0 %v206
    %322 = vmatprep.subr.mxu0 0.0
    %323 = vmatpush1.msra.mxu0 %v207
    %324 = vmatprep.subr.mxu0 0.0
    %325 = vmatpush1.msra.mxu0 %v208
    %326 = vmatprep.subr.mxu0 0.0
    %327 = vmatpush1.msra.mxu0 %v209
    %328 = vmatprep.subr.mxu0 0.0
    %329 = vmatpush1.msra.mxu0 %v210
    %330 = vmatprep.subr.mxu0 0.0
    %331 = vmatpush1.msra.mxu0 %v211
    %332 = vmatprep.subr.mxu0 0.0
    %333 = vmatpush1.msra.mxu0 %v212
    %334 = vmatprep.subr.mxu0 0.0
    %335 = vmatpush1.msra.mxu0 %v213
    %336 = vmatprep.subr.mxu0 0.0
    %337 = vmatpush1.msra.mxu0 %v214
    %338 = vmatprep.subr.mxu0 0.0
    %339 = vmatpush1.msra.mxu0 %v215
    %340 = vmatprep.subr.mxu0 0.0
    %341 = vmatpush1.msra.mxu0 %v216
    %342 = vmatprep.subr.mxu0 0.0
    %343 = vmatpush1.msra.mxu0 %v217
    %344 = vmatprep.subr.mxu0 0.0
    %345 = vmatpush1.msra.mxu0 %v218
    %346 = vmatprep.subr.mxu0 0.0
    %347 = vmatpush1.msra.mxu0 %v219
    %348 = vmatprep.subr.mxu0 0.0
    %349 = vmatpush1.msra.mxu0 %v220
    %350 = vmatprep.subr.mxu0 0.0
    %351 = vmatpush1.msra.mxu0 %v221
    %352 = vmatprep.subr.mxu0 0.0
    %353 = vmatpush1.msra.mxu0 %v222
    %354 = vmatprep.subr.mxu0 0.0
    %355 = vmatpush1.msra.mxu0 %v223
    %356 = vmatprep.subr.mxu0 0.0
    %357 = vmatpush1.msra.mxu0 %v224
    %358 = vmatprep.subr.mxu0 0.0
    %359 = vmatpush1.msra.mxu0 %v225
    %360 = vmatprep.subr.mxu0 0.0
    %361 = vmatpush1.msra.mxu0 %v226
    %362 = vmatprep.subr.mxu0 0.0
    %363 = vmatpush1.msra.mxu0 %v227
    %364 = vmatprep.subr.mxu0 0.0
    %365 = vmatpush1.msra.mxu0 %v228
    %366 = vmatprep.subr.mxu0 0.0
    %367 = vmatpush1.msra.mxu0 %v229
    %368 = vmatprep.subr.mxu0 0.0
    %369 = vmatpush1.msra.mxu0 %v230
    %370 = vmatprep.subr.mxu0 0.0
    %371 = vmatpush1.msra.mxu0 %v231
    %372 = vmatprep.subr.mxu0 0.0
    %373 = vmatpush1.msra.mxu0 %v232
    %374 = vmatprep.mubr.f32.mxu0 %v167
    %375 = vmatmul.mubr.f32.gmra.mrb[0].mxu0 %v165
    %v376 = vpop.f32.mrb[0].mxu0
    %v377 = vadd.f32 %v307, %v376
    %v378 = vpop.f32.mrb[0].mxu0
    %379 = vdwg.mxu0
    %vm380 = vcmask 25600
    %381 = vst.msk [vmem:[#allocation2] sm:$0x3] %vm380, %v377
    // Predicated region
    $region18: #{_lambda_.11} parent=1 // pred_check
      _
    $region19: #{_lambda_.11} parent=1 // pred_check_branch
      %383 = sbr.rel (0) target = $region21
    $region20: #{_lambda_.11} parent=1 // pred_region
      %s385 = ssub.s32 32, 32
      %386 = vsyncadd [#allocation3], %s385
      %s388 = sshll.u32 [#allocation2], 4
      %s389 = int_to_ptr.vmem [resolvable:$true] %s388
      %391 = dma.vmem_to_hbm [thread:$0]  %s389, 32, %s4, [#allocation3]
    $region21: #{_lambda_.11} parent=1 // pred_fallthru
      _
    // Predicated region
    $region22: #{_lambda_.11} parent=1 // pred_check
      _
    $region23: #{_lambda_.11} parent=1 // pred_check_branch
      %393 = sbr.rel (0) target = $region25
    $region24: #{_lambda_.11} parent=1 // pred_region
      %394 = dma.done [#allocation3], 32
    $region25: #{_lambda_.11} parent=1 // pred_fallthru
      _
    %395 = vsyncpa [#allocation3], 1

// kernel: _lambda_.9
$region0: #{_lambda_.9}
  #allocation0 [shape = 'u32[]', space=smem, size = 0x4, offset = 0x4, fixed_abs, tag = 'smem constant byte address 0x4 - core index']
  #allocation1 [shape = 'u32[144,128]{1,0:T(1,128)}', space=vmem, size = 0x12000, scoped, tag = 'internal scratch']
  #allocation2 [shape = 'f32[17,128]{1,0:T(8,128)}', space=vmem, size = 0x3000, scoped, tag = 'scratch operand']
  #allocation3 [shape = 'f32[18,256]{1,0:T(8,128)}', space=vmem, size = 0x6000, scoped, tag = 'scratch operand']
  %s0 = inlined_call_operand.vmem [shape: f32[16,256], index: 0, kind: input, shape index: {}]
  %s1 = inlined_call_operand.vmem [shape: bf16[3,128,256], index: 1, kind: input, shape index: {}]
  %s2 = inlined_call_operand.vmem [shape: f32[2,256], index: 2, kind: input, shape index: {}]
  %s3 = inlined_call_operand.vmem [shape: bf16[3,256,256], index: 3, kind: input, shape index: {}]
  %s4 = inlined_call_operand.vmem [shape: f32[2,256], index: 4, kind: input, shape index: {}]
  %s5 = inlined_call_operand.vmem [shape: bf16[128,256], index: 5, kind: input, shape index: {}]
  %s6 = inlined_call_operand.vmem [shape: f32[2,256], index: 6, kind: input, shape index: {}]
  %s7 = inlined_call_operand.vmem [shape: f32[16,256], index: 7, kind: output, shape index: {}]
  %s8 = sld [smem:[#allocation0]]
  $region38: #{_lambda_.9} parent=0
    _
  %s10 = ssub.s32 1, %s8
  %s11 = scalar_select 0, %s10, %s8
  // Predicated region
  $region2: #{_lambda_.9} parent=0 // pred_check
    _
  $region3: #{_lambda_.9} parent=0 // pred_check_branch
    %13 = sbr.rel (0) target = $region5
  $region4: #{_lambda_.9} parent=0 // pred_region
    _
  $region5: #{_lambda_.9} parent=0 // pred_fallthru
    _
  // Predicated region
  $region6: #{_lambda_.9} parent=0 // pred_check
    _
  $region7: #{_lambda_.9} parent=0 // pred_check_branch
    %15 = sbr.rel (0) target = $region9
  $region8: #{_lambda_.9} parent=0 // pred_region
    _
  $region9: #{_lambda_.9} parent=0 // pred_fallthru
    _
  // Predicated region
  $region10: #{_lambda_.9} parent=0 // pred_check
    _
  $region11: #{_lambda_.9} parent=0 // pred_check_branch
    %17 = sbr.rel (0) target = $region13
  $region12: #{_lambda_.9} parent=0 // pred_region
    _
  $region13: #{_lambda_.9} parent=0 // pred_fallthru
    _
  // Predicated region
  $region14: #{_lambda_.9} parent=0 // pred_check
    _
  $region15: #{_lambda_.9} parent=0 // pred_check_branch
    %19 = sbr.rel (0) target = $region17
  $region16: #{_lambda_.9} parent=0 // pred_region
    _
  $region17: #{_lambda_.9} parent=0 // pred_fallthru
    _
  // Predicated region
  $region18: #{_lambda_.9} parent=0 // pred_check
    _
  $region19: #{_lambda_.9} parent=0 // pred_check_branch
    %21 = sbr.rel (0) target = $region21
  $region20: #{_lambda_.9} parent=0 // pred_region
    _
  $region21: #{_lambda_.9} parent=0 // pred_fallthru
    _
  // Predicated region
  $region22: #{_lambda_.9} parent=0 // pred_check
    _
  $region23: #{_lambda_.9} parent=0 // pred_check_branch
    %23 = sbr.rel (0) target = $region25
  $region24: #{_lambda_.9} parent=0 // pred_region
    _
  $region25: #{_lambda_.9} parent=0 // pred_fallthru
    _
  // Predicated region
  $region26: #{_lambda_.9} parent=0 // pred_check
    _
  $region27: #{_lambda_.9} parent=0 // pred_check_branch
    %25 = sbr.rel (0) target = $region29
  $region28: #{_lambda_.9} parent=0 // pred_region
    _
  $region29: #{_lambda_.9} parent=0 // pred_fallthru
    _
  %v27 = vlaneseq
  %v28 = vshrl.u32 %v27, 7
  %v29 = vadd.s32 %v28, 8
  %vm30 = vcmp.lt.s32.totalorder %v28, 0
  %v31 = vsub.s32 0, %v28
  %v32 = vsel %vm30, %v31, %v28
  %v33 = vshrl.u32 %v32, 3
  %v34 = vand.u32 %v32, 7
  %v35 = vsub.s32 0, %v34
  %v36 = vsel %vm30, %v35, %v34
  %vm37 = vcmp.lt.s32.totalorder %v29, 0
  %v38 = vsub.s32 0, %v29
  %v39 = vsel %vm37, %v38, %v29
  %v40 = vshrl.u32 %v39, 3
  %v41 = vand.u32 %v39, 7
  %v42 = vsub.s32 0, %v41
  %v43 = vsel %vm37, %v42, %v41
  %vm44 = vcmp.ne.s32.totalorder %v36, 0
  %vm45 = vcmp.ne.s32.totalorder %v43, 0
  %vm46 = vcmp.lt.s32.totalorder %v36, 0
  %vm47 = vcmp.lt.s32.totalorder %v43, 0
  %vm48 = vmand %vm46, %vm44
  %vm49 = vmand %vm47, %vm45
  %v50 = vadd.s32 %v36, 8
  %v51 = vadd.s32 %v43, 8
  %v52 = vsel %vm48, %v50, %v36
  %v53 = vsel %vm49, %v51, %v43
  %vm54 = vcmp.eq.s32.totalorder %v52, 0
  %vm55 = vcmp.eq.s32.totalorder %v53, 0
  %vm56 = vcmp.eq.s32.totalorder %v52, 7
  %vm57 = vcmp.eq.s32.totalorder %v53, 7
  %v58 = vld [vmem:[%s0] sm:$0xff]
  %v59 = vld [vmem:[%s0 + $0x8] sm:$0xff]
  %v60 = vld [vmem:[%s0 + $0x10] sm:$0xff]
  %v61 = vld [vmem:[%s0 + $0x18] sm:$0xff]
  %62 = vst [vmem:[#allocation2] sm:$0xff] 0.0
  %63 = vst [vmem:[#allocation2 + $0x8] sm:$0xff] 0.0
  %64 = vst [vmem:[#allocation2 + $0x10] sm:$0x1] 0.0
  %65 = vst [vmem:[#allocation2 + $0x1] sm:$0xff] %v59
  %66 = vst [vmem:[#allocation2 + $0x9] sm:$0xff] %v61
  %v67 = vld [vmem:[#allocation2] sm:$0xff]
  %v68 = vld [vmem:[#allocation2 + $0x8] sm:$0xff]
  %v69 = vsel %vm54, 1, 0
  %v70 = vsel %vm55, 1, 0
  %vm71 = vcmp.eq.s32.totalorder %v69, 1
  %vm72 = vcmp.eq.s32.totalorder %v70, 1
  %v73 = vsel %vm71, 0.0, %v67
  %v74 = vsel %vm72, 0.0, %v68
  %v75 = vld [vmem:[%s1] sm:$0xff]
  %v76 = vld [vmem:[%s1 + $0x8] sm:$0xff]
  %v77 = vld [vmem:[%s1 + $0x10] sm:$0xff]
  %v78 = vld [vmem:[%s1 + $0x18] sm:$0xff]
  %v79 = vld [vmem:[%s1 + $0x20] sm:$0xff]
  %v80 = vld [vmem:[%s1 + $0x28] sm:$0xff]
  %v81 = vld [vmem:[%s1 + $0x30] sm:$0xff]
  %v82 = vld [vmem:[%s1 + $0x38] sm:$0xff]
  %v83 = vld [vmem:[%s1 + $0x40] sm:$0xff]
  %v84 = vld [vmem:[%s1 + $0x48] sm:$0xff]
  %v85 = vld [vmem:[%s1 + $0x50] sm:$0xff]
  %v86 = vld [vmem:[%s1 + $0x58] sm:$0xff]
  %v87 = vld [vmem:[%s1 + $0x60] sm:$0xff]
  %v88 = vld [vmem:[%s1 + $0x68] sm:$0xff]
  %v89 = vld [vmem:[%s1 + $0x70] sm:$0xff]
  %v90 = vld [vmem:[%s1 + $0x78] sm:$0xff]
  %v91 = vpack.c.bf16 %v74, %v73
  %s92 = scalar_lea.vmem %s1, 128
  %v93 = vld [vmem:[%s92] sm:$0xff]
  %v94 = vld [vmem:[%s92 + $0x8] sm:$0xff]
  %v95 = vld [vmem:[%s92 + $0x10] sm:$0xff]
  %v96 = vld [vmem:[%s92 + $0x18] sm:$0xff]
  %v97 = vld [vmem:[%s92 + $0x20] sm:$0xff]
  %v98 = vld [vmem:[%s92 + $0x28] sm:$0xff]
  %v99 = vld [vmem:[%s92 + $0x30] sm:$0xff]
  %v100 = vld [vmem:[%s92 + $0x38] sm:$0xff]
  %v101 = vld [vmem:[%s92 + $0x40] sm:$0xff]
  %v102 = vld [vmem:[%s92 + $0x48] sm:$0xff]
  %v103 = vld [vmem:[%s92 + $0x50] sm:$0xff]
  %v104 = vld [vmem:[%s92 + $0x58] sm:$0xff]
  %v105 = vld [vmem:[%s92 + $0x60] sm:$0xff]
  %v106 = vld [vmem:[%s92 + $0x68] sm:$0xff]
  %v107 = vld [vmem:[%s92 + $0x70] sm:$0xff]
  %v108 = vld [vmem:[%s92 + $0x78] sm:$0xff]
  %v109 = vpack.c.bf16 %v60, %v58
  %v126 = vunpack.c.l.b16 %v93
  %v127 = vunpack.c.h.b16 %v93
  %v128 = vunpack.c.l.b16 %v94
  %v129 = vunpack.c.h.b16 %v94
  %v130 = vunpack.c.l.b16 %v95
  %v131 = vunpack.c.h.b16 %v95
  %v132 = vunpack.c.l.b16 %v96
  %v133 = vunpack.c.h.b16 %v96
  %v134 = vunpack.c.l.b16 %v97
  %v135 = vunpack.c.h.b16 %v97
  %v136 = vunpack.c.l.b16 %v98
  %v137 = vunpack.c.h.b16 %v98
  %v138 = vunpack.c.l.b16 %v99
  %v139 = vunpack.c.h.b16 %v99
  %v140 = vunpack.c.l.b16 %v100
  %v141 = vunpack.c.h.b16 %v100
  %v142 = vunpack.c.l.b16 %v101
  %v143 = vunpack.c.h.b16 %v101
  %v144 = vunpack.c.l.b16 %v102
  %v145 = vunpack.c.h.b16 %v102
  %v146 = vunpack.c.l.b16 %v103
  %v147 = vunpack.c.h.b16 %v103
  %v148 = vunpack.c.l.b16 %v104
  %v149 = vunpack.c.h.b16 %v104
  %v150 = vunpack.c.l.b16 %v105
  %v151 = vunpack.c.h.b16 %v105
  %v152 = vunpack.c.l.b16 %v106
  %v153 = vunpack.c.h.b16 %v106
  %v154 = vunpack.c.l.b16 %v107
  %v155 = vunpack.c.h.b16 %v107
  %v156 = vunpack.c.l.b16 %v108
  %v157 = vunpack.c.h.b16 %v108
  %v158 = vpack.c.b16 %v128, %v126
  %v159 = vpack.c.b16 %v129, %v127
  %v160 = vpack.c.b16 %v132, %v130
  %v161 = vpack.c.b16 %v133, %v131
  %v162 = vpack.c.b16 %v136, %v134
  %v163 = vpack.c.b16 %v137, %v135
  %v164 = vpack.c.b16 %v140, %v138
  %v165 = vpack.c.b16 %v141, %v139
  %v166 = vpack.c.b16 %v144, %v142
  %v167 = vpack.c.b16 %v145, %v143
  %v168 = vpack.c.b16 %v148, %v146
  %v169 = vpack.c.b16 %v149, %v147
  %v170 = vpack.c.b16 %v152, %v150
  %v171 = vpack.c.b16 %v153, %v151
  %v172 = vpack.c.b16 %v156, %v154
  %v173 = vpack.c.b16 %v157, %v155
  %190 = vmatprep.subr.bf16.mxu0 %v159
  %191 = vmatpush1.bf16.msra.mxu0 %v158
  %192 = vmatprep.subr.bf16.mxu0 %v161
  %193 = vmatpush1.bf16.msra.mxu0 %v160
  %194 = vmatprep.subr.bf16.mxu0 %v163
  %195 = vmatpush1.bf16.msra.mxu0 %v162
  %196 = vmatprep.subr.bf16.mxu0 %v165
  %197 = vmatpush1.bf16.msra.mxu0 %v164
  %198 = vmatprep.subr.bf16.mxu0 %v167
  %199 = vmatpush1.bf16.msra.mxu0 %v166
  %200 = vmatprep.subr.bf16.mxu0 %v169
  %201 = vmatpush1.bf16.msra.mxu0 %v168
  %202 = vmatprep.subr.bf16.mxu0 %v171
  %203 = vmatpush1.bf16.msra.mxu0 %v170
  %204 = vmatprep.subr.bf16.mxu0 %v173
  %205 = vmatpush1.bf16.msra.mxu0 %v172
  %206 = vmatprep.subr.bf16.mxu0 0
  %207 = vmatpush1.bf16.msra.mxu0 0
  %208 = vmatprep.subr.bf16.mxu0 0
  %209 = vmatpush1.bf16.msra.mxu0 0
  %210 = vmatprep.subr.bf16.mxu0 0
  %211 = vmatpush1.bf16.msra.mxu0 0
  %212 = vmatprep.subr.bf16.mxu0 0
  %213 = vmatpush1.bf16.msra.mxu0 0
  %214 = vmatprep.subr.bf16.mxu0 0
  %215 = vmatpush1.bf16.msra.mxu0 0
  %216 = vmatprep.subr.bf16.mxu0 0
  %217 = vmatpush1.bf16.msra.mxu0 0
  %218 = vmatprep.subr.bf16.mxu0 0
  %219 = vmatpush1.bf16.msra.mxu0 0
  %220 = vmatprep.subr.bf16.mxu0 0
  %221 = vmatpush1.bf16.msra.mxu0 0
  %222 = vmatprep.mubr.bf16.mxu0 0
  %223 = vmatmul.mubr.bf16.gmra.mrb[0].mxu0 %v109
  %v224 = vpop.f32.mrb[0].mxu0
  %v225 = vadd.f32 0.0, %v224
  %v226 = vpop.f32.mrb[0].mxu0
  %v227 = vadd.f32 0.0, %v226
  %v228 = vpop.f32.mrb[0].mxu0
  %v229 = vadd.f32 0.0, %v228
  %v230 = vpop.f32.mrb[0].mxu0
  %v231 = vadd.f32 0.0, %v230
  %232 = vdwg.mxu0
  %v249 = vunpack.c.l.b16 %v75
  %v250 = vunpack.c.h.b16 %v75
  %v251 = vunpack.c.l.b16 %v76
  %v252 = vunpack.c.h.b16 %v76
  %v253 = vunpack.c.l.b16 %v77
  %v254 = vunpack.c.h.b16 %v77
  %v255 = vunpack.c.l.b16 %v78
  %v256 = vunpack.c.h.b16 %v78
  %v257 = vunpack.c.l.b16 %v79
  %v258 = vunpack.c.h.b16 %v79
  %v259 = vunpack.c.l.b16 %v80
  %v260 = vunpack.c.h.b16 %v80
  %v261 = vunpack.c.l.b16 %v81
  %v262 = vunpack.c.h.b16 %v81
  %v263 = vunpack.c.l.b16 %v82
  %v264 = vunpack.c.h.b16 %v82
  %v265 = vunpack.c.l.b16 %v83
  %v266 = vunpack.c.h.b16 %v83
  %v267 = vunpack.c.l.b16 %v84
  %v268 = vunpack.c.h.b16 %v84
  %v269 = vunpack.c.l.b16 %v85
  %v270 = vunpack.c.h.b16 %v85
  %v271 = vunpack.c.l.b16 %v86
  %v272 = vunpack.c.h.b16 %v86
  %v273 = vunpack.c.l.b16 %v87
  %v274 = vunpack.c.h.b16 %v87
  %v275 = vunpack.c.l.b16 %v88
  %v276 = vunpack.c.h.b16 %v88
  %v277 = vunpack.c.l.b16 %v89
  %v278 = vunpack.c.h.b16 %v89
  %v279 = vunpack.c.l.b16 %v90
  %v280 = vunpack.c.h.b16 %v90
  %v281 = vpack.c.b16 %v251, %v249
  %v282 = vpack.c.b16 %v252, %v250
  %v283 = vpack.c.b16 %v255, %v253
  %v284 = vpack.c.b16 %v256, %v254
  %v285 = vpack.c.b16 %v259, %v257
  %v286 = vpack.c.b16 %v260, %v258
  %v287 = vpack.c.b16 %v263, %v261
  %v288 = vpack.c.b16 %v264, %v262
  %v289 = vpack.c.b16 %v267, %v265
  %v290 = vpack.c.b16 %v268, %v266
  %v291 = vpack.c.b16 %v271, %v269
  %v292 = vpack.c.b16 %v272, %v270
  %v293 = vpack.c.b16 %v275, %v273
  %v294 = vpack.c.b16 %v276, %v274
  %v295 = vpack.c.b16 %v279, %v277
  %v296 = vpack.c.b16 %v280, %v278
  %313 = vmatprep.subr.bf16.mxu0 %v282
  %314 = vmatpush1.bf16.msra.mxu0 %v281
  %315 = vmatprep.subr.bf16.mxu0 %v284
  %316 = vmatpush1.bf16.msra.mxu0 %v283
  %317 = vmatprep.subr.bf16.mxu0 %v286
  %318 = vmatpush1.bf16.msra.mxu0 %v285
  %319 = vmatprep.subr.bf16.mxu0 %v288
  %320 = vmatpush1.bf16.msra.mxu0 %v287
  %321 = vmatprep.subr.bf16.mxu0 %v290
  %322 = vmatpush1.bf16.msra.mxu0 %v289
  %323 = vmatprep.subr.bf16.mxu0 %v292
  %324 = vmatpush1.bf16.msra.mxu0 %v291
  %325 = vmatprep.subr.bf16.mxu0 %v294
  %326 = vmatpush1.bf16.msra.mxu0 %v293
  %327 = vmatprep.subr.bf16.mxu0 %v296
  %328 = vmatpush1.bf16.msra.mxu0 %v295
  %329 = vmatprep.subr.bf16.mxu0 0
  %330 = vmatpush1.bf16.msra.mxu0 0
  %331 = vmatprep.subr.bf16.mxu0 0
  %332 = vmatpush1.bf16.msra.mxu0 0
  %333 = vmatprep.subr.bf16.mxu0 0
  %334 = vmatpush1.bf16.msra.mxu0 0
  %335 = vmatprep.subr.bf16.mxu0 0
  %336 = vmatpush1.bf16.msra.mxu0 0
  %337 = vmatprep.subr.bf16.mxu0 0
  %338 = vmatpush1.bf16.msra.mxu0 0
  %339 = vmatprep.subr.bf16.mxu0 0
  %340 = vmatpush1.bf16.msra.mxu0 0
  %341 = vmatprep.subr.bf16.mxu0 0
  %342 = vmatpush1.bf16.msra.mxu0 0
  %343 = vmatprep.subr.bf16.mxu0 0
  %344 = vmatpush1.bf16.msra.mxu0 0
  %345 = vmatprep.mubr.bf16.mxu0 0
  %346 = vmatmul.mubr.bf16.gmra.mrb[0].mxu0 %v91
  %v347 = vpop.f32.mrb[0].mxu0
  %v348 = vadd.f32 %v225, %v347
  %v349 = vpop.f32.mrb[0].mxu0
  %v350 = vadd.f32 %v227, %v349
  %v351 = vpop.f32.mrb[0].mxu0
  %v352 = vadd.f32 %v229, %v351
  %v353 = vpop.f32.mrb[0].mxu0
  %v354 = vadd.f32 %v231, %v353
  %355 = vdwg.mxu0
  %s356 = scalar_lea.vmem %s1, 256
  %v357 = vld [vmem:[%s356] sm:$0xff]
  %v358 = vld [vmem:[%s356 + $0x8] sm:$0xff]
  %v359 = vld [vmem:[%s356 + $0x10] sm:$0xff]
  %v360 = vld [vmem:[%s356 + $0x18] sm:$0xff]
  %v361 = vld [vmem:[%s356 + $0x20] sm:$0xff]
  %v362 = vld [vmem:[%s356 + $0x28] sm:$0xff]
  %v363 = vld [vmem:[%s356 + $0x30] sm:$0xff]
  %v364 = vld [vmem:[%s356 + $0x38] sm:$0xff]
  %v365 = vld [vmem:[%s356 + $0x40] sm:$0xff]
  %v366 = vld [vmem:[%s356 + $0x48] sm:$0xff]
  %v367 = vld [vmem:[%s356 + $0x50] sm:$0xff]
  %v368 = vld [vmem:[%s356 + $0x58] sm:$0xff]
  %v369 = vld [vmem:[%s356 + $0x60] sm:$0xff]
  %v370 = vld [vmem:[%s356 + $0x68] sm:$0xff]
  %v371 = vld [vmem:[%s356 + $0x70] sm:$0xff]
  %v372 = vld [vmem:[%s356 + $0x78] sm:$0xff]
  %v373 = vpack.c.bf16 %v61, %v59
  %v390 = vunpack.c.l.b16 %v357
  %v391 = vunpack.c.h.b16 %v357
  %v392 = vunpack.c.l.b16 %v358
  %v393 = vunpack.c.h.b16 %v358
  %v394 = vunpack.c.l.b16 %v359
  %v395 = vunpack.c.h.b16 %v359
  %v396 = vunpack.c.l.b16 %v360
  %v397 = vunpack.c.h.b16 %v360
  %v398 = vunpack.c.l.b16 %v361
  %v399 = vunpack.c.h.b16 %v361
  %v400 = vunpack.c.l.b16 %v362
  %v401 = vunpack.c.h.b16 %v362
  %v402 = vunpack.c.l.b16 %v363
  %v403 = vunpack.c.h.b16 %v363
  %v404 = vunpack.c.l.b16 %v364
  %v405 = vunpack.c.h.b16 %v364
  %v406 = vunpack.c.l.b16 %v365
  %v407 = vunpack.c.h.b16 %v365
  %v408 = vunpack.c.l.b16 %v366
  %v409 = vunpack.c.h.b16 %v366
  %v410 = vunpack.c.l.b16 %v367
  %v411 = vunpack.c.h.b16 %v367
  %v412 = vunpack.c.l.b16 %v368
  %v413 = vunpack.c.h.b16 %v368
  %v414 = vunpack.c.l.b16 %v369
  %v415 = vunpack.c.h.b16 %v369
  %v416 = vunpack.c.l.b16 %v370
  %v417 = vunpack.c.h.b16 %v370
  %v418 = vunpack.c.l.b16 %v371
  %v419 = vunpack.c.h.b16 %v371
  %v420 = vunpack.c.l.b16 %v372
  %v421 = vunpack.c.h.b16 %v372
  %v422 = vpack.c.b16 %v392, %v390
  %v423 = vpack.c.b16 %v393, %v391
  %v424 = vpack.c.b16 %v396, %v394
  %v425 = vpack.c.b16 %v397, %v395
  %v426 = vpack.c.b16 %v400, %v398
  %v427 = vpack.c.b16 %v401, %v399
  %v428 = vpack.c.b16 %v404, %v402
  %v429 = vpack.c.b16 %v405, %v403
  %v430 = vpack.c.b16 %v408, %v406
  %v431 = vpack.c.b16 %v409, %v407
  %v432 = vpack.c.b16 %v412, %v410
  %v433 = vpack.c.b16 %v413, %v411
  %v434 = vpack.c.b16 %v416, %v414
  %v435 = vpack.c.b16 %v417, %v415
  %v436 = vpack.c.b16 %v420, %v418
  %v437 = vpack.c.b16 %v421, %v419
  %454 = vmatprep.subr.bf16.mxu0 %v423
  %455 = vmatpush1.bf16.msra.mxu0 %v422
  %456 = vmatprep.subr.bf16.mxu0 %v425
  %457 = vmatpush1.bf16.msra.mxu0 %v424
  %458 = vmatprep.subr.bf16.mxu0 %v427
  %459 = vmatpush1.bf16.msra.mxu0 %v426
  %460 = vmatprep.subr.bf16.mxu0 %v429
  %461 = vmatpush1.bf16.msra.mxu0 %v428
  %462 = vmatprep.subr.bf16.mxu0 %v431
  %463 = vmatpush1.bf16.msra.mxu0 %v430
  %464 = vmatprep.subr.bf16.mxu0 %v433
  %465 = vmatpush1.bf16.msra.mxu0 %v432
  %466 = vmatprep.subr.bf16.mxu0 %v435
  %467 = vmatpush1.bf16.msra.mxu0 %v434
  %468 = vmatprep.subr.bf16.mxu0 %v437
  %469 = vmatpush1.bf16.msra.mxu0 %v436
  %470 = vmatprep.subr.bf16.mxu0 0
  %471 = vmatpush1.bf16.msra.mxu0 0
  %472 = vmatprep.subr.bf16.mxu0 0
  %473 = vmatpush1.bf16.msra.mxu0 0
  %474 = vmatprep.subr.bf16.mxu0 0
  %475 = vmatpush1.bf16.msra.mxu0 0
  %476 = vmatprep.subr.bf16.mxu0 0
  %477 = vmatpush1.bf16.msra.mxu0 0
  %478 = vmatprep.subr.bf16.mxu0 0
  %479 = vmatpush1.bf16.msra.mxu0 0
  %480 = vmatprep.subr.bf16.mxu0 0
  %481 = vmatpush1.bf16.msra.mxu0 0
  %482 = vmatprep.subr.bf16.mxu0 0
  %483 = vmatpush1.bf16.msra.mxu0 0
  %484 = vmatprep.subr.bf16.mxu0 0
  %485 = vmatpush1.bf16.msra.mxu0 0
  %486 = vmatprep.mubr.bf16.mxu0 0
  %487 = vmatmul.mubr.bf16.gmra.mrb[0].mxu0 %v373
  %v488 = vpop.f32.mrb[0].mxu0
  %v489 = vadd.f32 0.0, %v488
  %v490 = vpop.f32.mrb[0].mxu0
  %v491 = vadd.f32 0.0, %v490
  %v492 = vpop.f32.mrb[0].mxu0
  %v493 = vadd.f32 0.0, %v492
  %v494 = vpop.f32.mrb[0].mxu0
  %v495 = vadd.f32 0.0, %v494
  %496 = vdwg.mxu0
  %v497 = vadd.f32 %v348, %v489
  %v498 = vadd.f32 %v350, %v491
  %v499 = vadd.f32 %v352, %v493
  %v500 = vadd.f32 %v354, %v495
  %v501 = vld [vmem:[%s2] sm:$0xf]
  %v502 = vadd.f32 %v497, %v499
  %v503 = vrot.slane %v502, 4
  %v504 = vadd.f32 %v502, %v503
  %v505 = vrot.slane %v504, 2
  %v506 = vadd.f32 %v504, %v505
  %v507 = vrot.slane %v506, 1
  %v508 = vadd.f32 %v506, %v507
  %v509 = vadd.f32 %v498, %v500
  %v510 = vrot.slane %v509, 4
  %v511 = vadd.f32 %v509, %v510
  %v512 = vrot.slane %v511, 2
  %v513 = vadd.f32 %v511, %v512
  %v514 = vrot.slane %v513, 1
  %v515 = vadd.f32 %v513, %v514
  %v516 = vrcp.pop 16.0
  %v517 = vmul.f32 %v508, %v516
  %v518 = vmul.f32 %v515, %v516
  %v519 = vsub.f32 %v497, %v517
  %v520 = vsub.f32 %v498, %v518
  %v521 = vsub.f32 %v499, %v517
  %v522 = vsub.f32 %v500, %v518
  %v523 = vmul.f32 %v519, %v519
  %v524 = vmul.f32 %v520, %v520
  %v525 = vmul.f32 %v521, %v521
  %v526 = vmul.f32 %v522, %v522
  %v527 = vadd.f32 %v523, %v525
  %v528 = vrot.slane %v527, 4
  %v529 = vadd.f32 %v527, %v528
  %v530 = vrot.slane %v529, 2
  %v531 = vadd.f32 %v529, %v530
  %v532 = vrot.slane %v531, 1
  %v533 = vadd.f32 %v531, %v532
  %v534 = vadd.f32 %v524, %v526
  %v535 = vrot.slane %v534, 4
  %v536 = vadd.f32 %v534, %v535
  %v537 = vrot.slane %v536, 2
  %v538 = vadd.f32 %v536, %v537
  %v539 = vrot.slane %v538, 1
  %v540 = vadd.f32 %v538, %v539
  %v541 = vmul.f32 %v533, %v516
  %v542 = vmul.f32 %v540, %v516
  %v543 = vadd.f32 %v541, 1e-05
  %v544 = vadd.f32 %v542, 1e-05
  %v545 = vrsqrt.pop %v543
  %v546 = vrsqrt.pop %v544
  %v547 = vmul.f32 %v519, %v545
  %v548 = vmul.f32 %v520, %v546
  %v549 = vmul.f32 %v521, %v545
  %v550 = vmul.f32 %v522, %v546
  %v552 = vlaneseq
  %v553 = vshrl.u32 %v552, 7
  %v554 = vsub.s32 0, %v553
  %v555 = vrot.slane %v501, %v554
  %v556 = vlaneseq
  %v557 = vshrl.u32 %v556, 7
  %v558 = vsub.s32 2, %v557
  %v559 = vrot.slane %v501, %v558
  %v562 = vlaneseq
  %v563 = vshrl.u32 %v562, 7
  %v564 = vsub.s32 0, %v563
  %v565 = vrot.slane %v555, %v564
  %v566 = vlaneseq
  %v567 = vshrl.u32 %v566, 7
  %v568 = vsub.s32 0, %v567
  %v569 = vrot.slane %v559, %v568
  %v570 = vmul.f32 %v547, %v565
  %v571 = vmul.f32 %v548, %v569
  %v572 = vmul.f32 %v549, %v565
  %v573 = vmul.f32 %v550, %v569
  %v574 = vlaneseq
  %v575 = vshrl.u32 %v574, 7
  %v576 = vsub.s32 1, %v575
  %v577 = vrot.slane %v501, %v576
  %v578 = vlaneseq
  %v579 = vshrl.u32 %v578, 7
  %v580 = vsub.s32 3, %v579
  %v581 = vrot.slane %v501, %v580
  %v584 = vlaneseq
  %v585 = vshrl.u32 %v584, 7
  %v586 = vsub.s32 1, %v585
  %v587 = vrot.slane %v577, %v586
  %v588 = vlaneseq
  %v589 = vshrl.u32 %v588, 7
  %v590 = vsub.s32 1, %v589
  %v591 = vrot.slane %v581, %v590
  %v592 = vadd.f32 %v570, %v587
  %v593 = vadd.f32 %v571, %v591
  %v594 = vadd.f32 %v572, %v587
  %v595 = vadd.f32 %v573, %v591
  %v596 = vmax.f32 %v592, 0.0
  %v597 = vmax.f32 %v593, 0.0
  %v598 = vmax.f32 %v594, 0.0
  %v599 = vmax.f32 %v595, 0.0
  %600 = vst [vmem:[#allocation3] sm:$0xff] 0.0
  %601 = vst [vmem:[#allocation3 + $0x8] sm:$0xff] 0.0
  %602 = vst [vmem:[#allocation3 + $0x10] sm:$0xff] 0.0
  %603 = vst [vmem:[#allocation3 + $0x18] sm:$0xff] 0.0
  %604 = vst [vmem:[#allocation3 + $0x20] sm:$0x3] 0.0
  %605 = vst [vmem:[#allocation3 + $0x28] sm:$0x3] 0.0
  %vm610 = vcmask 1040384
  %v611 = vrot.slane %v596, 7
  %v612 = vrot.slane %v597, 7
  %v613 = vrot.slane %v598, 7
  %v614 = vsel %vm610, %v611, %v613
  %v615 = vrot.slane %v599, 7
  %v616 = vsel %vm610, %v612, %v615
  %623 = vst [vmem:[#allocation3] sm:$0xfe] %v611
  %624 = vst [vmem:[#allocation3 + $0x8] sm:$0xfe] %v612
  %625 = vst [vmem:[#allocation3 + $0x10] sm:$0xff] %v614
  %626 = vst [vmem:[#allocation3 + $0x18] sm:$0xff] %v616
  %627 = vst [vmem:[#allocation3 + $0x20] sm:$0x1] %v613
  %628 = vst [vmem:[#allocation3 + $0x28] sm:$0x1] %v615
  %v629 = vld [vmem:[#allocation3] sm:$0xff]
  %v630 = vld [vmem:[#allocation3 + $0x8] sm:$0xff]
  %v631 = vld [vmem:[#allocation3 + $0x10] sm:$0xff]
  %v632 = vld [vmem:[#allocation3 + $0x18] sm:$0xff]
  %v633 = vsel %vm71, 0.0, %v629
  %v634 = vsel %vm71, 0.0, %v630
  %v635 = vsel %vm72, 0.0, %v631
  %v636 = vsel %vm72, 0.0, %v632
  %v637 = vld [vmem:[#allocation3] sm:$0xfc]
  %v638 = vld [vmem:[#allocation3 + $0x8] sm:$0xfc]
  %v639 = vld [vmem:[#allocation3 + $0x20] sm:$0x3]
  %v640 = vld [vmem:[#allocation3 + $0x28] sm:$0x3]
  %v641 = vsel %vm56, 1, 0
  %v642 = vsel %vm57, 1, 0
  %vm643 = vcmp.eq.s32.totalorder %v641, 1
  %vm644 = vcmp.eq.s32.totalorder %v642, 1
  %vm651 = vcmask 1045504
  %v652 = vrot.slane %v637, 2
  %v653 = vrot.slane %v631, 2
  %v654 = vsel %vm651, %v652, %v653
  %v655 = vrot.slane %v638, 2
  %v656 = vrot.slane %v632, 2
  %v657 = vsel %vm651, %v655, %v656
  %v658 = vrot.slane %v639, 2
  %v659 = vsel %vm651, %v653, %v658
  %v660 = vrot.slane %v640, 2
  %v661 = vsel %vm651, %v656, %v660
  %v666 = vsel %vm643, 0.0, %v654
  %v667 = vsel %vm643, 0.0, %v657
  %v668 = vsel %vm644, 0.0, %v659
  %v669 = vsel %vm644, 0.0, %v661
  %v670 = vld [vmem:[%s3] sm:$0xff]
  %v671 = vld [vmem:[%s3 + $0x8] sm:$0xff]
  %v672 = vld [vmem:[%s3 + $0x10] sm:$0xff]
  %v673 = vld [vmem:[%s3 + $0x18] sm:$0xff]
  %v674 = vld [vmem:[%s3 + $0x20] sm:$0xff]
  %v675 = vld [vmem:[%s3 + $0x28] sm:$0xff]
  %v676 = vld [vmem:[%s3 + $0x30] sm:$0xff]
  %v677 = vld [vmem:[%s3 + $0x38] sm:$0xff]
  %v678 = vld [vmem:[%s3 + $0x40] sm:$0xff]
  %v679 = vld [vmem:[%s3 + $0x48] sm:$0xff]
  %v680 = vld [vmem:[%s3 + $0x50] sm:$0xff]
  %v681 = vld [vmem:[%s3 + $0x58] sm:$0xff]
  %v682 = vld [vmem:[%s3 + $0x60] sm:$0xff]
  %v683 = vld [vmem:[%s3 + $0x68] sm:$0xff]
  %v684 = vld [vmem:[%s3 + $0x70] sm:$0xff]
  %v685 = vld [vmem:[%s3 + $0x78] sm:$0xff]
  %v686 = vld [vmem:[%s3 + $0x80] sm:$0xff]
  %v687 = vld [vmem:[%s3 + $0x88] sm:$0xff]
  %v688 = vld [vmem:[%s3 + $0x90] sm:$0xff]
  %v689 = vld [vmem:[%s3 + $0x98] sm:$0xff]
  %v690 = vld [vmem:[%s3 + $0xa0] sm:$0xff]
  %v691 = vld [vmem:[%s3 + $0xa8] sm:$0xff]
  %v692 = vld [vmem:[%s3 + $0xb0] sm:$0xff]
  %v693 = vld [vmem:[%s3 + $0xb8] sm:$0xff]
  %v694 = vld [vmem:[%s3 + $0xc0] sm:$0xff]
  %v695 = vld [vmem:[%s3 + $0xc8] sm:$0xff]
  %v696 = vld [vmem:[%s3 + $0xd0] sm:$0xff]
  %v697 = vld [vmem:[%s3 + $0xd8] sm:$0xff]
  %v698 = vld [vmem:[%s3 + $0xe0] sm:$0xff]
  %v699 = vld [vmem:[%s3 + $0xe8] sm:$0xff]
  %v700 = vld [vmem:[%s3 + $0xf0] sm:$0xff]
  %v701 = vld [vmem:[%s3 + $0xf8] sm:$0xff]
  %v702 = vpack.c.bf16 %v635, %v633
  %v703 = vpack.c.bf16 %v636, %v634
  %s704 = scalar_lea.vmem %s3, 256
  %v705 = vld [vmem:[%s704] sm:$0xff]
  %v706 = vld [vmem:[%s704 + $0x8] sm:$0xff]
  %v707 = vld [vmem:[%s704 + $0x10] sm:$0xff]
  %v708 = vld [vmem:[%s704 + $0x18] sm:$0xff]
  %v709 = vld [vmem:[%s704 + $0x20] sm:$0xff]
  %v710 = vld [vmem:[%s704 + $0x28] sm:$0xff]
  %v711 = vld [vmem:[%s704 + $0x30] sm:$0xff]
  %v712 = vld [vmem:[%s704 + $0x38] sm:$0xff]
  %v713 = vld [vmem:[%s704 + $0x40] sm:$0xff]
  %v714 = vld [vmem:[%s704 + $0x48] sm:$0xff]
  %v715 = vld [vmem:[%s704 + $0x50] sm:$0xff]
  %v716 = vld [vmem:[%s704 + $0x58] sm:$0xff]
  %v717 = vld [vmem:[%s704 + $0x60] sm:$0xff]
  %v718 = vld [vmem:[%s704 + $0x68] sm:$0xff]
  %v719 = vld [vmem:[%s704 + $0x70] sm:$0xff]
  %v720 = vld [vmem:[%s704 + $0x78] sm:$0xff]
  %v721 = vld [vmem:[%s704 + $0x80] sm:$0xff]
  %v722 = vld [vmem:[%s704 + $0x88] sm:$0xff]
  %v723 = vld [vmem:[%s704 + $0x90] sm:$0xff]
  %v724 = vld [vmem:[%s704 + $0x98] sm:$0xff]
  %v725 = vld [vmem:[%s704 + $0xa0] sm:$0xff]
  %v726 = vld [vmem:[%s704 + $0xa8] sm:$0xff]
  %v727 = vld [vmem:[%s704 + $0xb0] sm:$0xff]
  %v728 = vld [vmem:[%s704 + $0xb8] sm:$0xff]
  %v729 = vld [vmem:[%s704 + $0xc0] sm:$0xff]
  %v730 = vld [vmem:[%s704 + $0xc8] sm:$0xff]
  %v731 = vld [vmem:[%s704 + $0xd0] sm:$0xff]
  %v732 = vld [vmem:[%s704 + $0xd8] sm:$0xff]
  %v733 = vld [vmem:[%s704 + $0xe0] sm:$0xff]
  %v734 = vld [vmem:[%s704 + $0xe8] sm:$0xff]
  %v735 = vld [vmem:[%s704 + $0xf0] sm:$0xff]
  %v736 = vld [vmem:[%s704 + $0xf8] sm:$0xff]
  %v737 = vpack.c.bf16 %v598, %v596
  %v738 = vpack.c.bf16 %v599, %v597
  %v771 = vunpack.c.l.b16 %v705
  %v772 = vunpack.c.h.b16 %v705
  %v773 = vunpack.c.l.b16 %v706
  %v774 = vunpack.c.h.b16 %v706
  %v775 = vunpack.c.l.b16 %v707
  %v776 = vunpack.c.h.b16 %v707
  %v777 = vunpack.c.l.b16 %v708
  %v778 = vunpack.c.h.b16 %v708
  %v779 = vunpack.c.l.b16 %v709
  %v780 = vunpack.c.h.b16 %v709
  %v781 = vunpack.c.l.b16 %v710
  %v782 = vunpack.c.h.b16 %v710
  %v783 = vunpack.c.l.b16 %v711
  %v784 = vunpack.c.h.b16 %v711
  %v785 = vunpack.c.l.b16 %v712
  %v786 = vunpack.c.h.b16 %v712
  %v787 = vunpack.c.l.b16 %v713
  %v788 = vunpack.c.h.b16 %v713
  %v789 = vunpack.c.l.b16 %v714
  %v790 = vunpack.c.h.b16 %v714
  %v791 = vunpack.c.l.b16 %v715
  %v792 = vunpack.c.h.b16 %v715
  %v793 = vunpack.c.l.b16 %v716
  %v794 = vunpack.c.h.b16 %v716
  %v795 = vunpack.c.l.b16 %v717
  %v796 = vunpack.c.h.b16 %v717
  %v797 = vunpack.c.l.b16 %v718
  %v798 = vunpack.c.h.b16 %v718
  %v799 = vunpack.c.l.b16 %v719
  %v800 = vunpack.c.h.b16 %v719
  %v801 = vunpack.c.l.b16 %v720
  %v802 = vunpack.c.h.b16 %v720
  %v803 = vunpack.c.l.b16 %v721
  %v804 = vunpack.c.h.b16 %v721
  %v805 = vunpack.c.l.b16 %v722
  %v806 = vunpack.c.h.b16 %v722
  %v807 = vunpack.c.l.b16 %v723
  %v808 = vunpack.c.h.b16 %v723
  %v809 = vunpack.c.l.b16 %v724
  %v810 = vunpack.c.h.b16 %v724
  %v811 = vunpack.c.l.b16 %v725
  %v812 = vunpack.c.h.b16 %v725
  %v813 = vunpack.c.l.b16 %v726
  %v814 = vunpack.c.h.b16 %v726
  %v815 = vunpack.c.l.b16 %v727
  %v816 = vunpack.c.h.b16 %v727
  %v817 = vunpack.c.l.b16 %v728
  %v818 = vunpack.c.h.b16 %v728
  %v819 = vunpack.c.l.b16 %v729
  %v820 = vunpack.c.h.b16 %v729
  %v821 = vunpack.c.l.b16 %v730
  %v822 = vunpack.c.h.b16 %v730
  %v823 = vunpack.c.l.b16 %v731
  %v824 = vunpack.c.h.b16 %v731
  %v825 = vunpack.c.l.b16 %v732
  %v826 = vunpack.c.h.b16 %v732
  %v827 = vunpack.c.l.b16 %v733
  %v828 = vunpack.c.h.b16 %v733
  %v829 = vunpack.c.l.b16 %v734
  %v830 = vunpack.c.h.b16 %v734
  %v831 = vunpack.c.l.b16 %v735
  %v832 = vunpack.c.h.b16 %v735
  %v833 = vunpack.c.l.b16 %v736
  %v834 = vunpack.c.h.b16 %v736
  %v835 = vpack.c.b16 %v773, %v771
  %v836 = vpack.c.b16 %v774, %v772
  %v837 = vpack.c.b16 %v777, %v775
  %v838 = vpack.c.b16 %v778, %v776
  %v839 = vpack.c.b16 %v781, %v779
  %v840 = vpack.c.b16 %v782, %v780
  %v841 = vpack.c.b16 %v785, %v783
  %v842 = vpack.c.b16 %v786, %v784
  %v843 = vpack.c.b16 %v789, %v787
  %v844 = vpack.c.b16 %v790, %v788
  %v845 = vpack.c.b16 %v793, %v791
  %v846 = vpack.c.b16 %v794, %v792
  %v847 = vpack.c.b16 %v797, %v795
  %v848 = vpack.c.b16 %v798, %v796
  %v849 = vpack.c.b16 %v801, %v799
  %v850 = vpack.c.b16 %v802, %v800
  %v851 = vpack.c.b16 %v805, %v803
  %v852 = vpack.c.b16 %v806, %v804
  %v853 = vpack.c.b16 %v809, %v807
  %v854 = vpack.c.b16 %v810, %v808
  %v855 = vpack.c.b16 %v813, %v811
  %v856 = vpack.c.b16 %v814, %v812
  %v857 = vpack.c.b16 %v817, %v815
  %v858 = vpack.c.b16 %v818, %v816
  %v859 = vpack.c.b16 %v821, %v819
  %v860 = vpack.c.b16 %v822, %v820
  %v861 = vpack.c.b16 %v825, %v823
  %v862 = vpack.c.b16 %v826, %v824
  %v863 = vpack.c.b16 %v829, %v827
  %v864 = vpack.c.b16 %v830, %v828
  %v865 = vpack.c.b16 %v833, %v831
  %v866 = vpack.c.b16 %v834, %v832
  %899 = vmatprep.subr.bf16.mxu0 %v836
  %900 = vmatpush1.bf16.msra.mxu0 %v835
  %901 = vmatprep.subr.bf16.mxu0 %v838
  %902 = vmatpush1.bf16.msra.mxu0 %v837
  %903 = vmatprep.subr.bf16.mxu0 %v840
  %904 = vmatpush1.bf16.msra.mxu0 %v839
  %905 = vmatprep.subr.bf16.mxu0 %v842
  %906 = vmatpush1.bf16.msra.mxu0 %v841
  %907 = vmatprep.subr.bf16.mxu0 %v844
  %908 = vmatpush1.bf16.msra.mxu0 %v843
  %909 = vmatprep.subr.bf16.mxu0 %v846
  %910 = vmatpush1.bf16.msra.mxu0 %v845
  %911 = vmatprep.subr.bf16.mxu0 %v848
  %912 = vmatpush1.bf16.msra.mxu0 %v847
  %913 = vmatprep.subr.bf16.mxu0 %v850
  %914 = vmatpush1.bf16.msra.mxu0 %v849
  %915 = vmatprep.subr.bf16.mxu0 %v852
  %916 = vmatpush1.bf16.msra.mxu0 %v851
  %917 = vmatprep.subr.bf16.mxu0 %v854
  %918 = vmatpush1.bf16.msra.mxu0 %v853
  %919 = vmatprep.subr.bf16.mxu0 %v856
  %920 = vmatpush1.bf16.msra.mxu0 %v855
  %921 = vmatprep.subr.bf16.mxu0 %v858
  %922 = vmatpush1.bf16.msra.mxu0 %v857
  %923 = vmatprep.subr.bf16.mxu0 %v860
  %924 = vmatpush1.bf16.msra.mxu0 %v859
  %925 = vmatprep.subr.bf16.mxu0 %v862
  %926 = vmatpush1.bf16.msra.mxu0 %v861
  %927 = vmatprep.subr.bf16.mxu0 %v864
  %928 = vmatpush1.bf16.msra.mxu0 %v863
  %929 = vmatprep.subr.bf16.mxu0 %v866
  %930 = vmatpush1.bf16.msra.mxu0 %v865
  %931 = vmatprep.mubr.bf16.mxu0 %v738
  %932 = vmatmul.mubr.bf16.gmra.mrb[0].mxu0 %v737
  %v933 = vpop.f32.mrb[0].mxu0
  %v934 = vadd.f32 0.0, %v933
  %v935 = vpop.f32.mrb[0].mxu0
  %v936 = vadd.f32 0.0, %v935
  %v937 = vpop.f32.mrb[0].mxu0
  %v938 = vadd.f32 0.0, %v937
  %v939 = vpop.f32.mrb[0].mxu0
  %v940 = vadd.f32 0.0, %v939
  %941 = vdwg.mxu0
  %v974 = vunpack.c.l.b16 %v670
  %v975 = vunpack.c.h.b16 %v670
  %v976 = vunpack.c.l.b16 %v671
  %v977 = vunpack.c.h.b16 %v671
  %v978 = vunpack.c.l.b16 %v672
  %v979 = vunpack.c.h.b16 %v672
  %v980 = vunpack.c.l.b16 %v673
  %v981 = vunpack.c.h.b16 %v673
  %v982 = vunpack.c.l.b16 %v674
  %v983 = vunpack.c.h.b16 %v674
  %v984 = vunpack.c.l.b16 %v675
  %v985 = vunpack.c.h.b16 %v675
  %v986 = vunpack.c.l.b16 %v676
  %v987 = vunpack.c.h.b16 %v676
  %v988 = vunpack.c.l.b16 %v677
  %v989 = vunpack.c.h.b16 %v677
  %v990 = vunpack.c.l.b16 %v678
  %v991 = vunpack.c.h.b16 %v678
  %v992 = vunpack.c.l.b16 %v679
  %v993 = vunpack.c.h.b16 %v679
  %v994 = vunpack.c.l.b16 %v680
  %v995 = vunpack.c.h.b16 %v680
  %v996 = vunpack.c.l.b16 %v681
  %v997 = vunpack.c.h.b16 %v681
  %v998 = vunpack.c.l.b16 %v682
  %v999 = vunpack.c.h.b16 %v682
  %v1000 = vunpack.c.l.b16 %v683
  %v1001 = vunpack.c.h.b16 %v683
  %v1002 = vunpack.c.l.b16 %v684
  %v1003 = vunpack.c.h.b16 %v684
  %v1004 = vunpack.c.l.b16 %v685
  %v1005 = vunpack.c.h.b16 %v685
  %v1006 = vunpack.c.l.b16 %v686
  %v1007 = vunpack.c.h.b16 %v686
  %v1008 = vunpack.c.l.b16 %v687
  %v1009 = vunpack.c.h.b16 %v687
  %v1010 = vunpack.c.l.b16 %v688
  %v1011 = vunpack.c.h.b16 %v688
  %v1012 = vunpack.c.l.b16 %v689
  %v1013 = vunpack.c.h.b16 %v689
  %v1014 = vunpack.c.l.b16 %v690
  %v1015 = vunpack.c.h.b16 %v690
  %v1016 = vunpack.c.l.b16 %v691
  %v1017 = vunpack.c.h.b16 %v691
  %v1018 = vunpack.c.l.b16 %v692
  %v1019 = vunpack.c.h.b16 %v692
  %v1020 = vunpack.c.l.b16 %v693
  %v1021 = vunpack.c.h.b16 %v693
  %v1022 = vunpack.c.l.b16 %v694
  %v1023 = vunpack.c.h.b16 %v694
  %v1024 = vunpack.c.l.b16 %v695
  %v1025 = vunpack.c.h.b16 %v695
  %v1026 = vunpack.c.l.b16 %v696
  %v1027 = vunpack.c.h.b16 %v696
  %v1028 = vunpack.c.l.b16 %v697
  %v1029 = vunpack.c.h.b16 %v697
  %v1030 = vunpack.c.l.b16 %v698
  %v1031 = vunpack.c.h.b16 %v698
  %v1032 = vunpack.c.l.b16 %v699
  %v1033 = vunpack.c.h.b16 %v699
  %v1034 = vunpack.c.l.b16 %v700
  %v1035 = vunpack.c.h.b16 %v700
  %v1036 = vunpack.c.l.b16 %v701
  %v1037 = vunpack.c.h.b16 %v701
  %v1038 = vpack.c.b16 %v976, %v974
  %v1039 = vpack.c.b16 %v977, %v975
  %v1040 = vpack.c.b16 %v980, %v978
  %v1041 = vpack.c.b16 %v981, %v979
  %v1042 = vpack.c.b16 %v984, %v982
  %v1043 = vpack.c.b16 %v985, %v983
  %v1044 = vpack.c.b16 %v988, %v986
  %v1045 = vpack.c.b16 %v989, %v987
  %v1046 = vpack.c.b16 %v992, %v990
  %v1047 = vpack.c.b16 %v993, %v991
  %v1048 = vpack.c.b16 %v996, %v994
  %v1049 = vpack.c.b16 %v997, %v995
  %v1050 = vpack.c.b16 %v1000, %v998
  %v1051 = vpack.c.b16 %v1001, %v999
  %v1052 = vpack.c.b16 %v1004, %v1002
  %v1053 = vpack.c.b16 %v1005, %v1003
  %v1054 = vpack.c.b16 %v1008, %v1006
  %v1055 = vpack.c.b16 %v1009, %v1007
  %v1056 = vpack.c.b16 %v1012, %v1010
  %v1057 = vpack.c.b16 %v1013, %v1011
  %v1058 = vpack.c.b16 %v1016, %v1014
  %v1059 = vpack.c.b16 %v1017, %v1015
  %v1060 = vpack.c.b16 %v1020, %v1018
  %v1061 = vpack.c.b16 %v1021, %v1019
  %v1062 = vpack.c.b16 %v1024, %v1022
  %v1063 = vpack.c.b16 %v1025, %v1023
  %v1064 = vpack.c.b16 %v1028, %v1026
  %v1065 = vpack.c.b16 %v1029, %v1027
  %v1066 = vpack.c.b16 %v1032, %v1030
  %v1067 = vpack.c.b16 %v1033, %v1031
  %v1068 = vpack.c.b16 %v1036, %v1034
  %v1069 = vpack.c.b16 %v1037, %v1035
  %1102 = vmatprep.subr.bf16.mxu0 %v1039
  %1103 = vmatpush1.bf16.msra.mxu0 %v1038
  %1104 = vmatprep.subr.bf16.mxu0 %v1041
  %1105 = vmatpush1.bf16.msra.mxu0 %v1040
  %1106 = vmatprep.subr.bf16.mxu0 %v1043
  %1107 = vmatpush1.bf16.msra.mxu0 %v1042
  %1108 = vmatprep.subr.bf16.mxu0 %v1045
  %1109 = vmatpush1.bf16.msra.mxu0 %v1044
  %1110 = vmatprep.subr.bf16.mxu0 %v1047
  %1111 = vmatpush1.bf16.msra.mxu0 %v1046
  %1112 = vmatprep.subr.bf16.mxu0 %v1049
  %1113 = vmatpush1.bf16.msra.mxu0 %v1048
  %1114 = vmatprep.subr.bf16.mxu0 %v1051
  %1115 = vmatpush1.bf16.msra.mxu0 %v1050
  %1116 = vmatprep.subr.bf16.mxu0 %v1053
  %1117 = vmatpush1.bf16.msra.mxu0 %v1052
  %1118 = vmatprep.subr.bf16.mxu0 %v1055
  %1119 = vmatpush1.bf16.msra.mxu0 %v1054
  %1120 = vmatprep.subr.bf16.mxu0 %v1057
  %1121 = vmatpush1.bf16.msra.mxu0 %v1056
  %1122 = vmatprep.subr.bf16.mxu0 %v1059
  %1123 = vmatpush1.bf16.msra.mxu0 %v1058
  %1124 = vmatprep.subr.bf16.mxu0 %v1061
  %1125 = vmatpush1.bf16.msra.mxu0 %v1060
  %1126 = vmatprep.subr.bf16.mxu0 %v1063
  %1127 = vmatpush1.bf16.msra.mxu0 %v1062
  %1128 = vmatprep.subr.bf16.mxu0 %v1065
  %1129 = vmatpush1.bf16.msra.mxu0 %v1064
  %1130 = vmatprep.subr.bf16.mxu0 %v1067
  %1131 = vmatpush1.bf16.msra.mxu0 %v1066
  %1132 = vmatprep.subr.bf16.mxu0 %v1069
  %1133 = vmatpush1.bf16.msra.mxu0 %v1068
  %1134 = vmatprep.mubr.bf16.mxu0 %v703
  %1135 = vmatmul.mubr.bf16.gmra.mrb[0].mxu0 %v702
  %v1136 = vpop.f32.mrb[0].mxu0
  %v1137 = vadd.f32 %v934, %v1136
  %v1138 = vpop.f32.mrb[0].mxu0
  %v1139 = vadd.f32 %v936, %v1138
  %v1140 = vpop.f32.mrb[0].mxu0
  %v1141 = vadd.f32 %v938, %v1140
  %v1142 = vpop.f32.mrb[0].mxu0
  %v1143 = vadd.f32 %v940, %v1142
  %1144 = vdwg.mxu0
  %s1145 = scalar_lea.vmem %s3, 512
  %v1146 = vld [vmem:[%s1145] sm:$0xff]
  %v1147 = vld [vmem:[%s1145 + $0x8] sm:$0xff]
  %v1148 = vld [vmem:[%s1145 + $0x10] sm:$0xff]
  %v1149 = vld [vmem:[%s1145 + $0x18] sm:$0xff]
  %v1150 = vld [vmem:[%s1145 + $0x20] sm:$0xff]
  %v1151 = vld [vmem:[%s1145 + $0x28] sm:$0xff]
  %v1152 = vld [vmem:[%s1145 + $0x30] sm:$0xff]
  %v1153 = vld [vmem:[%s1145 + $0x38] sm:$0xff]
  %v1154 = vld [vmem:[%s1145 + $0x40] sm:$0xff]
  %v1155 = vld [vmem:[%s1145 + $0x48] sm:$0xff]
  %v1156 = vld [vmem:[%s1145 + $0x50] sm:$0xff]
  %v1157 = vld [vmem:[%s1145 + $0x58] sm:$0xff]
  %v1158 = vld [vmem:[%s1145 + $0x60] sm:$0xff]
  %v1159 = vld [vmem:[%s1145 + $0x68] sm:$0xff]
  %v1160 = vld [vmem:[%s1145 + $0x70] sm:$0xff]
  %v1161 = vld [vmem:[%s1145 + $0x78] sm:$0xff]
  %v1162 = vld [vmem:[%s1145 + $0x80] sm:$0xff]
  %v1163 = vld [vmem:[%s1145 + $0x88] sm:$0xff]
  %v1164 = vld [vmem:[%s1145 + $0x90] sm:$0xff]
  %v1165 = vld [vmem:[%s1145 + $0x98] sm:$0xff]
  %v1166 = vld [vmem:[%s1145 + $0xa0] sm:$0xff]
  %v1167 = vld [vmem:[%s1145 + $0xa8] sm:$0xff]
  %v1168 = vld [vmem:[%s1145 + $0xb0] sm:$0xff]
  %v1169 = vld [vmem:[%s1145 + $0xb8] sm:$0xff]
  %v1170 = vld [vmem:[%s1145 + $0xc0] sm:$0xff]
  %v1171 = vld [vmem:[%s1145 + $0xc8] sm:$0xff]
  %v1172 = vld [vmem:[%s1145 + $0xd0] sm:$0xff]
  %v1173 = vld [vmem:[%s1145 + $0xd8] sm:$0xff]
  %v1174 = vld [vmem:[%s1145 + $0xe0] sm:$0xff]
  %v1175 = vld [vmem:[%s1145 + $0xe8] sm:$0xff]
  %v1176 = vld [vmem:[%s1145 + $0xf0] sm:$0xff]
  %v1177 = vld [vmem:[%s1145 + $0xf8] sm:$0xff]
  %v1178 = vpack.c.bf16 %v668, %v666
  %v1179 = vpack.c.bf16 %v669, %v667
  %v1212 = vunpack.c.l.b16 %v1146
  %v1213 = vunpack.c.h.b16 %v1146
  %v1214 = vunpack.c.l.b16 %v1147
  %v1215 = vunpack.c.h.b16 %v1147
  %v1216 = vunpack.c.l.b16 %v1148
  %v1217 = vunpack.c.h.b16 %v1148
  %v1218 = vunpack.c.l.b16 %v1149
  %v1219 = vunpack.c.h.b16 %v1149
  %v1220 = vunpack.c.l.b16 %v1150
  %v1221 = vunpack.c.h.b16 %v1150
  %v1222 = vunpack.c.l.b16 %v1151
  %v1223 = vunpack.c.h.b16 %v1151
  %v1224 = vunpack.c.l.b16 %v1152
  %v1225 = vunpack.c.h.b16 %v1152
  %v1226 = vunpack.c.l.b16 %v1153
  %v1227 = vunpack.c.h.b16 %v1153
  %v1228 = vunpack.c.l.b16 %v1154
  %v1229 = vunpack.c.h.b16 %v1154
  %v1230 = vunpack.c.l.b16 %v1155
  %v1231 = vunpack.c.h.b16 %v1155
  %v1232 = vunpack.c.l.b16 %v1156
  %v1233 = vunpack.c.h.b16 %v1156
  %v1234 = vunpack.c.l.b16 %v1157
  %v1235 = vunpack.c.h.b16 %v1157
  %v1236 = vunpack.c.l.b16 %v1158
  %v1237 = vunpack.c.h.b16 %v1158
  %v1238 = vunpack.c.l.b16 %v1159
  %v1239 = vunpack.c.h.b16 %v1159
  %v1240 = vunpack.c.l.b16 %v1160
  %v1241 = vunpack.c.h.b16 %v1160
  %v1242 = vunpack.c.l.b16 %v1161
  %v1243 = vunpack.c.h.b16 %v1161
  %v1244 = vunpack.c.l.b16 %v1162
  %v1245 = vunpack.c.h.b16 %v1162
  %v1246 = vunpack.c.l.b16 %v1163
  %v1247 = vunpack.c.h.b16 %v1163
  %v1248 = vunpack.c.l.b16 %v1164
  %v1249 = vunpack.c.h.b16 %v1164
  %v1250 = vunpack.c.l.b16 %v1165
  %v1251 = vunpack.c.h.b16 %v1165
  %v1252 = vunpack.c.l.b16 %v1166
  %v1253 = vunpack.c.h.b16 %v1166
  %v1254 = vunpack.c.l.b16 %v1167
  %v1255 = vunpack.c.h.b16 %v1167
  %v1256 = vunpack.c.l.b16 %v1168
  %v1257 = vunpack.c.h.b16 %v1168
  %v1258 = vunpack.c.l.b16 %v1169
  %v1259 = vunpack.c.h.b16 %v1169
  %v1260 = vunpack.c.l.b16 %v1170
  %v1261 = vunpack.c.h.b16 %v1170
  %v1262 = vunpack.c.l.b16 %v1171
  %v1263 = vunpack.c.h.b16 %v1171
  %v1264 = vunpack.c.l.b16 %v1172
  %v1265 = vunpack.c.h.b16 %v1172
  %v1266 = vunpack.c.l.b16 %v1173
  %v1267 = vunpack.c.h.b16 %v1173
  %v1268 = vunpack.c.l.b16 %v1174
  %v1269 = vunpack.c.h.b16 %v1174
  %v1270 = vunpack.c.l.b16 %v1175
  %v1271 = vunpack.c.h.b16 %v1175
  %v1272 = vunpack.c.l.b16 %v1176
  %v1273 = vunpack.c.h.b16 %v1176
  %v1274 = vunpack.c.l.b16 %v1177
  %v1275 = vunpack.c.h.b16 %v1177
  %v1276 = vpack.c.b16 %v1214, %v1212
  %v1277 = vpack.c.b16 %v1215, %v1213
  %v1278 = vpack.c.b16 %v1218, %v1216
  %v1279 = vpack.c.b16 %v1219, %v1217
  %v1280 = vpack.c.b16 %v1222, %v1220
  %v1281 = vpack.c.b16 %v1223, %v1221
  %v1282 = vpack.c.b16 %v1226, %v1224
  %v1283 = vpack.c.b16 %v1227, %v1225
  %v1284 = vpack.c.b16 %v1230, %v1228
  %v1285 = vpack.c.b16 %v1231, %v1229
  %v1286 = vpack.c.b16 %v1234, %v1232
  %v1287 = vpack.c.b16 %v1235, %v1233
  %v1288 = vpack.c.b16 %v1238, %v1236
  %v1289 = vpack.c.b16 %v1239, %v1237
  %v1290 = vpack.c.b16 %v1242, %v1240
  %v1291 = vpack.c.b16 %v1243, %v1241
  %v1292 = vpack.c.b16 %v1246, %v1244
  %v1293 = vpack.c.b16 %v1247, %v1245
  %v1294 = vpack.c.b16 %v1250, %v1248
  %v1295 = vpack.c.b16 %v1251, %v1249
  %v1296 = vpack.c.b16 %v1254, %v1252
  %v1297 = vpack.c.b16 %v1255, %v1253
  %v1298 = vpack.c.b16 %v1258, %v1256
  %v1299 = vpack.c.b16 %v1259, %v1257
  %v1300 = vpack.c.b16 %v1262, %v1260
  %v1301 = vpack.c.b16 %v1263, %v1261
  %v1302 = vpack.c.b16 %v1266, %v1264
  %v1303 = vpack.c.b16 %v1267, %v1265
  %v1304 = vpack.c.b16 %v1270, %v1268
  %v1305 = vpack.c.b16 %v1271, %v1269
  %v1306 = vpack.c.b16 %v1274, %v1272
  %v1307 = vpack.c.b16 %v1275, %v1273
  %1340 = vmatprep.subr.bf16.mxu0 %v1277
  %1341 = vmatpush1.bf16.msra.mxu0 %v1276
  %1342 = vmatprep.subr.bf16.mxu0 %v1279
  %1343 = vmatpush1.bf16.msra.mxu0 %v1278
  %1344 = vmatprep.subr.bf16.mxu0 %v1281
  %1345 = vmatpush1.bf16.msra.mxu0 %v1280
  %1346 = vmatprep.subr.bf16.mxu0 %v1283
  %1347 = vmatpush1.bf16.msra.mxu0 %v1282
  %1348 = vmatprep.subr.bf16.mxu0 %v1285
  %1349 = vmatpush1.bf16.msra.mxu0 %v1284
  %1350 = vmatprep.subr.bf16.mxu0 %v1287
  %1351 = vmatpush1.bf16.msra.mxu0 %v1286
  %1352 = vmatprep.subr.bf16.mxu0 %v1289
  %1353 = vmatpush1.bf16.msra.mxu0 %v1288
  %1354 = vmatprep.subr.bf16.mxu0 %v1291
  %1355 = vmatpush1.bf16.msra.mxu0 %v1290
  %1356 = vmatprep.subr.bf16.mxu0 %v1293
  %1357 = vmatpush1.bf16.msra.mxu0 %v1292
  %1358 = vmatprep.subr.bf16.mxu0 %v1295
  %1359 = vmatpush1.bf16.msra.mxu0 %v1294
  %1360 = vmatprep.subr.bf16.mxu0 %v1297
  %1361 = vmatpush1.bf16.msra.mxu0 %v1296
  %1362 = vmatprep.subr.bf16.mxu0 %v1299
  %1363 = vmatpush1.bf16.msra.mxu0 %v1298
  %1364 = vmatprep.subr.bf16.mxu0 %v1301
  %1365 = vmatpush1.bf16.msra.mxu0 %v1300
  %1366 = vmatprep.subr.bf16.mxu0 %v1303
  %1367 = vmatpush1.bf16.msra.mxu0 %v1302
  %1368 = vmatprep.subr.bf16.mxu0 %v1305
  %1369 = vmatpush1.bf16.msra.mxu0 %v1304
  %1370 = vmatprep.subr.bf16.mxu0 %v1307
  %1371 = vmatpush1.bf16.msra.mxu0 %v1306
  %1372 = vmatprep.mubr.bf16.mxu0 %v1179
  %1373 = vmatmul.mubr.bf16.gmra.mrb[0].mxu0 %v1178
  %v1374 = vpop.f32.mrb[0].mxu0
  %v1375 = vadd.f32 0.0, %v1374
  %v1376 = vpop.f32.mrb[0].mxu0
  %v1377 = vadd.f32 0.0, %v1376
  %v1378 = vpop.f32.mrb[0].mxu0
  %v1379 = vadd.f32 0.0, %v1378
  %v1380 = vpop.f32.mrb[0].mxu0
  %v1381 = vadd.f32 0.0, %v1380
  %1382 = vdwg.mxu0
  %v1383 = vadd.f32 %v1137, %v1375
  %v1384 = vadd.f32 %v1139, %v1377
  %v1385 = vadd.f32 %v1141, %v1379
  %v1386 = vadd.f32 %v1143, %v1381
  %v1387 = vld [vmem:[%s4] sm:$0xf]
  %v1388 = vadd.f32 %v1383, %v1385
  %v1389 = vrot.slane %v1388, 4
  %v1390 = vadd.f32 %v1388, %v1389
  %v1391 = vrot.slane %v1390, 2
  %v1392 = vadd.f32 %v1390, %v1391
  %v1393 = vrot.slane %v1392, 1
  %v1394 = vadd.f32 %v1392, %v1393
  %v1395 = vadd.f32 %v1384, %v1386
  %v1396 = vrot.slane %v1395, 4
  %v1397 = vadd.f32 %v1395, %v1396
  %v1398 = vrot.slane %v1397, 2
  %v1399 = vadd.f32 %v1397, %v1398
  %v1400 = vrot.slane %v1399, 1
  %v1401 = vadd.f32 %v1399, %v1400
  %v1402 = vmul.f32 %v1394, %v516
  %v1403 = vmul.f32 %v1401, %v516
  %v1404 = vsub.f32 %v1383, %v1402
  %v1405 = vsub.f32 %v1384, %v1403
  %v1406 = vsub.f32 %v1385, %v1402
  %v1407 = vsub.f32 %v1386, %v1403
  %v1408 = vmul.f32 %v1404, %v1404
  %v1409 = vmul.f32 %v1405, %v1405
  %v1410 = vmul.f32 %v1406, %v1406
  %v1411 = vmul.f32 %v1407, %v1407
  %v1412 = vadd.f32 %v1408, %v1410
  %v1413 = vrot.slane %v1412, 4
  %v1414 = vadd.f32 %v1412, %v1413
  %v1415 = vrot.slane %v1414, 2
  %v1416 = vadd.f32 %v1414, %v1415
  %v1417 = vrot.slane %v1416, 1
  %v1418 = vadd.f32 %v1416, %v1417
  %v1419 = vadd.f32 %v1409, %v1411
  %v1420 = vrot.slane %v1419, 4
  %v1421 = vadd.f32 %v1419, %v1420
  %v1422 = vrot.slane %v1421, 2
  %v1423 = vadd.f32 %v1421, %v1422
  %v1424 = vrot.slane %v1423, 1
  %v1425 = vadd.f32 %v1423, %v1424
  %v1426 = vmul.f32 %v1418, %v516
  %v1427 = vmul.f32 %v1425, %v516
  %v1428 = vadd.f32 %v1426, 1e-05
  %v1429 = vadd.f32 %v1427, 1e-05
  %v1430 = vrsqrt.pop %v1428
  %v1431 = vrsqrt.pop %v1429
  %v1432 = vmul.f32 %v1404, %v1430
  %v1433 = vmul.f32 %v1405, %v1431
  %v1434 = vmul.f32 %v1406, %v1430
  %v1435 = vmul.f32 %v1407, %v1431
  %v1437 = vlaneseq
  %v1438 = vshrl.u32 %v1437, 7
  %v1439 = vsub.s32 0, %v1438
  %v1440 = vrot.slane %v1387, %v1439
  %v1441 = vlaneseq
  %v1442 = vshrl.u32 %v1441, 7
  %v1443 = vsub.s32 2, %v1442
  %v1444 = vrot.slane %v1387, %v1443
  %v1447 = vlaneseq
  %v1448 = vshrl.u32 %v1447, 7
  %v1449 = vsub.s32 0, %v1448
  %v1450 = vrot.slane %v1440, %v1449
  %v1451 = vlaneseq
  %v1452 = vshrl.u32 %v1451, 7
  %v1453 = vsub.s32 0, %v1452
  %v1454 = vrot.slane %v1444, %v1453
  %v1455 = vmul.f32 %v1432, %v1450
  %v1456 = vmul.f32 %v1433, %v1454
  %v1457 = vmul.f32 %v1434, %v1450
  %v1458 = vmul.f32 %v1435, %v1454
  %v1459 = vlaneseq
  %v1460 = vshrl.u32 %v1459, 7
  %v1461 = vsub.s32 1, %v1460
  %v1462 = vrot.slane %v1387, %v1461
  %v1463 = vlaneseq
  %v1464 = vshrl.u32 %v1463, 7
  %v1465 = vsub.s32 3, %v1464
  %v1466 = vrot.slane %v1387, %v1465
  %v1469 = vlaneseq
  %v1470 = vshrl.u32 %v1469, 7
  %v1471 = vsub.s32 1, %v1470
  %v1472 = vrot.slane %v1462, %v1471
  %v1473 = vlaneseq
  %v1474 = vshrl.u32 %v1473, 7
  %v1475 = vsub.s32 1, %v1474
  %v1476 = vrot.slane %v1466, %v1475
  %v1477 = vadd.f32 %v1455, %v1472
  %v1478 = vadd.f32 %v1456, %v1476
  %v1479 = vadd.f32 %v1457, %v1472
  %v1480 = vadd.f32 %v1458, %v1476
  %v1481 = vld [vmem:[%s5] sm:$0xff]
  %v1482 = vld [vmem:[%s5 + $0x8] sm:$0xff]
  %v1483 = vld [vmem:[%s5 + $0x10] sm:$0xff]
  %v1484 = vld [vmem:[%s5 + $0x18] sm:$0xff]
  %v1485 = vld [vmem:[%s5 + $0x20] sm:$0xff]
  %v1486 = vld [vmem:[%s5 + $0x28] sm:$0xff]
  %v1487 = vld [vmem:[%s5 + $0x30] sm:$0xff]
  %v1488 = vld [vmem:[%s5 + $0x38] sm:$0xff]
  %v1489 = vld [vmem:[%s5 + $0x40] sm:$0xff]
  %v1490 = vld [vmem:[%s5 + $0x48] sm:$0xff]
  %v1491 = vld [vmem:[%s5 + $0x50] sm:$0xff]
  %v1492 = vld [vmem:[%s5 + $0x58] sm:$0xff]
  %v1493 = vld [vmem:[%s5 + $0x60] sm:$0xff]
  %v1494 = vld [vmem:[%s5 + $0x68] sm:$0xff]
  %v1495 = vld [vmem:[%s5 + $0x70] sm:$0xff]
  %v1496 = vld [vmem:[%s5 + $0x78] sm:$0xff]
  %v1513 = vunpack.c.l.b16 %v1481
  %v1514 = vunpack.c.h.b16 %v1481
  %v1515 = vunpack.c.l.b16 %v1482
  %v1516 = vunpack.c.h.b16 %v1482
  %v1517 = vunpack.c.l.b16 %v1483
  %v1518 = vunpack.c.h.b16 %v1483
  %v1519 = vunpack.c.l.b16 %v1484
  %v1520 = vunpack.c.h.b16 %v1484
  %v1521 = vunpack.c.l.b16 %v1485
  %v1522 = vunpack.c.h.b16 %v1485
  %v1523 = vunpack.c.l.b16 %v1486
  %v1524 = vunpack.c.h.b16 %v1486
  %v1525 = vunpack.c.l.b16 %v1487
  %v1526 = vunpack.c.h.b16 %v1487
  %v1527 = vunpack.c.l.b16 %v1488
  %v1528 = vunpack.c.h.b16 %v1488
  %v1529 = vunpack.c.l.b16 %v1489
  %v1530 = vunpack.c.h.b16 %v1489
  %v1531 = vunpack.c.l.b16 %v1490
  %v1532 = vunpack.c.h.b16 %v1490
  %v1533 = vunpack.c.l.b16 %v1491
  %v1534 = vunpack.c.h.b16 %v1491
  %v1535 = vunpack.c.l.b16 %v1492
  %v1536 = vunpack.c.h.b16 %v1492
  %v1537 = vunpack.c.l.b16 %v1493
  %v1538 = vunpack.c.h.b16 %v1493
  %v1539 = vunpack.c.l.b16 %v1494
  %v1540 = vunpack.c.h.b16 %v1494
  %v1541 = vunpack.c.l.b16 %v1495
  %v1542 = vunpack.c.h.b16 %v1495
  %v1543 = vunpack.c.l.b16 %v1496
  %v1544 = vunpack.c.h.b16 %v1496
  %v1545 = vpack.c.b16 %v1515, %v1513
  %v1546 = vpack.c.b16 %v1516, %v1514
  %v1547 = vpack.c.b16 %v1519, %v1517
  %v1548 = vpack.c.b16 %v1520, %v1518
  %v1549 = vpack.c.b16 %v1523, %v1521
  %v1550 = vpack.c.b16 %v1524, %v1522
  %v1551 = vpack.c.b16 %v1527, %v1525
  %v1552 = vpack.c.b16 %v1528, %v1526
  %v1553 = vpack.c.b16 %v1531, %v1529
  %v1554 = vpack.c.b16 %v1532, %v1530
  %v1555 = vpack.c.b16 %v1535, %v1533
  %v1556 = vpack.c.b16 %v1536, %v1534
  %v1557 = vpack.c.b16 %v1539, %v1537
  %v1558 = vpack.c.b16 %v1540, %v1538
  %v1559 = vpack.c.b16 %v1543, %v1541
  %v1560 = vpack.c.b16 %v1544, %v1542
  %1577 = vmatprep.subr.bf16.mxu0 %v1546
  %1578 = vmatpush1.bf16.msra.mxu0 %v1545
  %1579 = vmatprep.subr.bf16.mxu0 %v1548
  %1580 = vmatpush1.bf16.msra.mxu0 %v1547
  %1581 = vmatprep.subr.bf16.mxu0 %v1550
  %1582 = vmatpush1.bf16.msra.mxu0 %v1549
  %1583 = vmatprep.subr.bf16.mxu0 %v1552
  %1584 = vmatpush1.bf16.msra.mxu0 %v1551
  %1585 = vmatprep.subr.bf16.mxu0 %v1554
  %1586 = vmatpush1.bf16.msra.mxu0 %v1553
  %1587 = vmatprep.subr.bf16.mxu0 %v1556
  %1588 = vmatpush1.bf16.msra.mxu0 %v1555
  %1589 = vmatprep.subr.bf16.mxu0 %v1558
  %1590 = vmatpush1.bf16.msra.mxu0 %v1557
  %1591 = vmatprep.subr.bf16.mxu0 %v1560
  %1592 = vmatpush1.bf16.msra.mxu0 %v1559
  %1593 = vmatprep.subr.bf16.mxu0 0
  %1594 = vmatpush1.bf16.msra.mxu0 0
  %1595 = vmatprep.subr.bf16.mxu0 0
  %1596 = vmatpush1.bf16.msra.mxu0 0
  %1597 = vmatprep.subr.bf16.mxu0 0
  %1598 = vmatpush1.bf16.msra.mxu0 0
  %1599 = vmatprep.subr.bf16.mxu0 0
  %1600 = vmatpush1.bf16.msra.mxu0 0
  %1601 = vmatprep.subr.bf16.mxu0 0
  %1602 = vmatpush1.bf16.msra.mxu0 0
  %1603 = vmatprep.subr.bf16.mxu0 0
  %1604 = vmatpush1.bf16.msra.mxu0 0
  %1605 = vmatprep.subr.bf16.mxu0 0
  %1606 = vmatpush1.bf16.msra.mxu0 0
  %1607 = vmatprep.subr.bf16.mxu0 0
  %1608 = vmatpush1.bf16.msra.mxu0 0
  %1609 = vmatprep.mubr.bf16.mxu0 0
  %1610 = vmatmul.mubr.bf16.gmra.mrb[0].mxu0 %v109
  %v1611 = vpop.f32.mrb[0].mxu0
  %v1612 = vadd.f32 0.0, %v1611
  %v1613 = vpop.f32.mrb[0].mxu0
  %v1614 = vadd.f32 0.0, %v1613
  %v1615 = vpop.f32.mrb[0].mxu0
  %v1616 = vadd.f32 0.0, %v1615
  %v1617 = vpop.f32.mrb[0].mxu0
  %v1618 = vadd.f32 0.0, %v1617
  %1619 = vdwg.mxu0
  %v1620 = vld [vmem:[%s6] sm:$0xf]
  %v1621 = vadd.f32 %v1612, %v1616
  %v1622 = vrot.slane %v1621, 4
  %v1623 = vadd.f32 %v1621, %v1622
  %v1624 = vrot.slane %v1623, 2
  %v1625 = vadd.f32 %v1623, %v1624
  %v1626 = vrot.slane %v1625, 1
  %v1627 = vadd.f32 %v1625, %v1626
  %v1628 = vadd.f32 %v1614, %v1618
  %v1629 = vrot.slane %v1628, 4
  %v1630 = vadd.f32 %v1628, %v1629
  %v1631 = vrot.slane %v1630, 2
  %v1632 = vadd.f32 %v1630, %v1631
  %v1633 = vrot.slane %v1632, 1
  %v1634 = vadd.f32 %v1632, %v1633
  %v1635 = vmul.f32 %v1627, %v516
  %v1636 = vmul.f32 %v1634, %v516
  %v1637 = vsub.f32 %v1612, %v1635
  %v1638 = vsub.f32 %v1614, %v1636
  %v1639 = vsub.f32 %v1616, %v1635
  %v1640 = vsub.f32 %v1618, %v1636
  %v1641 = vmul.f32 %v1637, %v1637
  %v1642 = vmul.f32 %v1638, %v1638
  %v1643 = vmul.f32 %v1639, %v1639
  %v1644 = vmul.f32 %v1640, %v1640
  %v1645 = vadd.f32 %v1641, %v1643
  %v1646 = vrot.slane %v1645, 4
  %v1647 = vadd.f32 %v1645, %v1646
  %v1648 = vrot.slane %v1647, 2
  %v1649 = vadd.f32 %v1647, %v1648
  %v1650 = vrot.slane %v1649, 1
  %v1651 = vadd.f32 %v1649, %v1650
  %v1652 = vadd.f32 %v1642, %v1644
  %v1653 = vrot.slane %v1652, 4
  %v1654 = vadd.f32 %v1652, %v1653
  %v1655 = vrot.slane %v1654, 2
  %v1656 = vadd.f32 %v1654, %v1655
  %v1657 = vrot.slane %v1656, 1
  %v1658 = vadd.f32 %v1656, %v1657
  %v1659 = vmul.f32 %v1651, %v516
  %v1660 = vmul.f32 %v1658, %v516
  %v1661 = vadd.f32 %v1659, 1e-05
  %v1662 = vadd.f32 %v1660, 1e-05
  %v1663 = vrsqrt.pop %v1661
  %v1664 = vrsqrt.pop %v1662
  %v1665 = vmul.f32 %v1637, %v1663
  %v1666 = vmul.f32 %v1638, %v1664
  %v1667 = vmul.f32 %v1639, %v1663
  %v1668 = vmul.f32 %v1640, %v1664
  %v1670 = vlaneseq
  %v1671 = vshrl.u32 %v1670, 7
  %v1672 = vsub.s32 0, %v1671
  %v1673 = vrot.slane %v1620, %v1672
  %v1674 = vlaneseq
  %v1675 = vshrl.u32 %v1674, 7
  %v1676 = vsub.s32 2, %v1675
  %v1677 = vrot.slane %v1620, %v1676
  %v1680 = vlaneseq
  %v1681 = vshrl.u32 %v1680, 7
  %v1682 = vsub.s32 0, %v1681
  %v1683 = vrot.slane %v1673, %v1682
  %v1684 = vlaneseq
  %v1685 = vshrl.u32 %v1684, 7
  %v1686 = vsub.s32 0, %v1685
  %v1687 = vrot.slane %v1677, %v1686
  %v1688 = vmul.f32 %v1665, %v1683
  %v1689 = vmul.f32 %v1666, %v1687
  %v1690 = vmul.f32 %v1667, %v1683
  %v1691 = vmul.f32 %v1668, %v1687
  %v1692 = vlaneseq
  %v1693 = vshrl.u32 %v1692, 7
  %v1694 = vsub.s32 1, %v1693
  %v1695 = vrot.slane %v1620, %v1694
  %v1696 = vlaneseq
  %v1697 = vshrl.u32 %v1696, 7
  %v1698 = vsub.s32 3, %v1697
  %v1699 = vrot.slane %v1620, %v1698
  %v1702 = vlaneseq
  %v1703 = vshrl.u32 %v1702, 7
  %v1704 = vsub.s32 1, %v1703
  %v1705 = vrot.slane %v1695, %v1704
  %v1706 = vlaneseq
  %v1707 = vshrl.u32 %v1706, 7
  %v1708 = vsub.s32 1, %v1707
  %v1709 = vrot.slane %v1699, %v1708
  %v1710 = vadd.f32 %v1688, %v1705
  %v1711 = vadd.f32 %v1689, %v1709
  %v1712 = vadd.f32 %v1690, %v1705
  %v1713 = vadd.f32 %v1691, %v1709
  %v1714 = vadd.f32 %v1477, %v1710
  %v1715 = vadd.f32 %v1478, %v1711
  %v1716 = vadd.f32 %v1479, %v1712
  %v1717 = vadd.f32 %v1480, %v1713
  %v1718 = vmax.f32 %v1714, 0.0
  %v1719 = vmax.f32 %v1715, 0.0
  %v1720 = vmax.f32 %v1716, 0.0
  %v1721 = vmax.f32 %v1717, 0.0
  %1722 = vst [vmem:[%s7] sm:$0xff] %v1718
  %1723 = vst [vmem:[%s7 + $0x8] sm:$0xff] %v1719
  %1724 = vst [vmem:[%s7 + $0x10] sm:$0xff] %v1720
  %1725 = vst [vmem:[%s7 + $0x18] sm:$0xff] %v1721
  // Predicated region
  $region30: #{_lambda_.9} parent=0 // pred_check
    _
  $region31: #{_lambda_.9} parent=0 // pred_check_branch
    %1727 = sbr.rel (0) target = $region33
  $region32: #{_lambda_.9} parent=0 // pred_region
    _
  $region33: #{_lambda_.9} parent=0 // pred_fallthru
    _
  // Predicated region
  $region34: #{_lambda_.9} parent=0 // pred_check
    _
  $region35: #{_lambda_.9} parent=0 // pred_check_branch
    %1729 = sbr.rel (0) target = $region37
  $region36: #{_lambda_.9} parent=0 // pred_region
    _
  $region37: #{_lambda_.9} parent=0 // pred_fallthru
    _

// kernel: _lambda_.10
$region0: #{_lambda_.10}
  #allocation0 [shape = 'u32[]', space=smem, size = 0x4, offset = 0x4, fixed_abs, tag = 'smem constant byte address 0x4 - core index']
  #allocation1 [shape = 'u32[144,128]{1,0:T(1,128)}', space=vmem, size = 0x12000, scoped, tag = 'internal scratch']
  #allocation2 [shape = 'f32[9,256]{1,0:T(8,128)}', space=vmem, size = 0x4000, scoped, tag = 'scratch operand']
  #allocation3 [shape = 'f32[10,512]{1,0:T(8,128)}', space=vmem, size = 0x8000, scoped, tag = 'scratch operand']
  %s0 = inlined_call_operand.vmem [shape: f32[8,512], index: 0, kind: input, shape index: {}]
  %s1 = inlined_call_operand.vmem [shape: bf16[3,256,512], index: 1, kind: input, shape index: {}]
  %s2 = inlined_call_operand.vmem [shape: f32[2,512], index: 2, kind: input, shape index: {}]
  %s3 = inlined_call_operand.vmem [shape: bf16[3,512,512], index: 3, kind: input, shape index: {}]
  %s4 = inlined_call_operand.vmem [shape: f32[2,512], index: 4, kind: input, shape index: {}]
  %s5 = inlined_call_operand.vmem [shape: bf16[256,512], index: 5, kind: input, shape index: {}]
  %s6 = inlined_call_operand.vmem [shape: f32[2,512], index: 6, kind: input, shape index: {}]
  %s7 = inlined_call_operand.vmem [shape: f32[8,512], index: 7, kind: output, shape index: {}]
  %s8 = sld [smem:[#allocation0]]
  $region38: #{_lambda_.10} parent=0
    _
  %s10 = ssub.s32 1, %s8
  %s11 = scalar_select 0, %s10, %s8
  // Predicated region
  $region2: #{_lambda_.10} parent=0 // pred_check
    _
  $region3: #{_lambda_.10} parent=0 // pred_check_branch
    %13 = sbr.rel (0) target = $region5
  $region4: #{_lambda_.10} parent=0 // pred_region
    _
  $region5: #{_lambda_.10} parent=0 // pred_fallthru
    _
  // Predicated region
  $region6: #{_lambda_.10} parent=0 // pred_check
    _
  $region7: #{_lambda_.10} parent=0 // pred_check_branch
    %15 = sbr.rel (0) target = $region9
  $region8: #{_lambda_.10} parent=0 // pred_region
    _
  $region9: #{_lambda_.10} parent=0 // pred_fallthru
    _
  // Predicated region
  $region10: #{_lambda_.10} parent=0 // pred_check
    _
  $region11: #{_lambda_.10} parent=0 // pred_check_branch
    %17 = sbr.rel (0) target = $region13
  $region12: #{_lambda_.10} parent=0 // pred_region
    _
  $region13: #{_lambda_.10} parent=0 // pred_fallthru
    _
  // Predicated region
  $region14: #{_lambda_.10} parent=0 // pred_check
    _
  $region15: #{_lambda_.10} parent=0 // pred_check_branch
    %19 = sbr.rel (0) target = $region17
  $region16: #{_lambda_.10} parent=0 // pred_region
    _
  $region17: #{_lambda_.10} parent=0 // pred_fallthru
    _
  // Predicated region
  $region18: #{_lambda_.10} parent=0 // pred_check
    _
  $region19: #{_lambda_.10} parent=0 // pred_check_branch
    %21 = sbr.rel (0) target = $region21
  $region20: #{_lambda_.10} parent=0 // pred_region
    _
  $region21: #{_lambda_.10} parent=0 // pred_fallthru
    _
  // Predicated region
  $region22: #{_lambda_.10} parent=0 // pred_check
    _
  $region23: #{_lambda_.10} parent=0 // pred_check_branch
    %23 = sbr.rel (0) target = $region25
  $region24: #{_lambda_.10} parent=0 // pred_region
    _
  $region25: #{_lambda_.10} parent=0 // pred_fallthru
    _
  // Predicated region
  $region26: #{_lambda_.10} parent=0 // pred_check
    _
  $region27: #{_lambda_.10} parent=0 // pred_check_branch
    %25 = sbr.rel (0) target = $region29
  $region28: #{_lambda_.10} parent=0 // pred_region
    _
  $region29: #{_lambda_.10} parent=0 // pred_fallthru
    _
  %v26 = vlaneseq
  %v27 = vshrl.u32 %v26, 7
  %vm28 = vcmp.lt.s32.totalorder %v27, 0
  %v29 = vsub.s32 0, %v27
  %v30 = vsel %vm28, %v29, %v27
  %v31 = vshrl.u32 %v30, 2
  %v32 = vand.u32 %v30, 3
  %v33 = vsub.s32 0, %v32
  %v34 = vsel %vm28, %v33, %v32
  %vm35 = vcmp.ne.s32.totalorder %v34, 0
  %vm36 = vcmp.lt.s32.totalorder %v34, 0
  %vm37 = vmand %vm36, %vm35
  %v38 = vadd.s32 %v34, 4
  %v39 = vsel %vm37, %v38, %v34
  %vm40 = vcmp.eq.s32.totalorder %v39, 0
  %vm41 = vcmp.eq.s32.totalorder %v39, 3
  %v42 = vld [vmem:[%s0] sm:$0xff]
  %v43 = vld [vmem:[%s0 + $0x8] sm:$0xff]
  %v44 = vld [vmem:[%s0 + $0x10] sm:$0xff]
  %v45 = vld [vmem:[%s0 + $0x18] sm:$0xff]
  %46 = vst [vmem:[#allocation2] sm:$0xff] 0.0
  %47 = vst [vmem:[#allocation2 + $0x8] sm:$0xff] 0.0
  %48 = vst [vmem:[#allocation2 + $0x10] sm:$0x1] 0.0
  %49 = vst [vmem:[#allocation2 + $0x18] sm:$0x1] 0.0
  %v52 = vrot.slane %v44, 7
  %v53 = vrot.slane %v45, 7
  %56 = vst [vmem:[#allocation2] sm:$0xfe] %v52
  %57 = vst [vmem:[#allocation2 + $0x8] sm:$0xfe] %v53
  %58 = vst [vmem:[#allocation2 + $0x10] sm:$0x1] %v52
  %59 = vst [vmem:[#allocation2 + $0x18] sm:$0x1] %v53
  %v60 = vld [vmem:[#allocation2] sm:$0xff]
  %v61 = vld [vmem:[#allocation2 + $0x8] sm:$0xff]
  %v62 = vsel %vm40, 1, 0
  %vm63 = vcmp.eq.s32.totalorder %v62, 1
  %v64 = vsel %vm63, 0.0, %v60
  %v65 = vsel %vm63, 0.0, %v61
  %v66 = vld [vmem:[%s1] sm:$0xff]
  %v67 = vld [vmem:[%s1 + $0x8] sm:$0xff]
  %v68 = vld [vmem:[%s1 + $0x10] sm:$0xff]
  %v69 = vld [vmem:[%s1 + $0x18] sm:$0xff]
  %v70 = vld [vmem:[%s1 + $0x20] sm:$0xff]
  %v71 = vld [vmem:[%s1 + $0x28] sm:$0xff]
  %v72 = vld [vmem:[%s1 + $0x30] sm:$0xff]
  %v73 = vld [vmem:[%s1 + $0x38] sm:$0xff]
  %v74 = vld [vmem:[%s1 + $0x40] sm:$0xff]
  %v75 = vld [vmem:[%s1 + $0x48] sm:$0xff]
  %v76 = vld [vmem:[%s1 + $0x50] sm:$0xff]
  %v77 = vld [vmem:[%s1 + $0x58] sm:$0xff]
  %v78 = vld [vmem:[%s1 + $0x60] sm:$0xff]
  %v79 = vld [vmem:[%s1 + $0x68] sm:$0xff]
  %v80 = vld [vmem:[%s1 + $0x70] sm:$0xff]
  %v81 = vld [vmem:[%s1 + $0x78] sm:$0xff]
  %v82 = vld [vmem:[%s1 + $0x80] sm:$0xff]
  %v83 = vld [vmem:[%s1 + $0x88] sm:$0xff]
  %v84 = vld [vmem:[%s1 + $0x90] sm:$0xff]
  %v85 = vld [vmem:[%s1 + $0x98] sm:$0xff]
  %v86 = vld [vmem:[%s1 + $0xa0] sm:$0xff]
  %v87 = vld [vmem:[%s1 + $0xa8] sm:$0xff]
  %v88 = vld [vmem:[%s1 + $0xb0] sm:$0xff]
  %v89 = vld [vmem:[%s1 + $0xb8] sm:$0xff]
  %v90 = vld [vmem:[%s1 + $0xc0] sm:$0xff]
  %v91 = vld [vmem:[%s1 + $0xc8] sm:$0xff]
  %v92 = vld [vmem:[%s1 + $0xd0] sm:$0xff]
  %v93 = vld [vmem:[%s1 + $0xd8] sm:$0xff]
  %v94 = vld [vmem:[%s1 + $0xe0] sm:$0xff]
  %v95 = vld [vmem:[%s1 + $0xe8] sm:$0xff]
  %v96 = vld [vmem:[%s1 + $0xf0] sm:$0xff]
  %v97 = vld [vmem:[%s1 + $0xf8] sm:$0xff]
  %v98 = vld [vmem:[%s1 + $0x100] sm:$0xff]
  %v99 = vld [vmem:[%s1 + $0x108] sm:$0xff]
  %v100 = vld [vmem:[%s1 + $0x110] sm:$0xff]
  %v101 = vld [vmem:[%s1 + $0x118] sm:$0xff]
  %v102 = vld [vmem:[%s1 + $0x120] sm:$0xff]
  %v103 = vld [vmem:[%s1 + $0x128] sm:$0xff]
  %v104 = vld [vmem:[%s1 + $0x130] sm:$0xff]
  %v105 = vld [vmem:[%s1 + $0x138] sm:$0xff]
  %v106 = vld [vmem:[%s1 + $0x140] sm:$0xff]
  %v107 = vld [vmem:[%s1 + $0x148] sm:$0xff]
  %v108 = vld [vmem:[%s1 + $0x150] sm:$0xff]
  %v109 = vld [vmem:[%s1 + $0x158] sm:$0xff]
  %v110 = vld [vmem:[%s1 + $0x160] sm:$0xff]
  %v111 = vld [vmem:[%s1 + $0x168] sm:$0xff]
  %v112 = vld [vmem:[%s1 + $0x170] sm:$0xff]
  %v113 = vld [vmem:[%s1 + $0x178] sm:$0xff]
  %v114 = vld [vmem:[%s1 + $0x180] sm:$0xff]
  %v115 = vld [vmem:[%s1 + $0x188] sm:$0xff]
  %v116 = vld [vmem:[%s1 + $0x190] sm:$0xff]
  %v117 = vld [vmem:[%s1 + $0x198] sm:$0xff]
  %v118 = vld [vmem:[%s1 + $0x1a0] sm:$0xff]
  %v119 = vld [vmem:[%s1 + $0x1a8] sm:$0xff]
  %v120 = vld [vmem:[%s1 + $0x1b0] sm:$0xff]
  %v121 = vld [vmem:[%s1 + $0x1b8] sm:$0xff]
  %v122 = vld [vmem:[%s1 + $0x1c0] sm:$0xff]
  %v123 = vld [vmem:[%s1 + $0x1c8] sm:$0xff]
  %v124 = vld [vmem:[%s1 + $0x1d0] sm:$0xff]
  %v125 = vld [vmem:[%s1 + $0x1d8] sm:$0xff]
  %v126 = vld [vmem:[%s1 + $0x1e0] sm:$0xff]
  %v127 = vld [vmem:[%s1 + $0x1e8] sm:$0xff]
  %v128 = vld [vmem:[%s1 + $0x1f0] sm:$0xff]
  %v129 = vld [vmem:[%s1 + $0x1f8] sm:$0xff]
  %v130 = vpack.c.bf16 %v64, %v64
  %v131 = vpack.c.bf16 %v65, %v65
  %s132 = scalar_lea.vmem %s1, 512
  %v133 = vld [vmem:[%s132] sm:$0xff]
  %v134 = vld [vmem:[%s132 + $0x8] sm:$0xff]
  %v135 = vld [vmem:[%s132 + $0x10] sm:$0xff]
  %v136 = vld [vmem:[%s132 + $0x18] sm:$0xff]
  %v137 = vld [vmem:[%s132 + $0x20] sm:$0xff]
  %v138 = vld [vmem:[%s132 + $0x28] sm:$0xff]
  %v139 = vld [vmem:[%s132 + $0x30] sm:$0xff]
  %v140 = vld [vmem:[%s132 + $0x38] sm:$0xff]
  %v141 = vld [vmem:[%s132 + $0x40] sm:$0xff]
  %v142 = vld [vmem:[%s132 + $0x48] sm:$0xff]
  %v143 = vld [vmem:[%s132 + $0x50] sm:$0xff]
  %v144 = vld [vmem:[%s132 + $0x58] sm:$0xff]
  %v145 = vld [vmem:[%s132 + $0x60] sm:$0xff]
  %v146 = vld [vmem:[%s132 + $0x68] sm:$0xff]
  %v147 = vld [vmem:[%s132 + $0x70] sm:$0xff]
  %v148 = vld [vmem:[%s132 + $0x78] sm:$0xff]
  %v149 = vld [vmem:[%s132 + $0x80] sm:$0xff]
  %v150 = vld [vmem:[%s132 + $0x88] sm:$0xff]
  %v151 = vld [vmem:[%s132 + $0x90] sm:$0xff]
  %v152 = vld [vmem:[%s132 + $0x98] sm:$0xff]
  %v153 = vld [vmem:[%s132 + $0xa0] sm:$0xff]
  %v154 = vld [vmem:[%s132 + $0xa8] sm:$0xff]
  %v155 = vld [vmem:[%s132 + $0xb0] sm:$0xff]
  %v156 = vld [vmem:[%s132 + $0xb8] sm:$0xff]
  %v157 = vld [vmem:[%s132 + $0xc0] sm:$0xff]
  %v158 = vld [vmem:[%s132 + $0xc8] sm:$0xff]
  %v159 = vld [vmem:[%s132 + $0xd0] sm:$0xff]
  %v160 = vld [vmem:[%s132 + $0xd8] sm:$0xff]
  %v161 = vld [vmem:[%s132 + $0xe0] sm:$0xff]
  %v162 = vld [vmem:[%s132 + $0xe8] sm:$0xff]
  %v163 = vld [vmem:[%s132 + $0xf0] sm:$0xff]
  %v164 = vld [vmem:[%s132 + $0xf8] sm:$0xff]
  %v165 = vld [vmem:[%s132 + $0x100] sm:$0xff]
  %v166 = vld [vmem:[%s132 + $0x108] sm:$0xff]
  %v167 = vld [vmem:[%s132 + $0x110] sm:$0xff]
  %v168 = vld [vmem:[%s132 + $0x118] sm:$0xff]
  %v169 = vld [vmem:[%s132 + $0x120] sm:$0xff]
  %v170 = vld [vmem:[%s132 + $0x128] sm:$0xff]
  %v171 = vld [vmem:[%s132 + $0x130] sm:$0xff]
  %v172 = vld [vmem:[%s132 + $0x138] sm:$0xff]
  %v173 = vld [vmem:[%s132 + $0x140] sm:$0xff]
  %v174 = vld [vmem:[%s132 + $0x148] sm:$0xff]
  %v175 = vld [vmem:[%s132 + $0x150] sm:$0xff]
  %v176 = vld [vmem:[%s132 + $0x158] sm:$0xff]
  %v177 = vld [vmem:[%s132 + $0x160] sm:$0xff]
  %v178 = vld [vmem:[%s132 + $0x168] sm:$0xff]
  %v179 = vld [vmem:[%s132 + $0x170] sm:$0xff]
  %v180 = vld [vmem:[%s132 + $0x178] sm:$0xff]
  %v181 = vld [vmem:[%s132 + $0x180] sm:$0xff]
  %v182 = vld [vmem:[%s132 + $0x188] sm:$0xff]
  %v183 = vld [vmem:[%s132 + $0x190] sm:$0xff]
  %v184 = vld [vmem:[%s132 + $0x198] sm:$0xff]
  %v185 = vld [vmem:[%s132 + $0x1a0] sm:$0xff]
  %v186 = vld [vmem:[%s132 + $0x1a8] sm:$0xff]
  %v187 = vld [vmem:[%s132 + $0x1b0] sm:$0xff]
  %v188 = vld [vmem:[%s132 + $0x1b8] sm:$0xff]
  %v189 = vld [vmem:[%s132 + $0x1c0] sm:$0xff]
  %v190 = vld [vmem:[%s132 + $0x1c8] sm:$0xff]
  %v191 = vld [vmem:[%s132 + $0x1d0] sm:$0xff]
  %v192 = vld [vmem:[%s132 + $0x1d8] sm:$0xff]
  %v193 = vld [vmem:[%s132 + $0x1e0] sm:$0xff]
  %v194 = vld [vmem:[%s132 + $0x1e8] sm:$0xff]
  %v195 = vld [vmem:[%s132 + $0x1f0] sm:$0xff]
  %v196 = vld [vmem:[%s132 + $0x1f8] sm:$0xff]
  %v197 = vpack.c.bf16 %v42, %v42
  %v198 = vpack.c.bf16 %v43, %v43
  %v263 = vunpack.c.l.b16 %v133
  %v264 = vunpack.c.h.b16 %v133
  %v265 = vunpack.c.l.b16 %v134
  %v266 = vunpack.c.h.b16 %v134
  %v267 = vunpack.c.l.b16 %v135
  %v268 = vunpack.c.h.b16 %v135
  %v269 = vunpack.c.l.b16 %v136
  %v270 = vunpack.c.h.b16 %v136
  %v271 = vunpack.c.l.b16 %v137
  %v272 = vunpack.c.h.b16 %v137
  %v273 = vunpack.c.l.b16 %v138
  %v274 = vunpack.c.h.b16 %v138
  %v275 = vunpack.c.l.b16 %v139
  %v276 = vunpack.c.h.b16 %v139
  %v277 = vunpack.c.l.b16 %v140
  %v278 = vunpack.c.h.b16 %v140
  %v279 = vunpack.c.l.b16 %v141
  %v280 = vunpack.c.h.b16 %v141
  %v281 = vunpack.c.l.b16 %v142
  %v282 = vunpack.c.h.b16 %v142
  %v283 = vunpack.c.l.b16 %v143
  %v284 = vunpack.c.h.b16 %v143
  %v285 = vunpack.c.l.b16 %v144
  %v286 = vunpack.c.h.b16 %v144
  %v287 = vunpack.c.l.b16 %v145
  %v288 = vunpack.c.h.b16 %v145
  %v289 = vunpack.c.l.b16 %v146
  %v290 = vunpack.c.h.b16 %v146
  %v291 = vunpack.c.l.b16 %v147
  %v292 = vunpack.c.h.b16 %v147
  %v293 = vunpack.c.l.b16 %v148
  %v294 = vunpack.c.h.b16 %v148
  %v295 = vunpack.c.l.b16 %v149
  %v296 = vunpack.c.h.b16 %v149
  %v297 = vunpack.c.l.b16 %v150
  %v298 = vunpack.c.h.b16 %v150
  %v299 = vunpack.c.l.b16 %v151
  %v300 = vunpack.c.h.b16 %v151
  %v301 = vunpack.c.l.b16 %v152
  %v302 = vunpack.c.h.b16 %v152
  %v303 = vunpack.c.l.b16 %v153
  %v304 = vunpack.c.h.b16 %v153
  %v305 = vunpack.c.l.b16 %v154
  %v306 = vunpack.c.h.b16 %v154
  %v307 = vunpack.c.l.b16 %v155
  %v308 = vunpack.c.h.b16 %v155
  %v309 = vunpack.c.l.b16 %v156
  %v310 = vunpack.c.h.b16 %v156
  %v311 = vunpack.c.l.b16 %v157
  %v312 = vunpack.c.h.b16 %v157
  %v313 = vunpack.c.l.b16 %v158
  %v314 = vunpack.c.h.b16 %v158
  %v315 = vunpack.c.l.b16 %v159
  %v316 = vunpack.c.h.b16 %v159
  %v317 = vunpack.c.l.b16 %v160
  %v318 = vunpack.c.h.b16 %v160
  %v319 = vunpack.c.l.b16 %v161
  %v320 = vunpack.c.h.b16 %v161
  %v321 = vunpack.c.l.b16 %v162
  %v322 = vunpack.c.h.b16 %v162
  %v323 = vunpack.c.l.b16 %v163
  %v324 = vunpack.c.h.b16 %v163
  %v325 = vunpack.c.l.b16 %v164
  %v326 = vunpack.c.h.b16 %v164
  %v327 = vunpack.c.l.b16 %v165
  %v328 = vunpack.c.h.b16 %v165
  %v329 = vunpack.c.l.b16 %v166
  %v330 = vunpack.c.h.b16 %v166
  %v331 = vunpack.c.l.b16 %v167
  %v332 = vunpack.c.h.b16 %v167
  %v333 = vunpack.c.l.b16 %v168
  %v334 = vunpack.c.h.b16 %v168
  %v335 = vunpack.c.l.b16 %v169
  %v336 = vunpack.c.h.b16 %v169
  %v337 = vunpack.c.l.b16 %v170
  %v338 = vunpack.c.h.b16 %v170
  %v339 = vunpack.c.l.b16 %v171
  %v340 = vunpack.c.h.b16 %v171
  %v341 = vunpack.c.l.b16 %v172
  %v342 = vunpack.c.h.b16 %v172
  %v343 = vunpack.c.l.b16 %v173
  %v344 = vunpack.c.h.b16 %v173
  %v345 = vunpack.c.l.b16 %v174
  %v346 = vunpack.c.h.b16 %v174
  %v347 = vunpack.c.l.b16 %v175
  %v348 = vunpack.c.h.b16 %v175
  %v349 = vunpack.c.l.b16 %v176
  %v350 = vunpack.c.h.b16 %v176
  %v351 = vunpack.c.l.b16 %v177
  %v352 = vunpack.c.h.b16 %v177
  %v353 = vunpack.c.l.b16 %v178
  %v354 = vunpack.c.h.b16 %v178
  %v355 = vunpack.c.l.b16 %v179
  %v356 = vunpack.c.h.b16 %v179
  %v357 = vunpack.c.l.b16 %v180
  %v358 = vunpack.c.h.b16 %v180
  %v359 = vunpack.c.l.b16 %v181
  %v360 = vunpack.c.h.b16 %v181
  %v361 = vunpack.c.l.b16 %v182
  %v362 = vunpack.c.h.b16 %v182
  %v363 = vunpack.c.l.b16 %v183
  %v364 = vunpack.c.h.b16 %v183
  %v365 = vunpack.c.l.b16 %v184
  %v366 = vunpack.c.h.b16 %v184
  %v367 = vunpack.c.l.b16 %v185
  %v368 = vunpack.c.h.b16 %v185
  %v369 = vunpack.c.l.b16 %v186
  %v370 = vunpack.c.h.b16 %v186
  %v371 = vunpack.c.l.b16 %v187
  %v372 = vunpack.c.h.b16 %v187
  %v373 = vunpack.c.l.b16 %v188
  %v374 = vunpack.c.h.b16 %v188
  %v375 = vunpack.c.l.b16 %v189
  %v376 = vunpack.c.h.b16 %v189
  %v377 = vunpack.c.l.b16 %v190
  %v378 = vunpack.c.h.b16 %v190
  %v379 = vunpack.c.l.b16 %v191
  %v380 = vunpack.c.h.b16 %v191
  %v381 = vunpack.c.l.b16 %v192
  %v382 = vunpack.c.h.b16 %v192
  %v383 = vunpack.c.l.b16 %v193
  %v384 = vunpack.c.h.b16 %v193
  %v385 = vunpack.c.l.b16 %v194
  %v386 = vunpack.c.h.b16 %v194
  %v387 = vunpack.c.l.b16 %v195
  %v388 = vunpack.c.h.b16 %v195
  %v389 = vunpack.c.l.b16 %v196
  %v390 = vunpack.c.h.b16 %v196
  %v391 = vpack.c.b16 %v267, %v263
  %v392 = vpack.c.b16 %v268, %v264
  %v393 = vpack.c.b16 %v269, %v265
  %v394 = vpack.c.b16 %v270, %v266
  %v395 = vpack.c.b16 %v275, %v271
  %v396 = vpack.c.b16 %v276, %v272
  %v397 = vpack.c.b16 %v277, %v273
  %v398 = vpack.c.b16 %v278, %v274
  %v399 = vpack.c.b16 %v283, %v279
  %v400 = vpack.c.b16 %v284, %v280
  %v401 = vpack.c.b16 %v285, %v281
  %v402 = vpack.c.b16 %v286, %v282
  %v403 = vpack.c.b16 %v291, %v287
  %v404 = vpack.c.b16 %v292, %v288
  %v405 = vpack.c.b16 %v293, %v289
  %v406 = vpack.c.b16 %v294, %v290
  %v407 = vpack.c.b16 %v299, %v295
  %v408 = vpack.c.b16 %v300, %v296
  %v409 = vpack.c.b16 %v301, %v297
  %v410 = vpack.c.b16 %v302, %v298
  %v411 = vpack.c.b16 %v307, %v303
  %v412 = vpack.c.b16 %v308, %v304
  %v413 = vpack.c.b16 %v309, %v305
  %v414 = vpack.c.b16 %v310, %v306
  %v415 = vpack.c.b16 %v315, %v311
  %v416 = vpack.c.b16 %v316, %v312
  %v417 = vpack.c.b16 %v317, %v313
  %v418 = vpack.c.b16 %v318, %v314
  %v419 = vpack.c.b16 %v323, %v319
  %v420 = vpack.c.b16 %v324, %v320
  %v421 = vpack.c.b16 %v325, %v321
  %v422 = vpack.c.b16 %v326, %v322
  %v423 = vpack.c.b16 %v331, %v327
  %v424 = vpack.c.b16 %v332, %v328
  %v425 = vpack.c.b16 %v333, %v329
  %v426 = vpack.c.b16 %v334, %v330
  %v427 = vpack.c.b16 %v339, %v335
  %v428 = vpack.c.b16 %v340, %v336
  %v429 = vpack.c.b16 %v341, %v337
  %v430 = vpack.c.b16 %v342, %v338
  %v431 = vpack.c.b16 %v347, %v343
  %v432 = vpack.c.b16 %v348, %v344
  %v433 = vpack.c.b16 %v349, %v345
  %v434 = vpack.c.b16 %v350, %v346
  %v435 = vpack.c.b16 %v355, %v351
  %v436 = vpack.c.b16 %v356, %v352
  %v437 = vpack.c.b16 %v357, %v353
  %v438 = vpack.c.b16 %v358, %v354
  %v439 = vpack.c.b16 %v363, %v359
  %v440 = vpack.c.b16 %v364, %v360
  %v441 = vpack.c.b16 %v365, %v361
  %v442 = vpack.c.b16 %v366, %v362
  %v443 = vpack.c.b16 %v371, %v367
  %v444 = vpack.c.b16 %v372, %v368
  %v445 = vpack.c.b16 %v373, %v369
  %v446 = vpack.c.b16 %v374, %v370
  %v447 = vpack.c.b16 %v379, %v375
  %v448 = vpack.c.b16 %v380, %v376
  %v449 = vpack.c.b16 %v381, %v377
  %v450 = vpack.c.b16 %v382, %v378
  %v451 = vpack.c.b16 %v387, %v383
  %v452 = vpack.c.b16 %v388, %v384
  %v453 = vpack.c.b16 %v389, %v385
  %v454 = vpack.c.b16 %v390, %v386
  %519 = vmatprep.subr.bf16.mxu0 %v392
  %520 = vmatpush1.bf16.msra.mxu0 %v391
  %521 = vmatprep.subr.bf16.mxu0 %v396
  %522 = vmatpush1.bf16.msra.mxu0 %v395
  %523 = vmatprep.subr.bf16.mxu0 %v400
  %524 = vmatpush1.bf16.msra.mxu0 %v399
  %525 = vmatprep.subr.bf16.mxu0 %v404
  %526 = vmatpush1.bf16.msra.mxu0 %v403
  %527 = vmatprep.subr.bf16.mxu0 %v408
  %528 = vmatpush1.bf16.msra.mxu0 %v407
  %529 = vmatprep.subr.bf16.mxu0 %v412
  %530 = vmatpush1.bf16.msra.mxu0 %v411
  %531 = vmatprep.subr.bf16.mxu0 %v416
  %532 = vmatpush1.bf16.msra.mxu0 %v415
  %533 = vmatprep.subr.bf16.mxu0 %v420
  %534 = vmatpush1.bf16.msra.mxu0 %v419
  %535 = vmatprep.subr.bf16.mxu0 %v424
  %536 = vmatpush1.bf16.msra.mxu0 %v423
  %537 = vmatprep.subr.bf16.mxu0 %v428
  %538 = vmatpush1.bf16.msra.mxu0 %v427
  %539 = vmatprep.subr.bf16.mxu0 %v432
  %540 = vmatpush1.bf16.msra.mxu0 %v431
  %541 = vmatprep.subr.bf16.mxu0 %v436
  %542 = vmatpush1.bf16.msra.mxu0 %v435
  %543 = vmatprep.subr.bf16.mxu0 %v440
  %544 = vmatpush1.bf16.msra.mxu0 %v439
  %545 = vmatprep.subr.bf16.mxu0 %v444
  %546 = vmatpush1.bf16.msra.mxu0 %v443
  %547 = vmatprep.subr.bf16.mxu0 %v448
  %548 = vmatpush1.bf16.msra.mxu0 %v447
  %549 = vmatprep.subr.bf16.mxu0 %v452
  %550 = vmatpush1.bf16.msra.mxu0 %v451
  %551 = vmatprep.mubr.bf16.mxu0 %v198
  %552 = vmatmul.mubr.bf16.gmra.mrb[0].mxu0 %v197
  %v553 = vpop.f32.mrb[0].mxu0
  %v554 = vadd.f32 0.0, %v553
  %v555 = vpop.f32.mrb[0].mxu0
  %v556 = vadd.f32 0.0, %v555
  %v557 = vpop.f32.mrb[0].mxu0
  %v558 = vpop.f32.mrb[0].mxu0
  %559 = vdwg.mxu0
  %560 = vmatprep.subr.bf16.mxu0 %v394
  %561 = vmatpush1.bf16.msra.mxu0 %v393
  %562 = vmatprep.subr.bf16.mxu0 %v398
  %563 = vmatpush1.bf16.msra.mxu0 %v397
  %564 = vmatprep.subr.bf16.mxu0 %v402
  %565 = vmatpush1.bf16.msra.mxu0 %v401
  %566 = vmatprep.subr.bf16.mxu0 %v406
  %567 = vmatpush1.bf16.msra.mxu0 %v405
  %568 = vmatprep.subr.bf16.mxu0 %v410
  %569 = vmatpush1.bf16.msra.mxu0 %v409
  %570 = vmatprep.subr.bf16.mxu0 %v414
  %571 = vmatpush1.bf16.msra.mxu0 %v413
  %572 = vmatprep.subr.bf16.mxu0 %v418
  %573 = vmatpush1.bf16.msra.mxu0 %v417
  %574 = vmatprep.subr.bf16.mxu0 %v422
  %575 = vmatpush1.bf16.msra.mxu0 %v421
  %576 = vmatprep.subr.bf16.mxu0 %v426
  %577 = vmatpush1.bf16.msra.mxu0 %v425
  %578 = vmatprep.subr.bf16.mxu0 %v430
  %579 = vmatpush1.bf16.msra.mxu0 %v429
  %580 = vmatprep.subr.bf16.mxu0 %v434
  %581 = vmatpush1.bf16.msra.mxu0 %v433
  %582 = vmatprep.subr.bf16.mxu0 %v438
  %583 = vmatpush1.bf16.msra.mxu0 %v437
  %584 = vmatprep.subr.bf16.mxu0 %v442
  %585 = vmatpush1.bf16.msra.mxu0 %v441
  %586 = vmatprep.subr.bf16.mxu0 %v446
  %587 = vmatpush1.bf16.msra.mxu0 %v445
  %588 = vmatprep.subr.bf16.mxu0 %v450
  %589 = vmatpush1.bf16.msra.mxu0 %v449
  %590 = vmatprep.subr.bf16.mxu0 %v454
  %591 = vmatpush1.bf16.msra.mxu0 %v453
  %592 = vmatprep.mubr.bf16.mxu0 %v198
  %593 = vmatmul.mubr.bf16.gmra.mrb[0].mxu0 %v197
  %v594 = vpop.f32.mrb[0].mxu0
  %v595 = vadd.f32 0.0, %v594
  %v596 = vpop.f32.mrb[0].mxu0
  %v597 = vadd.f32 0.0, %v596
  %v598 = vpop.f32.mrb[0].mxu0
  %v599 = vpop.f32.mrb[0].mxu0
  %600 = vdwg.mxu0
  %v665 = vunpack.c.l.b16 %v66
  %v666 = vunpack.c.h.b16 %v66
  %v667 = vunpack.c.l.b16 %v67
  %v668 = vunpack.c.h.b16 %v67
  %v669 = vunpack.c.l.b16 %v68
  %v670 = vunpack.c.h.b16 %v68
  %v671 = vunpack.c.l.b16 %v69
  %v672 = vunpack.c.h.b16 %v69
  %v673 = vunpack.c.l.b16 %v70
  %v674 = vunpack.c.h.b16 %v70
  %v675 = vunpack.c.l.b16 %v71
  %v676 = vunpack.c.h.b16 %v71
  %v677 = vunpack.c.l.b16 %v72
  %v678 = vunpack.c.h.b16 %v72
  %v679 = vunpack.c.l.b16 %v73
  %v680 = vunpack.c.h.b16 %v73
  %v681 = vunpack.c.l.b16 %v74
  %v682 = vunpack.c.h.b16 %v74
  %v683 = vunpack.c.l.b16 %v75
  %v684 = vunpack.c.h.b16 %v75
  %v685 = vunpack.c.l.b16 %v76
  %v686 = vunpack.c.h.b16 %v76
  %v687 = vunpack.c.l.b16 %v77
  %v688 = vunpack.c.h.b16 %v77
  %v689 = vunpack.c.l.b16 %v78
  %v690 = vunpack.c.h.b16 %v78
  %v691 = vunpack.c.l.b16 %v79
  %v692 = vunpack.c.h.b16 %v79
  %v693 = vunpack.c.l.b16 %v80
  %v694 = vunpack.c.h.b16 %v80
  %v695 = vunpack.c.l.b16 %v81
  %v696 = vunpack.c.h.b16 %v81
  %v697 = vunpack.c.l.b16 %v82
  %v698 = vunpack.c.h.b16 %v82
  %v699 = vunpack.c.l.b16 %v83
  %v700 = vunpack.c.h.b16 %v83
  %v701 = vunpack.c.l.b16 %v84
  %v702 = vunpack.c.h.b16 %v84
  %v703 = vunpack.c.l.b16 %v85
  %v704 = vunpack.c.h.b16 %v85
  %v705 = vunpack.c.l.b16 %v86
  %v706 = vunpack.c.h.b16 %v86
  %v707 = vunpack.c.l.b16 %v87
  %v708 = vunpack.c.h.b16 %v87
  %v709 = vunpack.c.l.b16 %v88
  %v710 = vunpack.c.h.b16 %v88
  %v711 = vunpack.c.l.b16 %v89
  %v712 = vunpack.c.h.b16 %v89
  %v713 = vunpack.c.l.b16 %v90
  %v714 = vunpack.c.h.b16 %v90
  %v715 = vunpack.c.l.b16 %v91
  %v716 = vunpack.c.h.b16 %v91
  %v717 = vunpack.c.l.b16 %v92
  %v718 = vunpack.c.h.b16 %v92
  %v719 = vunpack.c.l.b16 %v93
  %v720 = vunpack.c.h.b16 %v93
  %v721 = vunpack.c.l.b16 %v94
  %v722 = vunpack.c.h.b16 %v94
  %v723 = vunpack.c.l.b16 %v95
  %v724 = vunpack.c.h.b16 %v95
  %v725 = vunpack.c.l.b16 %v96
  %v726 = vunpack.c.h.b16 %v96
  %v727 = vunpack.c.l.b16 %v97
  %v728 = vunpack.c.h.b16 %v97
  %v729 = vunpack.c.l.b16 %v98
  %v730 = vunpack.c.h.b16 %v98
  %v731 = vunpack.c.l.b16 %v99
  %v732 = vunpack.c.h.b16 %v99
  %v733 = vunpack.c.l.b16 %v100
  %v734 = vunpack.c.h.b16 %v100
  %v735 = vunpack.c.l.b16 %v101
  %v736 = vunpack.c.h.b16 %v101
  %v737 = vunpack.c.l.b16 %v102
  %v738 = vunpack.c.h.b16 %v102
  %v739 = vunpack.c.l.b16 %v103
  %v740 = vunpack.c.h.b16 %v103
  %v741 = vunpack.c.l.b16 %v104
  %v742 = vunpack.c.h.b16 %v104
  %v743 = vunpack.c.l.b16 %v105
  %v744 = vunpack.c.h.b16 %v105
  %v745 = vunpack.c.l.b16 %v106
  %v746 = vunpack.c.h.b16 %v106
  %v747 = vunpack.c.l.b16 %v107
  %v748 = vunpack.c.h.b16 %v107
  %v749 = vunpack.c.l.b16 %v108
  %v750 = vunpack.c.h.b16 %v108
  %v751 = vunpack.c.l.b16 %v109
  %v752 = vunpack.c.h.b16 %v109
  %v753 = vunpack.c.l.b16 %v110
  %v754 = vunpack.c.h.b16 %v110
  %v755 = vunpack.c.l.b16 %v111
  %v756 = vunpack.c.h.b16 %v111
  %v757 = vunpack.c.l.b16 %v112
  %v758 = vunpack.c.h.b16 %v112
  %v759 = vunpack.c.l.b16 %v113
  %v760 = vunpack.c.h.b16 %v113
  %v761 = vunpack.c.l.b16 %v114
  %v762 = vunpack.c.h.b16 %v114
  %v763 = vunpack.c.l.b16 %v115
  %v764 = vunpack.c.h.b16 %v115
  %v765 = vunpack.c.l.b16 %v116
  %v766 = vunpack.c.h.b16 %v116
  %v767 = vunpack.c.l.b16 %v117
  %v768 = vunpack.c.h.b16 %v117
  %v769 = vunpack.c.l.b16 %v118
  %v770 = vunpack.c.h.b16 %v118
  %v771 = vunpack.c.l.b16 %v119
  %v772 = vunpack.c.h.b16 %v119
  %v773 = vunpack.c.l.b16 %v120
  %v774 = vunpack.c.h.b16 %v120
  %v775 = vunpack.c.l.b16 %v121
  %v776 = vunpack.c.h.b16 %v121
  %v777 = vunpack.c.l.b16 %v122
  %v778 = vunpack.c.h.b16 %v122
  %v779 = vunpack.c.l.b16 %v123
  %v780 = vunpack.c.h.b16 %v123
  %v781 = vunpack.c.l.b16 %v124
  %v782 = vunpack.c.h.b16 %v124
  %v783 = vunpack.c.l.b16 %v125
  %v784 = vunpack.c.h.b16 %v125
  %v785 = vunpack.c.l.b16 %v126
  %v786 = vunpack.c.h.b16 %v126
  %v787 = vunpack.c.l.b16 %v127
  %v788 = vunpack.c.h.b16 %v127
  %v789 = vunpack.c.l.b16 %v128
  %v790 = vunpack.c.h.b16 %v128
  %v791 = vunpack.c.l.b16 %v129
  %v792 = vunpack.c.h.b16 %v129
  %v793 = vpack.c.b16 %v669, %v665
  %v794 = vpack.c.b16 %v670, %v666
  %v795 = vpack.c.b16 %v671, %v667
  %v796 = vpack.c.b16 %v672, %v668
  %v797 = vpack.c.b16 %v677, %v673
  %v798 = vpack.c.b16 %v678, %v674
  %v799 = vpack.c.b16 %v679, %v675
  %v800 = vpack.c.b16 %v680, %v676
  %v801 = vpack.c.b16 %v685, %v681
  %v802 = vpack.c.b16 %v686, %v682
  %v803 = vpack.c.b16 %v687, %v683
  %v804 = vpack.c.b16 %v688, %v684
  %v805 = vpack.c.b16 %v693, %v689
  %v806 = vpack.c.b16 %v694, %v690
  %v807 = vpack.c.b16 %v695, %v691
  %v808 = vpack.c.b16 %v696, %v692
  %v809 = vpack.c.b16 %v701, %v697
  %v810 = vpack.c.b16 %v702, %v698
  %v811 = vpack.c.b16 %v703, %v699
  %v812 = vpack.c.b16 %v704, %v700
  %v813 = vpack.c.b16 %v709, %v705
  %v814 = vpack.c.b16 %v710, %v706
  %v815 = vpack.c.b16 %v711, %v707
  %v816 = vpack.c.b16 %v712, %v708
  %v817 = vpack.c.b16 %v717, %v713
  %v818 = vpack.c.b16 %v718, %v714
  %v819 = vpack.c.b16 %v719, %v715
  %v820 = vpack.c.b16 %v720, %v716
  %v821 = vpack.c.b16 %v725, %v721
  %v822 = vpack.c.b16 %v726, %v722
  %v823 = vpack.c.b16 %v727, %v723
  %v824 = vpack.c.b16 %v728, %v724
  %v825 = vpack.c.b16 %v733, %v729
  %v826 = vpack.c.b16 %v734, %v730
  %v827 = vpack.c.b16 %v735, %v731
  %v828 = vpack.c.b16 %v736, %v732
  %v829 = vpack.c.b16 %v741, %v737
  %v830 = vpack.c.b16 %v742, %v738
  %v831 = vpack.c.b16 %v743, %v739
  %v832 = vpack.c.b16 %v744, %v740
  %v833 = vpack.c.b16 %v749, %v745
  %v834 = vpack.c.b16 %v750, %v746
  %v835 = vpack.c.b16 %v751, %v747
  %v836 = vpack.c.b16 %v752, %v748
  %v837 = vpack.c.b16 %v757, %v753
  %v838 = vpack.c.b16 %v758, %v754
  %v839 = vpack.c.b16 %v759, %v755
  %v840 = vpack.c.b16 %v760, %v756
  %v841 = vpack.c.b16 %v765, %v761
  %v842 = vpack.c.b16 %v766, %v762
  %v843 = vpack.c.b16 %v767, %v763
  %v844 = vpack.c.b16 %v768, %v764
  %v845 = vpack.c.b16 %v773, %v769
  %v846 = vpack.c.b16 %v774, %v770
  %v847 = vpack.c.b16 %v775, %v771
  %v848 = vpack.c.b16 %v776, %v772
  %v849 = vpack.c.b16 %v781, %v777
  %v850 = vpack.c.b16 %v782, %v778
  %v851 = vpack.c.b16 %v783, %v779
  %v852 = vpack.c.b16 %v784, %v780
  %v853 = vpack.c.b16 %v789, %v785
  %v854 = vpack.c.b16 %v790, %v786
  %v855 = vpack.c.b16 %v791, %v787
  %v856 = vpack.c.b16 %v792, %v788
  %921 = vmatprep.subr.bf16.mxu0 %v794
  %922 = vmatpush1.bf16.msra.mxu0 %v793
  %923 = vmatprep.subr.bf16.mxu0 %v798
  %924 = vmatpush1.bf16.msra.mxu0 %v797
  %925 = vmatprep.subr.bf16.mxu0 %v802
  %926 = vmatpush1.bf16.msra.mxu0 %v801
  %927 = vmatprep.subr.bf16.mxu0 %v806
  %928 = vmatpush1.bf16.msra.mxu0 %v805
  %929 = vmatprep.subr.bf16.mxu0 %v810
  %930 = vmatpush1.bf16.msra.mxu0 %v809
  %931 = vmatprep.subr.bf16.mxu0 %v814
  %932 = vmatpush1.bf16.msra.mxu0 %v813
  %933 = vmatprep.subr.bf16.mxu0 %v818
  %934 = vmatpush1.bf16.msra.mxu0 %v817
  %935 = vmatprep.subr.bf16.mxu0 %v822
  %936 = vmatpush1.bf16.msra.mxu0 %v821
  %937 = vmatprep.subr.bf16.mxu0 %v826
  %938 = vmatpush1.bf16.msra.mxu0 %v825
  %939 = vmatprep.subr.bf16.mxu0 %v830
  %940 = vmatpush1.bf16.msra.mxu0 %v829
  %941 = vmatprep.subr.bf16.mxu0 %v834
  %942 = vmatpush1.bf16.msra.mxu0 %v833
  %943 = vmatprep.subr.bf16.mxu0 %v838
  %944 = vmatpush1.bf16.msra.mxu0 %v837
  %945 = vmatprep.subr.bf16.mxu0 %v842
  %946 = vmatpush1.bf16.msra.mxu0 %v841
  %947 = vmatprep.subr.bf16.mxu0 %v846
  %948 = vmatpush1.bf16.msra.mxu0 %v845
  %949 = vmatprep.subr.bf16.mxu0 %v850
  %950 = vmatpush1.bf16.msra.mxu0 %v849
  %951 = vmatprep.subr.bf16.mxu0 %v854
  %952 = vmatpush1.bf16.msra.mxu0 %v853
  %953 = vmatprep.mubr.bf16.mxu0 %v131
  %954 = vmatmul.mubr.bf16.gmra.mrb[0].mxu0 %v130
  %v955 = vpop.f32.mrb[0].mxu0
  %v956 = vadd.f32 %v554, %v955
  %v957 = vpop.f32.mrb[0].mxu0
  %v958 = vadd.f32 %v556, %v957
  %v959 = vpop.f32.mrb[0].mxu0
  %v960 = vpop.f32.mrb[0].mxu0
  %961 = vdwg.mxu0
  %962 = vmatprep.subr.bf16.mxu0 %v796
  %963 = vmatpush1.bf16.msra.mxu0 %v795
  %964 = vmatprep.subr.bf16.mxu0 %v800
  %965 = vmatpush1.bf16.msra.mxu0 %v799
  %966 = vmatprep.subr.bf16.mxu0 %v804
  %967 = vmatpush1.bf16.msra.mxu0 %v803
  %968 = vmatprep.subr.bf16.mxu0 %v808
  %969 = vmatpush1.bf16.msra.mxu0 %v807
  %970 = vmatprep.subr.bf16.mxu0 %v812
  %971 = vmatpush1.bf16.msra.mxu0 %v811
  %972 = vmatprep.subr.bf16.mxu0 %v816
  %973 = vmatpush1.bf16.msra.mxu0 %v815
  %974 = vmatprep.subr.bf16.mxu0 %v820
  %975 = vmatpush1.bf16.msra.mxu0 %v819
  %976 = vmatprep.subr.bf16.mxu0 %v824
  %977 = vmatpush1.bf16.msra.mxu0 %v823
  %978 = vmatprep.subr.bf16.mxu0 %v828
  %979 = vmatpush1.bf16.msra.mxu0 %v827
  %980 = vmatprep.subr.bf16.mxu0 %v832
  %981 = vmatpush1.bf16.msra.mxu0 %v831
  %982 = vmatprep.subr.bf16.mxu0 %v836
  %983 = vmatpush1.bf16.msra.mxu0 %v835
  %984 = vmatprep.subr.bf16.mxu0 %v840
  %985 = vmatpush1.bf16.msra.mxu0 %v839
  %986 = vmatprep.subr.bf16.mxu0 %v844
  %987 = vmatpush1.bf16.msra.mxu0 %v843
  %988 = vmatprep.subr.bf16.mxu0 %v848
  %989 = vmatpush1.bf16.msra.mxu0 %v847
  %990 = vmatprep.subr.bf16.mxu0 %v852
  %991 = vmatpush1.bf16.msra.mxu0 %v851
  %992 = vmatprep.subr.bf16.mxu0 %v856
  %993 = vmatpush1.bf16.msra.mxu0 %v855
  %994 = vmatprep.mubr.bf16.mxu0 %v131
  %995 = vmatmul.mubr.bf16.gmra.mrb[0].mxu0 %v130
  %v996 = vpop.f32.mrb[0].mxu0
  %v997 = vadd.f32 %v595, %v996
  %v998 = vpop.f32.mrb[0].mxu0
  %v999 = vadd.f32 %v597, %v998
  %v1000 = vpop.f32.mrb[0].mxu0
  %v1001 = vpop.f32.mrb[0].mxu0
  %1002 = vdwg.mxu0
  %s1003 = scalar_lea.vmem %s1, 1024
  %v1004 = vld [vmem:[%s1003] sm:$0xff]
  %v1005 = vld [vmem:[%s1003 + $0x8] sm:$0xff]
  %v1006 = vld [vmem:[%s1003 + $0x10] sm:$0xff]
  %v1007 = vld [vmem:[%s1003 + $0x18] sm:$0xff]
  %v1008 = vld [vmem:[%s1003 + $0x20] sm:$0xff]
  %v1009 = vld [vmem:[%s1003 + $0x28] sm:$0xff]
  %v1010 = vld [vmem:[%s1003 + $0x30] sm:$0xff]
  %v1011 = vld [vmem:[%s1003 + $0x38] sm:$0xff]
  %v1012 = vld [vmem:[%s1003 + $0x40] sm:$0xff]
  %v1013 = vld [vmem:[%s1003 + $0x48] sm:$0xff]
  %v1014 = vld [vmem:[%s1003 + $0x50] sm:$0xff]
  %v1015 = vld [vmem:[%s1003 + $0x58] sm:$0xff]
  %v1016 = vld [vmem:[%s1003 + $0x60] sm:$0xff]
  %v1017 = vld [vmem:[%s1003 + $0x68] sm:$0xff]
  %v1018 = vld [vmem:[%s1003 + $0x70] sm:$0xff]
  %v1019 = vld [vmem:[%s1003 + $0x78] sm:$0xff]
  %v1020 = vld [vmem:[%s1003 + $0x80] sm:$0xff]
  %v1021 = vld [vmem:[%s1003 + $0x88] sm:$0xff]
  %v1022 = vld [vmem:[%s1003 + $0x90] sm:$0xff]
  %v1023 = vld [vmem:[%s1003 + $0x98] sm:$0xff]
  %v1024 = vld [vmem:[%s1003 + $0xa0] sm:$0xff]
  %v1025 = vld [vmem:[%s1003 + $0xa8] sm:$0xff]
  %v1026 = vld [vmem:[%s1003 + $0xb0] sm:$0xff]
  %v1027 = vld [vmem:[%s1003 + $0xb8] sm:$0xff]
  %v1028 = vld [vmem:[%s1003 + $0xc0] sm:$0xff]
  %v1029 = vld [vmem:[%s1003 + $0xc8] sm:$0xff]
  %v1030 = vld [vmem:[%s1003 + $0xd0] sm:$0xff]
  %v1031 = vld [vmem:[%s1003 + $0xd8] sm:$0xff]
  %v1032 = vld [vmem:[%s1003 + $0xe0] sm:$0xff]
  %v1033 = vld [vmem:[%s1003 + $0xe8] sm:$0xff]
  %v1034 = vld [vmem:[%s1003 + $0xf0] sm:$0xff]
  %v1035 = vld [vmem:[%s1003 + $0xf8] sm:$0xff]
  %v1036 = vld [vmem:[%s1003 + $0x100] sm:$0xff]
  %v1037 = vld [vmem:[%s1003 + $0x108] sm:$0xff]
  %v1038 = vld [vmem:[%s1003 + $0x110] sm:$0xff]
  %v1039 = vld [vmem:[%s1003 + $0x118] sm:$0xff]
  %v1040 = vld [vmem:[%s1003 + $0x120] sm:$0xff]
  %v1041 = vld [vmem:[%s1003 + $0x128] sm:$0xff]
  %v1042 = vld [vmem:[%s1003 + $0x130] sm:$0xff]
  %v1043 = vld [vmem:[%s1003 + $0x138] sm:$0xff]
  %v1044 = vld [vmem:[%s1003 + $0x140] sm:$0xff]
  %v1045 = vld [vmem:[%s1003 + $0x148] sm:$0xff]
  %v1046 = vld [vmem:[%s1003 + $0x150] sm:$0xff]
  %v1047 = vld [vmem:[%s1003 + $0x158] sm:$0xff]
  %v1048 = vld [vmem:[%s1003 + $0x160] sm:$0xff]
  %v1049 = vld [vmem:[%s1003 + $0x168] sm:$0xff]
  %v1050 = vld [vmem:[%s1003 + $0x170] sm:$0xff]
  %v1051 = vld [vmem:[%s1003 + $0x178] sm:$0xff]
  %v1052 = vld [vmem:[%s1003 + $0x180] sm:$0xff]
  %v1053 = vld [vmem:[%s1003 + $0x188] sm:$0xff]
  %v1054 = vld [vmem:[%s1003 + $0x190] sm:$0xff]
  %v1055 = vld [vmem:[%s1003 + $0x198] sm:$0xff]
  %v1056 = vld [vmem:[%s1003 + $0x1a0] sm:$0xff]
  %v1057 = vld [vmem:[%s1003 + $0x1a8] sm:$0xff]
  %v1058 = vld [vmem:[%s1003 + $0x1b0] sm:$0xff]
  %v1059 = vld [vmem:[%s1003 + $0x1b8] sm:$0xff]
  %v1060 = vld [vmem:[%s1003 + $0x1c0] sm:$0xff]
  %v1061 = vld [vmem:[%s1003 + $0x1c8] sm:$0xff]
  %v1062 = vld [vmem:[%s1003 + $0x1d0] sm:$0xff]
  %v1063 = vld [vmem:[%s1003 + $0x1d8] sm:$0xff]
  %v1064 = vld [vmem:[%s1003 + $0x1e0] sm:$0xff]
  %v1065 = vld [vmem:[%s1003 + $0x1e8] sm:$0xff]
  %v1066 = vld [vmem:[%s1003 + $0x1f0] sm:$0xff]
  %v1067 = vld [vmem:[%s1003 + $0x1f8] sm:$0xff]
  %v1068 = vpack.c.bf16 %v44, %v44
  %v1069 = vpack.c.bf16 %v45, %v45
  %v1134 = vunpack.c.l.b16 %v1004
  %v1135 = vunpack.c.h.b16 %v1004
  %v1136 = vunpack.c.l.b16 %v1005
  %v1137 = vunpack.c.h.b16 %v1005
  %v1138 = vunpack.c.l.b16 %v1006
  %v1139 = vunpack.c.h.b16 %v1006
  %v1140 = vunpack.c.l.b16 %v1007
  %v1141 = vunpack.c.h.b16 %v1007
  %v1142 = vunpack.c.l.b16 %v1008
  %v1143 = vunpack.c.h.b16 %v1008
  %v1144 = vunpack.c.l.b16 %v1009
  %v1145 = vunpack.c.h.b16 %v1009
  %v1146 = vunpack.c.l.b16 %v1010
  %v1147 = vunpack.c.h.b16 %v1010
  %v1148 = vunpack.c.l.b16 %v1011
  %v1149 = vunpack.c.h.b16 %v1011
  %v1150 = vunpack.c.l.b16 %v1012
  %v1151 = vunpack.c.h.b16 %v1012
  %v1152 = vunpack.c.l.b16 %v1013
  %v1153 = vunpack.c.h.b16 %v1013
  %v1154 = vunpack.c.l.b16 %v1014
  %v1155 = vunpack.c.h.b16 %v1014
  %v1156 = vunpack.c.l.b16 %v1015
  %v1157 = vunpack.c.h.b16 %v1015
  %v1158 = vunpack.c.l.b16 %v1016
  %v1159 = vunpack.c.h.b16 %v1016
  %v1160 = vunpack.c.l.b16 %v1017
  %v1161 = vunpack.c.h.b16 %v1017
  %v1162 = vunpack.c.l.b16 %v1018
  %v1163 = vunpack.c.h.b16 %v1018
  %v1164 = vunpack.c.l.b16 %v1019
  %v1165 = vunpack.c.h.b16 %v1019
  %v1166 = vunpack.c.l.b16 %v1020
  %v1167 = vunpack.c.h.b16 %v1020
  %v1168 = vunpack.c.l.b16 %v1021
  %v1169 = vunpack.c.h.b16 %v1021
  %v1170 = vunpack.c.l.b16 %v1022
  %v1171 = vunpack.c.h.b16 %v1022
  %v1172 = vunpack.c.l.b16 %v1023
  %v1173 = vunpack.c.h.b16 %v1023
  %v1174 = vunpack.c.l.b16 %v1024
  %v1175 = vunpack.c.h.b16 %v1024
  %v1176 = vunpack.c.l.b16 %v1025
  %v1177 = vunpack.c.h.b16 %v1025
  %v1178 = vunpack.c.l.b16 %v1026
  %v1179 = vunpack.c.h.b16 %v1026
  %v1180 = vunpack.c.l.b16 %v1027
  %v1181 = vunpack.c.h.b16 %v1027
  %v1182 = vunpack.c.l.b16 %v1028
  %v1183 = vunpack.c.h.b16 %v1028
  %v1184 = vunpack.c.l.b16 %v1029
  %v1185 = vunpack.c.h.b16 %v1029
  %v1186 = vunpack.c.l.b16 %v1030
  %v1187 = vunpack.c.h.b16 %v1030
  %v1188 = vunpack.c.l.b16 %v1031
  %v1189 = vunpack.c.h.b16 %v1031
  %v1190 = vunpack.c.l.b16 %v1032
  %v1191 = vunpack.c.h.b16 %v1032
  %v1192 = vunpack.c.l.b16 %v1033
  %v1193 = vunpack.c.h.b16 %v1033
  %v1194 = vunpack.c.l.b16 %v1034
  %v1195 = vunpack.c.h.b16 %v1034
  %v1196 = vunpack.c.l.b16 %v1035
  %v1197 = vunpack.c.h.b16 %v1035
  %v1198 = vunpack.c.l.b16 %v1036
  %v1199 = vunpack.c.h.b16 %v1036
  %v1200 = vunpack.c.l.b16 %v1037
  %v1201 = vunpack.c.h.b16 %v1037
  %v1202 = vunpack.c.l.b16 %v1038
  %v1203 = vunpack.c.h.b16 %v1038
  %v1204 = vunpack.c.l.b16 %v1039
  %v1205 = vunpack.c.h.b16 %v1039
  %v1206 = vunpack.c.l.b16 %v1040
  %v1207 = vunpack.c.h.b16 %v1040
  %v1208 = vunpack.c.l.b16 %v1041
  %v1209 = vunpack.c.h.b16 %v1041
  %v1210 = vunpack.c.l.b16 %v1042
  %v1211 = vunpack.c.h.b16 %v1042
  %v1212 = vunpack.c.l.b16 %v1043
  %v1213 = vunpack.c.h.b16 %v1043
  %v1214 = vunpack.c.l.b16 %v1044
  %v1215 = vunpack.c.h.b16 %v1044
  %v1216 = vunpack.c.l.b16 %v1045
  %v1217 = vunpack.c.h.b16 %v1045
  %v1218 = vunpack.c.l.b16 %v1046
  %v1219 = vunpack.c.h.b16 %v1046
  %v1220 = vunpack.c.l.b16 %v1047
  %v1221 = vunpack.c.h.b16 %v1047
  %v1222 = vunpack.c.l.b16 %v1048
  %v1223 = vunpack.c.h.b16 %v1048
  %v1224 = vunpack.c.l.b16 %v1049
  %v1225 = vunpack.c.h.b16 %v1049
  %v1226 = vunpack.c.l.b16 %v1050
  %v1227 = vunpack.c.h.b16 %v1050
  %v1228 = vunpack.c.l.b16 %v1051
  %v1229 = vunpack.c.h.b16 %v1051
  %v1230 = vunpack.c.l.b16 %v1052
  %v1231 = vunpack.c.h.b16 %v1052
  %v1232 = vunpack.c.l.b16 %v1053
  %v1233 = vunpack.c.h.b16 %v1053
  %v1234 = vunpack.c.l.b16 %v1054
  %v1235 = vunpack.c.h.b16 %v1054
  %v1236 = vunpack.c.l.b16 %v1055
  %v1237 = vunpack.c.h.b16 %v1055
  %v1238 = vunpack.c.l.b16 %v1056
  %v1239 = vunpack.c.h.b16 %v1056
  %v1240 = vunpack.c.l.b16 %v1057
  %v1241 = vunpack.c.h.b16 %v1057
  %v1242 = vunpack.c.l.b16 %v1058
  %v1243 = vunpack.c.h.b16 %v1058
  %v1244 = vunpack.c.l.b16 %v1059
  %v1245 = vunpack.c.h.b16 %v1059
  %v1246 = vunpack.c.l.b16 %v1060
  %v1247 = vunpack.c.h.b16 %v1060
  %v1248 = vunpack.c.l.b16 %v1061
  %v1249 = vunpack.c.h.b16 %v1061
  %v1250 = vunpack.c.l.b16 %v1062
  %v1251 = vunpack.c.h.b16 %v1062
  %v1252 = vunpack.c.l.b16 %v1063
  %v1253 = vunpack.c.h.b16 %v1063
  %v1254 = vunpack.c.l.b16 %v1064
  %v1255 = vunpack.c.h.b16 %v1064
  %v1256 = vunpack.c.l.b16 %v1065
  %v1257 = vunpack.c.h.b16 %v1065
  %v1258 = vunpack.c.l.b16 %v1066
  %v1259 = vunpack.c.h.b16 %v1066
  %v1260 = vunpack.c.l.b16 %v1067
  %v1261 = vunpack.c.h.b16 %v1067
  %v1262 = vpack.c.b16 %v1138, %v1134
  %v1263 = vpack.c.b16 %v1139, %v1135
  %v1264 = vpack.c.b16 %v1140, %v1136
  %v1265 = vpack.c.b16 %v1141, %v1137
  %v1266 = vpack.c.b16 %v1146, %v1142
  %v1267 = vpack.c.b16 %v1147, %v1143
  %v1268 = vpack.c.b16 %v1148, %v1144
  %v1269 = vpack.c.b16 %v1149, %v1145
  %v1270 = vpack.c.b16 %v1154, %v1150
  %v1271 = vpack.c.b16 %v1155, %v1151
  %v1272 = vpack.c.b16 %v1156, %v1152
  %v1273 = vpack.c.b16 %v1157, %v1153
  %v1274 = vpack.c.b16 %v1162, %v1158
  %v1275 = vpack.c.b16 %v1163, %v1159
  %v1276 = vpack.c.b16 %v1164, %v1160
  %v1277 = vpack.c.b16 %v1165, %v1161
  %v1278 = vpack.c.b16 %v1170, %v1166
  %v1279 = vpack.c.b16 %v1171, %v1167
  %v1280 = vpack.c.b16 %v1172, %v1168
  %v1281 = vpack.c.b16 %v1173, %v1169
  %v1282 = vpack.c.b16 %v1178, %v1174
  %v1283 = vpack.c.b16 %v1179, %v1175
  %v1284 = vpack.c.b16 %v1180, %v1176
  %v1285 = vpack.c.b16 %v1181, %v1177
  %v1286 = vpack.c.b16 %v1186, %v1182
  %v1287 = vpack.c.b16 %v1187, %v1183
  %v1288 = vpack.c.b16 %v1188, %v1184
  %v1289 = vpack.c.b16 %v1189, %v1185
  %v1290 = vpack.c.b16 %v1194, %v1190
  %v1291 = vpack.c.b16 %v1195, %v1191
  %v1292 = vpack.c.b16 %v1196, %v1192
  %v1293 = vpack.c.b16 %v1197, %v1193
  %v1294 = vpack.c.b16 %v1202, %v1198
  %v1295 = vpack.c.b16 %v1203, %v1199
  %v1296 = vpack.c.b16 %v1204, %v1200
  %v1297 = vpack.c.b16 %v1205, %v1201
  %v1298 = vpack.c.b16 %v1210, %v1206
  %v1299 = vpack.c.b16 %v1211, %v1207
  %v1300 = vpack.c.b16 %v1212, %v1208
  %v1301 = vpack.c.b16 %v1213, %v1209
  %v1302 = vpack.c.b16 %v1218, %v1214
  %v1303 = vpack.c.b16 %v1219, %v1215
  %v1304 = vpack.c.b16 %v1220, %v1216
  %v1305 = vpack.c.b16 %v1221, %v1217
  %v1306 = vpack.c.b16 %v1226, %v1222
  %v1307 = vpack.c.b16 %v1227, %v1223
  %v1308 = vpack.c.b16 %v1228, %v1224
  %v1309 = vpack.c.b16 %v1229, %v1225
  %v1310 = vpack.c.b16 %v1234, %v1230
  %v1311 = vpack.c.b16 %v1235, %v1231
  %v1312 = vpack.c.b16 %v1236, %v1232
  %v1313 = vpack.c.b16 %v1237, %v1233
  %v1314 = vpack.c.b16 %v1242, %v1238
  %v1315 = vpack.c.b16 %v1243, %v1239
  %v1316 = vpack.c.b16 %v1244, %v1240
  %v1317 = vpack.c.b16 %v1245, %v1241
  %v1318 = vpack.c.b16 %v1250, %v1246
  %v1319 = vpack.c.b16 %v1251, %v1247
  %v1320 = vpack.c.b16 %v1252, %v1248
  %v1321 = vpack.c.b16 %v1253, %v1249
  %v1322 = vpack.c.b16 %v1258, %v1254
  %v1323 = vpack.c.b16 %v1259, %v1255
  %v1324 = vpack.c.b16 %v1260, %v1256
  %v1325 = vpack.c.b16 %v1261, %v1257
  %1390 = vmatprep.subr.bf16.mxu0 %v1263
  %1391 = vmatpush1.bf16.msra.mxu0 %v1262
  %1392 = vmatprep.subr.bf16.mxu0 %v1267
  %1393 = vmatpush1.bf16.msra.mxu0 %v1266
  %1394 = vmatprep.subr.bf16.mxu0 %v1271
  %1395 = vmatpush1.bf16.msra.mxu0 %v1270
  %1396 = vmatprep.subr.bf16.mxu0 %v1275
  %1397 = vmatpush1.bf16.msra.mxu0 %v1274
  %1398 = vmatprep.subr.bf16.mxu0 %v1279
  %1399 = vmatpush1.bf16.msra.mxu0 %v1278
  %1400 = vmatprep.subr.bf16.mxu0 %v1283
  %1401 = vmatpush1.bf16.msra.mxu0 %v1282
  %1402 = vmatprep.subr.bf16.mxu0 %v1287
  %1403 = vmatpush1.bf16.msra.mxu0 %v1286
  %1404 = vmatprep.subr.bf16.mxu0 %v1291
  %1405 = vmatpush1.bf16.msra.mxu0 %v1290
  %1406 = vmatprep.subr.bf16.mxu0 %v1295
  %1407 = vmatpush1.bf16.msra.mxu0 %v1294
  %1408 = vmatprep.subr.bf16.mxu0 %v1299
  %1409 = vmatpush1.bf16.msra.mxu0 %v1298
  %1410 = vmatprep.subr.bf16.mxu0 %v1303
  %1411 = vmatpush1.bf16.msra.mxu0 %v1302
  %1412 = vmatprep.subr.bf16.mxu0 %v1307
  %1413 = vmatpush1.bf16.msra.mxu0 %v1306
  %1414 = vmatprep.subr.bf16.mxu0 %v1311
  %1415 = vmatpush1.bf16.msra.mxu0 %v1310
  %1416 = vmatprep.subr.bf16.mxu0 %v1315
  %1417 = vmatpush1.bf16.msra.mxu0 %v1314
  %1418 = vmatprep.subr.bf16.mxu0 %v1319
  %1419 = vmatpush1.bf16.msra.mxu0 %v1318
  %1420 = vmatprep.subr.bf16.mxu0 %v1323
  %1421 = vmatpush1.bf16.msra.mxu0 %v1322
  %1422 = vmatprep.mubr.bf16.mxu0 %v1069
  %1423 = vmatmul.mubr.bf16.gmra.mrb[0].mxu0 %v1068
  %v1424 = vpop.f32.mrb[0].mxu0
  %v1425 = vadd.f32 0.0, %v1424
  %v1426 = vpop.f32.mrb[0].mxu0
  %v1427 = vadd.f32 0.0, %v1426
  %v1428 = vpop.f32.mrb[0].mxu0
  %v1429 = vpop.f32.mrb[0].mxu0
  %1430 = vdwg.mxu0
  %1431 = vmatprep.subr.bf16.mxu0 %v1265
  %1432 = vmatpush1.bf16.msra.mxu0 %v1264
  %1433 = vmatprep.subr.bf16.mxu0 %v1269
  %1434 = vmatpush1.bf16.msra.mxu0 %v1268
  %1435 = vmatprep.subr.bf16.mxu0 %v1273
  %1436 = vmatpush1.bf16.msra.mxu0 %v1272
  %1437 = vmatprep.subr.bf16.mxu0 %v1277
  %1438 = vmatpush1.bf16.msra.mxu0 %v1276
  %1439 = vmatprep.subr.bf16.mxu0 %v1281
  %1440 = vmatpush1.bf16.msra.mxu0 %v1280
  %1441 = vmatprep.subr.bf16.mxu0 %v1285
  %1442 = vmatpush1.bf16.msra.mxu0 %v1284
  %1443 = vmatprep.subr.bf16.mxu0 %v1289
  %1444 = vmatpush1.bf16.msra.mxu0 %v1288
  %1445 = vmatprep.subr.bf16.mxu0 %v1293
  %1446 = vmatpush1.bf16.msra.mxu0 %v1292
  %1447 = vmatprep.subr.bf16.mxu0 %v1297
  %1448 = vmatpush1.bf16.msra.mxu0 %v1296
  %1449 = vmatprep.subr.bf16.mxu0 %v1301
  %1450 = vmatpush1.bf16.msra.mxu0 %v1300
  %1451 = vmatprep.subr.bf16.mxu0 %v1305
  %1452 = vmatpush1.bf16.msra.mxu0 %v1304
  %1453 = vmatprep.subr.bf16.mxu0 %v1309
  %1454 = vmatpush1.bf16.msra.mxu0 %v1308
  %1455 = vmatprep.subr.bf16.mxu0 %v1313
  %1456 = vmatpush1.bf16.msra.mxu0 %v1312
  %1457 = vmatprep.subr.bf16.mxu0 %v1317
  %1458 = vmatpush1.bf16.msra.mxu0 %v1316
  %1459 = vmatprep.subr.bf16.mxu0 %v1321
  %1460 = vmatpush1.bf16.msra.mxu0 %v1320
  %1461 = vmatprep.subr.bf16.mxu0 %v1325
  %1462 = vmatpush1.bf16.msra.mxu0 %v1324
  %1463 = vmatprep.mubr.bf16.mxu0 %v1069
  %1464 = vmatmul.mubr.bf16.gmra.mrb[0].mxu0 %v1068
  %v1465 = vpop.f32.mrb[0].mxu0
  %v1466 = vadd.f32 0.0, %v1465
  %v1467 = vpop.f32.mrb[0].mxu0
  %v1468 = vadd.f32 0.0, %v1467
  %v1469 = vpop.f32.mrb[0].mxu0
  %v1470 = vpop.f32.mrb[0].mxu0
  %1471 = vdwg.mxu0
  %v1472 = vadd.f32 %v956, %v1425
  %v1473 = vadd.f32 %v958, %v1427
  %v1474 = vadd.f32 %v997, %v1466
  %v1475 = vadd.f32 %v999, %v1468
  %v1476 = vld [vmem:[%s2] sm:$0xff]
  %v1477 = vrot.slane %v1472, 4
  %v1478 = vadd.f32 %v1472, %v1477
  %v1479 = vrot.slane %v1478, 2
  %v1480 = vadd.f32 %v1478, %v1479
  %v1481 = vrot.slane %v1480, 1
  %v1482 = vadd.f32 %v1480, %v1481
  %v1483 = vrot.slane %v1473, 4
  %v1484 = vadd.f32 %v1473, %v1483
  %v1485 = vrot.slane %v1484, 2
  %v1486 = vadd.f32 %v1484, %v1485
  %v1487 = vrot.slane %v1486, 1
  %v1488 = vadd.f32 %v1486, %v1487
  %v1489 = vrot.slane %v1474, 4
  %v1490 = vadd.f32 %v1474, %v1489
  %v1491 = vrot.slane %v1490, 2
  %v1492 = vadd.f32 %v1490, %v1491
  %v1493 = vrot.slane %v1492, 1
  %v1494 = vadd.f32 %v1492, %v1493
  %v1495 = vrot.slane %v1475, 4
  %v1496 = vadd.f32 %v1475, %v1495
  %v1497 = vrot.slane %v1496, 2
  %v1498 = vadd.f32 %v1496, %v1497
  %v1499 = vrot.slane %v1498, 1
  %v1500 = vadd.f32 %v1498, %v1499
  %v1501 = vrcp.pop 8.0
  %v1502 = vmul.f32 %v1482, %v1501
  %v1503 = vmul.f32 %v1488, %v1501
  %v1504 = vmul.f32 %v1494, %v1501
  %v1505 = vmul.f32 %v1500, %v1501
  %v1506 = vsub.f32 %v1472, %v1502
  %v1507 = vsub.f32 %v1473, %v1503
  %v1508 = vsub.f32 %v1474, %v1504
  %v1509 = vsub.f32 %v1475, %v1505
  %v1510 = vmul.f32 %v1506, %v1506
  %v1511 = vmul.f32 %v1507, %v1507
  %v1512 = vmul.f32 %v1508, %v1508
  %v1513 = vmul.f32 %v1509, %v1509
  %v1514 = vrot.slane %v1510, 4
  %v1515 = vadd.f32 %v1510, %v1514
  %v1516 = vrot.slane %v1515, 2
  %v1517 = vadd.f32 %v1515, %v1516
  %v1518 = vrot.slane %v1517, 1
  %v1519 = vadd.f32 %v1517, %v1518
  %v1520 = vrot.slane %v1511, 4
  %v1521 = vadd.f32 %v1511, %v1520
  %v1522 = vrot.slane %v1521, 2
  %v1523 = vadd.f32 %v1521, %v1522
  %v1524 = vrot.slane %v1523, 1
  %v1525 = vadd.f32 %v1523, %v1524
  %v1526 = vrot.slane %v1512, 4
  %v1527 = vadd.f32 %v1512, %v1526
  %v1528 = vrot.slane %v1527, 2
  %v1529 = vadd.f32 %v1527, %v1528
  %v1530 = vrot.slane %v1529, 1
  %v1531 = vadd.f32 %v1529, %v1530
  %v1532 = vrot.slane %v1513, 4
  %v1533 = vadd.f32 %v1513, %v1532
  %v1534 = vrot.slane %v1533, 2
  %v1535 = vadd.f32 %v1533, %v1534
  %v1536 = vrot.slane %v1535, 1
  %v1537 = vadd.f32 %v1535, %v1536
  %v1538 = vmul.f32 %v1519, %v1501
  %v1539 = vmul.f32 %v1525, %v1501
  %v1540 = vmul.f32 %v1531, %v1501
  %v1541 = vmul.f32 %v1537, %v1501
  %v1542 = vadd.f32 %v1538, 1e-05
  %v1543 = vadd.f32 %v1539, 1e-05
  %v1544 = vadd.f32 %v1540, 1e-05
  %v1545 = vadd.f32 %v1541, 1e-05
  %v1546 = vrsqrt.pop %v1542
  %v1547 = vrsqrt.pop %v1543
  %v1548 = vrsqrt.pop %v1544
  %v1549 = vrsqrt.pop %v1545
  %v1550 = vmul.f32 %v1506, %v1546
  %v1551 = vmul.f32 %v1507, %v1547
  %v1552 = vmul.f32 %v1508, %v1548
  %v1553 = vmul.f32 %v1509, %v1549
  %v1555 = vlaneseq
  %v1556 = vshrl.u32 %v1555, 7
  %v1557 = vsub.s32 0, %v1556
  %v1558 = vrot.slane %v1476, %v1557
  %v1559 = vlaneseq
  %v1560 = vshrl.u32 %v1559, 7
  %v1561 = vsub.s32 2, %v1560
  %v1562 = vrot.slane %v1476, %v1561
  %v1563 = vlaneseq
  %v1564 = vshrl.u32 %v1563, 7
  %v1565 = vsub.s32 4, %v1564
  %v1566 = vrot.slane %v1476, %v1565
  %v1567 = vlaneseq
  %v1568 = vshrl.u32 %v1567, 7
  %v1569 = vsub.s32 6, %v1568
  %v1570 = vrot.slane %v1476, %v1569
  %v1575 = vlaneseq
  %v1576 = vshrl.u32 %v1575, 7
  %v1577 = vsub.s32 0, %v1576
  %v1578 = vrot.slane %v1558, %v1577
  %v1579 = vlaneseq
  %v1580 = vshrl.u32 %v1579, 7
  %v1581 = vsub.s32 0, %v1580
  %v1582 = vrot.slane %v1562, %v1581
  %v1583 = vlaneseq
  %v1584 = vshrl.u32 %v1583, 7
  %v1585 = vsub.s32 0, %v1584
  %v1586 = vrot.slane %v1566, %v1585
  %v1587 = vlaneseq
  %v1588 = vshrl.u32 %v1587, 7
  %v1589 = vsub.s32 0, %v1588
  %v1590 = vrot.slane %v1570, %v1589
  %v1591 = vmul.f32 %v1550, %v1578
  %v1592 = vmul.f32 %v1551, %v1582
  %v1593 = vmul.f32 %v1552, %v1586
  %v1594 = vmul.f32 %v1553, %v1590
  %v1595 = vlaneseq
  %v1596 = vshrl.u32 %v1595, 7
  %v1597 = vsub.s32 1, %v1596
  %v1598 = vrot.slane %v1476, %v1597
  %v1599 = vlaneseq
  %v1600 = vshrl.u32 %v1599, 7
  %v1601 = vsub.s32 3, %v1600
  %v1602 = vrot.slane %v1476, %v1601
  %v1603 = vlaneseq
  %v1604 = vshrl.u32 %v1603, 7
  %v1605 = vsub.s32 5, %v1604
  %v1606 = vrot.slane %v1476, %v1605
  %v1607 = vlaneseq
  %v1608 = vshrl.u32 %v1607, 7
  %v1609 = vsub.s32 7, %v1608
  %v1610 = vrot.slane %v1476, %v1609
  %v1615 = vlaneseq
  %v1616 = vshrl.u32 %v1615, 7
  %v1617 = vsub.s32 1, %v1616
  %v1618 = vrot.slane %v1598, %v1617
  %v1619 = vlaneseq
  %v1620 = vshrl.u32 %v1619, 7
  %v1621 = vsub.s32 1, %v1620
  %v1622 = vrot.slane %v1602, %v1621
  %v1623 = vlaneseq
  %v1624 = vshrl.u32 %v1623, 7
  %v1625 = vsub.s32 1, %v1624
  %v1626 = vrot.slane %v1606, %v1625
  %v1627 = vlaneseq
  %v1628 = vshrl.u32 %v1627, 7
  %v1629 = vsub.s32 1, %v1628
  %v1630 = vrot.slane %v1610, %v1629
  %v1631 = vadd.f32 %v1591, %v1618
  %v1632 = vadd.f32 %v1592, %v1622
  %v1633 = vadd.f32 %v1593, %v1626
  %v1634 = vadd.f32 %v1594, %v1630
  %v1635 = vmax.f32 %v1631, 0.0
  %v1636 = vmax.f32 %v1632, 0.0
  %v1637 = vmax.f32 %v1633, 0.0
  %v1638 = vmax.f32 %v1634, 0.0
  %1639 = vst [vmem:[#allocation3] sm:$0xff] 0.0
  %1640 = vst [vmem:[#allocation3 + $0x8] sm:$0xff] 0.0
  %1641 = vst [vmem:[#allocation3 + $0x10] sm:$0xff] 0.0
  %1642 = vst [vmem:[#allocation3 + $0x18] sm:$0xff] 0.0
  %1643 = vst [vmem:[#allocation3 + $0x20] sm:$0x3] 0.0
  %1644 = vst [vmem:[#allocation3 + $0x28] sm:$0x3] 0.0
  %1645 = vst [vmem:[#allocation3 + $0x30] sm:$0x3] 0.0
  %1646 = vst [vmem:[#allocation3 + $0x38] sm:$0x3] 0.0
  %v1651 = vrot.slane %v1635, 7
  %v1652 = vrot.slane %v1636, 7
  %v1653 = vrot.slane %v1637, 7
  %v1654 = vrot.slane %v1638, 7
  %1659 = vst [vmem:[#allocation3] sm:$0xfe] %v1651
  %1660 = vst [vmem:[#allocation3 + $0x8] sm:$0xfe] %v1652
  %1661 = vst [vmem:[#allocation3 + $0x10] sm:$0xfe] %v1653
  %1662 = vst [vmem:[#allocation3 + $0x18] sm:$0xfe] %v1654
  %1663 = vst [vmem:[#allocation3 + $0x20] sm:$0x1] %v1651
  %1664 = vst [vmem:[#allocation3 + $0x28] sm:$0x1] %v1652
  %1665 = vst [vmem:[#allocation3 + $0x30] sm:$0x1] %v1653
  %1666 = vst [vmem:[#allocation3 + $0x38] sm:$0x1] %v1654
  %v1667 = vld [vmem:[#allocation3] sm:$0xff]
  %v1668 = vld [vmem:[#allocation3 + $0x8] sm:$0xff]
  %v1669 = vld [vmem:[#allocation3 + $0x10] sm:$0xff]
  %v1670 = vld [vmem:[#allocation3 + $0x18] sm:$0xff]
  %v1671 = vsel %vm63, 0.0, %v1667
  %v1672 = vsel %vm63, 0.0, %v1668
  %v1673 = vsel %vm63, 0.0, %v1669
  %v1674 = vsel %vm63, 0.0, %v1670
  %v1675 = vld [vmem:[#allocation3] sm:$0xfc]
  %v1676 = vld [vmem:[#allocation3 + $0x8] sm:$0xfc]
  %v1677 = vld [vmem:[#allocation3 + $0x10] sm:$0xfc]
  %v1678 = vld [vmem:[#allocation3 + $0x18] sm:$0xfc]
  %v1679 = vld [vmem:[#allocation3 + $0x20] sm:$0x3]
  %v1680 = vld [vmem:[#allocation3 + $0x28] sm:$0x3]
  %v1681 = vld [vmem:[#allocation3 + $0x30] sm:$0x3]
  %v1682 = vld [vmem:[#allocation3 + $0x38] sm:$0x3]
  %v1683 = vsel %vm41, 1, 0
  %vm1684 = vcmp.eq.s32.totalorder %v1683, 1
  %vm1693 = vcmask 1045504
  %v1694 = vrot.slane %v1675, 2
  %v1695 = vrot.slane %v1679, 2
  %v1696 = vsel %vm1693, %v1694, %v1695
  %v1697 = vrot.slane %v1676, 2
  %v1698 = vrot.slane %v1680, 2
  %v1699 = vsel %vm1693, %v1697, %v1698
  %v1700 = vrot.slane %v1677, 2
  %v1701 = vrot.slane %v1681, 2
  %v1702 = vsel %vm1693, %v1700, %v1701
  %v1703 = vrot.slane %v1678, 2
  %v1704 = vrot.slane %v1682, 2
  %v1705 = vsel %vm1693, %v1703, %v1704
  %v1710 = vsel %vm1684, 0.0, %v1696
  %v1711 = vsel %vm1684, 0.0, %v1699
  %v1712 = vsel %vm1684, 0.0, %v1702
  %v1713 = vsel %vm1684, 0.0, %v1705
  %v1714 = vld [vmem:[%s3] sm:$0xff]
  %v1715 = vld [vmem:[%s3 + $0x8] sm:$0xff]
  %v1716 = vld [vmem:[%s3 + $0x10] sm:$0xff]
  %v1717 = vld [vmem:[%s3 + $0x18] sm:$0xff]
  %v1718 = vld [vmem:[%s3 + $0x20] sm:$0xff]
  %v1719 = vld [vmem:[%s3 + $0x28] sm:$0xff]
  %v1720 = vld [vmem:[%s3 + $0x30] sm:$0xff]
  %v1721 = vld [vmem:[%s3 + $0x38] sm:$0xff]
  %v1722 = vld [vmem:[%s3 + $0x40] sm:$0xff]
  %v1723 = vld [vmem:[%s3 + $0x48] sm:$0xff]
  %v1724 = vld [vmem:[%s3 + $0x50] sm:$0xff]
  %v1725 = vld [vmem:[%s3 + $0x58] sm:$0xff]
  %v1726 = vld [vmem:[%s3 + $0x60] sm:$0xff]
  %v1727 = vld [vmem:[%s3 + $0x68] sm:$0xff]
  %v1728 = vld [vmem:[%s3 + $0x70] sm:$0xff]
  %v1729 = vld [vmem:[%s3 + $0x78] sm:$0xff]
  %v1730 = vld [vmem:[%s3 + $0x80] sm:$0xff]
  %v1731 = vld [vmem:[%s3 + $0x88] sm:$0xff]
  %v1732 = vld [vmem:[%s3 + $0x90] sm:$0xff]
  %v1733 = vld [vmem:[%s3 + $0x98] sm:$0xff]
  %v1734 = vld [vmem:[%s3 + $0xa0] sm:$0xff]
  %v1735 = vld [vmem:[%s3 + $0xa8] sm:$0xff]
  %v1736 = vld [vmem:[%s3 + $0xb0] sm:$0xff]
  %v1737 = vld [vmem:[%s3 + $0xb8] sm:$0xff]
  %v1738 = vld [vmem:[%s3 + $0xc0] sm:$0xff]
  %v1739 = vld [vmem:[%s3 + $0xc8] sm:$0xff]
  %v1740 = vld [vmem:[%s3 + $0xd0] sm:$0xff]
  %v1741 = vld [vmem:[%s3 + $0xd8] sm:$0xff]
  %v1742 = vld [vmem:[%s3 + $0xe0] sm:$0xff]
  %v1743 = vld [vmem:[%s3 + $0xe8] sm:$0xff]
  %v1744 = vld [vmem:[%s3 + $0xf0] sm:$0xff]
  %v1745 = vld [vmem:[%s3 + $0xf8] sm:$0xff]
  %v1746 = vld [vmem:[%s3 + $0x100] sm:$0xff]
  %v1747 = vld [vmem:[%s3 + $0x108] sm:$0xff]
  %v1748 = vld [vmem:[%s3 + $0x110] sm:$0xff]
  %v1749 = vld [vmem:[%s3 + $0x118] sm:$0xff]
  %v1750 = vld [vmem:[%s3 + $0x120] sm:$0xff]
  %v1751 = vld [vmem:[%s3 + $0x128] sm:$0xff]
  %v1752 = vld [vmem:[%s3 + $0x130] sm:$0xff]
  %v1753 = vld [vmem:[%s3 + $0x138] sm:$0xff]
  %v1754 = vld [vmem:[%s3 + $0x140] sm:$0xff]
  %v1755 = vld [vmem:[%s3 + $0x148] sm:$0xff]
  %v1756 = vld [vmem:[%s3 + $0x150] sm:$0xff]
  %v1757 = vld [vmem:[%s3 + $0x158] sm:$0xff]
  %v1758 = vld [vmem:[%s3 + $0x160] sm:$0xff]
  %v1759 = vld [vmem:[%s3 + $0x168] sm:$0xff]
  %v1760 = vld [vmem:[%s3 + $0x170] sm:$0xff]
  %v1761 = vld [vmem:[%s3 + $0x178] sm:$0xff]
  %v1762 = vld [vmem:[%s3 + $0x180] sm:$0xff]
  %v1763 = vld [vmem:[%s3 + $0x188] sm:$0xff]
  %v1764 = vld [vmem:[%s3 + $0x190] sm:$0xff]
  %v1765 = vld [vmem:[%s3 + $0x198] sm:$0xff]
  %v1766 = vld [vmem:[%s3 + $0x1a0] sm:$0xff]
  %v1767 = vld [vmem:[%s3 + $0x1a8] sm:$0xff]
  %v1768 = vld [vmem:[%s3 + $0x1b0] sm:$0xff]
  %v1769 = vld [vmem:[%s3 + $0x1b8] sm:$0xff]
  %v1770 = vld [vmem:[%s3 + $0x1c0] sm:$0xff]
  %v1771 = vld [vmem:[%s3 + $0x1c8] sm:$0xff]
  %v1772 = vld [vmem:[%s3 + $0x1d0] sm:$0xff]
  %v1773 = vld [vmem:[%s3 + $0x1d8] sm:$0xff]
  %v1774 = vld [vmem:[%s3 + $0x1e0] sm:$0xff]
  %v1775 = vld [vmem:[%s3 + $0x1e8] sm:$0xff]
  %v1776 = vld [vmem:[%s3 + $0x1f0] sm:$0xff]
  %v1777 = vld [vmem:[%s3 + $0x1f8] sm:$0xff]
  %v1778 = vld [vmem:[%s3 + $0x200] sm:$0xff]
  %v1779 = vld [vmem:[%s3 + $0x208] sm:$0xff]
  %v1780 = vld [vmem:[%s3 + $0x210] sm:$0xff]
  %v1781 = vld [vmem:[%s3 + $0x218] sm:$0xff]
  %v1782 = vld [vmem:[%s3 + $0x220] sm:$0xff]
  %v1783 = vld [vmem:[%s3 + $0x228] sm:$0xff]
  %v1784 = vld [vmem:[%s3 + $0x230] sm:$0xff]
  %v1785 = vld [vmem:[%s3 + $0x238] sm:$0xff]
  %v1786 = vld [vmem:[%s3 + $0x240] sm:$0xff]
  %v1787 = vld [vmem:[%s3 + $0x248] sm:$0xff]
  %v1788 = vld [vmem:[%s3 + $0x250] sm:$0xff]
  %v1789 = vld [vmem:[%s3 + $0x258] sm:$0xff]
  %v1790 = vld [vmem:[%s3 + $0x260] sm:$0xff]
  %v1791 = vld [vmem:[%s3 + $0x268] sm:$0xff]
  %v1792 = vld [vmem:[%s3 + $0x270] sm:$0xff]
  %v1793 = vld [vmem:[%s3 + $0x278] sm:$0xff]
  %v1794 = vld [vmem:[%s3 + $0x280] sm:$0xff]
  %v1795 = vld [vmem:[%s3 + $0x288] sm:$0xff]
  %v1796 = vld [vmem:[%s3 + $0x290] sm:$0xff]
  %v1797 = vld [vmem:[%s3 + $0x298] sm:$0xff]
  %v1798 = vld [vmem:[%s3 + $0x2a0] sm:$0xff]
  %v1799 = vld [vmem:[%s3 + $0x2a8] sm:$0xff]
  %v1800 = vld [vmem:[%s3 + $0x2b0] sm:$0xff]
  %v1801 = vld [vmem:[%s3 + $0x2b8] sm:$0xff]
  %v1802 = vld [vmem:[%s3 + $0x2c0] sm:$0xff]
  %v1803 = vld [vmem:[%s3 + $0x2c8] sm:$0xff]
  %v1804 = vld [vmem:[%s3 + $0x2d0] sm:$0xff]
  %v1805 = vld [vmem:[%s3 + $0x2d8] sm:$0xff]
  %v1806 = vld [vmem:[%s3 + $0x2e0] sm:$0xff]
  %v1807 = vld [vmem:[%s3 + $0x2e8] sm:$0xff]
  %v1808 = vld [vmem:[%s3 + $0x2f0] sm:$0xff]
  %v1809 = vld [vmem:[%s3 + $0x2f8] sm:$0xff]
  %v1810 = vld [vmem:[%s3 + $0x300] sm:$0xff]
  %v1811 = vld [vmem:[%s3 + $0x308] sm:$0xff]
  %v1812 = vld [vmem:[%s3 + $0x310] sm:$0xff]
  %v1813 = vld [vmem:[%s3 + $0x318] sm:$0xff]
  %v1814 = vld [vmem:[%s3 + $0x320] sm:$0xff]
  %v1815 = vld [vmem:[%s3 + $0x328] sm:$0xff]
  %v1816 = vld [vmem:[%s3 + $0x330] sm:$0xff]
  %v1817 = vld [vmem:[%s3 + $0x338] sm:$0xff]
  %v1818 = vld [vmem:[%s3 + $0x340] sm:$0xff]
  %v1819 = vld [vmem:[%s3 + $0x348] sm:$0xff]
  %v1820 = vld [vmem:[%s3 + $0x350] sm:$0xff]
  %v1821 = vld [vmem:[%s3 + $0x358] sm:$0xff]
  %v1822 = vld [vmem:[%s3 + $0x360] sm:$0xff]
  %v1823 = vld [vmem:[%s3 + $0x368] sm:$0xff]
  %v1824 = vld [vmem:[%s3 + $0x370] sm:$0xff]
  %v1825 = vld [vmem:[%s3 + $0x378] sm:$0xff]
  %v1826 = vld [vmem:[%s3 + $0x380] sm:$0xff]
  %v1827 = vld [vmem:[%s3 + $0x388] sm:$0xff]
  %v1828 = vld [vmem:[%s3 + $0x390] sm:$0xff]
  %v1829 = vld [vmem:[%s3 + $0x398] sm:$0xff]
  %v1830 = vld [vmem:[%s3 + $0x3a0] sm:$0xff]
  %v1831 = vld [vmem:[%s3 + $0x3a8] sm:$0xff]
  %v1832 = vld [vmem:[%s3 + $0x3b0] sm:$0xff]
  %v1833 = vld [vmem:[%s3 + $0x3b8] sm:$0xff]
  %v1834 = vld [vmem:[%s3 + $0x3c0] sm:$0xff]
  %v1835 = vld [vmem:[%s3 + $0x3c8] sm:$0xff]
  %v1836 = vld [vmem:[%s3 + $0x3d0] sm:$0xff]
  %v1837 = vld [vmem:[%s3 + $0x3d8] sm:$0xff]
  %v1838 = vld [vmem:[%s3 + $0x3e0] sm:$0xff]
  %v1839 = vld [vmem:[%s3 + $0x3e8] sm:$0xff]
  %v1840 = vld [vmem:[%s3 + $0x3f0] sm:$0xff]
  %v1841 = vld [vmem:[%s3 + $0x3f8] sm:$0xff]
  %v1842 = vpack.c.bf16 %v1671, %v1671
  %v1843 = vpack.c.bf16 %v1672, %v1672
  %v1844 = vpack.c.bf16 %v1673, %v1673
  %v1845 = vpack.c.bf16 %v1674, %v1674
  %s1846 = scalar_lea.vmem %s3, 1024
  %v1847 = vld [vmem:[%s1846] sm:$0xff]
  %v1848 = vld [vmem:[%s1846 + $0x8] sm:$0xff]
  %v1849 = vld [vmem:[%s1846 + $0x10] sm:$0xff]
  %v1850 = vld [vmem:[%s1846 + $0x18] sm:$0xff]
  %v1851 = vld [vmem:[%s1846 + $0x20] sm:$0xff]
  %v1852 = vld [vmem:[%s1846 + $0x28] sm:$0xff]
  %v1853 = vld [vmem:[%s1846 + $0x30] sm:$0xff]
  %v1854 = vld [vmem:[%s1846 + $0x38] sm:$0xff]
  %v1855 = vld [vmem:[%s1846 + $0x40] sm:$0xff]
  %v1856 = vld [vmem:[%s1846 + $0x48] sm:$0xff]
  %v1857 = vld [vmem:[%s1846 + $0x50] sm:$0xff]
  %v1858 = vld [vmem:[%s1846 + $0x58] sm:$0xff]
  %v1859 = vld [vmem:[%s1846 + $0x60] sm:$0xff]
  %v1860 = vld [vmem:[%s1846 + $0x68] sm:$0xff]
  %v1861 = vld [vmem:[%s1846 + $0x70] sm:$0xff]
  %v1862 = vld [vmem:[%s1846 + $0x78] sm:$0xff]
  %v1863 = vld [vmem:[%s1846 + $0x80] sm:$0xff]
  %v1864 = vld [vmem:[%s1846 + $0x88] sm:$0xff]
  %v1865 = vld [vmem:[%s1846 + $0x90] sm:$0xff]
  %v1866 = vld [vmem:[%s1846 + $0x98] sm:$0xff]
  %v1867 = vld [vmem:[%s1846 + $0xa0] sm:$0xff]
  %v1868 = vld [vmem:[%s1846 + $0xa8] sm:$0xff]
  %v1869 = vld [vmem:[%s1846 + $0xb0] sm:$0xff]
  %v1870 = vld [vmem:[%s1846 + $0xb8] sm:$0xff]
  %v1871 = vld [vmem:[%s1846 + $0xc0] sm:$0xff]
  %v1872 = vld [vmem:[%s1846 + $0xc8] sm:$0xff]
  %v1873 = vld [vmem:[%s1846 + $0xd0] sm:$0xff]
  %v1874 = vld [vmem:[%s1846 + $0xd8] sm:$0xff]
  %v1875 = vld [vmem:[%s1846 + $0xe0] sm:$0xff]
  %v1876 = vld [vmem:[%s1846 + $0xe8] sm:$0xff]
  %v1877 = vld [vmem:[%s1846 + $0xf0] sm:$0xff]
  %v1878 = vld [vmem:[%s1846 + $0xf8] sm:$0xff]
  %v1879 = vld [vmem:[%s1846 + $0x100] sm:$0xff]
  %v1880 = vld [vmem:[%s1846 + $0x108] sm:$0xff]
  %v1881 = vld [vmem:[%s1846 + $0x110] sm:$0xff]
  %v1882 = vld [vmem:[%s1846 + $0x118] sm:$0xff]
  %v1883 = vld [vmem:[%s1846 + $0x120] sm:$0xff]
  %v1884 = vld [vmem:[%s1846 + $0x128] sm:$0xff]
  %v1885 = vld [vmem:[%s1846 + $0x130] sm:$0xff]
  %v1886 = vld [vmem:[%s1846 + $0x138] sm:$0xff]
  %v1887 = vld [vmem:[%s1846 + $0x140] sm:$0xff]
  %v1888 = vld [vmem:[%s1846 + $0x148] sm:$0xff]
  %v1889 = vld [vmem:[%s1846 + $0x150] sm:$0xff]
  %v1890 = vld [vmem:[%s1846 + $0x158] sm:$0xff]
  %v1891 = vld [vmem:[%s1846 + $0x160] sm:$0xff]
  %v1892 = vld [vmem:[%s1846 + $0x168] sm:$0xff]
  %v1893 = vld [vmem:[%s1846 + $0x170] sm:$0xff]
  %v1894 = vld [vmem:[%s1846 + $0x178] sm:$0xff]
  %v1895 = vld [vmem:[%s1846 + $0x180] sm:$0xff]
  %v1896 = vld [vmem:[%s1846 + $0x188] sm:$0xff]
  %v1897 = vld [vmem:[%s1846 + $0x190] sm:$0xff]
  %v1898 = vld [vmem:[%s1846 + $0x198] sm:$0xff]
  %v1899 = vld [vmem:[%s1846 + $0x1a0] sm:$0xff]
  %v1900 = vld [vmem:[%s1846 + $0x1a8] sm:$0xff]
  %v1901 = vld [vmem:[%s1846 + $0x1b0] sm:$0xff]
  %v1902 = vld [vmem:[%s1846 + $0x1b8] sm:$0xff]
  %v1903 = vld [vmem:[%s1846 + $0x1c0] sm:$0xff]
  %v1904 = vld [vmem:[%s1846 + $0x1c8] sm:$0xff]
  %v1905 = vld [vmem:[%s1846 + $0x1d0] sm:$0xff]
  %v1906 = vld [vmem:[%s1846 + $0x1d8] sm:$0xff]
  %v1907 = vld [vmem:[%s1846 + $0x1e0] sm:$0xff]
  %v1908 = vld [vmem:[%s1846 + $0x1e8] sm:$0xff]
  %v1909 = vld [vmem:[%s1846 + $0x1f0] sm:$0xff]
  %v1910 = vld [vmem:[%s1846 + $0x1f8] sm:$0xff]
  %v1911 = vld [vmem:[%s1846 + $0x200] sm:$0xff]
  %v1912 = vld [vmem:[%s1846 + $0x208] sm:$0xff]
  %v1913 = vld [vmem:[%s1846 + $0x210] sm:$0xff]
  %v1914 = vld [vmem:[%s1846 + $0x218] sm:$0xff]
  %v1915 = vld [vmem:[%s1846 + $0x220] sm:$0xff]
  %v1916 = vld [vmem:[%s1846 + $0x228] sm:$0xff]
  %v1917 = vld [vmem:[%s1846 + $0x230] sm:$0xff]
  %v1918 = vld [vmem:[%s1846 + $0x238] sm:$0xff]
  %v1919 = vld [vmem:[%s1846 + $0x240] sm:$0xff]
  %v1920 = vld [vmem:[%s1846 + $0x248] sm:$0xff]
  %v1921 = vld [vmem:[%s1846 + $0x250] sm:$0xff]
  %v1922 = vld [vmem:[%s1846 + $0x258] sm:$0xff]
  %v1923 = vld [vmem:[%s1846 + $0x260] sm:$0xff]
  %v1924 = vld [vmem:[%s1846 + $0x268] sm:$0xff]
  %v1925 = vld [vmem:[%s1846 + $0x270] sm:$0xff]
  %v1926 = vld [vmem:[%s1846 + $0x278] sm:$0xff]
  %v1927 = vld [vmem:[%s1846 + $0x280] sm:$0xff]
  %v1928 = vld [vmem:[%s1846 + $0x288] sm:$0xff]
  %v1929 = vld [vmem:[%s1846 + $0x290] sm:$0xff]
  %v1930 = vld [vmem:[%s1846 + $0x298] sm:$0xff]
  %v1931 = vld [vmem:[%s1846 + $0x2a0] sm:$0xff]
  %v1932 = vld [vmem:[%s1846 + $0x2a8] sm:$0xff]
  %v1933 = vld [vmem:[%s1846 + $0x2b0] sm:$0xff]
  %v1934 = vld [vmem:[%s1846 + $0x2b8] sm:$0xff]
  %v1935 = vld [vmem:[%s1846 + $0x2c0] sm:$0xff]
  %v1936 = vld [vmem:[%s1846 + $0x2c8] sm:$0xff]
  %v1937 = vld [vmem:[%s1846 + $0x2d0] sm:$0xff]
  %v1938 = vld [vmem:[%s1846 + $0x2d8] sm:$0xff]
  %v1939 = vld [vmem:[%s1846 + $0x2e0] sm:$0xff]
  %v1940 = vld [vmem:[%s1846 + $0x2e8] sm:$0xff]
  %v1941 = vld [vmem:[%s1846 + $0x2f0] sm:$0xff]
  %v1942 = vld [vmem:[%s1846 + $0x2f8] sm:$0xff]
  %v1943 = vld [vmem:[%s1846 + $0x300] sm:$0xff]
  %v1944 = vld [vmem:[%s1846 + $0x308] sm:$0xff]
  %v1945 = vld [vmem:[%s1846 + $0x310] sm:$0xff]
  %v1946 = vld [vmem:[%s1846 + $0x318] sm:$0xff]
  %v1947 = vld [vmem:[%s1846 + $0x320] sm:$0xff]
  %v1948 = vld [vmem:[%s1846 + $0x328] sm:$0xff]
  %v1949 = vld [vmem:[%s1846 + $0x330] sm:$0xff]
  %v1950 = vld [vmem:[%s1846 + $0x338] sm:$0xff]
  %v1951 = vld [vmem:[%s1846 + $0x340] sm:$0xff]
  %v1952 = vld [vmem:[%s1846 + $0x348] sm:$0xff]
  %v1953 = vld [vmem:[%s1846 + $0x350] sm:$0xff]
  %v1954 = vld [vmem:[%s1846 + $0x358] sm:$0xff]
  %v1955 = vld [vmem:[%s1846 + $0x360] sm:$0xff]
  %v1956 = vld [vmem:[%s1846 + $0x368] sm:$0xff]
  %v1957 = vld [vmem:[%s1846 + $0x370] sm:$0xff]
  %v1958 = vld [vmem:[%s1846 + $0x378] sm:$0xff]
  %v1959 = vld [vmem:[%s1846 + $0x380] sm:$0xff]
  %v1960 = vld [vmem:[%s1846 + $0x388] sm:$0xff]
  %v1961 = vld [vmem:[%s1846 + $0x390] sm:$0xff]
  %v1962 = vld [vmem:[%s1846 + $0x398] sm:$0xff]
  %v1963 = vld [vmem:[%s1846 + $0x3a0] sm:$0xff]
  %v1964 = vld [vmem:[%s1846 + $0x3a8] sm:$0xff]
  %v1965 = vld [vmem:[%s1846 + $0x3b0] sm:$0xff]
  %v1966 = vld [vmem:[%s1846 + $0x3b8] sm:$0xff]
  %v1967 = vld [vmem:[%s1846 + $0x3c0] sm:$0xff]
  %v1968 = vld [vmem:[%s1846 + $0x3c8] sm:$0xff]
  %v1969 = vld [vmem:[%s1846 + $0x3d0] sm:$0xff]
  %v1970 = vld [vmem:[%s1846 + $0x3d8] sm:$0xff]
  %v1971 = vld [vmem:[%s1846 + $0x3e0] sm:$0xff]
  %v1972 = vld [vmem:[%s1846 + $0x3e8] sm:$0xff]
  %v1973 = vld [vmem:[%s1846 + $0x3f0] sm:$0xff]
  %v1974 = vld [vmem:[%s1846 + $0x3f8] sm:$0xff]
  %v1975 = vpack.c.bf16 %v1635, %v1635
  %v1976 = vpack.c.bf16 %v1636, %v1636
  %v1977 = vpack.c.bf16 %v1637, %v1637
  %v1978 = vpack.c.bf16 %v1638, %v1638
  %v2107 = vunpack.c.l.b16 %v1847
  %v2108 = vunpack.c.h.b16 %v1847
  %v2109 = vunpack.c.l.b16 %v1848
  %v2110 = vunpack.c.h.b16 %v1848
  %v2111 = vunpack.c.l.b16 %v1849
  %v2112 = vunpack.c.h.b16 %v1849
  %v2113 = vunpack.c.l.b16 %v1850
  %v2114 = vunpack.c.h.b16 %v1850
  %v2115 = vunpack.c.l.b16 %v1851
  %v2116 = vunpack.c.h.b16 %v1851
  %v2117 = vunpack.c.l.b16 %v1852
  %v2118 = vunpack.c.h.b16 %v1852
  %v2119 = vunpack.c.l.b16 %v1853
  %v2120 = vunpack.c.h.b16 %v1853
  %v2121 = vunpack.c.l.b16 %v1854
  %v2122 = vunpack.c.h.b16 %v1854
  %v2123 = vunpack.c.l.b16 %v1855
  %v2124 = vunpack.c.h.b16 %v1855
  %v2125 = vunpack.c.l.b16 %v1856
  %v2126 = vunpack.c.h.b16 %v1856
  %v2127 = vunpack.c.l.b16 %v1857
  %v2128 = vunpack.c.h.b16 %v1857
  %v2129 = vunpack.c.l.b16 %v1858
  %v2130 = vunpack.c.h.b16 %v1858
  %v2131 = vunpack.c.l.b16 %v1859
  %v2132 = vunpack.c.h.b16 %v1859
  %v2133 = vunpack.c.l.b16 %v1860
  %v2134 = vunpack.c.h.b16 %v1860
  %v2135 = vunpack.c.l.b16 %v1861
  %v2136 = vunpack.c.h.b16 %v1861
  %v2137 = vunpack.c.l.b16 %v1862
  %v2138 = vunpack.c.h.b16 %v1862
  %v2139 = vunpack.c.l.b16 %v1863
  %v2140 = vunpack.c.h.b16 %v1863
  %v2141 = vunpack.c.l.b16 %v1864
  %v2142 = vunpack.c.h.b16 %v1864
  %v2143 = vunpack.c.l.b16 %v1865
  %v2144 = vunpack.c.h.b16 %v1865
  %v2145 = vunpack.c.l.b16 %v1866
  %v2146 = vunpack.c.h.b16 %v1866
  %v2147 = vunpack.c.l.b16 %v1867
  %v2148 = vunpack.c.h.b16 %v1867
  %v2149 = vunpack.c.l.b16 %v1868
  %v2150 = vunpack.c.h.b16 %v1868
  %v2151 = vunpack.c.l.b16 %v1869
  %v2152 = vunpack.c.h.b16 %v1869
  %v2153 = vunpack.c.l.b16 %v1870
  %v2154 = vunpack.c.h.b16 %v1870
  %v2155 = vunpack.c.l.b16 %v1871
  %v2156 = vunpack.c.h.b16 %v1871
  %v2157 = vunpack.c.l.b16 %v1872
  %v2158 = vunpack.c.h.b16 %v1872
  %v2159 = vunpack.c.l.b16 %v1873
  %v2160 = vunpack.c.h.b16 %v1873
  %v2161 = vunpack.c.l.b16 %v1874
  %v2162 = vunpack.c.h.b16 %v1874
  %v2163 = vunpack.c.l.b16 %v1875
  %v2164 = vunpack.c.h.b16 %v1875
  %v2165 = vunpack.c.l.b16 %v1876
  %v2166 = vunpack.c.h.b16 %v1876
  %v2167 = vunpack.c.l.b16 %v1877
  %v2168 = vunpack.c.h.b16 %v1877
  %v2169 = vunpack.c.l.b16 %v1878
  %v2170 = vunpack.c.h.b16 %v1878
  %v2171 = vunpack.c.l.b16 %v1879
  %v2172 = vunpack.c.h.b16 %v1879
  %v2173 = vunpack.c.l.b16 %v1880
  %v2174 = vunpack.c.h.b16 %v1880
  %v2175 = vunpack.c.l.b16 %v1881
  %v2176 = vunpack.c.h.b16 %v1881
  %v2177 = vunpack.c.l.b16 %v1882
  %v2178 = vunpack.c.h.b16 %v1882
  %v2179 = vunpack.c.l.b16 %v1883
  %v2180 = vunpack.c.h.b16 %v1883
  %v2181 = vunpack.c.l.b16 %v1884
  %v2182 = vunpack.c.h.b16 %v1884
  %v2183 = vunpack.c.l.b16 %v1885
  %v2184 = vunpack.c.h.b16 %v1885
  %v2185 = vunpack.c.l.b16 %v1886
  %v2186 = vunpack.c.h.b16 %v1886
  %v2187 = vunpack.c.l.b16 %v1887
  %v2188 = vunpack.c.h.b16 %v1887
  %v2189 = vunpack.c.l.b16 %v1888
  %v2190 = vunpack.c.h.b16 %v1888
  %v2191 = vunpack.c.l.b16 %v1889
  %v2192 = vunpack.c.h.b16 %v1889
  %v2193 = vunpack.c.l.b16 %v1890
  %v2194 = vunpack.c.h.b16 %v1890
  %v2195 = vunpack.c.l.b16 %v1891
  %v2196 = vunpack.c.h.b16 %v1891
  %v2197 = vunpack.c.l.b16 %v1892
  %v2198 = vunpack.c.h.b16 %v1892
  %v2199 = vunpack.c.l.b16 %v1893
  %v2200 = vunpack.c.h.b16 %v1893
  %v2201 = vunpack.c.l.b16 %v1894
  %v2202 = vunpack.c.h.b16 %v1894
  %v2203 = vunpack.c.l.b16 %v1895
  %v2204 = vunpack.c.h.b16 %v1895
  %v2205 = vunpack.c.l.b16 %v1896
  %v2206 = vunpack.c.h.b16 %v1896
  %v2207 = vunpack.c.l.b16 %v1897
  %v2208 = vunpack.c.h.b16 %v1897
  %v2209 = vunpack.c.l.b16 %v1898
  %v2210 = vunpack.c.h.b16 %v1898
  %v2211 = vunpack.c.l.b16 %v1899
  %v2212 = vunpack.c.h.b16 %v1899
  %v2213 = vunpack.c.l.b16 %v1900
  %v2214 = vunpack.c.h.b16 %v1900
  %v2215 = vunpack.c.l.b16 %v1901
  %v2216 = vunpack.c.h.b16 %v1901
  %v2217 = vunpack.c.l.b16 %v1902
  %v2218 = vunpack.c.h.b16 %v1902
  %v2219 = vunpack.c.l.b16 %v1903
  %v2220 = vunpack.c.h.b16 %v1903
  %v2221 = vunpack.c.l.b16 %v1904
  %v2222 = vunpack.c.h.b16 %v1904
  %v2223 = vunpack.c.l.b16 %v1905
  %v2224 = vunpack.c.h.b16 %v1905
  %v2225 = vunpack.c.l.b16 %v1906
  %v2226 = vunpack.c.h.b16 %v1906
  %v2227 = vunpack.c.l.b16 %v1907
  %v2228 = vunpack.c.h.b16 %v1907
  %v2229 = vunpack.c.l.b16 %v1908
  %v2230 = vunpack.c.h.b16 %v1908
  %v2231 = vunpack.c.l.b16 %v1909
  %v2232 = vunpack.c.h.b16 %v1909
  %v2233 = vunpack.c.l.b16 %v1910
  %v2234 = vunpack.c.h.b16 %v1910
  %v2235 = vunpack.c.l.b16 %v1911
  %v2236 = vunpack.c.h.b16 %v1911
  %v2237 = vunpack.c.l.b16 %v1912
  %v2238 = vunpack.c.h.b16 %v1912
  %v2239 = vunpack.c.l.b16 %v1913
  %v2240 = vunpack.c.h.b16 %v1913
  %v2241 = vunpack.c.l.b16 %v1914
  %v2242 = vunpack.c.h.b16 %v1914
  %v2243 = vunpack.c.l.b16 %v1915
  %v2244 = vunpack.c.h.b16 %v1915
  %v2245 = vunpack.c.l.b16 %v1916
  %v2246 = vunpack.c.h.b16 %v1916
  %v2247 = vunpack.c.l.b16 %v1917
  %v2248 = vunpack.c.h.b16 %v1917
  %v2249 = vunpack.c.l.b16 %v1918
  %v2250 = vunpack.c.h.b16 %v1918
  %v2251 = vunpack.c.l.b16 %v1919
  %v2252 = vunpack.c.h.b16 %v1919
  %v2253 = vunpack.c.l.b16 %v1920
  %v2254 = vunpack.c.h.b16 %v1920
  %v2255 = vunpack.c.l.b16 %v1921
  %v2256 = vunpack.c.h.b16 %v1921
  %v2257 = vunpack.c.l.b16 %v1922
  %v2258 = vunpack.c.h.b16 %v1922
  %v2259 = vunpack.c.l.b16 %v1923
  %v2260 = vunpack.c.h.b16 %v1923
  %v2261 = vunpack.c.l.b16 %v1924
  %v2262 = vunpack.c.h.b16 %v1924
  %v2263 = vunpack.c.l.b16 %v1925
  %v2264 = vunpack.c.h.b16 %v1925
  %v2265 = vunpack.c.l.b16 %v1926
  %v2266 = vunpack.c.h.b16 %v1926
  %v2267 = vunpack.c.l.b16 %v1927
  %v2268 = vunpack.c.h.b16 %v1927
  %v2269 = vunpack.c.l.b16 %v1928
  %v2270 = vunpack.c.h.b16 %v1928
  %v2271 = vunpack.c.l.b16 %v1929
  %v2272 = vunpack.c.h.b16 %v1929
  %v2273 = vunpack.c.l.b16 %v1930
  %v2274 = vunpack.c.h.b16 %v1930
  %v2275 = vunpack.c.l.b16 %v1931
  %v2276 = vunpack.c.h.b16 %v1931
  %v2277 = vunpack.c.l.b16 %v1932
  %v2278 = vunpack.c.h.b16 %v1932
  %v2279 = vunpack.c.l.b16 %v1933
  %v2280 = vunpack.c.h.b16 %v1933
  %v2281 = vunpack.c.l.b16 %v1934
  %v2282 = vunpack.c.h.b16 %v1934
  %v2283 = vunpack.c.l.b16 %v1935
  %v2284 = vunpack.c.h.b16 %v1935
  %v2285 = vunpack.c.l.b16 %v1936
  %v2286 = vunpack.c.h.b16 %v1936
  %v2287 = vunpack.c.l.b16 %v1937
  %v2288 = vunpack.c.h.b16 %v1937
  %v2289 = vunpack.c.l.b16 %v1938
  %v2290 = vunpack.c.h.b16 %v1938
  %v2291 = vunpack.c.l.b16 %v1939
  %v2292 = vunpack.c.h.b16 %v1939
  %v2293 = vunpack.c.l.b16 %v1940
  %v2294 = vunpack.c.h.b16 %v1940
  %v2295 = vunpack.c.l.b16 %v1941
  %v2296 = vunpack.c.h.b16 %v1941
  %v2297 = vunpack.c.l.b16 %v1942
  %v2298 = vunpack.c.h.b16 %v1942
  %v2299 = vunpack.c.l.b16 %v1943
  %v2300 = vunpack.c.h.b16 %v1943
  %v2301 = vunpack.c.l.b16 %v1944
  %v2302 = vunpack.c.h.b16 %v1944
  %v2303 = vunpack.c.l.b16 %v1945
  %v2304 = vunpack.c.h.b16 %v1945
  %v2305 = vunpack.c.l.b16 %v1946
  %v2306 = vunpack.c.h.b16 %v1946
  %v2307 = vunpack.c.l.b16 %v1947
  %v2308 = vunpack.c.h.b16 %v1947
  %v2309 = vunpack.c.l.b16 %v1948
  %v2310 = vunpack.c.h.b16 %v1948
  %v2311 = vunpack.c.l.b16 %v1949
  %v2312 = vunpack.c.h.b16 %v1949
  %v2313 = vunpack.c.l.b16 %v1950
  %v2314 = vunpack.c.h.b16 %v1950
  %v2315 = vunpack.c.l.b16 %v1951
  %v2316 = vunpack.c.h.b16 %v1951
  %v2317 = vunpack.c.l.b16 %v1952
  %v2318 = vunpack.c.h.b16 %v1952
  %v2319 = vunpack.c.l.b16 %v1953
  %v2320 = vunpack.c.h.b16 %v1953
  %v2321 = vunpack.c.l.b16 %v1954
  %v2322 = vunpack.c.h.b16 %v1954
  %v2323 = vunpack.c.l.b16 %v1955
  %v2324 = vunpack.c.h.b16 %v1955
  %v2325 = vunpack.c.l.b16 %v1956
  %v2326 = vunpack.c.h.b16 %v1956
  %v2327 = vunpack.c.l.b16 %v1957
  %v2328 = vunpack.c.h.b16 %v1957
  %v2329 = vunpack.c.l.b16 %v1958
  %v2330 = vunpack.c.h.b16 %v1958
  %v2331 = vunpack.c.l.b16 %v1959
  %v2332 = vunpack.c.h.b16 %v1959
  %v2333 = vunpack.c.l.b16 %v1960
  %v2334 = vunpack.c.h.b16 %v1960
  %v2335 = vunpack.c.l.b16 %v1961
  %v2336 = vunpack.c.h.b16 %v1961
  %v2337 = vunpack.c.l.b16 %v1962
  %v2338 = vunpack.c.h.b16 %v1962
  %v2339 = vunpack.c.l.b16 %v1963
  %v2340 = vunpack.c.h.b16 %v1963
  %v2341 = vunpack.c.l.b16 %v1964
  %v2342 = vunpack.c.h.b16 %v1964
  %v2343 = vunpack.c.l.b16 %v1965
  %v2344 = vunpack.c.h.b16 %v1965
  %v2345 = vunpack.c.l.b16 %v1966
  %v2346 = vunpack.c.h.b16 %v1966
  %v2347 = vunpack.c.l.b16 %v1967
  %v2348 = vunpack.c.h.b16 %v1967
  %v2349 = vunpack.c.l.b16 %v1968
  %v2350 = vunpack.c.h.b16 %v1968
  %v2351 = vunpack.c.l.b16 %v1969
  %v2352 = vunpack.c.h.b16 %v1969
  %v2353 = vunpack.c.l.b16 %v1970
  %v2354 = vunpack.c.h.b16 %v1970
  %v2355 = vunpack.c.l.b16 %v1971
  %v2356 = vunpack.c.h.b16 %v1971
  %v2357 = vunpack.c.l.b16 %v1972
  %v2358 = vunpack.c.h.b16 %v1972
  %v2359 = vunpack.c.l.b16 %v1973
  %v2360 = vunpack.c.h.b16 %v1973
  %v2361 = vunpack.c.l.b16 %v1974
  %v2362 = vunpack.c.h.b16 %v1974
  %v2363 = vpack.c.b16 %v2111, %v2107
  %v2364 = vpack.c.b16 %v2112, %v2108
  %v2365 = vpack.c.b16 %v2113, %v2109
  %v2366 = vpack.c.b16 %v2114, %v2110
  %v2367 = vpack.c.b16 %v2119, %v2115
  %v2368 = vpack.c.b16 %v2120, %v2116
  %v2369 = vpack.c.b16 %v2121, %v2117
  %v2370 = vpack.c.b16 %v2122, %v2118
  %v2371 = vpack.c.b16 %v2127, %v2123
  %v2372 = vpack.c.b16 %v2128, %v2124
  %v2373 = vpack.c.b16 %v2129, %v2125
  %v2374 = vpack.c.b16 %v2130, %v2126
  %v2375 = vpack.c.b16 %v2135, %v2131
  %v2376 = vpack.c.b16 %v2136, %v2132
  %v2377 = vpack.c.b16 %v2137, %v2133
  %v2378 = vpack.c.b16 %v2138, %v2134
  %v2379 = vpack.c.b16 %v2143, %v2139
  %v2380 = vpack.c.b16 %v2144, %v2140
  %v2381 = vpack.c.b16 %v2145, %v2141
  %v2382 = vpack.c.b16 %v2146, %v2142
  %v2383 = vpack.c.b16 %v2151, %v2147
  %v2384 = vpack.c.b16 %v2152, %v2148
  %v2385 = vpack.c.b16 %v2153, %v2149
  %v2386 = vpack.c.b16 %v2154, %v2150
  %v2387 = vpack.c.b16 %v2159, %v2155
  %v2388 = vpack.c.b16 %v2160, %v2156
  %v2389 = vpack.c.b16 %v2161, %v2157
  %v2390 = vpack.c.b16 %v2162, %v2158
  %v2391 = vpack.c.b16 %v2167, %v2163
  %v2392 = vpack.c.b16 %v2168, %v2164
  %v2393 = vpack.c.b16 %v2169, %v2165
  %v2394 = vpack.c.b16 %v2170, %v2166
  %v2395 = vpack.c.b16 %v2175, %v2171
  %v2396 = vpack.c.b16 %v2176, %v2172
  %v2397 = vpack.c.b16 %v2177, %v2173
  %v2398 = vpack.c.b16 %v2178, %v2174
  %v2399 = vpack.c.b16 %v2183, %v2179
  %v2400 = vpack.c.b16 %v2184, %v2180
  %v2401 = vpack.c.b16 %v2185, %v2181
  %v2402 = vpack.c.b16 %v2186, %v2182
  %v2403 = vpack.c.b16 %v2191, %v2187
  %v2404 = vpack.c.b16 %v2192, %v2188
  %v2405 = vpack.c.b16 %v2193, %v2189
  %v2406 = vpack.c.b16 %v2194, %v2190
  %v2407 = vpack.c.b16 %v2199, %v2195
  %v2408 = vpack.c.b16 %v2200, %v2196
  %v2409 = vpack.c.b16 %v2201, %v2197
  %v2410 = vpack.c.b16 %v2202, %v2198
  %v2411 = vpack.c.b16 %v2207, %v2203
  %v2412 = vpack.c.b16 %v2208, %v2204
  %v2413 = vpack.c.b16 %v2209, %v2205
  %v2414 = vpack.c.b16 %v2210, %v2206
  %v2415 = vpack.c.b16 %v2215, %v2211
  %v2416 = vpack.c.b16 %v2216, %v2212
  %v2417 = vpack.c.b16 %v2217, %v2213
  %v2418 = vpack.c.b16 %v2218, %v2214
  %v2419 = vpack.c.b16 %v2223, %v2219
  %v2420 = vpack.c.b16 %v2224, %v2220
  %v2421 = vpack.c.b16 %v2225, %v2221
  %v2422 = vpack.c.b16 %v2226, %v2222
  %v2423 = vpack.c.b16 %v2231, %v2227
  %v2424 = vpack.c.b16 %v2232, %v2228
  %v2425 = vpack.c.b16 %v2233, %v2229
  %v2426 = vpack.c.b16 %v2234, %v2230
  %v2427 = vpack.c.b16 %v2239, %v2235
  %v2428 = vpack.c.b16 %v2240, %v2236
  %v2429 = vpack.c.b16 %v2241, %v2237
  %v2430 = vpack.c.b16 %v2242, %v2238
  %v2431 = vpack.c.b16 %v2247, %v2243
  %v2432 = vpack.c.b16 %v2248, %v2244
  %v2433 = vpack.c.b16 %v2249, %v2245
  %v2434 = vpack.c.b16 %v2250, %v2246
  %v2435 = vpack.c.b16 %v2255, %v2251
  %v2436 = vpack.c.b16 %v2256, %v2252
  %v2437 = vpack.c.b16 %v2257, %v2253
  %v2438 = vpack.c.b16 %v2258, %v2254
  %v2439 = vpack.c.b16 %v2263, %v2259
  %v2440 = vpack.c.b16 %v2264, %v2260
  %v2441 = vpack.c.b16 %v2265, %v2261
  %v2442 = vpack.c.b16 %v2266, %v2262
  %v2443 = vpack.c.b16 %v2271, %v2267
  %v2444 = vpack.c.b16 %v2272, %v2268
  %v2445 = vpack.c.b16 %v2273, %v2269
  %v2446 = vpack.c.b16 %v2274, %v2270
  %v2447 = vpack.c.b16 %v2279, %v2275
  %v2448 = vpack.c.b16 %v2280, %v2276
  %v2449 = vpack.c.b16 %v2281, %v2277
  %v2450 = vpack.c.b16 %v2282, %v2278
  %v2451 = vpack.c.b16 %v2287, %v2283
  %v2452 = vpack.c.b16 %v2288, %v2284
  %v2453 = vpack.c.b16 %v2289, %v2285
  %v2454 = vpack.c.b16 %v2290, %v2286
  %v2455 = vpack.c.b16 %v2295, %v2291
  %v2456 = vpack.c.b16 %v2296, %v2292
  %v2457 = vpack.c.b16 %v2297, %v2293
  %v2458 = vpack.c.b16 %v2298, %v2294
  %v2459 = vpack.c.b16 %v2303, %v2299
  %v2460 = vpack.c.b16 %v2304, %v2300
  %v2461 = vpack.c.b16 %v2305, %v2301
  %v2462 = vpack.c.b16 %v2306, %v2302
  %v2463 = vpack.c.b16 %v2311, %v2307
  %v2464 = vpack.c.b16 %v2312, %v2308
  %v2465 = vpack.c.b16 %v2313, %v2309
  %v2466 = vpack.c.b16 %v2314, %v2310
  %v2467 = vpack.c.b16 %v2319, %v2315
  %v2468 = vpack.c.b16 %v2320, %v2316
  %v2469 = vpack.c.b16 %v2321, %v2317
  %v2470 = vpack.c.b16 %v2322, %v2318
  %v2471 = vpack.c.b16 %v2327, %v2323
  %v2472 = vpack.c.b16 %v2328, %v2324
  %v2473 = vpack.c.b16 %v2329, %v2325
  %v2474 = vpack.c.b16 %v2330, %v2326
  %v2475 = vpack.c.b16 %v2335, %v2331
  %v2476 = vpack.c.b16 %v2336, %v2332
  %v2477 = vpack.c.b16 %v2337, %v2333
  %v2478 = vpack.c.b16 %v2338, %v2334
  %v2479 = vpack.c.b16 %v2343, %v2339
  %v2480 = vpack.c.b16 %v2344, %v2340
  %v2481 = vpack.c.b16 %v2345, %v2341
  %v2482 = vpack.c.b16 %v2346, %v2342
  %v2483 = vpack.c.b16 %v2351, %v2347
  %v2484 = vpack.c.b16 %v2352, %v2348
  %v2485 = vpack.c.b16 %v2353, %v2349
  %v2486 = vpack.c.b16 %v2354, %v2350
  %v2487 = vpack.c.b16 %v2359, %v2355
  %v2488 = vpack.c.b16 %v2360, %v2356
  %v2489 = vpack.c.b16 %v2361, %v2357
  %v2490 = vpack.c.b16 %v2362, %v2358
  %2619 = vmatprep.subr.bf16.mxu0 %v2364
  %2620 = vmatpush1.bf16.msra.mxu0 %v2363
  %2621 = vmatprep.subr.bf16.mxu0 %v2368
  %2622 = vmatpush1.bf16.msra.mxu0 %v2367
  %2623 = vmatprep.subr.bf16.mxu0 %v2372
  %2624 = vmatpush1.bf16.msra.mxu0 %v2371
  %2625 = vmatprep.subr.bf16.mxu0 %v2376
  %2626 = vmatpush1.bf16.msra.mxu0 %v2375
  %2627 = vmatprep.subr.bf16.mxu0 %v2380
  %2628 = vmatpush1.bf16.msra.mxu0 %v2379
  %2629 = vmatprep.subr.bf16.mxu0 %v2384
  %2630 = vmatpush1.bf16.msra.mxu0 %v2383
  %2631 = vmatprep.subr.bf16.mxu0 %v2388
  %2632 = vmatpush1.bf16.msra.mxu0 %v2387
  %2633 = vmatprep.subr.bf16.mxu0 %v2392
  %2634 = vmatpush1.bf16.msra.mxu0 %v2391
  %2635 = vmatprep.subr.bf16.mxu0 %v2396
  %2636 = vmatpush1.bf16.msra.mxu0 %v2395
  %2637 = vmatprep.subr.bf16.mxu0 %v2400
  %2638 = vmatpush1.bf16.msra.mxu0 %v2399
  %2639 = vmatprep.subr.bf16.mxu0 %v2404
  %2640 = vmatpush1.bf16.msra.mxu0 %v2403
  %2641 = vmatprep.subr.bf16.mxu0 %v2408
  %2642 = vmatpush1.bf16.msra.mxu0 %v2407
  %2643 = vmatprep.subr.bf16.mxu0 %v2412
  %2644 = vmatpush1.bf16.msra.mxu0 %v2411
  %2645 = vmatprep.subr.bf16.mxu0 %v2416
  %2646 = vmatpush1.bf16.msra.mxu0 %v2415
  %2647 = vmatprep.subr.bf16.mxu0 %v2420
  %2648 = vmatpush1.bf16.msra.mxu0 %v2419
  %2649 = vmatprep.subr.bf16.mxu0 %v2424
  %2650 = vmatpush1.bf16.msra.mxu0 %v2423
  %2651 = vmatprep.mubr.bf16.mxu0 %v1976
  %2652 = vmatmul.mubr.bf16.gmra.mrb[0].mxu0 %v1975
  %v2653 = vpop.f32.mrb[0].mxu0
  %v2654 = vadd.f32 0.0, %v2653
  %v2655 = vpop.f32.mrb[0].mxu0
  %v2656 = vadd.f32 0.0, %v2655
  %v2657 = vpop.f32.mrb[0].mxu0
  %v2658 = vpop.f32.mrb[0].mxu0
  %2659 = vdwg.mxu0
  %2660 = vmatprep.subr.bf16.mxu0 %v2428
  %2661 = vmatpush1.bf16.msra.mxu0 %v2427
  %2662 = vmatprep.subr.bf16.mxu0 %v2432
  %2663 = vmatpush1.bf16.msra.mxu0 %v2431
  %2664 = vmatprep.subr.bf16.mxu0 %v2436
  %2665 = vmatpush1.bf16.msra.mxu0 %v2435
  %2666 = vmatprep.subr.bf16.mxu0 %v2440
  %2667 = vmatpush1.bf16.msra.mxu0 %v2439
  %2668 = vmatprep.subr.bf16.mxu0 %v2444
  %2669 = vmatpush1.bf16.msra.mxu0 %v2443
  %2670 = vmatprep.subr.bf16.mxu0 %v2448
  %2671 = vmatpush1.bf16.msra.mxu0 %v2447
  %2672 = vmatprep.subr.bf16.mxu0 %v2452
  %2673 = vmatpush1.bf16.msra.mxu0 %v2451
  %2674 = vmatprep.subr.bf16.mxu0 %v2456
  %2675 = vmatpush1.bf16.msra.mxu0 %v2455
  %2676 = vmatprep.subr.bf16.mxu0 %v2460
  %2677 = vmatpush1.bf16.msra.mxu0 %v2459
  %2678 = vmatprep.subr.bf16.mxu0 %v2464
  %2679 = vmatpush1.bf16.msra.mxu0 %v2463
  %2680 = vmatprep.subr.bf16.mxu0 %v2468
  %2681 = vmatpush1.bf16.msra.mxu0 %v2467
  %2682 = vmatprep.subr.bf16.mxu0 %v2472
  %2683 = vmatpush1.bf16.msra.mxu0 %v2471
  %2684 = vmatprep.subr.bf16.mxu0 %v2476
  %2685 = vmatpush1.bf16.msra.mxu0 %v2475
  %2686 = vmatprep.subr.bf16.mxu0 %v2480
  %2687 = vmatpush1.bf16.msra.mxu0 %v2479
  %2688 = vmatprep.subr.bf16.mxu0 %v2484
  %2689 = vmatpush1.bf16.msra.mxu0 %v2483
  %2690 = vmatprep.subr.bf16.mxu0 %v2488
  %2691 = vmatpush1.bf16.msra.mxu0 %v2487
  %2692 = vmatprep.mubr.bf16.mxu0 %v1978
  %2693 = vmatmul.mubr.bf16.gmra.mrb[0].mxu0 %v1977
  %v2694 = vpop.f32.mrb[0].mxu0
  %v2695 = vadd.f32 %v2654, %v2694
  %v2696 = vpop.f32.mrb[0].mxu0
  %v2697 = vadd.f32 %v2656, %v2696
  %v2698 = vpop.f32.mrb[0].mxu0
  %v2699 = vpop.f32.mrb[0].mxu0
  %2700 = vdwg.mxu0
  %2701 = vmatprep.subr.bf16.mxu0 %v2366
  %2702 = vmatpush1.bf16.msra.mxu0 %v2365
  %2703 = vmatprep.subr.bf16.mxu0 %v2370
  %2704 = vmatpush1.bf16.msra.mxu0 %v2369
  %2705 = vmatprep.subr.bf16.mxu0 %v2374
  %2706 = vmatpush1.bf16.msra.mxu0 %v2373
  %2707 = vmatprep.subr.bf16.mxu0 %v2378
  %2708 = vmatpush1.bf16.msra.mxu0 %v2377
  %2709 = vmatprep.subr.bf16.mxu0 %v2382
  %2710 = vmatpush1.bf16.msra.mxu0 %v2381
  %2711 = vmatprep.subr.bf16.mxu0 %v2386
  %2712 = vmatpush1.bf16.msra.mxu0 %v2385
  %2713 = vmatprep.subr.bf16.mxu0 %v2390
  %2714 = vmatpush1.bf16.msra.mxu0 %v2389
  %2715 = vmatprep.subr.bf16.mxu0 %v2394
  %2716 = vmatpush1.bf16.msra.mxu0 %v2393
  %2717 = vmatprep.subr.bf16.mxu0 %v2398
  %2718 = vmatpush1.bf16.msra.mxu0 %v2397
  %2719 = vmatprep.subr.bf16.mxu0 %v2402
  %2720 = vmatpush1.bf16.msra.mxu0 %v2401
  %2721 = vmatprep.subr.bf16.mxu0 %v2406
  %2722 = vmatpush1.bf16.msra.mxu0 %v2405
  %2723 = vmatprep.subr.bf16.mxu0 %v2410
  %2724 = vmatpush1.bf16.msra.mxu0 %v2409
  %2725 = vmatprep.subr.bf16.mxu0 %v2414
  %2726 = vmatpush1.bf16.msra.mxu0 %v2413
  %2727 = vmatprep.subr.bf16.mxu0 %v2418
  %2728 = vmatpush1.bf16.msra.mxu0 %v2417
  %2729 = vmatprep.subr.bf16.mxu0 %v2422
  %2730 = vmatpush1.bf16.msra.mxu0 %v2421
  %2731 = vmatprep.subr.bf16.mxu0 %v2426
  %2732 = vmatpush1.bf16.msra.mxu0 %v2425
  %2733 = vmatprep.mubr.bf16.mxu0 %v1976
  %2734 = vmatmul.mubr.bf16.gmra.mrb[0].mxu0 %v1975
  %v2735 = vpop.f32.mrb[0].mxu0
  %v2736 = vadd.f32 0.0, %v2735
  %v2737 = vpop.f32.mrb[0].mxu0
  %v2738 = vadd.f32 0.0, %v2737
  %v2739 = vpop.f32.mrb[0].mxu0
  %v2740 = vpop.f32.mrb[0].mxu0
  %2741 = vdwg.mxu0
  %2742 = vmatprep.subr.bf16.mxu0 %v2430
  %2743 = vmatpush1.bf16.msra.mxu0 %v2429
  %2744 = vmatprep.subr.bf16.mxu0 %v2434
  %2745 = vmatpush1.bf16.msra.mxu0 %v2433
  %2746 = vmatprep.subr.bf16.mxu0 %v2438
  %2747 = vmatpush1.bf16.msra.mxu0 %v2437
  %2748 = vmatprep.subr.bf16.mxu0 %v2442
  %2749 = vmatpush1.bf16.msra.mxu0 %v2441
  %2750 = vmatprep.subr.bf16.mxu0 %v2446
  %2751 = vmatpush1.bf16.msra.mxu0 %v2445
  %2752 = vmatprep.subr.bf16.mxu0 %v2450
  %2753 = vmatpush1.bf16.msra.mxu0 %v2449
  %2754 = vmatprep.subr.bf16.mxu0 %v2454
  %2755 = vmatpush1.bf16.msra.mxu0 %v2453
  %2756 = vmatprep.subr.bf16.mxu0 %v2458
  %2757 = vmatpush1.bf16.msra.mxu0 %v2457
  %2758 = vmatprep.subr.bf16.mxu0 %v2462
  %2759 = vmatpush1.bf16.msra.mxu0 %v2461
  %2760 = vmatprep.subr.bf16.mxu0 %v2466
  %2761 = vmatpush1.bf16.msra.mxu0 %v2465
  %2762 = vmatprep.subr.bf16.mxu0 %v2470
  %2763 = vmatpush1.bf16.msra.mxu0 %v2469
  %2764 = vmatprep.subr.bf16.mxu0 %v2474
  %2765 = vmatpush1.bf16.msra.mxu0 %v2473
  %2766 = vmatprep.subr.bf16.mxu0 %v2478
  %2767 = vmatpush1.bf16.msra.mxu0 %v2477
  %2768 = vmatprep.subr.bf16.mxu0 %v2482
  %2769 = vmatpush1.bf16.msra.mxu0 %v2481
  %2770 = vmatprep.subr.bf16.mxu0 %v2486
  %2771 = vmatpush1.bf16.msra.mxu0 %v2485
  %2772 = vmatprep.subr.bf16.mxu0 %v2490
  %2773 = vmatpush1.bf16.msra.mxu0 %v2489
  %2774 = vmatprep.mubr.bf16.mxu0 %v1978
  %2775 = vmatmul.mubr.bf16.gmra.mrb[0].mxu0 %v1977
  %v2776 = vpop.f32.mrb[0].mxu0
  %v2777 = vadd.f32 %v2736, %v2776
  %v2778 = vpop.f32.mrb[0].mxu0
  %v2779 = vadd.f32 %v2738, %v2778
  %v2780 = vpop.f32.mrb[0].mxu0
  %v2781 = vpop.f32.mrb[0].mxu0
  %2782 = vdwg.mxu0
  %v2911 = vunpack.c.l.b16 %v1714
  %v2912 = vunpack.c.h.b16 %v1714
  %v2913 = vunpack.c.l.b16 %v1715
  %v2914 = vunpack.c.h.b16 %v1715
  %v2915 = vunpack.c.l.b16 %v1716
  %v2916 = vunpack.c.h.b16 %v1716
  %v2917 = vunpack.c.l.b16 %v1717
  %v2918 = vunpack.c.h.b16 %v1717
  %v2919 = vunpack.c.l.b16 %v1718
  %v2920 = vunpack.c.h.b16 %v1718
  %v2921 = vunpack.c.l.b16 %v1719
  %v2922 = vunpack.c.h.b16 %v1719
  %v2923 = vunpack.c.l.b16 %v1720
  %v2924 = vunpack.c.h.b16 %v1720
  %v2925 = vunpack.c.l.b16 %v1721
  %v2926 = vunpack.c.h.b16 %v1721
  %v2927 = vunpack.c.l.b16 %v1722
  %v2928 = vunpack.c.h.b16 %v1722
  %v2929 = vunpack.c.l.b16 %v1723
  %v2930 = vunpack.c.h.b16 %v1723
  %v2931 = vunpack.c.l.b16 %v1724
  %v2932 = vunpack.c.h.b16 %v1724
  %v2933 = vunpack.c.l.b16 %v1725
  %v2934 = vunpack.c.h.b16 %v1725
  %v2935 = vunpack.c.l.b16 %v1726
  %v2936 = vunpack.c.h.b16 %v1726
  %v2937 = vunpack.c.l.b16 %v1727
  %v2938 = vunpack.c.h.b16 %v1727
  %v2939 = vunpack.c.l.b16 %v1728
  %v2940 = vunpack.c.h.b16 %v1728
  %v2941 = vunpack.c.l.b16 %v1729
  %v2942 = vunpack.c.h.b16 %v1729
  %v2943 = vunpack.c.l.b16 %v1730
  %v2944 = vunpack.c.h.b16 %v1730
  %v2945 = vunpack.c.l.b16 %v1731
  %v2946 = vunpack.c.h.b16 %v1731
  %v2947 = vunpack.c.l.b16 %v1732
  %v2948 = vunpack.c.h.b16 %v1732
  %v2949 = vunpack.c.l.b16 %v1733
  %v2950 = vunpack.c.h.b16 %v1733
  %v2951 = vunpack.c.l.b16 %v1734
  %v2952 = vunpack.c.h.b16 %v1734
  %v2953 = vunpack.c.l.b16 %v1735
  %v2954 = vunpack.c.h.b16 %v1735
  %v2955 = vunpack.c.l.b16 %v1736
  %v2956 = vunpack.c.h.b16 %v1736
  %v2957 = vunpack.c.l.b16 %v1737
  %v2958 = vunpack.c.h.b16 %v1737
  %v2959 = vunpack.c.l.b16 %v1738
  %v2960 = vunpack.c.h.b16 %v1738
  %v2961 = vunpack.c.l.b16 %v1739
  %v2962 = vunpack.c.h.b16 %v1739
  %v2963 = vunpack.c.l.b16 %v1740
  %v2964 = vunpack.c.h.b16 %v1740
  %v2965 = vunpack.c.l.b16 %v1741
  %v2966 = vunpack.c.h.b16 %v1741
  %v2967 = vunpack.c.l.b16 %v1742
  %v2968 = vunpack.c.h.b16 %v1742
  %v2969 = vunpack.c.l.b16 %v1743
  %v2970 = vunpack.c.h.b16 %v1743
  %v2971 = vunpack.c.l.b16 %v1744
  %v2972 = vunpack.c.h.b16 %v1744
  %v2973 = vunpack.c.l.b16 %v1745
  %v2974 = vunpack.c.h.b16 %v1745
  %v2975 = vunpack.c.l.b16 %v1746
  %v2976 = vunpack.c.h.b16 %v1746
  %v2977 = vunpack.c.l.b16 %v1747
  %v2978 = vunpack.c.h.b16 %v1747
  %v2979 = vunpack.c.l.b16 %v1748
  %v2980 = vunpack.c.h.b16 %v1748
  %v2981 = vunpack.c.l.b16 %v1749
  %v2982 = vunpack.c.h.b16 %v1749
  %v2983 = vunpack.c.l.b16 %v1750
  %v2984 = vunpack.c.h.b16 %v1750
  %v2985 = vunpack.c.l.b16 %v1751
  %v2986 = vunpack.c.h.b16 %v1751
  %v2987 = vunpack.c.l.b16 %v1752
  %v2988 = vunpack.c.h.b16 %v1752
  %v2989 = vunpack.c.l.b16 %v1753
  %v2990 = vunpack.c.h.b16 %v1753
  %v2991 = vunpack.c.l.b16 %v1754
  %v2992 = vunpack.c.h.b16 %v1754
  %v2993 = vunpack.c.l.b16 %v1755
  %v2994 = vunpack.c.h.b16 %v1755
  %v2995 = vunpack.c.l.b16 %v1756
  %v2996 = vunpack.c.h.b16 %v1756
  %v2997 = vunpack.c.l.b16 %v1757
  %v2998 = vunpack.c.h.b16 %v1757
  %v2999 = vunpack.c.l.b16 %v1758
  %v3000 = vunpack.c.h.b16 %v1758
  %v3001 = vunpack.c.l.b16 %v1759
  %v3002 = vunpack.c.h.b16 %v1759
  %v3003 = vunpack.c.l.b16 %v1760
  %v3004 = vunpack.c.h.b16 %v1760
  %v3005 = vunpack.c.l.b16 %v1761
  %v3006 = vunpack.c.h.b16 %v1761
  %v3007 = vunpack.c.l.b16 %v1762
  %v3008 = vunpack.c.h.b16 %v1762
  %v3009 = vunpack.c.l.b16 %v1763
  %v3010 = vunpack.c.h.b16 %v1763
  %v3011 = vunpack.c.l.b16 %v1764
  %v3012 = vunpack.c.h.b16 %v1764
  %v3013 = vunpack.c.l.b16 %v1765
  %v3014 = vunpack.c.h.b16 %v1765
  %v3015 = vunpack.c.l.b16 %v1766
  %v3016 = vunpack.c.h.b16 %v1766
  %v3017 = vunpack.c.l.b16 %v1767
  %v3018 = vunpack.c.h.b16 %v1767
  %v3019 = vunpack.c.l.b16 %v1768
  %v3020 = vunpack.c.h.b16 %v1768
  %v3021 = vunpack.c.l.b16 %v1769
  %v3022 = vunpack.c.h.b16 %v1769
  %v3023 = vunpack.c.l.b16 %v1770
  %v3024 = vunpack.c.h.b16 %v1770
  %v3025 = vunpack.c.l.b16 %v1771
  %v3026 = vunpack.c.h.b16 %v1771
  %v3027 = vunpack.c.l.b16 %v1772
  %v3028 = vunpack.c.h.b16 %v1772
  %v3029 = vunpack.c.l.b16 %v1773
  %v3030 = vunpack.c.h.b16 %v1773
  %v3031 = vunpack.c.l.b16 %v1774
  %v3032 = vunpack.c.h.b16 %v1774
  %v3033 = vunpack.c.l.b16 %v1775
  %v3034 = vunpack.c.h.b16 %v1775
  %v3035 = vunpack.c.l.b16 %v1776
  %v3036 = vunpack.c.h.b16 %v1776
  %v3037 = vunpack.c.l.b16 %v1777
  %v3038 = vunpack.c.h.b16 %v1777
  %v3039 = vunpack.c.l.b16 %v1778
  %v3040 = vunpack.c.h.b16 %v1778
  %v3041 = vunpack.c.l.b16 %v1779
  %v3042 = vunpack.c.h.b16 %v1779
  %v3043 = vunpack.c.l.b16 %v1780
  %v3044 = vunpack.c.h.b16 %v1780
  %v3045 = vunpack.c.l.b16 %v1781
  %v3046 = vunpack.c.h.b16 %v1781
  %v3047 = vunpack.c.l.b16 %v1782
  %v3048 = vunpack.c.h.b16 %v1782
  %v3049 = vunpack.c.l.b16 %v1783
  %v3050 = vunpack.c.h.b16 %v1783
  %v3051 = vunpack.c.l.b16 %v1784
  %v3052 = vunpack.c.h.b16 %v1784
  %v3053 = vunpack.c.l.b16 %v1785
  %v3054 = vunpack.c.h.b16 %v1785
  %v3055 = vunpack.c.l.b16 %v1786
  %v3056 = vunpack.c.h.b16 %v1786
  %v3057 = vunpack.c.l.b16 %v1787
  %v3058 = vunpack.c.h.b16 %v1787
  %v3059 = vunpack.c.l.b16 %v1788
  %v3060 = vunpack.c.h.b16 %v1788
  %v3061 = vunpack.c.l.b16 %v1789
  %v3062 = vunpack.c.h.b16 %v1789
  %v3063 = vunpack.c.l.b16 %v1790
  %v3064 = vunpack.c.h.b16 %v1790
  %v3065 = vunpack.c.l.b16 %v1791
  %v3066 = vunpack.c.h.b16 %v1791
  %v3067 = vunpack.c.l.b16 %v1792
  %v3068 = vunpack.c.h.b16 %v1792
  %v3069 = vunpack.c.l.b16 %v1793
  %v3070 = vunpack.c.h.b16 %v1793
  %v3071 = vunpack.c.l.b16 %v1794
  %v3072 = vunpack.c.h.b16 %v1794
  %v3073 = vunpack.c.l.b16 %v1795
  %v3074 = vunpack.c.h.b16 %v1795
  %v3075 = vunpack.c.l.b16 %v1796
  %v3076 = vunpack.c.h.b16 %v1796
  %v3077 = vunpack.c.l.b16 %v1797
  %v3078 = vunpack.c.h.b16 %v1797
  %v3079 = vunpack.c.l.b16 %v1798
  %v3080 = vunpack.c.h.b16 %v1798
  %v3081 = vunpack.c.l.b16 %v1799
  %v3082 = vunpack.c.h.b16 %v1799
  %v3083 = vunpack.c.l.b16 %v1800
  %v3084 = vunpack.c.h.b16 %v1800
  %v3085 = vunpack.c.l.b16 %v1801
  %v3086 = vunpack.c.h.b16 %v1801
  %v3087 = vunpack.c.l.b16 %v1802
  %v3088 = vunpack.c.h.b16 %v1802
  %v3089 = vunpack.c.l.b16 %v1803
  %v3090 = vunpack.c.h.b16 %v1803
  %v3091 = vunpack.c.l.b16 %v1804
  %v3092 = vunpack.c.h.b16 %v1804
  %v3093 = vunpack.c.l.b16 %v1805
  %v3094 = vunpack.c.h.b16 %v1805
  %v3095 = vunpack.c.l.b16 %v1806
  %v3096 = vunpack.c.h.b16 %v1806
  %v3097 = vunpack.c.l.b16 %v1807
  %v3098 = vunpack.c.h.b16 %v1807
  %v3099 = vunpack.c.l.b16 %v1808
  %v3100 = vunpack.c.h.b16 %v1808
  %v3101 = vunpack.c.l.b16 %v1809
  %v3102 = vunpack.c.h.b16 %v1809
  %v3103 = vunpack.c.l.b16 %v1810
  %v3104 = vunpack.c.h.b16 %v1810
  %v3105 = vunpack.c.l.b16 %v1811
  %v3106 = vunpack.c.h.b16 %v1811
  %v3107 = vunpack.c.l.b16 %v1812
  %v3108 = vunpack.c.h.b16 %v1812
  %v3109 = vunpack.c.l.b16 %v1813
  %v3110 = vunpack.c.h.b16 %v1813
  %v3111 = vunpack.c.l.b16 %v1814
  %v3112 = vunpack.c.h.b16 %v1814
  %v3113 = vunpack.c.l.b16 %v1815
  %v3114 = vunpack.c.h.b16 %v1815
  %v3115 = vunpack.c.l.b16 %v1816
  %v3116 = vunpack.c.h.b16 %v1816
  %v3117 = vunpack.c.l.b16 %v1817
  %v3118 = vunpack.c.h.b16 %v1817
  %v3119 = vunpack.c.l.b16 %v1818
  %v3120 = vunpack.c.h.b16 %v1818
  %v3121 = vunpack.c.l.b16 %v1819
  %v3122 = vunpack.c.h.b16 %v1819
  %v3123 = vunpack.c.l.b16 %v1820
  %v3124 = vunpack.c.h.b16 %v1820
  %v3125 = vunpack.c.l.b16 %v1821
  %v3126 = vunpack.c.h.b16 %v1821
  %v3127 = vunpack.c.l.b16 %v1822
  %v3128 = vunpack.c.h.b16 %v1822
  %v3129 = vunpack.c.l.b16 %v1823
  %v3130 = vunpack.c.h.b16 %v1823
  %v3131 = vunpack.c.l.b16 %v1824
  %v3132 = vunpack.c.h.b16 %v1824
  %v3133 = vunpack.c.l.b16 %v1825
  %v3134 = vunpack.c.h.b16 %v1825
  %v3135 = vunpack.c.l.b16 %v1826
  %v3136 = vunpack.c.h.b16 %v1826
  %v3137 = vunpack.c.l.b16 %v1827
  %v3138 = vunpack.c.h.b16 %v1827
  %v3139 = vunpack.c.l.b16 %v1828
  %v3140 = vunpack.c.h.b16 %v1828
  %v3141 = vunpack.c.l.b16 %v1829
  %v3142 = vunpack.c.h.b16 %v1829
  %v3143 = vunpack.c.l.b16 %v1830
  %v3144 = vunpack.c.h.b16 %v1830
  %v3145 = vunpack.c.l.b16 %v1831
  %v3146 = vunpack.c.h.b16 %v1831
  %v3147 = vunpack.c.l.b16 %v1832
  %v3148 = vunpack.c.h.b16 %v1832
  %v3149 = vunpack.c.l.b16 %v1833
  %v3150 = vunpack.c.h.b16 %v1833
  %v3151 = vunpack.c.l.b16 %v1834
  %v3152 = vunpack.c.h.b16 %v1834
  %v3153 = vunpack.c.l.b16 %v1835
  %v3154 = vunpack.c.h.b16 %v1835
  %v3155 = vunpack.c.l.b16 %v1836
  %v3156 = vunpack.c.h.b16 %v1836
  %v3157 = vunpack.c.l.b16 %v1837
  %v3158 = vunpack.c.h.b16 %v1837
  %v3159 = vunpack.c.l.b16 %v1838
  %v3160 = vunpack.c.h.b16 %v1838
  %v3161 = vunpack.c.l.b16 %v1839
  %v3162 = vunpack.c.h.b16 %v1839
  %v3163 = vunpack.c.l.b16 %v1840
  %v3164 = vunpack.c.h.b16 %v1840
  %v3165 = vunpack.c.l.b16 %v1841
  %v3166 = vunpack.c.h.b16 %v1841
  %v3167 = vpack.c.b16 %v2915, %v2911
  %v3168 = vpack.c.b16 %v2916, %v2912
  %v3169 = vpack.c.b16 %v2917, %v2913
  %v3170 = vpack.c.b16 %v2918, %v2914
  %v3171 = vpack.c.b16 %v2923, %v2919
  %v3172 = vpack.c.b16 %v2924, %v2920
  %v3173 = vpack.c.b16 %v2925, %v2921
  %v3174 = vpack.c.b16 %v2926, %v2922
  %v3175 = vpack.c.b16 %v2931, %v2927
  %v3176 = vpack.c.b16 %v2932, %v2928
  %v3177 = vpack.c.b16 %v2933, %v2929
  %v3178 = vpack.c.b16 %v2934, %v2930
  %v3179 = vpack.c.b16 %v2939, %v2935
  %v3180 = vpack.c.b16 %v2940, %v2936
  %v3181 = vpack.c.b16 %v2941, %v2937
  %v3182 = vpack.c.b16 %v2942, %v2938
  %v3183 = vpack.c.b16 %v2947, %v2943
  %v3184 = vpack.c.b16 %v2948, %v2944
  %v3185 = vpack.c.b16 %v2949, %v2945
  %v3186 = vpack.c.b16 %v2950, %v2946
  %v3187 = vpack.c.b16 %v2955, %v2951
  %v3188 = vpack.c.b16 %v2956, %v2952
  %v3189 = vpack.c.b16 %v2957, %v2953
  %v3190 = vpack.c.b16 %v2958, %v2954
  %v3191 = vpack.c.b16 %v2963, %v2959
  %v3192 = vpack.c.b16 %v2964, %v2960
  %v3193 = vpack.c.b16 %v2965, %v2961
  %v3194 = vpack.c.b16 %v2966, %v2962
  %v3195 = vpack.c.b16 %v2971, %v2967
  %v3196 = vpack.c.b16 %v2972, %v2968
  %v3197 = vpack.c.b16 %v2973, %v2969
  %v3198 = vpack.c.b16 %v2974, %v2970
  %v3199 = vpack.c.b16 %v2979, %v2975
  %v3200 = vpack.c.b16 %v2980, %v2976
  %v3201 = vpack.c.b16 %v2981, %v2977
  %v3202 = vpack.c.b16 %v2982, %v2978
  %v3203 = vpack.c.b16 %v2987, %v2983
  %v3204 = vpack.c.b16 %v2988, %v2984
  %v3205 = vpack.c.b16 %v2989, %v2985
  %v3206 = vpack.c.b16 %v2990, %v2986
  %v3207 = vpack.c.b16 %v2995, %v2991
  %v3208 = vpack.c.b16 %v2996, %v2992
  %v3209 = vpack.c.b16 %v2997, %v2993
  %v3210 = vpack.c.b16 %v2998, %v2994
  %v3211 = vpack.c.b16 %v3003, %v2999
  %v3212 = vpack.c.b16 %v3004, %v3000
  %v3213 = vpack.c.b16 %v3005, %v3001
  %v3214 = vpack.c.b16 %v3006, %v3002
  %v3215 = vpack.c.b16 %v3011, %v3007
  %v3216 = vpack.c.b16 %v3012, %v3008
  %v3217 = vpack.c.b16 %v3013, %v3009
  %v3218 = vpack.c.b16 %v3014, %v3010
  %v3219 = vpack.c.b16 %v3019, %v3015
  %v3220 = vpack.c.b16 %v3020, %v3016
  %v3221 = vpack.c.b16 %v3021, %v3017
  %v3222 = vpack.c.b16 %v3022, %v3018
  %v3223 = vpack.c.b16 %v3027, %v3023
  %v3224 = vpack.c.b16 %v3028, %v3024
  %v3225 = vpack.c.b16 %v3029, %v3025
  %v3226 = vpack.c.b16 %v3030, %v3026
  %v3227 = vpack.c.b16 %v3035, %v3031
  %v3228 = vpack.c.b16 %v3036, %v3032
  %v3229 = vpack.c.b16 %v3037, %v3033
  %v3230 = vpack.c.b16 %v3038, %v3034
  %v3231 = vpack.c.b16 %v3043, %v3039
  %v3232 = vpack.c.b16 %v3044, %v3040
  %v3233 = vpack.c.b16 %v3045, %v3041
  %v3234 = vpack.c.b16 %v3046, %v3042
  %v3235 = vpack.c.b16 %v3051, %v3047
  %v3236 = vpack.c.b16 %v3052, %v3048
  %v3237 = vpack.c.b16 %v3053, %v3049
  %v3238 = vpack.c.b16 %v3054, %v3050
  %v3239 = vpack.c.b16 %v3059, %v3055
  %v3240 = vpack.c.b16 %v3060, %v3056
  %v3241 = vpack.c.b16 %v3061, %v3057
  %v3242 = vpack.c.b16 %v3062, %v3058
  %v3243 = vpack.c.b16 %v3067, %v3063
  %v3244 = vpack.c.b16 %v3068, %v3064
  %v3245 = vpack.c.b16 %v3069, %v3065
  %v3246 = vpack.c.b16 %v3070, %v3066
  %v3247 = vpack.c.b16 %v3075, %v3071
  %v3248 = vpack.c.b16 %v3076, %v3072
  %v3249 = vpack.c.b16 %v3077, %v3073
  %v3250 = vpack.c.b16 %v3078, %v3074
  %v3251 = vpack.c.b16 %v3083, %v3079
  %v3252 = vpack.c.b16 %v3084, %v3080
  %v3253 = vpack.c.b16 %v3085, %v3081
  %v3254 = vpack.c.b16 %v3086, %v3082
  %v3255 = vpack.c.b16 %v3091, %v3087
  %v3256 = vpack.c.b16 %v3092, %v3088
  %v3257 = vpack.c.b16 %v3093, %v3089
  %v3258 = vpack.c.b16 %v3094, %v3090
  %v3259 = vpack.c.b16 %v3099, %v3095
  %v3260 = vpack.c.b16 %v3100, %v3096
  %v3261 = vpack.c.b16 %v3101, %v3097
  %v3262 = vpack.c.b16 %v3102, %v3098
  %v3263 = vpack.c.b16 %v3107, %v3103
  %v3264 = vpack.c.b16 %v3108, %v3104
  %v3265 = vpack.c.b16 %v3109, %v3105
  %v3266 = vpack.c.b16 %v3110, %v3106
  %v3267 = vpack.c.b16 %v3115, %v3111
  %v3268 = vpack.c.b16 %v3116, %v3112
  %v3269 = vpack.c.b16 %v3117, %v3113
  %v3270 = vpack.c.b16 %v3118, %v3114
  %v3271 = vpack.c.b16 %v3123, %v3119
  %v3272 = vpack.c.b16 %v3124, %v3120
  %v3273 = vpack.c.b16 %v3125, %v3121
  %v3274 = vpack.c.b16 %v3126, %v3122
  %v3275 = vpack.c.b16 %v3131, %v3127
  %v3276 = vpack.c.b16 %v3132, %v3128
  %v3277 = vpack.c.b16 %v3133, %v3129
  %v3278 = vpack.c.b16 %v3134, %v3130
  %v3279 = vpack.c.b16 %v3139, %v3135
  %v3280 = vpack.c.b16 %v3140, %v3136
  %v3281 = vpack.c.b16 %v3141, %v3137
  %v3282 = vpack.c.b16 %v3142, %v3138
  %v3283 = vpack.c.b16 %v3147, %v3143
  %v3284 = vpack.c.b16 %v3148, %v3144
  %v3285 = vpack.c.b16 %v3149, %v3145
  %v3286 = vpack.c.b16 %v3150, %v3146
  %v3287 = vpack.c.b16 %v3155, %v3151
  %v3288 = vpack.c.b16 %v3156, %v3152
  %v3289 = vpack.c.b16 %v3157, %v3153
  %v3290 = vpack.c.b16 %v3158, %v3154
  %v3291 = vpack.c.b16 %v3163, %v3159
  %v3292 = vpack.c.b16 %v3164, %v3160
  %v3293 = vpack.c.b16 %v3165, %v3161
  %v3294 = vpack.c.b16 %v3166, %v3162
  %3423 = vmatprep.subr.bf16.mxu0 %v3168
  %3424 = vmatpush1.bf16.msra.mxu0 %v3167
  %3425 = vmatprep.subr.bf16.mxu0 %v3172
  %3426 = vmatpush1.bf16.msra.mxu0 %v3171
  %3427 = vmatprep.subr.bf16.mxu0 %v3176
  %3428 = vmatpush1.bf16.msra.mxu0 %v3175
  %3429 = vmatprep.subr.bf16.mxu0 %v3180
  %3430 = vmatpush1.bf16.msra.mxu0 %v3179
  %3431 = vmatprep.subr.bf16.mxu0 %v3184
  %3432 = vmatpush1.bf16.msra.mxu0 %v3183
  %3433 = vmatprep.subr.bf16.mxu0 %v3188
  %3434 = vmatpush1.bf16.msra.mxu0 %v3187
  %3435 = vmatprep.subr.bf16.mxu0 %v3192
  %3436 = vmatpush1.bf16.msra.mxu0 %v3191
  %3437 = vmatprep.subr.bf16.mxu0 %v3196
  %3438 = vmatpush1.bf16.msra.mxu0 %v3195
  %3439 = vmatprep.subr.bf16.mxu0 %v3200
  %3440 = vmatpush1.bf16.msra.mxu0 %v3199
  %3441 = vmatprep.subr.bf16.mxu0 %v3204
  %3442 = vmatpush1.bf16.msra.mxu0 %v3203
  %3443 = vmatprep.subr.bf16.mxu0 %v3208
  %3444 = vmatpush1.bf16.msra.mxu0 %v3207
  %3445 = vmatprep.subr.bf16.mxu0 %v3212
  %3446 = vmatpush1.bf16.msra.mxu0 %v3211
  %3447 = vmatprep.subr.bf16.mxu0 %v3216
  %3448 = vmatpush1.bf16.msra.mxu0 %v3215
  %3449 = vmatprep.subr.bf16.mxu0 %v3220
  %3450 = vmatpush1.bf16.msra.mxu0 %v3219
  %3451 = vmatprep.subr.bf16.mxu0 %v3224
  %3452 = vmatpush1.bf16.msra.mxu0 %v3223
  %3453 = vmatprep.subr.bf16.mxu0 %v3228
  %3454 = vmatpush1.bf16.msra.mxu0 %v3227
  %3455 = vmatprep.mubr.bf16.mxu0 %v1843
  %3456 = vmatmul.mubr.bf16.gmra.mrb[0].mxu0 %v1842
  %v3457 = vpop.f32.mrb[0].mxu0
  %v3458 = vadd.f32 %v2695, %v3457
  %v3459 = vpop.f32.mrb[0].mxu0
  %v3460 = vadd.f32 %v2697, %v3459
  %v3461 = vpop.f32.mrb[0].mxu0
  %v3462 = vpop.f32.mrb[0].mxu0
  %3463 = vdwg.mxu0
  %3464 = vmatprep.subr.bf16.mxu0 %v3232
  %3465 = vmatpush1.bf16.msra.mxu0 %v3231
  %3466 = vmatprep.subr.bf16.mxu0 %v3236
  %3467 = vmatpush1.bf16.msra.mxu0 %v3235
  %3468 = vmatprep.subr.bf16.mxu0 %v3240
  %3469 = vmatpush1.bf16.msra.mxu0 %v3239
  %3470 = vmatprep.subr.bf16.mxu0 %v3244
  %3471 = vmatpush1.bf16.msra.mxu0 %v3243
  %3472 = vmatprep.subr.bf16.mxu0 %v3248
  %3473 = vmatpush1.bf16.msra.mxu0 %v3247
  %3474 = vmatprep.subr.bf16.mxu0 %v3252
  %3475 = vmatpush1.bf16.msra.mxu0 %v3251
  %3476 = vmatprep.subr.bf16.mxu0 %v3256
  %3477 = vmatpush1.bf16.msra.mxu0 %v3255
  %3478 = vmatprep.subr.bf16.mxu0 %v3260
  %3479 = vmatpush1.bf16.msra.mxu0 %v3259
  %3480 = vmatprep.subr.bf16.mxu0 %v3264
  %3481 = vmatpush1.bf16.msra.mxu0 %v3263
  %3482 = vmatprep.subr.bf16.mxu0 %v3268
  %3483 = vmatpush1.bf16.msra.mxu0 %v3267
  %3484 = vmatprep.subr.bf16.mxu0 %v3272
  %3485 = vmatpush1.bf16.msra.mxu0 %v3271
  %3486 = vmatprep.subr.bf16.mxu0 %v3276
  %3487 = vmatpush1.bf16.msra.mxu0 %v3275
  %3488 = vmatprep.subr.bf16.mxu0 %v3280
  %3489 = vmatpush1.bf16.msra.mxu0 %v3279
  %3490 = vmatprep.subr.bf16.mxu0 %v3284
  %3491 = vmatpush1.bf16.msra.mxu0 %v3283
  %3492 = vmatprep.subr.bf16.mxu0 %v3288
  %3493 = vmatpush1.bf16.msra.mxu0 %v3287
  %3494 = vmatprep.subr.bf16.mxu0 %v3292
  %3495 = vmatpush1.bf16.msra.mxu0 %v3291
  %3496 = vmatprep.mubr.bf16.mxu0 %v1845
  %3497 = vmatmul.mubr.bf16.gmra.mrb[0].mxu0 %v1844
  %v3498 = vpop.f32.mrb[0].mxu0
  %v3499 = vadd.f32 %v3458, %v3498
  %v3500 = vpop.f32.mrb[0].mxu0
  %v3501 = vadd.f32 %v3460, %v3500
  %v3502 = vpop.f32.mrb[0].mxu0
  %v3503 = vpop.f32.mrb[0].mxu0
  %3504 = vdwg.mxu0
  %3505 = vmatprep.subr.bf16.mxu0 %v3170
  %3506 = vmatpush1.bf16.msra.mxu0 %v3169
  %3507 = vmatprep.subr.bf16.mxu0 %v3174
  %3508 = vmatpush1.bf16.msra.mxu0 %v3173
  %3509 = vmatprep.subr.bf16.mxu0 %v3178
  %3510 = vmatpush1.bf16.msra.mxu0 %v3177
  %3511 = vmatprep.subr.bf16.mxu0 %v3182
  %3512 = vmatpush1.bf16.msra.mxu0 %v3181
  %3513 = vmatprep.subr.bf16.mxu0 %v3186
  %3514 = vmatpush1.bf16.msra.mxu0 %v3185
  %3515 = vmatprep.subr.bf16.mxu0 %v3190
  %3516 = vmatpush1.bf16.msra.mxu0 %v3189
  %3517 = vmatprep.subr.bf16.mxu0 %v3194
  %3518 = vmatpush1.bf16.msra.mxu0 %v3193
  %3519 = vmatprep.subr.bf16.mxu0 %v3198
  %3520 = vmatpush1.bf16.msra.mxu0 %v3197
  %3521 = vmatprep.subr.bf16.mxu0 %v3202
  %3522 = vmatpush1.bf16.msra.mxu0 %v3201
  %3523 = vmatprep.subr.bf16.mxu0 %v3206
  %3524 = vmatpush1.bf16.msra.mxu0 %v3205
  %3525 = vmatprep.subr.bf16.mxu0 %v3210
  %3526 = vmatpush1.bf16.msra.mxu0 %v3209
  %3527 = vmatprep.subr.bf16.mxu0 %v3214
  %3528 = vmatpush1.bf16.msra.mxu0 %v3213
  %3529 = vmatprep.subr.bf16.mxu0 %v3218
  %3530 = vmatpush1.bf16.msra.mxu0 %v3217
  %3531 = vmatprep.subr.bf16.mxu0 %v3222
  %3532 = vmatpush1.bf16.msra.mxu0 %v3221
  %3533 = vmatprep.subr.bf16.mxu0 %v3226
  %3534 = vmatpush1.bf16.msra.mxu0 %v3225
  %3535 = vmatprep.subr.bf16.mxu0 %v3230
  %3536 = vmatpush1.bf16.msra.mxu0 %v3229
  %3537 = vmatprep.mubr.bf16.mxu0 %v1843
  %3538 = vmatmul.mubr.bf16.gmra.mrb[0].mxu0 %v1842
  %v3539 = vpop.f32.mrb[0].mxu0
  %v3540 = vadd.f32 %v2777, %v3539
  %v3541 = vpop.f32.mrb[0].mxu0
  %v3542 = vadd.f32 %v2779, %v3541
  %v3543 = vpop.f32.mrb[0].mxu0
  %v3544 = vpop.f32.mrb[0].mxu0
  %3545 = vdwg.mxu0
  %3546 = vmatprep.subr.bf16.mxu0 %v3234
  %3547 = vmatpush1.bf16.msra.mxu0 %v3233
  %3548 = vmatprep.subr.bf16.mxu0 %v3238
  %3549 = vmatpush1.bf16.msra.mxu0 %v3237
  %3550 = vmatprep.subr.bf16.mxu0 %v3242
  %3551 = vmatpush1.bf16.msra.mxu0 %v3241
  %3552 = vmatprep.subr.bf16.mxu0 %v3246
  %3553 = vmatpush1.bf16.msra.mxu0 %v3245
  %3554 = vmatprep.subr.bf16.mxu0 %v3250
  %3555 = vmatpush1.bf16.msra.mxu0 %v3249
  %3556 = vmatprep.subr.bf16.mxu0 %v3254
  %3557 = vmatpush1.bf16.msra.mxu0 %v3253
  %3558 = vmatprep.subr.bf16.mxu0 %v3258
  %3559 = vmatpush1.bf16.msra.mxu0 %v3257
  %3560 = vmatprep.subr.bf16.mxu0 %v3262
  %3561 = vmatpush1.bf16.msra.mxu0 %v3261
  %3562 = vmatprep.subr.bf16.mxu0 %v3266
  %3563 = vmatpush1.bf16.msra.mxu0 %v3265
  %3564 = vmatprep.subr.bf16.mxu0 %v3270
  %3565 = vmatpush1.bf16.msra.mxu0 %v3269
  %3566 = vmatprep.subr.bf16.mxu0 %v3274
  %3567 = vmatpush1.bf16.msra.mxu0 %v3273
  %3568 = vmatprep.subr.bf16.mxu0 %v3278
  %3569 = vmatpush1.bf16.msra.mxu0 %v3277
  %3570 = vmatprep.subr.bf16.mxu0 %v3282
  %3571 = vmatpush1.bf16.msra.mxu0 %v3281
  %3572 = vmatprep.subr.bf16.mxu0 %v3286
  %3573 = vmatpush1.bf16.msra.mxu0 %v3285
  %3574 = vmatprep.subr.bf16.mxu0 %v3290
  %3575 = vmatpush1.bf16.msra.mxu0 %v3289
  %3576 = vmatprep.subr.bf16.mxu0 %v3294
  %3577 = vmatpush1.bf16.msra.mxu0 %v3293
  %3578 = vmatprep.mubr.bf16.mxu0 %v1845
  %3579 = vmatmul.mubr.bf16.gmra.mrb[0].mxu0 %v1844
  %v3580 = vpop.f32.mrb[0].mxu0
  %v3581 = vadd.f32 %v3540, %v3580
  %v3582 = vpop.f32.mrb[0].mxu0
  %v3583 = vadd.f32 %v3542, %v3582
  %v3584 = vpop.f32.mrb[0].mxu0
  %v3585 = vpop.f32.mrb[0].mxu0
  %3586 = vdwg.mxu0
  %s3587 = scalar_lea.vmem %s3, 2048
  %v3588 = vld [vmem:[%s3587] sm:$0xff]
  %v3589 = vld [vmem:[%s3587 + $0x8] sm:$0xff]
  %v3590 = vld [vmem:[%s3587 + $0x10] sm:$0xff]
  %v3591 = vld [vmem:[%s3587 + $0x18] sm:$0xff]
  %v3592 = vld [vmem:[%s3587 + $0x20] sm:$0xff]
  %v3593 = vld [vmem:[%s3587 + $0x28] sm:$0xff]
  %v3594 = vld [vmem:[%s3587 + $0x30] sm:$0xff]
  %v3595 = vld [vmem:[%s3587 + $0x38] sm:$0xff]
  %v3596 = vld [vmem:[%s3587 + $0x40] sm:$0xff]
  %v3597 = vld [vmem:[%s3587 + $0x48] sm:$0xff]
  %v3598 = vld [vmem:[%s3587 + $0x50] sm:$0xff]
  %v3599 = vld [vmem:[%s3587 + $0x58] sm:$0xff]
  %v3600 = vld [vmem:[%s3587 + $0x60] sm:$0xff]
  %v3601 = vld [vmem:[%s3587 + $0x68] sm:$0xff]
  %v3602 = vld [vmem:[%s3587 + $0x70] sm:$0xff]
  %v3603 = vld [vmem:[%s3587 + $0x78] sm:$0xff]
  %v3604 = vld [vmem:[%s3587 + $0x80] sm:$0xff]
  %v3605 = vld [vmem:[%s3587 + $0x88] sm:$0xff]
  %v3606 = vld [vmem:[%s3587 + $0x90] sm:$0xff]
  %v3607 = vld [vmem:[%s3587 + $0x98] sm:$0xff]
  %v3608 = vld [vmem:[%s3587 + $0xa0] sm:$0xff]
  %v3609 = vld [vmem:[%s3587 + $0xa8] sm:$0xff]
  %v3610 = vld [vmem:[%s3587 + $0xb0] sm:$0xff]
  %v3611 = vld [vmem:[%s3587 + $0xb8] sm:$0xff]
  %v3612 = vld [vmem:[%s3587 + $0xc0] sm:$0xff]
  %v3613 = vld [vmem:[%s3587 + $0xc8] sm:$0xff]
  %v3614 = vld [vmem:[%s3587 + $0xd0] sm:$0xff]
  %v3615 = vld [vmem:[%s3587 + $0xd8] sm:$0xff]
  %v3616 = vld [vmem:[%s3587 + $0xe0] sm:$0xff]
  %v3617 = vld [vmem:[%s3587 + $0xe8] sm:$0xff]
  %v3618 = vld [vmem:[%s3587 + $0xf0] sm:$0xff]
  %v3619 = vld [vmem:[%s3587 + $0xf8] sm:$0xff]
  %v3620 = vld [vmem:[%s3587 + $0x100] sm:$0xff]
  %v3621 = vld [vmem:[%s3587 + $0x108] sm:$0xff]
  %v3622 = vld [vmem:[%s3587 + $0x110] sm:$0xff]
  %v3623 = vld [vmem:[%s3587 + $0x118] sm:$0xff]
  %v3624 = vld [vmem:[%s3587 + $0x120] sm:$0xff]
  %v3625 = vld [vmem:[%s3587 + $0x128] sm:$0xff]
  %v3626 = vld [vmem:[%s3587 + $0x130] sm:$0xff]
  %v3627 = vld [vmem:[%s3587 + $0x138] sm:$0xff]
  %v3628 = vld [vmem:[%s3587 + $0x140] sm:$0xff]
  %v3629 = vld [vmem:[%s3587 + $0x148] sm:$0xff]
  %v3630 = vld [vmem:[%s3587 + $0x150] sm:$0xff]
  %v3631 = vld [vmem:[%s3587 + $0x158] sm:$0xff]
  %v3632 = vld [vmem:[%s3587 + $0x160] sm:$0xff]
  %v3633 = vld [vmem:[%s3587 + $0x168] sm:$0xff]
  %v3634 = vld [vmem:[%s3587 + $0x170] sm:$0xff]
  %v3635 = vld [vmem:[%s3587 + $0x178] sm:$0xff]
  %v3636 = vld [vmem:[%s3587 + $0x180] sm:$0xff]
  %v3637 = vld [vmem:[%s3587 + $0x188] sm:$0xff]
  %v3638 = vld [vmem:[%s3587 + $0x190] sm:$0xff]
  %v3639 = vld [vmem:[%s3587 + $0x198] sm:$0xff]
  %v3640 = vld [vmem:[%s3587 + $0x1a0] sm:$0xff]
  %v3641 = vld [vmem:[%s3587 + $0x1a8] sm:$0xff]
  %v3642 = vld [vmem:[%s3587 + $0x1b0] sm:$0xff]
  %v3643 = vld [vmem:[%s3587 + $0x1b8] sm:$0xff]
  %v3644 = vld [vmem:[%s3587 + $0x1c0] sm:$0xff]
  %v3645 = vld [vmem:[%s3587 + $0x1c8] sm:$0xff]
  %v3646 = vld [vmem:[%s3587 + $0x1d0] sm:$0xff]
  %v3647 = vld [vmem:[%s3587 + $0x1d8] sm:$0xff]
  %v3648 = vld [vmem:[%s3587 + $0x1e0] sm:$0xff]
  %v3649 = vld [vmem:[%s3587 + $0x1e8] sm:$0xff]
  %v3650 = vld [vmem:[%s3587 + $0x1f0] sm:$0xff]
  %v3651 = vld [vmem:[%s3587 + $0x1f8] sm:$0xff]
  %v3652 = vld [vmem:[%s3587 + $0x200] sm:$0xff]
  %v3653 = vld [vmem:[%s3587 + $0x208] sm:$0xff]
  %v3654 = vld [vmem:[%s3587 + $0x210] sm:$0xff]
  %v3655 = vld [vmem:[%s3587 + $0x218] sm:$0xff]
  %v3656 = vld [vmem:[%s3587 + $0x220] sm:$0xff]
  %v3657 = vld [vmem:[%s3587 + $0x228] sm:$0xff]
  %v3658 = vld [vmem:[%s3587 + $0x230] sm:$0xff]
  %v3659 = vld [vmem:[%s3587 + $0x238] sm:$0xff]
  %v3660 = vld [vmem:[%s3587 + $0x240] sm:$0xff]
  %v3661 = vld [vmem:[%s3587 + $0x248] sm:$0xff]
  %v3662 = vld [vmem:[%s3587 + $0x250] sm:$0xff]
  %v3663 = vld [vmem:[%s3587 + $0x258] sm:$0xff]
  %v3664 = vld [vmem:[%s3587 + $0x260] sm:$0xff]
  %v3665 = vld [vmem:[%s3587 + $0x268] sm:$0xff]
  %v3666 = vld [vmem:[%s3587 + $0x270] sm:$0xff]
  %v3667 = vld [vmem:[%s3587 + $0x278] sm:$0xff]
  %v3668 = vld [vmem:[%s3587 + $0x280] sm:$0xff]
  %v3669 = vld [vmem:[%s3587 + $0x288] sm:$0xff]
  %v3670 = vld [vmem:[%s3587 + $0x290] sm:$0xff]
  %v3671 = vld [vmem:[%s3587 + $0x298] sm:$0xff]
  %v3672 = vld [vmem:[%s3587 + $0x2a0] sm:$0xff]
  %v3673 = vld [vmem:[%s3587 + $0x2a8] sm:$0xff]
  %v3674 = vld [vmem:[%s3587 + $0x2b0] sm:$0xff]
  %v3675 = vld [vmem:[%s3587 + $0x2b8] sm:$0xff]
  %v3676 = vld [vmem:[%s3587 + $0x2c0] sm:$0xff]
  %v3677 = vld [vmem:[%s3587 + $0x2c8] sm:$0xff]
  %v3678 = vld [vmem:[%s3587 + $0x2d0] sm:$0xff]
  %v3679 = vld [vmem:[%s3587 + $0x2d8] sm:$0xff]
  %v3680 = vld [vmem:[%s3587 + $0x2e0] sm:$0xff]
  %v3681 = vld [vmem:[%s3587 + $0x2e8] sm:$0xff]
  %v3682 = vld [vmem:[%s3587 + $0x2f0] sm:$0xff]
  %v3683 = vld [vmem:[%s3587 + $0x2f8] sm:$0xff]
  %v3684 = vld [vmem:[%s3587 + $0x300] sm:$0xff]
  %v3685 = vld [vmem:[%s3587 + $0x308] sm:$0xff]
  %v3686 = vld [vmem:[%s3587 + $0x310] sm:$0xff]
  %v3687 = vld [vmem:[%s3587 + $0x318] sm:$0xff]
  %v3688 = vld [vmem:[%s3587 + $0x320] sm:$0xff]
  %v3689 = vld [vmem:[%s3587 + $0x328] sm:$0xff]
  %v3690 = vld [vmem:[%s3587 + $0x330] sm:$0xff]
  %v3691 = vld [vmem:[%s3587 + $0x338] sm:$0xff]
  %v3692 = vld [vmem:[%s3587 + $0x340] sm:$0xff]
  %v3693 = vld [vmem:[%s3587 + $0x348] sm:$0xff]
  %v3694 = vld [vmem:[%s3587 + $0x350] sm:$0xff]
  %v3695 = vld [vmem:[%s3587 + $0x358] sm:$0xff]
  %v3696 = vld [vmem:[%s3587 + $0x360] sm:$0xff]
  %v3697 = vld [vmem:[%s3587 + $0x368] sm:$0xff]
  %v3698 = vld [vmem:[%s3587 + $0x370] sm:$0xff]
  %v3699 = vld [vmem:[%s3587 + $0x378] sm:$0xff]
  %v3700 = vld [vmem:[%s3587 + $0x380] sm:$0xff]
  %v3701 = vld [vmem:[%s3587 + $0x388] sm:$0xff]
  %v3702 = vld [vmem:[%s3587 + $0x390] sm:$0xff]
  %v3703 = vld [vmem:[%s3587 + $0x398] sm:$0xff]
  %v3704 = vld [vmem:[%s3587 + $0x3a0] sm:$0xff]
  %v3705 = vld [vmem:[%s3587 + $0x3a8] sm:$0xff]
  %v3706 = vld [vmem:[%s3587 + $0x3b0] sm:$0xff]
  %v3707 = vld [vmem:[%s3587 + $0x3b8] sm:$0xff]
  %v3708 = vld [vmem:[%s3587 + $0x3c0] sm:$0xff]
  %v3709 = vld [vmem:[%s3587 + $0x3c8] sm:$0xff]
  %v3710 = vld [vmem:[%s3587 + $0x3d0] sm:$0xff]
  %v3711 = vld [vmem:[%s3587 + $0x3d8] sm:$0xff]
  %v3712 = vld [vmem:[%s3587 + $0x3e0] sm:$0xff]
  %v3713 = vld [vmem:[%s3587 + $0x3e8] sm:$0xff]
  %v3714 = vld [vmem:[%s3587 + $0x3f0] sm:$0xff]
  %v3715 = vld [vmem:[%s3587 + $0x3f8] sm:$0xff]
  %v3716 = vpack.c.bf16 %v1710, %v1710
  %v3717 = vpack.c.bf16 %v1711, %v1711
  %v3718 = vpack.c.bf16 %v1712, %v1712
  %v3719 = vpack.c.bf16 %v1713, %v1713
  %v3848 = vunpack.c.l.b16 %v3588
  %v3849 = vunpack.c.h.b16 %v3588
  %v3850 = vunpack.c.l.b16 %v3589
  %v3851 = vunpack.c.h.b16 %v3589
  %v3852 = vunpack.c.l.b16 %v3590
  %v3853 = vunpack.c.h.b16 %v3590
  %v3854 = vunpack.c.l.b16 %v3591
  %v3855 = vunpack.c.h.b16 %v3591
  %v3856 = vunpack.c.l.b16 %v3592
  %v3857 = vunpack.c.h.b16 %v3592
  %v3858 = vunpack.c.l.b16 %v3593
  %v3859 = vunpack.c.h.b16 %v3593
  %v3860 = vunpack.c.l.b16 %v3594
  %v3861 = vunpack.c.h.b16 %v3594
  %v3862 = vunpack.c.l.b16 %v3595
  %v3863 = vunpack.c.h.b16 %v3595
  %v3864 = vunpack.c.l.b16 %v3596
  %v3865 = vunpack.c.h.b16 %v3596
  %v3866 = vunpack.c.l.b16 %v3597
  %v3867 = vunpack.c.h.b16 %v3597
  %v3868 = vunpack.c.l.b16 %v3598
  %v3869 = vunpack.c.h.b16 %v3598
  %v3870 = vunpack.c.l.b16 %v3599
  %v3871 = vunpack.c.h.b16 %v3599
  %v3872 = vunpack.c.l.b16 %v3600
  %v3873 = vunpack.c.h.b16 %v3600
  %v3874 = vunpack.c.l.b16 %v3601
  %v3875 = vunpack.c.h.b16 %v3601
  %v3876 = vunpack.c.l.b16 %v3602
  %v3877 = vunpack.c.h.b16 %v3602
  %v3878 = vunpack.c.l.b16 %v3603
  %v3879 = vunpack.c.h.b16 %v3603
  %v3880 = vunpack.c.l.b16 %v3604
  %v3881 = vunpack.c.h.b16 %v3604
  %v3882 = vunpack.c.l.b16 %v3605
  %v3883 = vunpack.c.h.b16 %v3605
  %v3884 = vunpack.c.l.b16 %v3606
  %v3885 = vunpack.c.h.b16 %v3606
  %v3886 = vunpack.c.l.b16 %v3607
  %v3887 = vunpack.c.h.b16 %v3607
  %v3888 = vunpack.c.l.b16 %v3608
  %v3889 = vunpack.c.h.b16 %v3608
  %v3890 = vunpack.c.l.b16 %v3609
  %v3891 = vunpack.c.h.b16 %v3609
  %v3892 = vunpack.c.l.b16 %v3610
  %v3893 = vunpack.c.h.b16 %v3610
  %v3894 = vunpack.c.l.b16 %v3611
  %v3895 = vunpack.c.h.b16 %v3611
  %v3896 = vunpack.c.l.b16 %v3612
  %v3897 = vunpack.c.h.b16 %v3612
  %v3898 = vunpack.c.l.b16 %v3613
  %v3899 = vunpack.c.h.b16 %v3613
  %v3900 = vunpack.c.l.b16 %v3614
  %v3901 = vunpack.c.h.b16 %v3614
  %v3902 = vunpack.c.l.b16 %v3615
  %v3903 = vunpack.c.h.b16 %v3615
  %v3904 = vunpack.c.l.b16 %v3616
  %v3905 = vunpack.c.h.b16 %v3616
  %v3906 = vunpack.c.l.b16 %v3617
  %v3907 = vunpack.c.h.b16 %v3617
  %v3908 = vunpack.c.l.b16 %v3618
  %v3909 = vunpack.c.h.b16 %v3618
  %v3910 = vunpack.c.l.b16 %v3619
  %v3911 = vunpack.c.h.b16 %v3619
  %v3912 = vunpack.c.l.b16 %v3620
  %v3913 = vunpack.c.h.b16 %v3620
  %v3914 = vunpack.c.l.b16 %v3621
  %v3915 = vunpack.c.h.b16 %v3621
  %v3916 = vunpack.c.l.b16 %v3622
  %v3917 = vunpack.c.h.b16 %v3622
  %v3918 = vunpack.c.l.b16 %v3623
  %v3919 = vunpack.c.h.b16 %v3623
  %v3920 = vunpack.c.l.b16 %v3624
  %v3921 = vunpack.c.h.b16 %v3624
  %v3922 = vunpack.c.l.b16 %v3625
  %v3923 = vunpack.c.h.b16 %v3625
  %v3924 = vunpack.c.l.b16 %v3626
  %v3925 = vunpack.c.h.b16 %v3626
  %v3926 = vunpack.c.l.b16 %v3627
  %v3927 = vunpack.c.h.b16 %v3627
  %v3928 = vunpack.c.l.b16 %v3628
  %v3929 = vunpack.c.h.b16 %v3628
  %v3930 = vunpack.c.l.b16 %v3629
  %v3931 = vunpack.c.h.b16 %v3629
  %v3932 = vunpack.c.l.b16 %v3630
  %v3933 = vunpack.c.h.b16 %v3630
  %v3934 = vunpack.c.l.b16 %v3631
  %v3935 = vunpack.c.h.b16 %v3631
  %v3936 = vunpack.c.l.b16 %v3632
  %v3937 = vunpack.c.h.b16 %v3632
  %v3938 = vunpack.c.l.b16 %v3633
  %v3939 = vunpack.c.h.b16 %v3633
  %v3940 = vunpack.c.l.b16 %v3634
  %v3941 = vunpack.c.h.b16 %v3634
  %v3942 = vunpack.c.l.b16 %v3635
  %v3943 = vunpack.c.h.b16 %v3635
  %v3944 = vunpack.c.l.b16 %v3636
  %v3945 = vunpack.c.h.b16 %v3636
  %v3946 = vunpack.c.l.b16 %v3637
  %v3947 = vunpack.c.h.b16 %v3637
  %v3948 = vunpack.c.l.b16 %v3638
  %v3949 = vunpack.c.h.b16 %v3638
  %v3950 = vunpack.c.l.b16 %v3639
  %v3951 = vunpack.c.h.b16 %v3639
  %v3952 = vunpack.c.l.b16 %v3640
  %v3953 = vunpack.c.h.b16 %v3640
  %v3954 = vunpack.c.l.b16 %v3641
  %v3955 = vunpack.c.h.b16 %v3641
  %v3956 = vunpack.c.l.b16 %v3642
  %v3957 = vunpack.c.h.b16 %v3642
  %v3958 = vunpack.c.l.b16 %v3643
  %v3959 = vunpack.c.h.b16 %v3643
  %v3960 = vunpack.c.l.b16 %v3644
  %v3961 = vunpack.c.h.b16 %v3644
  %v3962 = vunpack.c.l.b16 %v3645
  %v3963 = vunpack.c.h.b16 %v3645
  %v3964 = vunpack.c.l.b16 %v3646
  %v3965 = vunpack.c.h.b16 %v3646
  %v3966 = vunpack.c.l.b16 %v3647
  %v3967 = vunpack.c.h.b16 %v3647
  %v3968 = vunpack.c.l.b16 %v3648
  %v3969 = vunpack.c.h.b16 %v3648
  %v3970 = vunpack.c.l.b16 %v3649
  %v3971 = vunpack.c.h.b16 %v3649
  %v3972 = vunpack.c.l.b16 %v3650
  %v3973 = vunpack.c.h.b16 %v3650
  %v3974 = vunpack.c.l.b16 %v3651
  %v3975 = vunpack.c.h.b16 %v3651
  %v3976 = vunpack.c.l.b16 %v3652
  %v3977 = vunpack.c.h.b16 %v3652
  %v3978 = vunpack.c.l.b16 %v3653
  %v3979 = vunpack.c.h.b16 %v3653
  %v3980 = vunpack.c.l.b16 %v3654
  %v3981 = vunpack.c.h.b16 %v3654
  %v3982 = vunpack.c.l.b16 %v3655
  %v3983 = vunpack.c.h.b16 %v3655
  %v3984 = vunpack.c.l.b16 %v3656
  %v3985 = vunpack.c.h.b16 %v3656
  %v3986 = vunpack.c.l.b16 %v3657
  %v3987 = vunpack.c.h.b16 %v3657
  %v3988 = vunpack.c.l.b16 %v3658
  %v3989 = vunpack.c.h.b16 %v3658
  %v3990 = vunpack.c.l.b16 %v3659
  %v3991 = vunpack.c.h.b16 %v3659
  %v3992 = vunpack.c.l.b16 %v3660
  %v3993 = vunpack.c.h.b16 %v3660
  %v3994 = vunpack.c.l.b16 %v3661
  %v3995 = vunpack.c.h.b16 %v3661
  %v3996 = vunpack.c.l.b16 %v3662
  %v3997 = vunpack.c.h.b16 %v3662
  %v3998 = vunpack.c.l.b16 %v3663
  %v3999 = vunpack.c.h.b16 %v3663
  %v4000 = vunpack.c.l.b16 %v3664
  %v4001 = vunpack.c.h.b16 %v3664
  %v4002 = vunpack.c.l.b16 %v3665
  %v4003 = vunpack.c.h.b16 %v3665
  %v4004 = vunpack.c.l.b16 %v3666
  %v4005 = vunpack.c.h.b16 %v3666
  %v4006 = vunpack.c.l.b16 %v3667
  %v4007 = vunpack.c.h.b16 %v3667
  %v4008 = vunpack.c.l.b16 %v3668
  %v4009 = vunpack.c.h.b16 %v3668
  %v4010 = vunpack.c.l.b16 %v3669
  %v4011 = vunpack.c.h.b16 %v3669
  %v4012 = vunpack.c.l.b16 %v3670
  %v4013 = vunpack.c.h.b16 %v3670
  %v4014 = vunpack.c.l.b16 %v3671
  %v4015 = vunpack.c.h.b16 %v3671
  %v4016 = vunpack.c.l.b16 %v3672
  %v4017 = vunpack.c.h.b16 %v3672
  %v4018 = vunpack.c.l.b16 %v3673
  %v4019 = vunpack.c.h.b16 %v3673
  %v4020 = vunpack.c.l.b16 %v3674
  %v4021 = vunpack.c.h.b16 %v3674
  %v4022 = vunpack.c.l.b16 %v3675
  %v4023 = vunpack.c.h.b16 %v3675
  %v4024 = vunpack.c.l.b16 %v3676
  %v4025 = vunpack.c.h.b16 %v3676
  %v4026 = vunpack.c.l.b16 %v3677
  %v4027 = vunpack.c.h.b16 %v3677
  %v4028 = vunpack.c.l.b16 %v3678
  %v4029 = vunpack.c.h.b16 %v3678
  %v4030 = vunpack.c.l.b16 %v3679
  %v4031 = vunpack.c.h.b16 %v3679
  %v4032 = vunpack.c.l.b16 %v3680
  %v4033 = vunpack.c.h.b16 %v3680
  %v4034 = vunpack.c.l.b16 %v3681
  %v4035 = vunpack.c.h.b16 %v3681
  %v4036 = vunpack.c.l.b16 %v3682
  %v4037 = vunpack.c.h.b16 %v3682
  %v4038 = vunpack.c.l.b16 %v3683
  %v4039 = vunpack.c.h.b16 %v3683
  %v4040 = vunpack.c.l.b16 %v3684
  %v4041 = vunpack.c.h.b16 %v3684
  %v4042 = vunpack.c.l.b16 %v3685
  %v4043 = vunpack.c.h.b16 %v3685
  %v4044 = vunpack.c.l.b16 %v3686
  %v4045 = vunpack.c.h.b16 %v3686
  %v4046 = vunpack.c.l.b16 %v3687
  %v4047 = vunpack.c.h.b16 %v3687
  %v4048 = vunpack.c.l.b16 %v3688
  %v4049 = vunpack.c.h.b16 %v3688
  %v4050 = vunpack.c.l.b16 %v3689
  %v4051 = vunpack.c.h.b16 %v3689
  %v4052 = vunpack.c.l.b16 %v3690
  %v4053 = vunpack.c.h.b16 %v3690
  %v4054 = vunpack.c.l.b16 %v3691
  %v4055 = vunpack.c.h.b16 %v3691
  %v4056 = vunpack.c.l.b16 %v3692
  %v4057 = vunpack.c.h.b16 %v3692
  %v4058 = vunpack.c.l.b16 %v3693
  %v4059 = vunpack.c.h.b16 %v3693
  %v4060 = vunpack.c.l.b16 %v3694
  %v4061 = vunpack.c.h.b16 %v3694
  %v4062 = vunpack.c.l.b16 %v3695
  %v4063 = vunpack.c.h.b16 %v3695
  %v4064 = vunpack.c.l.b16 %v3696
  %v4065 = vunpack.c.h.b16 %v3696
  %v4066 = vunpack.c.l.b16 %v3697
  %v4067 = vunpack.c.h.b16 %v3697
  %v4068 = vunpack.c.l.b16 %v3698
  %v4069 = vunpack.c.h.b16 %v3698
  %v4070 = vunpack.c.l.b16 %v3699
  %v4071 = vunpack.c.h.b16 %v3699
  %v4072 = vunpack.c.l.b16 %v3700
  %v4073 = vunpack.c.h.b16 %v3700
  %v4074 = vunpack.c.l.b16 %v3701
  %v4075 = vunpack.c.h.b16 %v3701
  %v4076 = vunpack.c.l.b16 %v3702
  %v4077 = vunpack.c.h.b16 %v3702
  %v4078 = vunpack.c.l.b16 %v3703
  %v4079 = vunpack.c.h.b16 %v3703
  %v4080 = vunpack.c.l.b16 %v3704
  %v4081 = vunpack.c.h.b16 %v3704
  %v4082 = vunpack.c.l.b16 %v3705
  %v4083 = vunpack.c.h.b16 %v3705
  %v4084 = vunpack.c.l.b16 %v3706
  %v4085 = vunpack.c.h.b16 %v3706
  %v4086 = vunpack.c.l.b16 %v3707
  %v4087 = vunpack.c.h.b16 %v3707
  %v4088 = vunpack.c.l.b16 %v3708
  %v4089 = vunpack.c.h.b16 %v3708
  %v4090 = vunpack.c.l.b16 %v3709
  %v4091 = vunpack.c.h.b16 %v3709
  %v4092 = vunpack.c.l.b16 %v3710
  %v4093 = vunpack.c.h.b16 %v3710
  %v4094 = vunpack.c.l.b16 %v3711
  %v4095 = vunpack.c.h.b16 %v3711
  %v4096 = vunpack.c.l.b16 %v3712
  %v4097 = vunpack.c.h.b16 %v3712
  %v4098 = vunpack.c.l.b16 %v3713
  %v4099 = vunpack.c.h.b16 %v3713
  %v4100 = vunpack.c.l.b16 %v3714
  %v4101 = vunpack.c.h.b16 %v3714
  %v4102 = vunpack.c.l.b16 %v3715
  %v4103 = vunpack.c.h.b16 %v3715
  %v4104 = vpack.c.b16 %v3852, %v3848
  %v4105 = vpack.c.b16 %v3853, %v3849
  %v4106 = vpack.c.b16 %v3854, %v3850
  %v4107 = vpack.c.b16 %v3855, %v3851
  %v4108 = vpack.c.b16 %v3860, %v3856
  %v4109 = vpack.c.b16 %v3861, %v3857
  %v4110 = vpack.c.b16 %v3862, %v3858
  %v4111 = vpack.c.b16 %v3863, %v3859
  %v4112 = vpack.c.b16 %v3868, %v3864
  %v4113 = vpack.c.b16 %v3869, %v3865
  %v4114 = vpack.c.b16 %v3870, %v3866
  %v4115 = vpack.c.b16 %v3871, %v3867
  %v4116 = vpack.c.b16 %v3876, %v3872
  %v4117 = vpack.c.b16 %v3877, %v3873
  %v4118 = vpack.c.b16 %v3878, %v3874
  %v4119 = vpack.c.b16 %v3879, %v3875
  %v4120 = vpack.c.b16 %v3884, %v3880
  %v4121 = vpack.c.b16 %v3885, %v3881
  %v4122 = vpack.c.b16 %v3886, %v3882
  %v4123 = vpack.c.b16 %v3887, %v3883
  %v4124 = vpack.c.b16 %v3892, %v3888
  %v4125 = vpack.c.b16 %v3893, %v3889
  %v4126 = vpack.c.b16 %v3894, %v3890
  %v4127 = vpack.c.b16 %v3895, %v3891
  %v4128 = vpack.c.b16 %v3900, %v3896
  %v4129 = vpack.c.b16 %v3901, %v3897
  %v4130 = vpack.c.b16 %v3902, %v3898
  %v4131 = vpack.c.b16 %v3903, %v3899
  %v4132 = vpack.c.b16 %v3908, %v3904
  %v4133 = vpack.c.b16 %v3909, %v3905
  %v4134 = vpack.c.b16 %v3910, %v3906
  %v4135 = vpack.c.b16 %v3911, %v3907
  %v4136 = vpack.c.b16 %v3916, %v3912
  %v4137 = vpack.c.b16 %v3917, %v3913
  %v4138 = vpack.c.b16 %v3918, %v3914
  %v4139 = vpack.c.b16 %v3919, %v3915
  %v4140 = vpack.c.b16 %v3924, %v3920
  %v4141 = vpack.c.b16 %v3925, %v3921
  %v4142 = vpack.c.b16 %v3926, %v3922
  %v4143 = vpack.c.b16 %v3927, %v3923
  %v4144 = vpack.c.b16 %v3932, %v3928
  %v4145 = vpack.c.b16 %v3933, %v3929
  %v4146 = vpack.c.b16 %v3934, %v3930
  %v4147 = vpack.c.b16 %v3935, %v3931
  %v4148 = vpack.c.b16 %v3940, %v3936
  %v4149 = vpack.c.b16 %v3941, %v3937
  %v4150 = vpack.c.b16 %v3942, %v3938
  %v4151 = vpack.c.b16 %v3943, %v3939
  %v4152 = vpack.c.b16 %v3948, %v3944
  %v4153 = vpack.c.b16 %v3949, %v3945
  %v4154 = vpack.c.b16 %v3950, %v3946
  %v4155 = vpack.c.b16 %v3951, %v3947
  %v4156 = vpack.c.b16 %v3956, %v3952
  %v4157 = vpack.c.b16 %v3957, %v3953
  %v4158 = vpack.c.b16 %v3958, %v3954
  %v4159 = vpack.c.b16 %v3959, %v3955
  %v4160 = vpack.c.b16 %v3964, %v3960
  %v4161 = vpack.c.b16 %v3965, %v3961
  %v4162 = vpack.c.b16 %v3966, %v3962
  %v4163 = vpack.c.b16 %v3967, %v3963
  %v4164 = vpack.c.b16 %v3972, %v3968
  %v4165 = vpack.c.b16 %v3973, %v3969
  %v4166 = vpack.c.b16 %v3974, %v3970
  %v4167 = vpack.c.b16 %v3975, %v3971
  %v4168 = vpack.c.b16 %v3980, %v3976
  %v4169 = vpack.c.b16 %v3981, %v3977
  %v4170 = vpack.c.b16 %v3982, %v3978
  %v4171 = vpack.c.b16 %v3983, %v3979
  %v4172 = vpack.c.b16 %v3988, %v3984
  %v4173 = vpack.c.b16 %v3989, %v3985
  %v4174 = vpack.c.b16 %v3990, %v3986
  %v4175 = vpack.c.b16 %v3991, %v3987
  %v4176 = vpack.c.b16 %v3996, %v3992
  %v4177 = vpack.c.b16 %v3997, %v3993
  %v4178 = vpack.c.b16 %v3998, %v3994
  %v4179 = vpack.c.b16 %v3999, %v3995
  %v4180 = vpack.c.b16 %v4004, %v4000
  %v4181 = vpack.c.b16 %v4005, %v4001
  %v4182 = vpack.c.b16 %v4006, %v4002
  %v4183 = vpack.c.b16 %v4007, %v4003
  %v4184 = vpack.c.b16 %v4012, %v4008
  %v4185 = vpack.c.b16 %v4013, %v4009
  %v4186 = vpack.c.b16 %v4014, %v4010
  %v4187 = vpack.c.b16 %v4015, %v4011
  %v4188 = vpack.c.b16 %v4020, %v4016
  %v4189 = vpack.c.b16 %v4021, %v4017
  %v4190 = vpack.c.b16 %v4022, %v4018
  %v4191 = vpack.c.b16 %v4023, %v4019
  %v4192 = vpack.c.b16 %v4028, %v4024
  %v4193 = vpack.c.b16 %v4029, %v4025
  %v4194 = vpack.c.b16 %v4030, %v4026
  %v4195 = vpack.c.b16 %v4031, %v4027
  %v4196 = vpack.c.b16 %v4036, %v4032
  %v4197 = vpack.c.b16 %v4037, %v4033
  %v4198 = vpack.c.b16 %v4038, %v4034
  %v4199 = vpack.c.b16 %v4039, %v4035
  %v4200 = vpack.c.b16 %v4044, %v4040
  %v4201 = vpack.c.b16 %v4045, %v4041
  %v4202 = vpack.c.b16 %v4046, %v4042
  %v4203 = vpack.c.b16 %v4047, %v4043
  %v4204 = vpack.c.b16 %v4052, %v4048
  %v4205 = vpack.c.b16 %v4053, %v4049
  %v4206 = vpack.c.b16 %v4054, %v4050
  %v4207 = vpack.c.b16 %v4055, %v4051
  %v4208 = vpack.c.b16 %v4060, %v4056
  %v4209 = vpack.c.b16 %v4061, %v4057
  %v4210 = vpack.c.b16 %v4062, %v4058
  %v4211 = vpack.c.b16 %v4063, %v4059
  %v4212 = vpack.c.b16 %v4068, %v4064
  %v4213 = vpack.c.b16 %v4069, %v4065
  %v4214 = vpack.c.b16 %v4070, %v4066
  %v4215 = vpack.c.b16 %v4071, %v4067
  %v4216 = vpack.c.b16 %v4076, %v4072
  %v4217 = vpack.c.b16 %v4077, %v4073
  %v4218 = vpack.c.b16 %v4078, %v4074
  %v4219 = vpack.c.b16 %v4079, %v4075
  %v4220 = vpack.c.b16 %v4084, %v4080
  %v4221 = vpack.c.b16 %v4085, %v4081
  %v4222 = vpack.c.b16 %v4086, %v4082
  %v4223 = vpack.c.b16 %v4087, %v4083
  %v4224 = vpack.c.b16 %v4092, %v4088
  %v4225 = vpack.c.b16 %v4093, %v4089
  %v4226 = vpack.c.b16 %v4094, %v4090
  %v4227 = vpack.c.b16 %v4095, %v4091
  %v4228 = vpack.c.b16 %v4100, %v4096
  %v4229 = vpack.c.b16 %v4101, %v4097
  %v4230 = vpack.c.b16 %v4102, %v4098
  %v4231 = vpack.c.b16 %v4103, %v4099
  %4360 = vmatprep.subr.bf16.mxu0 %v4105
  %4361 = vmatpush1.bf16.msra.mxu0 %v4104
  %4362 = vmatprep.subr.bf16.mxu0 %v4109
  %4363 = vmatpush1.bf16.msra.mxu0 %v4108
  %4364 = vmatprep.subr.bf16.mxu0 %v4113
  %4365 = vmatpush1.bf16.msra.mxu0 %v4112
  %4366 = vmatprep.subr.bf16.mxu0 %v4117
  %4367 = vmatpush1.bf16.msra.mxu0 %v4116
  %4368 = vmatprep.subr.bf16.mxu0 %v4121
  %4369 = vmatpush1.bf16.msra.mxu0 %v4120
  %4370 = vmatprep.subr.bf16.mxu0 %v4125
  %4371 = vmatpush1.bf16.msra.mxu0 %v4124
  %4372 = vmatprep.subr.bf16.mxu0 %v4129
  %4373 = vmatpush1.bf16.msra.mxu0 %v4128
  %4374 = vmatprep.subr.bf16.mxu0 %v4133
  %4375 = vmatpush1.bf16.msra.mxu0 %v4132
  %4376 = vmatprep.subr.bf16.mxu0 %v4137
  %4377 = vmatpush1.bf16.msra.mxu0 %v4136
  %4378 = vmatprep.subr.bf16.mxu0 %v4141
  %4379 = vmatpush1.bf16.msra.mxu0 %v4140
  %4380 = vmatprep.subr.bf16.mxu0 %v4145
  %4381 = vmatpush1.bf16.msra.mxu0 %v4144
  %4382 = vmatprep.subr.bf16.mxu0 %v4149
  %4383 = vmatpush1.bf16.msra.mxu0 %v4148
  %4384 = vmatprep.subr.bf16.mxu0 %v4153
  %4385 = vmatpush1.bf16.msra.mxu0 %v4152
  %4386 = vmatprep.subr.bf16.mxu0 %v4157
  %4387 = vmatpush1.bf16.msra.mxu0 %v4156
  %4388 = vmatprep.subr.bf16.mxu0 %v4161
  %4389 = vmatpush1.bf16.msra.mxu0 %v4160
  %4390 = vmatprep.subr.bf16.mxu0 %v4165
  %4391 = vmatpush1.bf16.msra.mxu0 %v4164
  %4392 = vmatprep.mubr.bf16.mxu0 %v3717
  %4393 = vmatmul.mubr.bf16.gmra.mrb[0].mxu0 %v3716
  %v4394 = vpop.f32.mrb[0].mxu0
  %v4395 = vadd.f32 0.0, %v4394
  %v4396 = vpop.f32.mrb[0].mxu0
  %v4397 = vadd.f32 0.0, %v4396
  %v4398 = vpop.f32.mrb[0].mxu0
  %v4399 = vpop.f32.mrb[0].mxu0
  %4400 = vdwg.mxu0
  %4401 = vmatprep.subr.bf16.mxu0 %v4169
  %4402 = vmatpush1.bf16.msra.mxu0 %v4168
  %4403 = vmatprep.subr.bf16.mxu0 %v4173
  %4404 = vmatpush1.bf16.msra.mxu0 %v4172
  %4405 = vmatprep.subr.bf16.mxu0 %v4177
  %4406 = vmatpush1.bf16.msra.mxu0 %v4176
  %4407 = vmatprep.subr.bf16.mxu0 %v4181
  %4408 = vmatpush1.bf16.msra.mxu0 %v4180
  %4409 = vmatprep.subr.bf16.mxu0 %v4185
  %4410 = vmatpush1.bf16.msra.mxu0 %v4184
  %4411 = vmatprep.subr.bf16.mxu0 %v4189
  %4412 = vmatpush1.bf16.msra.mxu0 %v4188
  %4413 = vmatprep.subr.bf16.mxu0 %v4193
  %4414 = vmatpush1.bf16.msra.mxu0 %v4192
  %4415 = vmatprep.subr.bf16.mxu0 %v4197
  %4416 = vmatpush1.bf16.msra.mxu0 %v4196
  %4417 = vmatprep.subr.bf16.mxu0 %v4201
  %4418 = vmatpush1.bf16.msra.mxu0 %v4200
  %4419 = vmatprep.subr.bf16.mxu0 %v4205
  %4420 = vmatpush1.bf16.msra.mxu0 %v4204
  %4421 = vmatprep.subr.bf16.mxu0 %v4209
  %4422 = vmatpush1.bf16.msra.mxu0 %v4208
  %4423 = vmatprep.subr.bf16.mxu0 %v4213
  %4424 = vmatpush1.bf16.msra.mxu0 %v4212
  %4425 = vmatprep.subr.bf16.mxu0 %v4217
  %4426 = vmatpush1.bf16.msra.mxu0 %v4216
  %4427 = vmatprep.subr.bf16.mxu0 %v4221
  %4428 = vmatpush1.bf16.msra.mxu0 %v4220
  %4429 = vmatprep.subr.bf16.mxu0 %v4225
  %4430 = vmatpush1.bf16.msra.mxu0 %v4224
  %4431 = vmatprep.subr.bf16.mxu0 %v4229
  %4432 = vmatpush1.bf16.msra.mxu0 %v4228
  %4433 = vmatprep.mubr.bf16.mxu0 %v3719
  %4434 = vmatmul.mubr.bf16.gmra.mrb[0].mxu0 %v3718
  %v4435 = vpop.f32.mrb[0].mxu0
  %v4436 = vadd.f32 %v4395, %v4435
  %v4437 = vpop.f32.mrb[0].mxu0
  %v4438 = vadd.f32 %v4397, %v4437
  %v4439 = vpop.f32.mrb[0].mxu0
  %v4440 = vpop.f32.mrb[0].mxu0
  %4441 = vdwg.mxu0
  %4442 = vmatprep.subr.bf16.mxu0 %v4107
  %4443 = vmatpush1.bf16.msra.mxu0 %v4106
  %4444 = vmatprep.subr.bf16.mxu0 %v4111
  %4445 = vmatpush1.bf16.msra.mxu0 %v4110
  %4446 = vmatprep.subr.bf16.mxu0 %v4115
  %4447 = vmatpush1.bf16.msra.mxu0 %v4114
  %4448 = vmatprep.subr.bf16.mxu0 %v4119
  %4449 = vmatpush1.bf16.msra.mxu0 %v4118
  %4450 = vmatprep.subr.bf16.mxu0 %v4123
  %4451 = vmatpush1.bf16.msra.mxu0 %v4122
  %4452 = vmatprep.subr.bf16.mxu0 %v4127
  %4453 = vmatpush1.bf16.msra.mxu0 %v4126
  %4454 = vmatprep.subr.bf16.mxu0 %v4131
  %4455 = vmatpush1.bf16.msra.mxu0 %v4130
  %4456 = vmatprep.subr.bf16.mxu0 %v4135
  %4457 = vmatpush1.bf16.msra.mxu0 %v4134
  %4458 = vmatprep.subr.bf16.mxu0 %v4139
  %4459 = vmatpush1.bf16.msra.mxu0 %v4138
  %4460 = vmatprep.subr.bf16.mxu0 %v4143
  %4461 = vmatpush1.bf16.msra.mxu0 %v4142
  %4462 = vmatprep.subr.bf16.mxu0 %v4147
  %4463 = vmatpush1.bf16.msra.mxu0 %v4146
  %4464 = vmatprep.subr.bf16.mxu0 %v4151
  %4465 = vmatpush1.bf16.msra.mxu0 %v4150
  %4466 = vmatprep.subr.bf16.mxu0 %v4155
  %4467 = vmatpush1.bf16.msra.mxu0 %v4154
  %4468 = vmatprep.subr.bf16.mxu0 %v4159
  %4469 = vmatpush1.bf16.msra.mxu0 %v4158
  %4470 = vmatprep.subr.bf16.mxu0 %v4163
  %4471 = vmatpush1.bf16.msra.mxu0 %v4162
  %4472 = vmatprep.subr.bf16.mxu0 %v4167
  %4473 = vmatpush1.bf16.msra.mxu0 %v4166
  %4474 = vmatprep.mubr.bf16.mxu0 %v3717
  %4475 = vmatmul.mubr.bf16.gmra.mrb[0].mxu0 %v3716
  %v4476 = vpop.f32.mrb[0].mxu0
  %v4477 = vadd.f32 0.0, %v4476
  %v4478 = vpop.f32.mrb[0].mxu0
  %v4479 = vadd.f32 0.0, %v4478
  %v4480 = vpop.f32.mrb[0].mxu0
  %v4481 = vpop.f32.mrb[0].mxu0
  %4482 = vdwg.mxu0
  %4483 = vmatprep.subr.bf16.mxu0 %v4171
  %4484 = vmatpush1.bf16.msra.mxu0 %v4170
  %4485 = vmatprep.subr.bf16.mxu0 %v4175
  %4486 = vmatpush1.bf16.msra.mxu0 %v4174
  %4487 = vmatprep.subr.bf16.mxu0 %v4179
  %4488 = vmatpush1.bf16.msra.mxu0 %v4178
  %4489 = vmatprep.subr.bf16.mxu0 %v4183
  %4490 = vmatpush1.bf16.msra.mxu0 %v4182
  %4491 = vmatprep.subr.bf16.mxu0 %v4187
  %4492 = vmatpush1.bf16.msra.mxu0 %v4186
  %4493 = vmatprep.subr.bf16.mxu0 %v4191
  %4494 = vmatpush1.bf16.msra.mxu0 %v4190
  %4495 = vmatprep.subr.bf16.mxu0 %v4195
  %4496 = vmatpush1.bf16.msra.mxu0 %v4194
  %4497 = vmatprep.subr.bf16.mxu0 %v4199
  %4498 = vmatpush1.bf16.msra.mxu0 %v4198
  %4499 = vmatprep.subr.bf16.mxu0 %v4203
  %4500 = vmatpush1.bf16.msra.mxu0 %v4202
  %4501 = vmatprep.subr.bf16.mxu0 %v4207
  %4502 = vmatpush1.bf16.msra.mxu0 %v4206
  %4503 = vmatprep.subr.bf16.mxu0 %v4211
  %4504 = vmatpush1.bf16.msra.mxu0 %v4210
  %4505 = vmatprep.subr.bf16.mxu0 %v4215
  %4506 = vmatpush1.bf16.msra.mxu0 %v4214
  %4507 = vmatprep.subr.bf16.mxu0 %v4219
  %4508 = vmatpush1.bf16.msra.mxu0 %v4218
  %4509 = vmatprep.subr.bf16.mxu0 %v4223
  %4510 = vmatpush1.bf16.msra.mxu0 %v4222
  %4511 = vmatprep.subr.bf16.mxu0 %v4227
  %4512 = vmatpush1.bf16.msra.mxu0 %v4226
  %4513 = vmatprep.subr.bf16.mxu0 %v4231
  %4514 = vmatpush1.bf16.msra.mxu0 %v4230
  %4515 = vmatprep.mubr.bf16.mxu0 %v3719
  %4516 = vmatmul.mubr.bf16.gmra.mrb[0].mxu0 %v3718
  %v4517 = vpop.f32.mrb[0].mxu0
  %v4518 = vadd.f32 %v4477, %v4517
  %v4519 = vpop.f32.mrb[0].mxu0
  %v4520 = vadd.f32 %v4479, %v4519
  %v4521 = vpop.f32.mrb[0].mxu0
  %v4522 = vpop.f32.mrb[0].mxu0
  %4523 = vdwg.mxu0
  %v4524 = vadd.f32 %v3499, %v4436
  %v4525 = vadd.f32 %v3501, %v4438
  %v4526 = vadd.f32 %v3581, %v4518
  %v4527 = vadd.f32 %v3583, %v4520
  %v4528 = vld [vmem:[%s4] sm:$0xff]
  %v4529 = vrot.slane %v4524, 4
  %v4530 = vadd.f32 %v4524, %v4529
  %v4531 = vrot.slane %v4530, 2
  %v4532 = vadd.f32 %v4530, %v4531
  %v4533 = vrot.slane %v4532, 1
  %v4534 = vadd.f32 %v4532, %v4533
  %v4535 = vrot.slane %v4525, 4
  %v4536 = vadd.f32 %v4525, %v4535
  %v4537 = vrot.slane %v4536, 2
  %v4538 = vadd.f32 %v4536, %v4537
  %v4539 = vrot.slane %v4538, 1
  %v4540 = vadd.f32 %v4538, %v4539
  %v4541 = vrot.slane %v4526, 4
  %v4542 = vadd.f32 %v4526, %v4541
  %v4543 = vrot.slane %v4542, 2
  %v4544 = vadd.f32 %v4542, %v4543
  %v4545 = vrot.slane %v4544, 1
  %v4546 = vadd.f32 %v4544, %v4545
  %v4547 = vrot.slane %v4527, 4
  %v4548 = vadd.f32 %v4527, %v4547
  %v4549 = vrot.slane %v4548, 2
  %v4550 = vadd.f32 %v4548, %v4549
  %v4551 = vrot.slane %v4550, 1
  %v4552 = vadd.f32 %v4550, %v4551
  %v4553 = vmul.f32 %v4534, %v1501
  %v4554 = vmul.f32 %v4540, %v1501
  %v4555 = vmul.f32 %v4546, %v1501
  %v4556 = vmul.f32 %v4552, %v1501
  %v4557 = vsub.f32 %v4524, %v4553
  %v4558 = vsub.f32 %v4525, %v4554
  %v4559 = vsub.f32 %v4526, %v4555
  %v4560 = vsub.f32 %v4527, %v4556
  %v4561 = vmul.f32 %v4557, %v4557
  %v4562 = vmul.f32 %v4558, %v4558
  %v4563 = vmul.f32 %v4559, %v4559
  %v4564 = vmul.f32 %v4560, %v4560
  %v4565 = vrot.slane %v4561, 4
  %v4566 = vadd.f32 %v4561, %v4565
  %v4567 = vrot.slane %v4566, 2
  %v4568 = vadd.f32 %v4566, %v4567
  %v4569 = vrot.slane %v4568, 1
  %v4570 = vadd.f32 %v4568, %v4569
  %v4571 = vrot.slane %v4562, 4
  %v4572 = vadd.f32 %v4562, %v4571
  %v4573 = vrot.slane %v4572, 2
  %v4574 = vadd.f32 %v4572, %v4573
  %v4575 = vrot.slane %v4574, 1
  %v4576 = vadd.f32 %v4574, %v4575
  %v4577 = vrot.slane %v4563, 4
  %v4578 = vadd.f32 %v4563, %v4577
  %v4579 = vrot.slane %v4578, 2
  %v4580 = vadd.f32 %v4578, %v4579
  %v4581 = vrot.slane %v4580, 1
  %v4582 = vadd.f32 %v4580, %v4581
  %v4583 = vrot.slane %v4564, 4
  %v4584 = vadd.f32 %v4564, %v4583
  %v4585 = vrot.slane %v4584, 2
  %v4586 = vadd.f32 %v4584, %v4585
  %v4587 = vrot.slane %v4586, 1
  %v4588 = vadd.f32 %v4586, %v4587
  %v4589 = vmul.f32 %v4570, %v1501
  %v4590 = vmul.f32 %v4576, %v1501
  %v4591 = vmul.f32 %v4582, %v1501
  %v4592 = vmul.f32 %v4588, %v1501
  %v4593 = vadd.f32 %v4589, 1e-05
  %v4594 = vadd.f32 %v4590, 1e-05
  %v4595 = vadd.f32 %v4591, 1e-05
  %v4596 = vadd.f32 %v4592, 1e-05
  %v4597 = vrsqrt.pop %v4593
  %v4598 = vrsqrt.pop %v4594
  %v4599 = vrsqrt.pop %v4595
  %v4600 = vrsqrt.pop %v4596
  %v4601 = vmul.f32 %v4557, %v4597
  %v4602 = vmul.f32 %v4558, %v4598
  %v4603 = vmul.f32 %v4559, %v4599
  %v4604 = vmul.f32 %v4560, %v4600
  %v4606 = vlaneseq
  %v4607 = vshrl.u32 %v4606, 7
  %v4608 = vsub.s32 0, %v4607
  %v4609 = vrot.slane %v4528, %v4608
  %v4610 = vlaneseq
  %v4611 = vshrl.u32 %v4610, 7
  %v4612 = vsub.s32 2, %v4611
  %v4613 = vrot.slane %v4528, %v4612
  %v4614 = vlaneseq
  %v4615 = vshrl.u32 %v4614, 7
  %v4616 = vsub.s32 4, %v4615
  %v4617 = vrot.slane %v4528, %v4616
  %v4618 = vlaneseq
  %v4619 = vshrl.u32 %v4618, 7
  %v4620 = vsub.s32 6, %v4619
  %v4621 = vrot.slane %v4528, %v4620
  %v4626 = vlaneseq
  %v4627 = vshrl.u32 %v4626, 7
  %v4628 = vsub.s32 0, %v4627
  %v4629 = vrot.slane %v4609, %v4628
  %v4630 = vlaneseq
  %v4631 = vshrl.u32 %v4630, 7
  %v4632 = vsub.s32 0, %v4631
  %v4633 = vrot.slane %v4613, %v4632
  %v4634 = vlaneseq
  %v4635 = vshrl.u32 %v4634, 7
  %v4636 = vsub.s32 0, %v4635
  %v4637 = vrot.slane %v4617, %v4636
  %v4638 = vlaneseq
  %v4639 = vshrl.u32 %v4638, 7
  %v4640 = vsub.s32 0, %v4639
  %v4641 = vrot.slane %v4621, %v4640
  %v4642 = vmul.f32 %v4601, %v4629
  %v4643 = vmul.f32 %v4602, %v4633
  %v4644 = vmul.f32 %v4603, %v4637
  %v4645 = vmul.f32 %v4604, %v4641
  %v4646 = vlaneseq
  %v4647 = vshrl.u32 %v4646, 7
  %v4648 = vsub.s32 1, %v4647
  %v4649 = vrot.slane %v4528, %v4648
  %v4650 = vlaneseq
  %v4651 = vshrl.u32 %v4650, 7
  %v4652 = vsub.s32 3, %v4651
  %v4653 = vrot.slane %v4528, %v4652
  %v4654 = vlaneseq
  %v4655 = vshrl.u32 %v4654, 7
  %v4656 = vsub.s32 5, %v4655
  %v4657 = vrot.slane %v4528, %v4656
  %v4658 = vlaneseq
  %v4659 = vshrl.u32 %v4658, 7
  %v4660 = vsub.s32 7, %v4659
  %v4661 = vrot.slane %v4528, %v4660
  %v4666 = vlaneseq
  %v4667 = vshrl.u32 %v4666, 7
  %v4668 = vsub.s32 1, %v4667
  %v4669 = vrot.slane %v4649, %v4668
  %v4670 = vlaneseq
  %v4671 = vshrl.u32 %v4670, 7
  %v4672 = vsub.s32 1, %v4671
  %v4673 = vrot.slane %v4653, %v4672
  %v4674 = vlaneseq
  %v4675 = vshrl.u32 %v4674, 7
  %v4676 = vsub.s32 1, %v4675
  %v4677 = vrot.slane %v4657, %v4676
  %v4678 = vlaneseq
  %v4679 = vshrl.u32 %v4678, 7
  %v4680 = vsub.s32 1, %v4679
  %v4681 = vrot.slane %v4661, %v4680
  %v4682 = vadd.f32 %v4642, %v4669
  %v4683 = vadd.f32 %v4643, %v4673
  %v4684 = vadd.f32 %v4644, %v4677
  %v4685 = vadd.f32 %v4645, %v4681
  %v4686 = vld [vmem:[%s5] sm:$0xff]
  %v4687 = vld [vmem:[%s5 + $0x8] sm:$0xff]
  %v4688 = vld [vmem:[%s5 + $0x10] sm:$0xff]
  %v4689 = vld [vmem:[%s5 + $0x18] sm:$0xff]
  %v4690 = vld [vmem:[%s5 + $0x20] sm:$0xff]
  %v4691 = vld [vmem:[%s5 + $0x28] sm:$0xff]
  %v4692 = vld [vmem:[%s5 + $0x30] sm:$0xff]
  %v4693 = vld [vmem:[%s5 + $0x38] sm:$0xff]
  %v4694 = vld [vmem:[%s5 + $0x40] sm:$0xff]
  %v4695 = vld [vmem:[%s5 + $0x48] sm:$0xff]
  %v4696 = vld [vmem:[%s5 + $0x50] sm:$0xff]
  %v4697 = vld [vmem:[%s5 + $0x58] sm:$0xff]
  %v4698 = vld [vmem:[%s5 + $0x60] sm:$0xff]
  %v4699 = vld [vmem:[%s5 + $0x68] sm:$0xff]
  %v4700 = vld [vmem:[%s5 + $0x70] sm:$0xff]
  %v4701 = vld [vmem:[%s5 + $0x78] sm:$0xff]
  %v4702 = vld [vmem:[%s5 + $0x80] sm:$0xff]
  %v4703 = vld [vmem:[%s5 + $0x88] sm:$0xff]
  %v4704 = vld [vmem:[%s5 + $0x90] sm:$0xff]
  %v4705 = vld [vmem:[%s5 + $0x98] sm:$0xff]
  %v4706 = vld [vmem:[%s5 + $0xa0] sm:$0xff]
  %v4707 = vld [vmem:[%s5 + $0xa8] sm:$0xff]
  %v4708 = vld [vmem:[%s5 + $0xb0] sm:$0xff]
  %v4709 = vld [vmem:[%s5 + $0xb8] sm:$0xff]
  %v4710 = vld [vmem:[%s5 + $0xc0] sm:$0xff]
  %v4711 = vld [vmem:[%s5 + $0xc8] sm:$0xff]
  %v4712 = vld [vmem:[%s5 + $0xd0] sm:$0xff]
  %v4713 = vld [vmem:[%s5 + $0xd8] sm:$0xff]
  %v4714 = vld [vmem:[%s5 + $0xe0] sm:$0xff]
  %v4715 = vld [vmem:[%s5 + $0xe8] sm:$0xff]
  %v4716 = vld [vmem:[%s5 + $0xf0] sm:$0xff]
  %v4717 = vld [vmem:[%s5 + $0xf8] sm:$0xff]
  %v4718 = vld [vmem:[%s5 + $0x100] sm:$0xff]
  %v4719 = vld [vmem:[%s5 + $0x108] sm:$0xff]
  %v4720 = vld [vmem:[%s5 + $0x110] sm:$0xff]
  %v4721 = vld [vmem:[%s5 + $0x118] sm:$0xff]
  %v4722 = vld [vmem:[%s5 + $0x120] sm:$0xff]
  %v4723 = vld [vmem:[%s5 + $0x128] sm:$0xff]
  %v4724 = vld [vmem:[%s5 + $0x130] sm:$0xff]
  %v4725 = vld [vmem:[%s5 + $0x138] sm:$0xff]
  %v4726 = vld [vmem:[%s5 + $0x140] sm:$0xff]
  %v4727 = vld [vmem:[%s5 + $0x148] sm:$0xff]
  %v4728 = vld [vmem:[%s5 + $0x150] sm:$0xff]
  %v4729 = vld [vmem:[%s5 + $0x158] sm:$0xff]
  %v4730 = vld [vmem:[%s5 + $0x160] sm:$0xff]
  %v4731 = vld [vmem:[%s5 + $0x168] sm:$0xff]
  %v4732 = vld [vmem:[%s5 + $0x170] sm:$0xff]
  %v4733 = vld [vmem:[%s5 + $0x178] sm:$0xff]
  %v4734 = vld [vmem:[%s5 + $0x180] sm:$0xff]
  %v4735 = vld [vmem:[%s5 + $0x188] sm:$0xff]
  %v4736 = vld [vmem:[%s5 + $0x190] sm:$0xff]
  %v4737 = vld [vmem:[%s5 + $0x198] sm:$0xff]
  %v4738 = vld [vmem:[%s5 + $0x1a0] sm:$0xff]
  %v4739 = vld [vmem:[%s5 + $0x1a8] sm:$0xff]
  %v4740 = vld [vmem:[%s5 + $0x1b0] sm:$0xff]
  %v4741 = vld [vmem:[%s5 + $0x1b8] sm:$0xff]
  %v4742 = vld [vmem:[%s5 + $0x1c0] sm:$0xff]
  %v4743 = vld [vmem:[%s5 + $0x1c8] sm:$0xff]
  %v4744 = vld [vmem:[%s5 + $0x1d0] sm:$0xff]
  %v4745 = vld [vmem:[%s5 + $0x1d8] sm:$0xff]
  %v4746 = vld [vmem:[%s5 + $0x1e0] sm:$0xff]
  %v4747 = vld [vmem:[%s5 + $0x1e8] sm:$0xff]
  %v4748 = vld [vmem:[%s5 + $0x1f0] sm:$0xff]
  %v4749 = vld [vmem:[%s5 + $0x1f8] sm:$0xff]
  %v4814 = vunpack.c.l.b16 %v4686
  %v4815 = vunpack.c.h.b16 %v4686
  %v4816 = vunpack.c.l.b16 %v4687
  %v4817 = vunpack.c.h.b16 %v4687
  %v4818 = vunpack.c.l.b16 %v4688
  %v4819 = vunpack.c.h.b16 %v4688
  %v4820 = vunpack.c.l.b16 %v4689
  %v4821 = vunpack.c.h.b16 %v4689
  %v4822 = vunpack.c.l.b16 %v4690
  %v4823 = vunpack.c.h.b16 %v4690
  %v4824 = vunpack.c.l.b16 %v4691
  %v4825 = vunpack.c.h.b16 %v4691
  %v4826 = vunpack.c.l.b16 %v4692
  %v4827 = vunpack.c.h.b16 %v4692
  %v4828 = vunpack.c.l.b16 %v4693
  %v4829 = vunpack.c.h.b16 %v4693
  %v4830 = vunpack.c.l.b16 %v4694
  %v4831 = vunpack.c.h.b16 %v4694
  %v4832 = vunpack.c.l.b16 %v4695
  %v4833 = vunpack.c.h.b16 %v4695
  %v4834 = vunpack.c.l.b16 %v4696
  %v4835 = vunpack.c.h.b16 %v4696
  %v4836 = vunpack.c.l.b16 %v4697
  %v4837 = vunpack.c.h.b16 %v4697
  %v4838 = vunpack.c.l.b16 %v4698
  %v4839 = vunpack.c.h.b16 %v4698
  %v4840 = vunpack.c.l.b16 %v4699
  %v4841 = vunpack.c.h.b16 %v4699
  %v4842 = vunpack.c.l.b16 %v4700
  %v4843 = vunpack.c.h.b16 %v4700
  %v4844 = vunpack.c.l.b16 %v4701
  %v4845 = vunpack.c.h.b16 %v4701
  %v4846 = vunpack.c.l.b16 %v4702
  %v4847 = vunpack.c.h.b16 %v4702
  %v4848 = vunpack.c.l.b16 %v4703
  %v4849 = vunpack.c.h.b16 %v4703
  %v4850 = vunpack.c.l.b16 %v4704
  %v4851 = vunpack.c.h.b16 %v4704
  %v4852 = vunpack.c.l.b16 %v4705
  %v4853 = vunpack.c.h.b16 %v4705
  %v4854 = vunpack.c.l.b16 %v4706
  %v4855 = vunpack.c.h.b16 %v4706
  %v4856 = vunpack.c.l.b16 %v4707
  %v4857 = vunpack.c.h.b16 %v4707
  %v4858 = vunpack.c.l.b16 %v4708
  %v4859 = vunpack.c.h.b16 %v4708
  %v4860 = vunpack.c.l.b16 %v4709
  %v4861 = vunpack.c.h.b16 %v4709
  %v4862 = vunpack.c.l.b16 %v4710
  %v4863 = vunpack.c.h.b16 %v4710
  %v4864 = vunpack.c.l.b16 %v4711
  %v4865 = vunpack.c.h.b16 %v4711
  %v4866 = vunpack.c.l.b16 %v4712
  %v4867 = vunpack.c.h.b16 %v4712
  %v4868 = vunpack.c.l.b16 %v4713
  %v4869 = vunpack.c.h.b16 %v4713
  %v4870 = vunpack.c.l.b16 %v4714
  %v4871 = vunpack.c.h.b16 %v4714
  %v4872 = vunpack.c.l.b16 %v4715
  %v4873 = vunpack.c.h.b16 %v4715
  %v4874 = vunpack.c.l.b16 %v4716
  %v4875 = vunpack.c.h.b16 %v4716
  %v4876 = vunpack.c.l.b16 %v4717
  %v4877 = vunpack.c.h.b16 %v4717
  %v4878 = vunpack.c.l.b16 %v4718
  %v4879 = vunpack.c.h.b16 %v4718
  %v4880 = vunpack.c.l.b16 %v4719
  %v4881 = vunpack.c.h.b16 %v4719
  %v4882 = vunpack.c.l.b16 %v4720
  %v4883 = vunpack.c.h.b16 %v4720
  %v4884 = vunpack.c.l.b16 %v4721
  %v4885 = vunpack.c.h.b16 %v4721
  %v4886 = vunpack.c.l.b16 %v4722
  %v4887 = vunpack.c.h.b16 %v4722
  %v4888 = vunpack.c.l.b16 %v4723
  %v4889 = vunpack.c.h.b16 %v4723
  %v4890 = vunpack.c.l.b16 %v4724
  %v4891 = vunpack.c.h.b16 %v4724
  %v4892 = vunpack.c.l.b16 %v4725
  %v4893 = vunpack.c.h.b16 %v4725
  %v4894 = vunpack.c.l.b16 %v4726
  %v4895 = vunpack.c.h.b16 %v4726
  %v4896 = vunpack.c.l.b16 %v4727
  %v4897 = vunpack.c.h.b16 %v4727
  %v4898 = vunpack.c.l.b16 %v4728
  %v4899 = vunpack.c.h.b16 %v4728
  %v4900 = vunpack.c.l.b16 %v4729
  %v4901 = vunpack.c.h.b16 %v4729
  %v4902 = vunpack.c.l.b16 %v4730
  %v4903 = vunpack.c.h.b16 %v4730
  %v4904 = vunpack.c.l.b16 %v4731
  %v4905 = vunpack.c.h.b16 %v4731
  %v4906 = vunpack.c.l.b16 %v4732
  %v4907 = vunpack.c.h.b16 %v4732
  %v4908 = vunpack.c.l.b16 %v4733
  %v4909 = vunpack.c.h.b16 %v4733
  %v4910 = vunpack.c.l.b16 %v4734
  %v4911 = vunpack.c.h.b16 %v4734
  %v4912 = vunpack.c.l.b16 %v4735
  %v4913 = vunpack.c.h.b16 %v4735
  %v4914 = vunpack.c.l.b16 %v4736
  %v4915 = vunpack.c.h.b16 %v4736
  %v4916 = vunpack.c.l.b16 %v4737
  %v4917 = vunpack.c.h.b16 %v4737
  %v4918 = vunpack.c.l.b16 %v4738
  %v4919 = vunpack.c.h.b16 %v4738
  %v4920 = vunpack.c.l.b16 %v4739
  %v4921 = vunpack.c.h.b16 %v4739
  %v4922 = vunpack.c.l.b16 %v4740
  %v4923 = vunpack.c.h.b16 %v4740
  %v4924 = vunpack.c.l.b16 %v4741
  %v4925 = vunpack.c.h.b16 %v4741
  %v4926 = vunpack.c.l.b16 %v4742
  %v4927 = vunpack.c.h.b16 %v4742
  %v4928 = vunpack.c.l.b16 %v4743
  %v4929 = vunpack.c.h.b16 %v4743
  %v4930 = vunpack.c.l.b16 %v4744
  %v4931 = vunpack.c.h.b16 %v4744
  %v4932 = vunpack.c.l.b16 %v4745
  %v4933 = vunpack.c.h.b16 %v4745
  %v4934 = vunpack.c.l.b16 %v4746
  %v4935 = vunpack.c.h.b16 %v4746
  %v4936 = vunpack.c.l.b16 %v4747
  %v4937 = vunpack.c.h.b16 %v4747
  %v4938 = vunpack.c.l.b16 %v4748
  %v4939 = vunpack.c.h.b16 %v4748
  %v4940 = vunpack.c.l.b16 %v4749
  %v4941 = vunpack.c.h.b16 %v4749
  %v4942 = vpack.c.b16 %v4818, %v4814
  %v4943 = vpack.c.b16 %v4819, %v4815
  %v4944 = vpack.c.b16 %v4820, %v4816
  %v4945 = vpack.c.b16 %v4821, %v4817
  %v4946 = vpack.c.b16 %v4826, %v4822
  %v4947 = vpack.c.b16 %v4827, %v4823
  %v4948 = vpack.c.b16 %v4828, %v4824
  %v4949 = vpack.c.b16 %v4829, %v4825
  %v4950 = vpack.c.b16 %v4834, %v4830
  %v4951 = vpack.c.b16 %v4835, %v4831
  %v4952 = vpack.c.b16 %v4836, %v4832
  %v4953 = vpack.c.b16 %v4837, %v4833
  %v4954 = vpack.c.b16 %v4842, %v4838
  %v4955 = vpack.c.b16 %v4843, %v4839
  %v4956 = vpack.c.b16 %v4844, %v4840
  %v4957 = vpack.c.b16 %v4845, %v4841
  %v4958 = vpack.c.b16 %v4850, %v4846
  %v4959 = vpack.c.b16 %v4851, %v4847
  %v4960 = vpack.c.b16 %v4852, %v4848
  %v4961 = vpack.c.b16 %v4853, %v4849
  %v4962 = vpack.c.b16 %v4858, %v4854
  %v4963 = vpack.c.b16 %v4859, %v4855
  %v4964 = vpack.c.b16 %v4860, %v4856
  %v4965 = vpack.c.b16 %v4861, %v4857
  %v4966 = vpack.c.b16 %v4866, %v4862
  %v4967 = vpack.c.b16 %v4867, %v4863
  %v4968 = vpack.c.b16 %v4868, %v4864
  %v4969 = vpack.c.b16 %v4869, %v4865
  %v4970 = vpack.c.b16 %v4874, %v4870
  %v4971 = vpack.c.b16 %v4875, %v4871
  %v4972 = vpack.c.b16 %v4876, %v4872
  %v4973 = vpack.c.b16 %v4877, %v4873
  %v4974 = vpack.c.b16 %v4882, %v4878
  %v4975 = vpack.c.b16 %v4883, %v4879
  %v4976 = vpack.c.b16 %v4884, %v4880
  %v4977 = vpack.c.b16 %v4885, %v4881
  %v4978 = vpack.c.b16 %v4890, %v4886
  %v4979 = vpack.c.b16 %v4891, %v4887
  %v4980 = vpack.c.b16 %v4892, %v4888
  %v4981 = vpack.c.b16 %v4893, %v4889
  %v4982 = vpack.c.b16 %v4898, %v4894
  %v4983 = vpack.c.b16 %v4899, %v4895
  %v4984 = vpack.c.b16 %v4900, %v4896
  %v4985 = vpack.c.b16 %v4901, %v4897
  %v4986 = vpack.c.b16 %v4906, %v4902
  %v4987 = vpack.c.b16 %v4907, %v4903
  %v4988 = vpack.c.b16 %v4908, %v4904
  %v4989 = vpack.c.b16 %v4909, %v4905
  %v4990 = vpack.c.b16 %v4914, %v4910
  %v4991 = vpack.c.b16 %v4915, %v4911
  %v4992 = vpack.c.b16 %v4916, %v4912
  %v4993 = vpack.c.b16 %v4917, %v4913
  %v4994 = vpack.c.b16 %v4922, %v4918
  %v4995 = vpack.c.b16 %v4923, %v4919
  %v4996 = vpack.c.b16 %v4924, %v4920
  %v4997 = vpack.c.b16 %v4925, %v4921
  %v4998 = vpack.c.b16 %v4930, %v4926
  %v4999 = vpack.c.b16 %v4931, %v4927
  %v5000 = vpack.c.b16 %v4932, %v4928
  %v5001 = vpack.c.b16 %v4933, %v4929
  %v5002 = vpack.c.b16 %v4938, %v4934
  %v5003 = vpack.c.b16 %v4939, %v4935
  %v5004 = vpack.c.b16 %v4940, %v4936
  %v5005 = vpack.c.b16 %v4941, %v4937
  %5070 = vmatprep.subr.bf16.mxu0 %v4943
  %5071 = vmatpush1.bf16.msra.mxu0 %v4942
  %5072 = vmatprep.subr.bf16.mxu0 %v4947
  %5073 = vmatpush1.bf16.msra.mxu0 %v4946
  %5074 = vmatprep.subr.bf16.mxu0 %v4951
  %5075 = vmatpush1.bf16.msra.mxu0 %v4950
  %5076 = vmatprep.subr.bf16.mxu0 %v4955
  %5077 = vmatpush1.bf16.msra.mxu0 %v4954
  %5078 = vmatprep.subr.bf16.mxu0 %v4959
  %5079 = vmatpush1.bf16.msra.mxu0 %v4958
  %5080 = vmatprep.subr.bf16.mxu0 %v4963
  %5081 = vmatpush1.bf16.msra.mxu0 %v4962
  %5082 = vmatprep.subr.bf16.mxu0 %v4967
  %5083 = vmatpush1.bf16.msra.mxu0 %v4966
  %5084 = vmatprep.subr.bf16.mxu0 %v4971
  %5085 = vmatpush1.bf16.msra.mxu0 %v4970
  %5086 = vmatprep.subr.bf16.mxu0 %v4975
  %5087 = vmatpush1.bf16.msra.mxu0 %v4974
  %5088 = vmatprep.subr.bf16.mxu0 %v4979
  %5089 = vmatpush1.bf16.msra.mxu0 %v4978
  %5090 = vmatprep.subr.bf16.mxu0 %v4983
  %5091 = vmatpush1.bf16.msra.mxu0 %v4982
  %5092 = vmatprep.subr.bf16.mxu0 %v4987
  %5093 = vmatpush1.bf16.msra.mxu0 %v4986
  %5094 = vmatprep.subr.bf16.mxu0 %v4991
  %5095 = vmatpush1.bf16.msra.mxu0 %v4990
  %5096 = vmatprep.subr.bf16.mxu0 %v4995
  %5097 = vmatpush1.bf16.msra.mxu0 %v4994
  %5098 = vmatprep.subr.bf16.mxu0 %v4999
  %5099 = vmatpush1.bf16.msra.mxu0 %v4998
  %5100 = vmatprep.subr.bf16.mxu0 %v5003
  %5101 = vmatpush1.bf16.msra.mxu0 %v5002
  %5102 = vmatprep.mubr.bf16.mxu0 %v198
  %5103 = vmatmul.mubr.bf16.gmra.mrb[0].mxu0 %v197
  %v5104 = vpop.f32.mrb[0].mxu0
  %v5105 = vadd.f32 0.0, %v5104
  %v5106 = vpop.f32.mrb[0].mxu0
  %v5107 = vadd.f32 0.0, %v5106
  %v5108 = vpop.f32.mrb[0].mxu0
  %v5109 = vpop.f32.mrb[0].mxu0
  %5110 = vdwg.mxu0
  %5111 = vmatprep.subr.bf16.mxu0 %v4945
  %5112 = vmatpush1.bf16.msra.mxu0 %v4944
  %5113 = vmatprep.subr.bf16.mxu0 %v4949
  %5114 = vmatpush1.bf16.msra.mxu0 %v4948
  %5115 = vmatprep.subr.bf16.mxu0 %v4953
  %5116 = vmatpush1.bf16.msra.mxu0 %v4952
  %5117 = vmatprep.subr.bf16.mxu0 %v4957
  %5118 = vmatpush1.bf16.msra.mxu0 %v4956
  %5119 = vmatprep.subr.bf16.mxu0 %v4961
  %5120 = vmatpush1.bf16.msra.mxu0 %v4960
  %5121 = vmatprep.subr.bf16.mxu0 %v4965
  %5122 = vmatpush1.bf16.msra.mxu0 %v4964
  %5123 = vmatprep.subr.bf16.mxu0 %v4969
  %5124 = vmatpush1.bf16.msra.mxu0 %v4968
  %5125 = vmatprep.subr.bf16.mxu0 %v4973
  %5126 = vmatpush1.bf16.msra.mxu0 %v4972
  %5127 = vmatprep.subr.bf16.mxu0 %v4977
  %5128 = vmatpush1.bf16.msra.mxu0 %v4976
  %5129 = vmatprep.subr.bf16.mxu0 %v4981
  %5130 = vmatpush1.bf16.msra.mxu0 %v4980
  %5131 = vmatprep.subr.bf16.mxu0 %v4985
  %5132 = vmatpush1.bf16.msra.mxu0 %v4984
  %5133 = vmatprep.subr.bf16.mxu0 %v4989
  %5134 = vmatpush1.bf16.msra.mxu0 %v4988
  %5135 = vmatprep.subr.bf16.mxu0 %v4993
  %5136 = vmatpush1.bf16.msra.mxu0 %v4992
  %5137 = vmatprep.subr.bf16.mxu0 %v4997
  %5138 = vmatpush1.bf16.msra.mxu0 %v4996
  %5139 = vmatprep.subr.bf16.mxu0 %v5001
  %5140 = vmatpush1.bf16.msra.mxu0 %v5000
  %5141 = vmatprep.subr.bf16.mxu0 %v5005
  %5142 = vmatpush1.bf16.msra.mxu0 %v5004
  %5143 = vmatprep.mubr.bf16.mxu0 %v198
  %5144 = vmatmul.mubr.bf16.gmra.mrb[0].mxu0 %v197
  %v5145 = vpop.f32.mrb[0].mxu0
  %v5146 = vadd.f32 0.0, %v5145
  %v5147 = vpop.f32.mrb[0].mxu0
  %v5148 = vadd.f32 0.0, %v5147
  %v5149 = vpop.f32.mrb[0].mxu0
  %v5150 = vpop.f32.mrb[0].mxu0
  %5151 = vdwg.mxu0
  %v5152 = vld [vmem:[%s6] sm:$0xff]
  %v5153 = vrot.slane %v5105, 4
  %v5154 = vadd.f32 %v5105, %v5153
  %v5155 = vrot.slane %v5154, 2
  %v5156 = vadd.f32 %v5154, %v5155
  %v5157 = vrot.slane %v5156, 1
  %v5158 = vadd.f32 %v5156, %v5157
  %v5159 = vrot.slane %v5107, 4
  %v5160 = vadd.f32 %v5107, %v5159
  %v5161 = vrot.slane %v5160, 2
  %v5162 = vadd.f32 %v5160, %v5161
  %v5163 = vrot.slane %v5162, 1
  %v5164 = vadd.f32 %v5162, %v5163
  %v5165 = vrot.slane %v5146, 4
  %v5166 = vadd.f32 %v5146, %v5165
  %v5167 = vrot.slane %v5166, 2
  %v5168 = vadd.f32 %v5166, %v5167
  %v5169 = vrot.slane %v5168, 1
  %v5170 = vadd.f32 %v5168, %v5169
  %v5171 = vrot.slane %v5148, 4
  %v5172 = vadd.f32 %v5148, %v5171
  %v5173 = vrot.slane %v5172, 2
  %v5174 = vadd.f32 %v5172, %v5173
  %v5175 = vrot.slane %v5174, 1
  %v5176 = vadd.f32 %v5174, %v5175
  %v5177 = vmul.f32 %v5158, %v1501
  %v5178 = vmul.f32 %v5164, %v1501
  %v5179 = vmul.f32 %v5170, %v1501
  %v5180 = vmul.f32 %v5176, %v1501
  %v5181 = vsub.f32 %v5105, %v5177
  %v5182 = vsub.f32 %v5107, %v5178
  %v5183 = vsub.f32 %v5146, %v5179
  %v5184 = vsub.f32 %v5148, %v5180
  %v5185 = vmul.f32 %v5181, %v5181
  %v5186 = vmul.f32 %v5182, %v5182
  %v5187 = vmul.f32 %v5183, %v5183
  %v5188 = vmul.f32 %v5184, %v5184
  %v5189 = vrot.slane %v5185, 4
  %v5190 = vadd.f32 %v5185, %v5189
  %v5191 = vrot.slane %v5190, 2
  %v5192 = vadd.f32 %v5190, %v5191
  %v5193 = vrot.slane %v5192, 1
  %v5194 = vadd.f32 %v5192, %v5193
  %v5195 = vrot.slane %v5186, 4
  %v5196 = vadd.f32 %v5186, %v5195
  %v5197 = vrot.slane %v5196, 2
  %v5198 = vadd.f32 %v5196, %v5197
  %v5199 = vrot.slane %v5198, 1
  %v5200 = vadd.f32 %v5198, %v5199
  %v5201 = vrot.slane %v5187, 4
  %v5202 = vadd.f32 %v5187, %v5201
  %v5203 = vrot.slane %v5202, 2
  %v5204 = vadd.f32 %v5202, %v5203
  %v5205 = vrot.slane %v5204, 1
  %v5206 = vadd.f32 %v5204, %v5205
  %v5207 = vrot.slane %v5188, 4
  %v5208 = vadd.f32 %v5188, %v5207
  %v5209 = vrot.slane %v5208, 2
  %v5210 = vadd.f32 %v5208, %v5209
  %v5211 = vrot.slane %v5210, 1
  %v5212 = vadd.f32 %v5210, %v5211
  %v5213 = vmul.f32 %v5194, %v1501
  %v5214 = vmul.f32 %v5200, %v1501
  %v5215 = vmul.f32 %v5206, %v1501
  %v5216 = vmul.f32 %v5212, %v1501
  %v5217 = vadd.f32 %v5213, 1e-05
  %v5218 = vadd.f32 %v5214, 1e-05
  %v5219 = vadd.f32 %v5215, 1e-05
  %v5220 = vadd.f32 %v5216, 1e-05
  %v5221 = vrsqrt.pop %v5217
  %v5222 = vrsqrt.pop %v5218
  %v5223 = vrsqrt.pop %v5219
  %v5224 = vrsqrt.pop %v5220
  %v5225 = vmul.f32 %v5181, %v5221
  %v5226 = vmul.f32 %v5182, %v5222
  %v5227 = vmul.f32 %v5183, %v5223
  %v5228 = vmul.f32 %v5184, %v5224
  %v5230 = vlaneseq
  %v5231 = vshrl.u32 %v5230, 7
  %v5232 = vsub.s32 0, %v5231
  %v5233 = vrot.slane %v5152, %v5232
  %v5234 = vlaneseq
  %v5235 = vshrl.u32 %v5234, 7
  %v5236 = vsub.s32 2, %v5235
  %v5237 = vrot.slane %v5152, %v5236
  %v5238 = vlaneseq
  %v5239 = vshrl.u32 %v5238, 7
  %v5240 = vsub.s32 4, %v5239
  %v5241 = vrot.slane %v5152, %v5240
  %v5242 = vlaneseq
  %v5243 = vshrl.u32 %v5242, 7
  %v5244 = vsub.s32 6, %v5243
  %v5245 = vrot.slane %v5152, %v5244
  %v5250 = vlaneseq
  %v5251 = vshrl.u32 %v5250, 7
  %v5252 = vsub.s32 0, %v5251
  %v5253 = vrot.slane %v5233, %v5252
  %v5254 = vlaneseq
  %v5255 = vshrl.u32 %v5254, 7
  %v5256 = vsub.s32 0, %v5255
  %v5257 = vrot.slane %v5237, %v5256
  %v5258 = vlaneseq
  %v5259 = vshrl.u32 %v5258, 7
  %v5260 = vsub.s32 0, %v5259
  %v5261 = vrot.slane %v5241, %v5260
  %v5262 = vlaneseq
  %v5263 = vshrl.u32 %v5262, 7
  %v5264 = vsub.s32 0, %v5263
  %v5265 = vrot.slane %v5245, %v5264
  %v5266 = vmul.f32 %v5225, %v5253
  %v5267 = vmul.f32 %v5226, %v5257
  %v5268 = vmul.f32 %v5227, %v5261
  %v5269 = vmul.f32 %v5228, %v5265
  %v5270 = vlaneseq
  %v5271 = vshrl.u32 %v5270, 7
  %v5272 = vsub.s32 1, %v5271
  %v5273 = vrot.slane %v5152, %v5272
  %v5274 = vlaneseq
  %v5275 = vshrl.u32 %v5274, 7
  %v5276 = vsub.s32 3, %v5275
  %v5277 = vrot.slane %v5152, %v5276
  %v5278 = vlaneseq
  %v5279 = vshrl.u32 %v5278, 7
  %v5280 = vsub.s32 5, %v5279
  %v5281 = vrot.slane %v5152, %v5280
  %v5282 = vlaneseq
  %v5283 = vshrl.u32 %v5282, 7
  %v5284 = vsub.s32 7, %v5283
  %v5285 = vrot.slane %v5152, %v5284
  %v5290 = vlaneseq
  %v5291 = vshrl.u32 %v5290, 7
  %v5292 = vsub.s32 1, %v5291
  %v5293 = vrot.slane %v5273, %v5292
  %v5294 = vlaneseq
  %v5295 = vshrl.u32 %v5294, 7
  %v5296 = vsub.s32 1, %v5295
  %v5297 = vrot.slane %v5277, %v5296
  %v5298 = vlaneseq
  %v5299 = vshrl.u32 %v5298, 7
  %v5300 = vsub.s32 1, %v5299
  %v5301 = vrot.slane %v5281, %v5300
  %v5302 = vlaneseq
  %v5303 = vshrl.u32 %v5302, 7
  %v5304 = vsub.s32 1, %v5303
  %v5305 = vrot.slane %v5285, %v5304
  %v5306 = vadd.f32 %v5266, %v5293
  %v5307 = vadd.f32 %v5267, %v5297
  %v5308 = vadd.f32 %v5268, %v5301
  %v5309 = vadd.f32 %v5269, %v5305
  %v5310 = vadd.f32 %v4682, %v5306
  %v5311 = vadd.f32 %v4683, %v5307
  %v5312 = vadd.f32 %v4684, %v5308
  %v5313 = vadd.f32 %v4685, %v5309
  %v5314 = vmax.f32 %v5310, 0.0
  %v5315 = vmax.f32 %v5311, 0.0
  %v5316 = vmax.f32 %v5312, 0.0
  %v5317 = vmax.f32 %v5313, 0.0
  %5318 = vst [vmem:[%s7] sm:$0xff] %v5314
  %5319 = vst [vmem:[%s7 + $0x8] sm:$0xff] %v5315
  %5320 = vst [vmem:[%s7 + $0x10] sm:$0xff] %v5316
  %5321 = vst [vmem:[%s7 + $0x18] sm:$0xff] %v5317
  // Predicated region
  $region30: #{_lambda_.10} parent=0 // pred_check
    _
  $region31: #{_lambda_.10} parent=0 // pred_check_branch
    %5323 = sbr.rel (0) target = $region33
  $region32: #{_lambda_.10} parent=0 // pred_region
    _
  $region33: #{_lambda_.10} parent=0 // pred_fallthru
    _
  // Predicated region
  $region34: #{_lambda_.10} parent=0 // pred_check
    _
  $region35: #{_lambda_.10} parent=0 // pred_check_branch
    %5325 = sbr.rel (0) target = $region37
  $region36: #{_lambda_.10} parent=0 // pred_region
    _
  $region37: #{_lambda_.10} parent=0 // pred_fallthru
    _

</llo_original>
